<compile_context>
chip_gen: v7x
topology: tpu7x:2x2x1
jax: 0.10.0
libtpu: 0.0.40
codegen_flags: <defaults>
</compile_context>

<pallas_src>
import functools

import jax
import jax.numpy as jnp
from jax.experimental import pallas as pl
from jax.experimental.pallas import tpu as pltpu


# ----------------------------------------------------------------------------- helpers
def _hardswish(x):
    # torch.nn.Hardswish: x * relu6(x + 3) / 6
    return x * jnp.clip(x + 3.0, 0.0, 6.0) * (1.0 / 6.0)


def _pad7(w):
    """Zero-pad a (K, K, C) depthwise kernel to (7, 7, C), centred ('same' preserving)."""
    K = w.shape[0]
    r = (7 - K) // 2
    return jnp.pad(w, ((r, r), (r, r), (0, 0)))


def _block_diag(blocks):
    rows = sum(b.shape[0] for b in blocks)
    cols = sum(b.shape[1] for b in blocks)
    out = jnp.zeros((rows, cols), jnp.float32)
    r = c = 0
    for b in blocks:
        out = out.at[r:r + b.shape[0], c:c + b.shape[1]].set(b.astype(jnp.float32))
        r += b.shape[0]
        c += b.shape[1]
    return out


# ------------------------------------------------------------------- the fused kernel
def _cross_att_kernel(x_ref, y_ref, kvw_ref, dw_ref, cmask_ref, pw_ref,
                      bng_ref, bnb_ref, lng_ref, lnb_ref,
                      crpew_ref, crpeb_ref, hmask_ref, projw_ref, projb_ref,
                      o_ref, conv_buf, crpe_buf,
                      *, B, H, W, dim, trans_dim, seg_dim, scale):
    f32 = jnp.float32
    bf16 = jnp.bfloat16
    N = H * W
    sd = seg_dim
    sd0 = dim - 4 * sd
    c3 = 3 * sd                      # conv channels per aggregator group
    D = trans_dim                    # = 4 * sd, attention channels (head*Ch + ch)
    CG = 3 * c3 + 3 * sd0            # stacked conv channels: k|v|q conv + k|v|q local
    TOP = 4 * W                      # zero rows above/below the flattened image

    # ---- kv = x @ W_kv : one (B*N, dim) @ (dim, 2*dim) MXU matmul --------------------
    x = x_ref[...]
    y = y_ref[...]
    kv = jnp.dot(x.astype(bf16), kvw_ref[...], preferred_element_type=f32)  # (B*N, 2*dim)

    # ---- build the zero-padded, channel-stacked conv input entirely in VMEM ----------
    # lane layout: [k_conv 3sd | v_conv 3sd | q_conv 3sd | k_loc sd0 | v_loc sd0 | q_loc sd0]
    conv_buf[...] = jnp.zeros_like(conv_buf)
    conv_in = jnp.concatenate(
        [kv[:, sd:4 * sd], kv[:, dim + sd:dim + 4 * sd], y[:, sd:4 * sd],
         kv[:, 4 * sd:dim], kv[:, dim + 4 * sd:2 * dim], y[:, 4 * sd:dim]], axis=-1)
    conv_buf[:, TOP:TOP + N, :] = conv_in.reshape(B, N, CG)

    # ---- all depthwise convs (3/5/7 windows zero-padded to 7x7) in ONE 49-tap loop ----
    # taps are flat-sequence sublane shifts; per-kw column masks kill row-boundary leaks.
    dw = dw_ref[...]                 # (7, 7, CG)
    cmask = cmask_ref[...]           # (7, N, 1)
    acc = jnp.zeros((B, N, CG), f32)
    for kw in range(7):
        part = jnp.zeros((B, N, CG), f32)
        for kh in range(7):
            d = (kh - 3) * W + (kw - 3)
            part = part + conv_buf[:, TOP + d:TOP + d + N, :] * dw[kh:kh + 1, kw:kw + 1, :]
        acc = acc + part * cmask[kw:kw + 1, :, :]
    acc = acc.reshape(B * N, CG)

    # block-diagonal 1x1 pointwise convs for all five groups: one (CG, 3*c3+2*sd0) matmul
    pwout = jnp.dot(acc.astype(bf16), pw_ref[...], preferred_element_type=f32)

    # ---- BatchNorm (training-mode batch stats, k/v copies pooled) + Hardswish ---------
    pre = jnp.concatenate([kv[:, 0:sd], pwout[:, 0:c3],
                           kv[:, dim:dim + sd], pwout[:, c3:2 * c3],
                           y[:, 0:sd], pwout[:, 2 * c3:3 * c3]], axis=-1)   # (B*N, 3*D)
    inv_cnt = 1.0 / float(B * N)
    s1 = jnp.sum(pre, axis=0, keepdims=True) * inv_cnt
    s2 = jnp.sum(pre * pre, axis=0, keepdims=True) * inv_cnt
    m_kv = 0.5 * (s1[:, 0:D] + s1[:, D:2 * D])
    e_kv = 0.5 * (s2[:, 0:D] + s2[:, D:2 * D])
    m_q = s1[:, 2 * D:3 * D]
    e_q = s2[:, 2 * D:3 * D]
    mean = jnp.concatenate([m_kv, m_kv, m_q], axis=-1)
    var = jnp.concatenate([e_kv - m_kv * m_kv, e_kv - m_kv * m_kv, e_q - m_q * m_q], axis=-1)
    xt = _hardswish((pre - mean) * jax.lax.rsqrt(var + 1e-5) * bng_ref[...] + bnb_ref[...])
    # xt lanes: [k heads (D) | v heads (D) | q heads (D)], channel = head*Ch + ch

    # ---- Agg_0 local branches: LayerNorm + Hardswish, then sum -----------------------
    def _ln(z, gamma, beta):
        mu = jnp.mean(z, axis=-1, keepdims=True)
        va = jnp.mean((z - mu) ** 2, axis=-1, keepdims=True)
        return _hardswish((z - mu) * jax.lax.rsqrt(va + 1e-5) * gamma + beta)

    a0 = (_ln(pwout[:, 3 * c3:3 * c3 + sd0], lng_ref[:, 0:sd0], lnb_ref[:, 0:sd0])
          + _ln(pwout[:, 3 * c3 + sd0:3 * c3 + 2 * sd0],
                lng_ref[:, sd0:2 * sd0], lnb_ref[:, sd0:2 * sd0]))          # (B*N, sd0)

    # ---- crpe: {3:2, 5:3, 7:3} windows fused into one 7x7 depthwise conv over v ------
    crpe_buf[...] = jnp.zeros_like(crpe_buf)
    crpe_buf[:, TOP:TOP + N, :] = xt[:, D:2 * D].reshape(B, N, D)
    cw = crpew_ref[...]
    cacc = jnp.zeros((B, N, D), f32)
    for kw in range(7):
        part = jnp.zeros((B, N, D), f32)
        for kh in range(7):
            d = (kh - 3) * W + (kw - 3)
            part = part + crpe_buf[:, TOP + d:TOP + d + N, :] * cw[kh:kh + 1, kw:kw + 1, :]
        cacc = cacc + part * cmask[kw:kw + 1, :, :]
    conv_v = cacc.reshape(B * N, D) + crpeb_ref[...]

    # ---- attention: column softmax, all heads batched on the MXU via a resident mask --
    hmask = hmask_ref[...]                                                   # (D, D) 0/1
    att_parts = []
    for b in range(B):
        r0 = b * N
        k = xt[r0:r0 + N, 0:D]
        v = xt[r0:r0 + N, D:2 * D]
        q = xt[r0:r0 + N, 2 * D:3 * D]
        mx = jnp.max(k, axis=0, keepdims=True)
        ex = jnp.exp(k - mx)
        ks = ex * pl.reciprocal(jnp.sum(ex, axis=0, keepdims=True), approx=True)
        ktv = jax.lax.dot_general(ks.astype(bf16), v.astype(bf16),
                                  (((0,), (0,)), ((), ())),
                                  preferred_element_type=f32) * hmask        # (D, D)
        eff = jnp.dot(q.astype(bf16), ktv.astype(bf16), preferred_element_type=f32)
        att_parts.append(scale * eff + q * conv_v[r0:r0 + N, :])
    att = jnp.concatenate(att_parts, axis=0)                                 # (B*N, D)

    # ---- concat([att, agg0_kv + agg0_q]) @ proj + bias (single MXU matmul) ------------
    xcat = jnp.concatenate([att, a0], axis=-1)                               # (B*N, dim)
    out = jnp.dot(xcat.astype(bf16), projw_ref[...], preferred_element_type=f32) + projb_ref[...]
    o_ref[...] = out.reshape(B, N, dim).astype(o_ref.dtype)


# ----------------------------------------------------------------------------- forward
def cross_att_forward(p, x, y, size, *, dim, num_heads):
    """x, y: (B, H, W, dim) NHWC (torch module uses NCHW).  Returns (B, H*W, dim)."""
    B, H, W, C = x.shape
    assert C == dim and size == (H, W)
    assert W >= 3, "flat-sequence conv padding needs W >= 3"
    N = H * W
    sd = dim // 5
    sd0 = dim - 4 * sd
    trans_dim = dim // 5 * 4
    Ch = trans_dim // num_heads
    scale = (dim // num_heads) ** (-0.5)
    CG = 9 * sd + 3 * sd0
    bf16 = jnp.bfloat16

    # ----- fused weight prep (tiny, parameter-only; constant under jit) -----
    def agg_dw(prefix):
        return jnp.concatenate([_pad7(p[prefix + 'agg1_dw']),
                                _pad7(p[prefix + 'agg2_dw']),
                                p[prefix + 'agg3_dw']], axis=-1)             # (7,7,3*sd)

    def agg_pw(prefix):
        return _block_diag([p[prefix + 'agg1_pw'], p[prefix + 'agg2_pw'],
                            p[prefix + 'agg3_pw']])                          # (3sd, 3sd)

    def agg_bn(prefix, which):
        return jnp.concatenate([p[prefix + f'bn{i}_{which}'] for i in range(4)])

    dw_kv, dw_q = agg_dw('kv_'), agg_dw('q_')
    dw_all = jnp.concatenate([dw_kv, dw_kv, dw_q,
                              _pad7(p['kv_agg0_dw']), _pad7(p['q_agg0_dw'])], axis=-1)
    pw_bd = _block_diag([agg_pw('kv_'), agg_pw('kv_'), agg_pw('q_'),
                         p['kv_agg0_pw'], p['q_agg0_pw']]).astype(bf16)      # (CG, 9sd+2sd0)
    bn_g = jnp.concatenate([agg_bn('kv_', 'g'), agg_bn('kv_', 'g'),
                            agg_bn('q_', 'g')]).reshape(1, 12 * sd)
    bn_b = jnp.concatenate([agg_bn('kv_', 'b'), agg_bn('kv_', 'b'),
                            agg_bn('q_', 'b')]).reshape(1, 12 * sd)
    ln_g = jnp.concatenate([p['kv_agg0_ln_g'], p['q_agg0_ln_g']]).reshape(1, 2 * sd0)
    ln_b = jnp.concatenate([p['kv_agg0_ln_b'], p['q_agg0_ln_b']]).reshape(1, 2 * sd0)
    crpe_w = jnp.concatenate([_pad7(p['crpe3_w']), _pad7(p['crpe5_w']), p['crpe7_w']], axis=-1)
    crpe_b = jnp.concatenate([p['crpe3_b'], p['crpe5_b'], p['crpe7_b']]).reshape(1, trans_dim)

    # per-kw column-validity masks (row-boundary handling for the flat-sequence conv)
    wpos = jnp.arange(N, dtype=jnp.int32) % W
    colmask = jnp.stack([((wpos + (kw - 3) >= 0) & (wpos + (kw - 3) < W)).astype(jnp.float32)
                         for kw in range(7)]).reshape(7, N, 1)
    # per-head block-diagonal attention mask (hoisted out of the kernel body)
    hidx = jnp.arange(trans_dim, dtype=jnp.int32) // Ch
    headmask = (hidx[:, None] == hidx[None, :]).astype(jnp.float32)

    kern = functools.partial(_cross_att_kernel, B=B, H=H, W=W, dim=dim,
                             trans_dim=trans_dim, seg_dim=sd, scale=scale)

    out = pl.pallas_call(
        kern,
        out_shape=jax.ShapeDtypeStruct((B, N, dim), jnp.float32),
        scratch_shapes=[
            pltpu.VMEM((B, N + 8 * W, CG), jnp.float32),        # padded conv input (all groups)
            pltpu.VMEM((B, N + 8 * W, trans_dim), jnp.float32),  # padded v image for crpe
        ],
    )(x.reshape(B * N, dim), y.reshape(B * N, dim),
      p['kv_w'].astype(bf16), dw_all, colmask, pw_bd, bn_g, bn_b, ln_g, ln_b,
      crpe_w, crpe_b, headmask, p['proj_w'].astype(bf16), p['proj_b'].reshape(1, dim))
    # attn_drop / proj_drop have p = 0.0 -> identity
    return out


# ----------------------------------------------------------------------------- params
def init_params(key, dim, num_heads):
    seg_dim = dim // 5
    seg_dim0 = dim - 4 * seg_dim
    trans_dim = dim // 5 * 4
    Ch = trans_dim // num_heads
    keys = iter(jax.random.split(key, 64))

    def nrm(shape, scale=0.1):
        return (scale * jax.random.normal(next(keys), shape)).astype(jnp.float32)

    p = {
        'kv_w': nrm((dim, 2 * dim)),       # nn.Linear(dim, 2*dim, bias=False)
        'proj_w': nrm((dim, dim)),         # nn.Linear(dim, dim)
        'proj_b': nrm((dim,)),
    }
    for prefix, num in (('kv_', 2), ('q_', 1)):
        p[prefix + 'agg1_dw'] = nrm((3, 3, seg_dim)); p[prefix + 'agg1_pw'] = nrm((seg_dim, seg_dim))
        p[prefix + 'agg2_dw'] = nrm((5, 5, seg_dim)); p[prefix + 'agg2_pw'] = nrm((seg_dim, seg_dim))
        p[prefix + 'agg3_dw'] = nrm((7, 7, seg_dim)); p[prefix + 'agg3_pw'] = nrm((seg_dim, seg_dim))
        p[prefix + 'agg0_dw'] = nrm((3, 3, num * seg_dim0))
        p[prefix + 'agg0_pw'] = nrm((num * seg_dim0, seg_dim0))
        p[prefix + 'agg0_ln_g'] = jnp.ones((seg_dim0,), jnp.float32)
        p[prefix + 'agg0_ln_b'] = nrm((seg_dim0,))
        for i in range(4):
            p[prefix + f'bn{i}_g'] = 1.0 + nrm((seg_dim,))
            p[prefix + f'bn{i}_b'] = nrm((seg_dim,))
    p['crpe3_w'] = nrm((3, 3, 2 * Ch)); p['crpe3_b'] = nrm((2 * Ch,))
    p['crpe5_w'] = nrm((5, 5, 3 * Ch)); p['crpe5_b'] = nrm((3 * Ch,))
    p['crpe7_w'] = nrm((7, 7, 3 * Ch)); p['crpe7_b'] = nrm((3 * Ch,))
    return p


# ----------------------------------------------------------------------------- main
if __name__ == "__main__":
    B, H, W = 2, 8, 8
    dim, num_heads = 40, 8          # dim % 5 == 0, (dim//5*4) % num_heads == 0, heads == 2+3+3
    key = jax.random.PRNGKey(0)
    kx, ky, kp = jax.random.split(key, 3)
    x = jax.random.normal(kx, (B, H, W, dim), jnp.float32)
    y = jax.random.normal(ky, (B, H, W, dim), jnp.float32)
    params = init_params(kp, dim, num_heads)

    fwd = jax.jit(lambda p_, x_, y_: cross_att_forward(p_, x_, y_, (H, W),
                                                       dim=dim, num_heads=num_heads))
    out = fwd(params, x, y)
    jax.block_until_ready(out)
    assert out.shape == (B, H * W, dim)
    assert bool(jnp.all(jnp.isfinite(out)))
    print("KERNEL_OK")
</pallas_src>

<mosaic_0001>
module attributes {stable_mosaic.version = 11 : i64} {
  func.func @_cross_att_kernel(%arg0: memref<128x40xf32, #tpu.memory_space<vmem>>, %arg1: memref<128x40xf32, #tpu.memory_space<vmem>>, %arg2: memref<40x80xbf16, #tpu.memory_space<vmem>>, %arg3: memref<7x7x96xf32, #tpu.memory_space<vmem>>, %arg4: memref<7x64x1xf32, #tpu.memory_space<vmem>>, %arg5: memref<96x88xbf16, #tpu.memory_space<vmem>>, %arg6: memref<1x96xf32, #tpu.memory_space<vmem>>, %arg7: memref<1x96xf32, #tpu.memory_space<vmem>>, %arg8: memref<1x16xf32, #tpu.memory_space<vmem>>, %arg9: memref<1x16xf32, #tpu.memory_space<vmem>>, %arg10: memref<7x7x32xf32, #tpu.memory_space<vmem>>, %arg11: memref<1x32xf32, #tpu.memory_space<vmem>>, %arg12: memref<32x32xf32, #tpu.memory_space<vmem>>, %arg13: memref<40x40xbf16, #tpu.memory_space<vmem>>, %arg14: memref<1x40xf32, #tpu.memory_space<vmem>>, %arg15: memref<2x64x40xf32, #tpu.memory_space<vmem>>, %arg16: memref<2x128x96xf32, #tpu.memory_space<vmem>>, %arg17: memref<2x128x32xf32, #tpu.memory_space<vmem>>) attributes {dimension_semantics = [], scalar_prefetch = 0 : i64, scratch_operands = 2 : i64, tpu.core_type = #tpu.core_type<tc>} {
    %c0 = arith.constant 0 : index
    %c0_0 = arith.constant 0 : index
    %0 = vector.load %arg0[%c0, %c0_0] : memref<128x40xf32, #tpu.memory_space<vmem>>, vector<128x40xf32>
    %c0_1 = arith.constant 0 : index
    %c0_2 = arith.constant 0 : index
    %1 = vector.load %arg1[%c0_1, %c0_2] : memref<128x40xf32, #tpu.memory_space<vmem>>, vector<128x40xf32>
    %2 = arith.truncf %0 : vector<128x40xf32> to vector<128x40xbf16>
    %c0_3 = arith.constant 0 : index
    %c0_4 = arith.constant 0 : index
    %3 = vector.load %arg2[%c0_3, %c0_4] : memref<40x80xbf16, #tpu.memory_space<vmem>>, vector<40x80xbf16>
    %cst = arith.constant dense<0.000000e+00> : vector<128x80xf32>
    %4 = tpu.matmul %2, %3, %cst {dimension_numbers = #tpu.dot_dimension_numbers<[1], [0], [0], [1], [0, 0, 1, 1], [], []>} : vector<128x40xbf16>, vector<40x80xbf16>, vector<128x80xf32> -> vector<128x80xf32>
    %cst_5 = arith.constant 0.000000e+00 : f32
    %5 = vector.broadcast %cst_5 : f32 to vector<2x128x96xf32>
    %c0_6 = arith.constant 0 : index
    %c0_7 = arith.constant 0 : index
    %c0_8 = arith.constant 0 : index
    %6 = vector.load %arg16[%c0_6, %c0_7, %c0_8] : memref<2x128x96xf32, #tpu.memory_space<vmem>>, vector<2x128x96xf32>
    tpu.vector_store %arg16[%c0_6, %c0_7, %c0_8], %5 {strides = array<i32>} : memref<2x128x96xf32, #tpu.memory_space<vmem>>, vector<2x128x96xf32>,
    %7 = vector.extract_strided_slice %4 {offsets = [0, 8], sizes = [128, 24], strides = [1, 1]} : vector<128x80xf32> to vector<128x24xf32>
    %8 = vector.extract_strided_slice %4 {offsets = [0, 48], sizes = [128, 24], strides = [1, 1]} : vector<128x80xf32> to vector<128x24xf32>
    %9 = vector.extract_strided_slice %1 {offsets = [0, 8], sizes = [128, 24], strides = [1, 1]} : vector<128x40xf32> to vector<128x24xf32>
    %10 = vector.extract_strided_slice %4 {offsets = [0, 32], sizes = [128, 8], strides = [1, 1]} : vector<128x80xf32> to vector<128x8xf32>
    %11 = vector.extract_strided_slice %4 {offsets = [0, 72], sizes = [128, 8], strides = [1, 1]} : vector<128x80xf32> to vector<128x8xf32>
    %12 = vector.extract_strided_slice %1 {offsets = [0, 32], sizes = [128, 8], strides = [1, 1]} : vector<128x40xf32> to vector<128x8xf32>
    %13 = tpu.concatenate %7, %8, %9, %10, %11, %12 in 1 : vector<128x24xf32>, vector<128x24xf32>, vector<128x24xf32>, vector<128x8xf32>, vector<128x8xf32>, vector<128x8xf32> -> vector<128x96xf32>
    %14 = vector.shape_cast %13 : vector<128x96xf32> to vector<2x64x96xf32>
    %c0_9 = arith.constant 0 : index
    %c32 = arith.constant 32 : index
    %c0_10 = arith.constant 0 : index
    %15 = vector.load %arg16[%c0_9, %c32, %c0_10] : memref<2x128x96xf32, #tpu.memory_space<vmem>>, vector<2x64x96xf32>
    tpu.vector_store %arg16[%c0_9, %c32, %c0_10], %14 {strides = array<i32>} : memref<2x128x96xf32, #tpu.memory_space<vmem>>, vector<2x64x96xf32>,
    %c0_11 = arith.constant 0 : index
    %c0_12 = arith.constant 0 : index
    %c0_13 = arith.constant 0 : index
    %16 = vector.load %arg3[%c0_11, %c0_12, %c0_13] : memref<7x7x96xf32, #tpu.memory_space<vmem>>, vector<7x7x96xf32>
    %c0_14 = arith.constant 0 : index
    %c0_15 = arith.constant 0 : index
    %c0_16 = arith.constant 0 : index
    %17 = vector.load %arg4[%c0_14, %c0_15, %c0_16] : memref<7x64x1xf32, #tpu.memory_space<vmem>>, vector<7x64x1xf32>
    %cst_17 = arith.constant 0.000000e+00 : f32
    %18 = vector.broadcast %cst_17 : f32 to vector<2x64x96xf32>
    %cst_18 = arith.constant 0.000000e+00 : f32
    %19 = vector.broadcast %cst_18 : f32 to vector<2x64x96xf32>
    %c0_19 = arith.constant 0 : index
    %c5 = arith.constant 5 : index
    %c0_20 = arith.constant 0 : index
    %20 = vector.load %arg16[%c0_19, %c5, %c0_20] : memref<2x128x96xf32, #tpu.memory_space<vmem>>, vector<2x64x96xf32>
    %21 = vector.extract_strided_slice %16 {offsets = [0, 0, 0], sizes = [1, 1, 96], strides = [1, 1, 1]} : vector<7x7x96xf32> to vector<1x1x96xf32>
    %22 = vector.broadcast %21 : vector<1x1x96xf32> to vector<2x64x96xf32>
    %23 = arith.mulf %20, %22 : vector<2x64x96xf32>
    %24 = arith.addf %19, %23 : vector<2x64x96xf32>
    %c0_21 = arith.constant 0 : index
    %c13 = arith.constant 13 : index
    %c0_22 = arith.constant 0 : index
    %25 = vector.load %arg16[%c0_21, %c13, %c0_22] : memref<2x128x96xf32, #tpu.memory_space<vmem>>, vector<2x64x96xf32>
    %26 = vector.extract_strided_slice %16 {offsets = [1, 0, 0], sizes = [1, 1, 96], strides = [1, 1, 1]} : vector<7x7x96xf32> to vector<1x1x96xf32>
    %27 = vector.broadcast %26 : vector<1x1x96xf32> to vector<2x64x96xf32>
    %28 = arith.mulf %25, %27 : vector<2x64x96xf32>
    %29 = arith.addf %24, %28 : vector<2x64x96xf32>
    %c0_23 = arith.constant 0 : index
    %c21 = arith.constant 21 : index
    %c0_24 = arith.constant 0 : index
    %30 = vector.load %arg16[%c0_23, %c21, %c0_24] : memref<2x128x96xf32, #tpu.memory_space<vmem>>, vector<2x64x96xf32>
    %31 = vector.extract_strided_slice %16 {offsets = [2, 0, 0], sizes = [1, 1, 96], strides = [1, 1, 1]} : vector<7x7x96xf32> to vector<1x1x96xf32>
    %32 = vector.broadcast %31 : vector<1x1x96xf32> to vector<2x64x96xf32>
    %33 = arith.mulf %30, %32 : vector<2x64x96xf32>
    %34 = arith.addf %29, %33 : vector<2x64x96xf32>
    %c0_25 = arith.constant 0 : index
    %c29 = arith.constant 29 : index
    %c0_26 = arith.constant 0 : index
    %35 = vector.load %arg16[%c0_25, %c29, %c0_26] : memref<2x128x96xf32, #tpu.memory_space<vmem>>, vector<2x64x96xf32>
    %36 = vector.extract_strided_slice %16 {offsets = [3, 0, 0], sizes = [1, 1, 96], strides = [1, 1, 1]} : vector<7x7x96xf32> to vector<1x1x96xf32>
    %37 = vector.broadcast %36 : vector<1x1x96xf32> to vector<2x64x96xf32>
    %38 = arith.mulf %35, %37 : vector<2x64x96xf32>
    %39 = arith.addf %34, %38 : vector<2x64x96xf32>
    %c0_27 = arith.constant 0 : index
    %c37 = arith.constant 37 : index
    %c0_28 = arith.constant 0 : index
    %40 = vector.load %arg16[%c0_27, %c37, %c0_28] : memref<2x128x96xf32, #tpu.memory_space<vmem>>, vector<2x64x96xf32>
    %41 = vector.extract_strided_slice %16 {offsets = [4, 0, 0], sizes = [1, 1, 96], strides = [1, 1, 1]} : vector<7x7x96xf32> to vector<1x1x96xf32>
    %42 = vector.broadcast %41 : vector<1x1x96xf32> to vector<2x64x96xf32>
    %43 = arith.mulf %40, %42 : vector<2x64x96xf32>
    %44 = arith.addf %39, %43 : vector<2x64x96xf32>
    %c0_29 = arith.constant 0 : index
    %c45 = arith.constant 45 : index
    %c0_30 = arith.constant 0 : index
    %45 = vector.load %arg16[%c0_29, %c45, %c0_30] : memref<2x128x96xf32, #tpu.memory_space<vmem>>, vector<2x64x96xf32>
    %46 = vector.extract_strided_slice %16 {offsets = [5, 0, 0], sizes = [1, 1, 96], strides = [1, 1, 1]} : vector<7x7x96xf32> to vector<1x1x96xf32>
    %47 = vector.broadcast %46 : vector<1x1x96xf32> to vector<2x64x96xf32>
    %48 = arith.mulf %45, %47 : vector<2x64x96xf32>
    %49 = arith.addf %44, %48 : vector<2x64x96xf32>
    %c0_31 = arith.constant 0 : index
    %c53 = arith.constant 53 : index
    %c0_32 = arith.constant 0 : index
    %50 = vector.load %arg16[%c0_31, %c53, %c0_32] : memref<2x128x96xf32, #tpu.memory_space<vmem>>, vector<2x64x96xf32>
    %51 = vector.extract_strided_slice %16 {offsets = [6, 0, 0], sizes = [1, 1, 96], strides = [1, 1, 1]} : vector<7x7x96xf32> to vector<1x1x96xf32>
    %52 = vector.broadcast %51 : vector<1x1x96xf32> to vector<2x64x96xf32>
    %53 = arith.mulf %50, %52 : vector<2x64x96xf32>
    %54 = arith.addf %49, %53 : vector<2x64x96xf32>
    %55 = vector.extract_strided_slice %17 {offsets = [0, 0, 0], sizes = [1, 64, 1], strides = [1, 1, 1]} : vector<7x64x1xf32> to vector<1x64x1xf32>
    %56 = vector.broadcast %55 : vector<1x64x1xf32> to vector<2x64x96xf32>
    %57 = arith.mulf %54, %56 : vector<2x64x96xf32>
    %58 = arith.addf %18, %57 : vector<2x64x96xf32>
    %cst_33 = arith.constant 0.000000e+00 : f32
    %59 = vector.broadcast %cst_33 : f32 to vector<2x64x96xf32>
    %c0_34 = arith.constant 0 : index
    %c6 = arith.constant 6 : index
    %c0_35 = arith.constant 0 : index
    %60 = vector.load %arg16[%c0_34, %c6, %c0_35] : memref<2x128x96xf32, #tpu.memory_space<vmem>>, vector<2x64x96xf32>
    %61 = vector.extract_strided_slice %16 {offsets = [0, 1, 0], sizes = [1, 1, 96], strides = [1, 1, 1]} : vector<7x7x96xf32> to vector<1x1x96xf32>
    %62 = vector.broadcast %61 : vector<1x1x96xf32> to vector<2x64x96xf32>
    %63 = arith.mulf %60, %62 : vector<2x64x96xf32>
    %64 = arith.addf %59, %63 : vector<2x64x96xf32>
    %c0_36 = arith.constant 0 : index
    %c14 = arith.constant 14 : index
    %c0_37 = arith.constant 0 : index
    %65 = vector.load %arg16[%c0_36, %c14, %c0_37] : memref<2x128x96xf32, #tpu.memory_space<vmem>>, vector<2x64x96xf32>
    %66 = vector.extract_strided_slice %16 {offsets = [1, 1, 0], sizes = [1, 1, 96], strides = [1, 1, 1]} : vector<7x7x96xf32> to vector<1x1x96xf32>
    %67 = vector.broadcast %66 : vector<1x1x96xf32> to vector<2x64x96xf32>
    %68 = arith.mulf %65, %67 : vector<2x64x96xf32>
    %69 = arith.addf %64, %68 : vector<2x64x96xf32>
    %c0_38 = arith.constant 0 : index
    %c22 = arith.constant 22 : index
    %c0_39 = arith.constant 0 : index
    %70 = vector.load %arg16[%c0_38, %c22, %c0_39] : memref<2x128x96xf32, #tpu.memory_space<vmem>>, vector<2x64x96xf32>
    %71 = vector.extract_strided_slice %16 {offsets = [2, 1, 0], sizes = [1, 1, 96], strides = [1, 1, 1]} : vector<7x7x96xf32> to vector<1x1x96xf32>
    %72 = vector.broadcast %71 : vector<1x1x96xf32> to vector<2x64x96xf32>
    %73 = arith.mulf %70, %72 : vector<2x64x96xf32>
    %74 = arith.addf %69, %73 : vector<2x64x96xf32>
    %c0_40 = arith.constant 0 : index
    %c30 = arith.constant 30 : index
    %c0_41 = arith.constant 0 : index
    %75 = vector.load %arg16[%c0_40, %c30, %c0_41] : memref<2x128x96xf32, #tpu.memory_space<vmem>>, vector<2x64x96xf32>
    %76 = vector.extract_strided_slice %16 {offsets = [3, 1, 0], sizes = [1, 1, 96], strides = [1, 1, 1]} : vector<7x7x96xf32> to vector<1x1x96xf32>
    %77 = vector.broadcast %76 : vector<1x1x96xf32> to vector<2x64x96xf32>
    %78 = arith.mulf %75, %77 : vector<2x64x96xf32>
    %79 = arith.addf %74, %78 : vector<2x64x96xf32>
    %c0_42 = arith.constant 0 : index
    %c38 = arith.constant 38 : index
    %c0_43 = arith.constant 0 : index
    %80 = vector.load %arg16[%c0_42, %c38, %c0_43] : memref<2x128x96xf32, #tpu.memory_space<vmem>>, vector<2x64x96xf32>
    %81 = vector.extract_strided_slice %16 {offsets = [4, 1, 0], sizes = [1, 1, 96], strides = [1, 1, 1]} : vector<7x7x96xf32> to vector<1x1x96xf32>
    %82 = vector.broadcast %81 : vector<1x1x96xf32> to vector<2x64x96xf32>
    %83 = arith.mulf %80, %82 : vector<2x64x96xf32>
    %84 = arith.addf %79, %83 : vector<2x64x96xf32>
    %c0_44 = arith.constant 0 : index
    %c46 = arith.constant 46 : index
    %c0_45 = arith.constant 0 : index
    %85 = vector.load %arg16[%c0_44, %c46, %c0_45] : memref<2x128x96xf32, #tpu.memory_space<vmem>>, vector<2x64x96xf32>
    %86 = vector.extract_strided_slice %16 {offsets = [5, 1, 0], sizes = [1, 1, 96], strides = [1, 1, 1]} : vector<7x7x96xf32> to vector<1x1x96xf32>
    %87 = vector.broadcast %86 : vector<1x1x96xf32> to vector<2x64x96xf32>
    %88 = arith.mulf %85, %87 : vector<2x64x96xf32>
    %89 = arith.addf %84, %88 : vector<2x64x96xf32>
    %c0_46 = arith.constant 0 : index
    %c54 = arith.constant 54 : index
    %c0_47 = arith.constant 0 : index
    %90 = vector.load %arg16[%c0_46, %c54, %c0_47] : memref<2x128x96xf32, #tpu.memory_space<vmem>>, vector<2x64x96xf32>
    %91 = vector.extract_strided_slice %16 {offsets = [6, 1, 0], sizes = [1, 1, 96], strides = [1, 1, 1]} : vector<7x7x96xf32> to vector<1x1x96xf32>
    %92 = vector.broadcast %91 : vector<1x1x96xf32> to vector<2x64x96xf32>
    %93 = arith.mulf %90, %92 : vector<2x64x96xf32>
    %94 = arith.addf %89, %93 : vector<2x64x96xf32>
    %95 = vector.extract_strided_slice %17 {offsets = [1, 0, 0], sizes = [1, 64, 1], strides = [1, 1, 1]} : vector<7x64x1xf32> to vector<1x64x1xf32>
    %96 = vector.broadcast %95 : vector<1x64x1xf32> to vector<2x64x96xf32>
    %97 = arith.mulf %94, %96 : vector<2x64x96xf32>
    %98 = arith.addf %58, %97 : vector<2x64x96xf32>
    %cst_48 = arith.constant 0.000000e+00 : f32
    %99 = vector.broadcast %cst_48 : f32 to vector<2x64x96xf32>
    %c0_49 = arith.constant 0 : index
    %c7 = arith.constant 7 : index
    %c0_50 = arith.constant 0 : index
    %100 = vector.load %arg16[%c0_49, %c7, %c0_50] : memref<2x128x96xf32, #tpu.memory_space<vmem>>, vector<2x64x96xf32>
    %101 = vector.extract_strided_slice %16 {offsets = [0, 2, 0], sizes = [1, 1, 96], strides = [1, 1, 1]} : vector<7x7x96xf32> to vector<1x1x96xf32>
    %102 = vector.broadcast %101 : vector<1x1x96xf32> to vector<2x64x96xf32>
    %103 = arith.mulf %100, %102 : vector<2x64x96xf32>
    %104 = arith.addf %99, %103 : vector<2x64x96xf32>
    %c0_51 = arith.constant 0 : index
    %c15 = arith.constant 15 : index
    %c0_52 = arith.constant 0 : index
    %105 = vector.load %arg16[%c0_51, %c15, %c0_52] : memref<2x128x96xf32, #tpu.memory_space<vmem>>, vector<2x64x96xf32>
    %106 = vector.extract_strided_slice %16 {offsets = [1, 2, 0], sizes = [1, 1, 96], strides = [1, 1, 1]} : vector<7x7x96xf32> to vector<1x1x96xf32>
    %107 = vector.broadcast %106 : vector<1x1x96xf32> to vector<2x64x96xf32>
    %108 = arith.mulf %105, %107 : vector<2x64x96xf32>
    %109 = arith.addf %104, %108 : vector<2x64x96xf32>
    %c0_53 = arith.constant 0 : index
    %c23 = arith.constant 23 : index
    %c0_54 = arith.constant 0 : index
    %110 = vector.load %arg16[%c0_53, %c23, %c0_54] : memref<2x128x96xf32, #tpu.memory_space<vmem>>, vector<2x64x96xf32>
    %111 = vector.extract_strided_slice %16 {offsets = [2, 2, 0], sizes = [1, 1, 96], strides = [1, 1, 1]} : vector<7x7x96xf32> to vector<1x1x96xf32>
    %112 = vector.broadcast %111 : vector<1x1x96xf32> to vector<2x64x96xf32>
    %113 = arith.mulf %110, %112 : vector<2x64x96xf32>
    %114 = arith.addf %109, %113 : vector<2x64x96xf32>
    %c0_55 = arith.constant 0 : index
    %c31 = arith.constant 31 : index
    %c0_56 = arith.constant 0 : index
    %115 = vector.load %arg16[%c0_55, %c31, %c0_56] : memref<2x128x96xf32, #tpu.memory_space<vmem>>, vector<2x64x96xf32>
    %116 = vector.extract_strided_slice %16 {offsets = [3, 2, 0], sizes = [1, 1, 96], strides = [1, 1, 1]} : vector<7x7x96xf32> to vector<1x1x96xf32>
    %117 = vector.broadcast %116 : vector<1x1x96xf32> to vector<2x64x96xf32>
    %118 = arith.mulf %115, %117 : vector<2x64x96xf32>
    %119 = arith.addf %114, %118 : vector<2x64x96xf32>
    %c0_57 = arith.constant 0 : index
    %c39 = arith.constant 39 : index
    %c0_58 = arith.constant 0 : index
    %120 = vector.load %arg16[%c0_57, %c39, %c0_58] : memref<2x128x96xf32, #tpu.memory_space<vmem>>, vector<2x64x96xf32>
    %121 = vector.extract_strided_slice %16 {offsets = [4, 2, 0], sizes = [1, 1, 96], strides = [1, 1, 1]} : vector<7x7x96xf32> to vector<1x1x96xf32>
    %122 = vector.broadcast %121 : vector<1x1x96xf32> to vector<2x64x96xf32>
    %123 = arith.mulf %120, %122 : vector<2x64x96xf32>
    %124 = arith.addf %119, %123 : vector<2x64x96xf32>
    %c0_59 = arith.constant 0 : index
    %c47 = arith.constant 47 : index
    %c0_60 = arith.constant 0 : index
    %125 = vector.load %arg16[%c0_59, %c47, %c0_60] : memref<2x128x96xf32, #tpu.memory_space<vmem>>, vector<2x64x96xf32>
    %126 = vector.extract_strided_slice %16 {offsets = [5, 2, 0], sizes = [1, 1, 96], strides = [1, 1, 1]} : vector<7x7x96xf32> to vector<1x1x96xf32>
    %127 = vector.broadcast %126 : vector<1x1x96xf32> to vector<2x64x96xf32>
    %128 = arith.mulf %125, %127 : vector<2x64x96xf32>
    %129 = arith.addf %124, %128 : vector<2x64x96xf32>
    %c0_61 = arith.constant 0 : index
    %c55 = arith.constant 55 : index
    %c0_62 = arith.constant 0 : index
    %130 = vector.load %arg16[%c0_61, %c55, %c0_62] : memref<2x128x96xf32, #tpu.memory_space<vmem>>, vector<2x64x96xf32>
    %131 = vector.extract_strided_slice %16 {offsets = [6, 2, 0], sizes = [1, 1, 96], strides = [1, 1, 1]} : vector<7x7x96xf32> to vector<1x1x96xf32>
    %132 = vector.broadcast %131 : vector<1x1x96xf32> to vector<2x64x96xf32>
    %133 = arith.mulf %130, %132 : vector<2x64x96xf32>
    %134 = arith.addf %129, %133 : vector<2x64x96xf32>
    %135 = vector.extract_strided_slice %17 {offsets = [2, 0, 0], sizes = [1, 64, 1], strides = [1, 1, 1]} : vector<7x64x1xf32> to vector<1x64x1xf32>
    %136 = vector.broadcast %135 : vector<1x64x1xf32> to vector<2x64x96xf32>
    %137 = arith.mulf %134, %136 : vector<2x64x96xf32>
    %138 = arith.addf %98, %137 : vector<2x64x96xf32>
    %cst_63 = arith.constant 0.000000e+00 : f32
    %139 = vector.broadcast %cst_63 : f32 to vector<2x64x96xf32>
    %c0_64 = arith.constant 0 : index
    %c8 = arith.constant 8 : index
    %c0_65 = arith.constant 0 : index
    %140 = vector.load %arg16[%c0_64, %c8, %c0_65] : memref<2x128x96xf32, #tpu.memory_space<vmem>>, vector<2x64x96xf32>
    %141 = vector.extract_strided_slice %16 {offsets = [0, 3, 0], sizes = [1, 1, 96], strides = [1, 1, 1]} : vector<7x7x96xf32> to vector<1x1x96xf32>
    %142 = vector.broadcast %141 : vector<1x1x96xf32> to vector<2x64x96xf32>
    %143 = arith.mulf %140, %142 : vector<2x64x96xf32>
    %144 = arith.addf %139, %143 : vector<2x64x96xf32>
    %c0_66 = arith.constant 0 : index
    %c16 = arith.constant 16 : index
    %c0_67 = arith.constant 0 : index
    %145 = vector.load %arg16[%c0_66, %c16, %c0_67] : memref<2x128x96xf32, #tpu.memory_space<vmem>>, vector<2x64x96xf32>
    %146 = vector.extract_strided_slice %16 {offsets = [1, 3, 0], sizes = [1, 1, 96], strides = [1, 1, 1]} : vector<7x7x96xf32> to vector<1x1x96xf32>
    %147 = vector.broadcast %146 : vector<1x1x96xf32> to vector<2x64x96xf32>
    %148 = arith.mulf %145, %147 : vector<2x64x96xf32>
    %149 = arith.addf %144, %148 : vector<2x64x96xf32>
    %c0_68 = arith.constant 0 : index
    %c24 = arith.constant 24 : index
    %c0_69 = arith.constant 0 : index
    %150 = vector.load %arg16[%c0_68, %c24, %c0_69] : memref<2x128x96xf32, #tpu.memory_space<vmem>>, vector<2x64x96xf32>
    %151 = vector.extract_strided_slice %16 {offsets = [2, 3, 0], sizes = [1, 1, 96], strides = [1, 1, 1]} : vector<7x7x96xf32> to vector<1x1x96xf32>
    %152 = vector.broadcast %151 : vector<1x1x96xf32> to vector<2x64x96xf32>
    %153 = arith.mulf %150, %152 : vector<2x64x96xf32>
    %154 = arith.addf %149, %153 : vector<2x64x96xf32>
    %c0_70 = arith.constant 0 : index
    %c32_71 = arith.constant 32 : index
    %c0_72 = arith.constant 0 : index
    %155 = vector.load %arg16[%c0_70, %c32_71, %c0_72] : memref<2x128x96xf32, #tpu.memory_space<vmem>>, vector<2x64x96xf32>
    %156 = vector.extract_strided_slice %16 {offsets = [3, 3, 0], sizes = [1, 1, 96], strides = [1, 1, 1]} : vector<7x7x96xf32> to vector<1x1x96xf32>
    %157 = vector.broadcast %156 : vector<1x1x96xf32> to vector<2x64x96xf32>
    %158 = arith.mulf %155, %157 : vector<2x64x96xf32>
    %159 = arith.addf %154, %158 : vector<2x64x96xf32>
    %c0_73 = arith.constant 0 : index
    %c40 = arith.constant 40 : index
    %c0_74 = arith.constant 0 : index
    %160 = vector.load %arg16[%c0_73, %c40, %c0_74] : memref<2x128x96xf32, #tpu.memory_space<vmem>>, vector<2x64x96xf32>
    %161 = vector.extract_strided_slice %16 {offsets = [4, 3, 0], sizes = [1, 1, 96], strides = [1, 1, 1]} : vector<7x7x96xf32> to vector<1x1x96xf32>
    %162 = vector.broadcast %161 : vector<1x1x96xf32> to vector<2x64x96xf32>
    %163 = arith.mulf %160, %162 : vector<2x64x96xf32>
    %164 = arith.addf %159, %163 : vector<2x64x96xf32>
    %c0_75 = arith.constant 0 : index
    %c48 = arith.constant 48 : index
    %c0_76 = arith.constant 0 : index
    %165 = vector.load %arg16[%c0_75, %c48, %c0_76] : memref<2x128x96xf32, #tpu.memory_space<vmem>>, vector<2x64x96xf32>
    %166 = vector.extract_strided_slice %16 {offsets = [5, 3, 0], sizes = [1, 1, 96], strides = [1, 1, 1]} : vector<7x7x96xf32> to vector<1x1x96xf32>
    %167 = vector.broadcast %166 : vector<1x1x96xf32> to vector<2x64x96xf32>
    %168 = arith.mulf %165, %167 : vector<2x64x96xf32>
    %169 = arith.addf %164, %168 : vector<2x64x96xf32>
    %c0_77 = arith.constant 0 : index
    %c56 = arith.constant 56 : index
    %c0_78 = arith.constant 0 : index
    %170 = vector.load %arg16[%c0_77, %c56, %c0_78] : memref<2x128x96xf32, #tpu.memory_space<vmem>>, vector<2x64x96xf32>
    %171 = vector.extract_strided_slice %16 {offsets = [6, 3, 0], sizes = [1, 1, 96], strides = [1, 1, 1]} : vector<7x7x96xf32> to vector<1x1x96xf32>
    %172 = vector.broadcast %171 : vector<1x1x96xf32> to vector<2x64x96xf32>
    %173 = arith.mulf %170, %172 : vector<2x64x96xf32>
    %174 = arith.addf %169, %173 : vector<2x64x96xf32>
    %175 = vector.extract_strided_slice %17 {offsets = [3, 0, 0], sizes = [1, 64, 1], strides = [1, 1, 1]} : vector<7x64x1xf32> to vector<1x64x1xf32>
    %176 = vector.broadcast %175 : vector<1x64x1xf32> to vector<2x64x96xf32>
    %177 = arith.mulf %174, %176 : vector<2x64x96xf32>
    %178 = arith.addf %138, %177 : vector<2x64x96xf32>
    %cst_79 = arith.constant 0.000000e+00 : f32
    %179 = vector.broadcast %cst_79 : f32 to vector<2x64x96xf32>
    %c0_80 = arith.constant 0 : index
    %c9 = arith.constant 9 : index
    %c0_81 = arith.constant 0 : index
    %180 = vector.load %arg16[%c0_80, %c9, %c0_81] : memref<2x128x96xf32, #tpu.memory_space<vmem>>, vector<2x64x96xf32>
    %181 = vector.extract_strided_slice %16 {offsets = [0, 4, 0], sizes = [1, 1, 96], strides = [1, 1, 1]} : vector<7x7x96xf32> to vector<1x1x96xf32>
    %182 = vector.broadcast %181 : vector<1x1x96xf32> to vector<2x64x96xf32>
    %183 = arith.mulf %180, %182 : vector<2x64x96xf32>
    %184 = arith.addf %179, %183 : vector<2x64x96xf32>
    %c0_82 = arith.constant 0 : index
    %c17 = arith.constant 17 : index
    %c0_83 = arith.constant 0 : index
    %185 = vector.load %arg16[%c0_82, %c17, %c0_83] : memref<2x128x96xf32, #tpu.memory_space<vmem>>, vector<2x64x96xf32>
    %186 = vector.extract_strided_slice %16 {offsets = [1, 4, 0], sizes = [1, 1, 96], strides = [1, 1, 1]} : vector<7x7x96xf32> to vector<1x1x96xf32>
    %187 = vector.broadcast %186 : vector<1x1x96xf32> to vector<2x64x96xf32>
    %188 = arith.mulf %185, %187 : vector<2x64x96xf32>
    %189 = arith.addf %184, %188 : vector<2x64x96xf32>
    %c0_84 = arith.constant 0 : index
    %c25 = arith.constant 25 : index
    %c0_85 = arith.constant 0 : index
    %190 = vector.load %arg16[%c0_84, %c25, %c0_85] : memref<2x128x96xf32, #tpu.memory_space<vmem>>, vector<2x64x96xf32>
    %191 = vector.extract_strided_slice %16 {offsets = [2, 4, 0], sizes = [1, 1, 96], strides = [1, 1, 1]} : vector<7x7x96xf32> to vector<1x1x96xf32>
    %192 = vector.broadcast %191 : vector<1x1x96xf32> to vector<2x64x96xf32>
    %193 = arith.mulf %190, %192 : vector<2x64x96xf32>
    %194 = arith.addf %189, %193 : vector<2x64x96xf32>
    %c0_86 = arith.constant 0 : index
    %c33 = arith.constant 33 : index
    %c0_87 = arith.constant 0 : index
    %195 = vector.load %arg16[%c0_86, %c33, %c0_87] : memref<2x128x96xf32, #tpu.memory_space<vmem>>, vector<2x64x96xf32>
    %196 = vector.extract_strided_slice %16 {offsets = [3, 4, 0], sizes = [1, 1, 96], strides = [1, 1, 1]} : vector<7x7x96xf32> to vector<1x1x96xf32>
    %197 = vector.broadcast %196 : vector<1x1x96xf32> to vector<2x64x96xf32>
    %198 = arith.mulf %195, %197 : vector<2x64x96xf32>
    %199 = arith.addf %194, %198 : vector<2x64x96xf32>
    %c0_88 = arith.constant 0 : index
    %c41 = arith.constant 41 : index
    %c0_89 = arith.constant 0 : index
    %200 = vector.load %arg16[%c0_88, %c41, %c0_89] : memref<2x128x96xf32, #tpu.memory_space<vmem>>, vector<2x64x96xf32>
    %201 = vector.extract_strided_slice %16 {offsets = [4, 4, 0], sizes = [1, 1, 96], strides = [1, 1, 1]} : vector<7x7x96xf32> to vector<1x1x96xf32>
    %202 = vector.broadcast %201 : vector<1x1x96xf32> to vector<2x64x96xf32>
    %203 = arith.mulf %200, %202 : vector<2x64x96xf32>
    %204 = arith.addf %199, %203 : vector<2x64x96xf32>
    %c0_90 = arith.constant 0 : index
    %c49 = arith.constant 49 : index
    %c0_91 = arith.constant 0 : index
    %205 = vector.load %arg16[%c0_90, %c49, %c0_91] : memref<2x128x96xf32, #tpu.memory_space<vmem>>, vector<2x64x96xf32>
    %206 = vector.extract_strided_slice %16 {offsets = [5, 4, 0], sizes = [1, 1, 96], strides = [1, 1, 1]} : vector<7x7x96xf32> to vector<1x1x96xf32>
    %207 = vector.broadcast %206 : vector<1x1x96xf32> to vector<2x64x96xf32>
    %208 = arith.mulf %205, %207 : vector<2x64x96xf32>
    %209 = arith.addf %204, %208 : vector<2x64x96xf32>
    %c0_92 = arith.constant 0 : index
    %c57 = arith.constant 57 : index
    %c0_93 = arith.constant 0 : index
    %210 = vector.load %arg16[%c0_92, %c57, %c0_93] : memref<2x128x96xf32, #tpu.memory_space<vmem>>, vector<2x64x96xf32>
    %211 = vector.extract_strided_slice %16 {offsets = [6, 4, 0], sizes = [1, 1, 96], strides = [1, 1, 1]} : vector<7x7x96xf32> to vector<1x1x96xf32>
    %212 = vector.broadcast %211 : vector<1x1x96xf32> to vector<2x64x96xf32>
    %213 = arith.mulf %210, %212 : vector<2x64x96xf32>
    %214 = arith.addf %209, %213 : vector<2x64x96xf32>
    %215 = vector.extract_strided_slice %17 {offsets = [4, 0, 0], sizes = [1, 64, 1], strides = [1, 1, 1]} : vector<7x64x1xf32> to vector<1x64x1xf32>
    %216 = vector.broadcast %215 : vector<1x64x1xf32> to vector<2x64x96xf32>
    %217 = arith.mulf %214, %216 : vector<2x64x96xf32>
    %218 = arith.addf %178, %217 : vector<2x64x96xf32>
    %cst_94 = arith.constant 0.000000e+00 : f32
    %219 = vector.broadcast %cst_94 : f32 to vector<2x64x96xf32>
    %c0_95 = arith.constant 0 : index
    %c10 = arith.constant 10 : index
    %c0_96 = arith.constant 0 : index
    %220 = vector.load %arg16[%c0_95, %c10, %c0_96] : memref<2x128x96xf32, #tpu.memory_space<vmem>>, vector<2x64x96xf32>
    %221 = vector.extract_strided_slice %16 {offsets = [0, 5, 0], sizes = [1, 1, 96], strides = [1, 1, 1]} : vector<7x7x96xf32> to vector<1x1x96xf32>
    %222 = vector.broadcast %221 : vector<1x1x96xf32> to vector<2x64x96xf32>
    %223 = arith.mulf %220, %222 : vector<2x64x96xf32>
    %224 = arith.addf %219, %223 : vector<2x64x96xf32>
    %c0_97 = arith.constant 0 : index
    %c18 = arith.constant 18 : index
    %c0_98 = arith.constant 0 : index
    %225 = vector.load %arg16[%c0_97, %c18, %c0_98] : memref<2x128x96xf32, #tpu.memory_space<vmem>>, vector<2x64x96xf32>
    %226 = vector.extract_strided_slice %16 {offsets = [1, 5, 0], sizes = [1, 1, 96], strides = [1, 1, 1]} : vector<7x7x96xf32> to vector<1x1x96xf32>
    %227 = vector.broadcast %226 : vector<1x1x96xf32> to vector<2x64x96xf32>
    %228 = arith.mulf %225, %227 : vector<2x64x96xf32>
    %229 = arith.addf %224, %228 : vector<2x64x96xf32>
    %c0_99 = arith.constant 0 : index
    %c26 = arith.constant 26 : index
    %c0_100 = arith.constant 0 : index
    %230 = vector.load %arg16[%c0_99, %c26, %c0_100] : memref<2x128x96xf32, #tpu.memory_space<vmem>>, vector<2x64x96xf32>
    %231 = vector.extract_strided_slice %16 {offsets = [2, 5, 0], sizes = [1, 1, 96], strides = [1, 1, 1]} : vector<7x7x96xf32> to vector<1x1x96xf32>
    %232 = vector.broadcast %231 : vector<1x1x96xf32> to vector<2x64x96xf32>
    %233 = arith.mulf %230, %232 : vector<2x64x96xf32>
    %234 = arith.addf %229, %233 : vector<2x64x96xf32>
    %c0_101 = arith.constant 0 : index
    %c34 = arith.constant 34 : index
    %c0_102 = arith.constant 0 : index
    %235 = vector.load %arg16[%c0_101, %c34, %c0_102] : memref<2x128x96xf32, #tpu.memory_space<vmem>>, vector<2x64x96xf32>
    %236 = vector.extract_strided_slice %16 {offsets = [3, 5, 0], sizes = [1, 1, 96], strides = [1, 1, 1]} : vector<7x7x96xf32> to vector<1x1x96xf32>
    %237 = vector.broadcast %236 : vector<1x1x96xf32> to vector<2x64x96xf32>
    %238 = arith.mulf %235, %237 : vector<2x64x96xf32>
    %239 = arith.addf %234, %238 : vector<2x64x96xf32>
    %c0_103 = arith.constant 0 : index
    %c42 = arith.constant 42 : index
    %c0_104 = arith.constant 0 : index
    %240 = vector.load %arg16[%c0_103, %c42, %c0_104] : memref<2x128x96xf32, #tpu.memory_space<vmem>>, vector<2x64x96xf32>
    %241 = vector.extract_strided_slice %16 {offsets = [4, 5, 0], sizes = [1, 1, 96], strides = [1, 1, 1]} : vector<7x7x96xf32> to vector<1x1x96xf32>
    %242 = vector.broadcast %241 : vector<1x1x96xf32> to vector<2x64x96xf32>
    %243 = arith.mulf %240, %242 : vector<2x64x96xf32>
    %244 = arith.addf %239, %243 : vector<2x64x96xf32>
    %c0_105 = arith.constant 0 : index
    %c50 = arith.constant 50 : index
    %c0_106 = arith.constant 0 : index
    %245 = vector.load %arg16[%c0_105, %c50, %c0_106] : memref<2x128x96xf32, #tpu.memory_space<vmem>>, vector<2x64x96xf32>
    %246 = vector.extract_strided_slice %16 {offsets = [5, 5, 0], sizes = [1, 1, 96], strides = [1, 1, 1]} : vector<7x7x96xf32> to vector<1x1x96xf32>
    %247 = vector.broadcast %246 : vector<1x1x96xf32> to vector<2x64x96xf32>
    %248 = arith.mulf %245, %247 : vector<2x64x96xf32>
    %249 = arith.addf %244, %248 : vector<2x64x96xf32>
    %c0_107 = arith.constant 0 : index
    %c58 = arith.constant 58 : index
    %c0_108 = arith.constant 0 : index
    %250 = vector.load %arg16[%c0_107, %c58, %c0_108] : memref<2x128x96xf32, #tpu.memory_space<vmem>>, vector<2x64x96xf32>
    %251 = vector.extract_strided_slice %16 {offsets = [6, 5, 0], sizes = [1, 1, 96], strides = [1, 1, 1]} : vector<7x7x96xf32> to vector<1x1x96xf32>
    %252 = vector.broadcast %251 : vector<1x1x96xf32> to vector<2x64x96xf32>
    %253 = arith.mulf %250, %252 : vector<2x64x96xf32>
    %254 = arith.addf %249, %253 : vector<2x64x96xf32>
    %255 = vector.extract_strided_slice %17 {offsets = [5, 0, 0], sizes = [1, 64, 1], strides = [1, 1, 1]} : vector<7x64x1xf32> to vector<1x64x1xf32>
    %256 = vector.broadcast %255 : vector<1x64x1xf32> to vector<2x64x96xf32>
    %257 = arith.mulf %254, %256 : vector<2x64x96xf32>
    %258 = arith.addf %218, %257 : vector<2x64x96xf32>
    %cst_109 = arith.constant 0.000000e+00 : f32
    %259 = vector.broadcast %cst_109 : f32 to vector<2x64x96xf32>
    %c0_110 = arith.constant 0 : index
    %c11 = arith.constant 11 : index
    %c0_111 = arith.constant 0 : index
    %260 = vector.load %arg16[%c0_110, %c11, %c0_111] : memref<2x128x96xf32, #tpu.memory_space<vmem>>, vector<2x64x96xf32>
    %261 = vector.extract_strided_slice %16 {offsets = [0, 6, 0], sizes = [1, 1, 96], strides = [1, 1, 1]} : vector<7x7x96xf32> to vector<1x1x96xf32>
    %262 = vector.broadcast %261 : vector<1x1x96xf32> to vector<2x64x96xf32>
    %263 = arith.mulf %260, %262 : vector<2x64x96xf32>
    %264 = arith.addf %259, %263 : vector<2x64x96xf32>
    %c0_112 = arith.constant 0 : index
    %c19 = arith.constant 19 : index
    %c0_113 = arith.constant 0 : index
    %265 = vector.load %arg16[%c0_112, %c19, %c0_113] : memref<2x128x96xf32, #tpu.memory_space<vmem>>, vector<2x64x96xf32>
    %266 = vector.extract_strided_slice %16 {offsets = [1, 6, 0], sizes = [1, 1, 96], strides = [1, 1, 1]} : vector<7x7x96xf32> to vector<1x1x96xf32>
    %267 = vector.broadcast %266 : vector<1x1x96xf32> to vector<2x64x96xf32>
    %268 = arith.mulf %265, %267 : vector<2x64x96xf32>
    %269 = arith.addf %264, %268 : vector<2x64x96xf32>
    %c0_114 = arith.constant 0 : index
    %c27 = arith.constant 27 : index
    %c0_115 = arith.constant 0 : index
    %270 = vector.load %arg16[%c0_114, %c27, %c0_115] : memref<2x128x96xf32, #tpu.memory_space<vmem>>, vector<2x64x96xf32>
    %271 = vector.extract_strided_slice %16 {offsets = [2, 6, 0], sizes = [1, 1, 96], strides = [1, 1, 1]} : vector<7x7x96xf32> to vector<1x1x96xf32>
    %272 = vector.broadcast %271 : vector<1x1x96xf32> to vector<2x64x96xf32>
    %273 = arith.mulf %270, %272 : vector<2x64x96xf32>
    %274 = arith.addf %269, %273 : vector<2x64x96xf32>
    %c0_116 = arith.constant 0 : index
    %c35 = arith.constant 35 : index
    %c0_117 = arith.constant 0 : index
    %275 = vector.load %arg16[%c0_116, %c35, %c0_117] : memref<2x128x96xf32, #tpu.memory_space<vmem>>, vector<2x64x96xf32>
    %276 = vector.extract_strided_slice %16 {offsets = [3, 6, 0], sizes = [1, 1, 96], strides = [1, 1, 1]} : vector<7x7x96xf32> to vector<1x1x96xf32>
    %277 = vector.broadcast %276 : vector<1x1x96xf32> to vector<2x64x96xf32>
    %278 = arith.mulf %275, %277 : vector<2x64x96xf32>
    %279 = arith.addf %274, %278 : vector<2x64x96xf32>
    %c0_118 = arith.constant 0 : index
    %c43 = arith.constant 43 : index
    %c0_119 = arith.constant 0 : index
    %280 = vector.load %arg16[%c0_118, %c43, %c0_119] : memref<2x128x96xf32, #tpu.memory_space<vmem>>, vector<2x64x96xf32>
    %281 = vector.extract_strided_slice %16 {offsets = [4, 6, 0], sizes = [1, 1, 96], strides = [1, 1, 1]} : vector<7x7x96xf32> to vector<1x1x96xf32>
    %282 = vector.broadcast %281 : vector<1x1x96xf32> to vector<2x64x96xf32>
    %283 = arith.mulf %280, %282 : vector<2x64x96xf32>
    %284 = arith.addf %279, %283 : vector<2x64x96xf32>
    %c0_120 = arith.constant 0 : index
    %c51 = arith.constant 51 : index
    %c0_121 = arith.constant 0 : index
    %285 = vector.load %arg16[%c0_120, %c51, %c0_121] : memref<2x128x96xf32, #tpu.memory_space<vmem>>, vector<2x64x96xf32>
    %286 = vector.extract_strided_slice %16 {offsets = [5, 6, 0], sizes = [1, 1, 96], strides = [1, 1, 1]} : vector<7x7x96xf32> to vector<1x1x96xf32>
    %287 = vector.broadcast %286 : vector<1x1x96xf32> to vector<2x64x96xf32>
    %288 = arith.mulf %285, %287 : vector<2x64x96xf32>
    %289 = arith.addf %284, %288 : vector<2x64x96xf32>
    %c0_122 = arith.constant 0 : index
    %c59 = arith.constant 59 : index
    %c0_123 = arith.constant 0 : index
    %290 = vector.load %arg16[%c0_122, %c59, %c0_123] : memref<2x128x96xf32, #tpu.memory_space<vmem>>, vector<2x64x96xf32>
    %291 = vector.extract_strided_slice %16 {offsets = [6, 6, 0], sizes = [1, 1, 96], strides = [1, 1, 1]} : vector<7x7x96xf32> to vector<1x1x96xf32>
    %292 = vector.broadcast %291 : vector<1x1x96xf32> to vector<2x64x96xf32>
    %293 = arith.mulf %290, %292 : vector<2x64x96xf32>
    %294 = arith.addf %289, %293 : vector<2x64x96xf32>
    %295 = vector.extract_strided_slice %17 {offsets = [6, 0, 0], sizes = [1, 64, 1], strides = [1, 1, 1]} : vector<7x64x1xf32> to vector<1x64x1xf32>
    %296 = vector.broadcast %295 : vector<1x64x1xf32> to vector<2x64x96xf32>
    %297 = arith.mulf %294, %296 : vector<2x64x96xf32>
    %298 = arith.addf %258, %297 : vector<2x64x96xf32>
    %299 = vector.shape_cast %298 : vector<2x64x96xf32> to vector<128x96xf32>
    %300 = arith.truncf %299 : vector<128x96xf32> to vector<128x96xbf16>
    %c0_124 = arith.constant 0 : index
    %c0_125 = arith.constant 0 : index
    %301 = vector.load %arg5[%c0_124, %c0_125] : memref<96x88xbf16, #tpu.memory_space<vmem>>, vector<96x88xbf16>
    %cst_126 = arith.constant dense<0.000000e+00> : vector<128x88xf32>
    %302 = tpu.matmul %300, %301, %cst_126 {dimension_numbers = #tpu.dot_dimension_numbers<[1], [0], [0], [1], [0, 0, 1, 1], [], []>} : vector<128x96xbf16>, vector<96x88xbf16>, vector<128x88xf32> -> vector<128x88xf32>
    %303 = vector.extract_strided_slice %4 {offsets = [0, 0], sizes = [128, 8], strides = [1, 1]} : vector<128x80xf32> to vector<128x8xf32>
    %304 = vector.extract_strided_slice %302 {offsets = [0, 0], sizes = [128, 24], strides = [1, 1]} : vector<128x88xf32> to vector<128x24xf32>
    %305 = vector.extract_strided_slice %4 {offsets = [0, 40], sizes = [128, 8], strides = [1, 1]} : vector<128x80xf32> to vector<128x8xf32>
    %306 = vector.extract_strided_slice %302 {offsets = [0, 24], sizes = [128, 24], strides = [1, 1]} : vector<128x88xf32> to vector<128x24xf32>
    %307 = vector.extract_strided_slice %1 {offsets = [0, 0], sizes = [128, 8], strides = [1, 1]} : vector<128x40xf32> to vector<128x8xf32>
    %308 = vector.extract_strided_slice %302 {offsets = [0, 48], sizes = [128, 24], strides = [1, 1]} : vector<128x88xf32> to vector<128x24xf32>
    %309 = tpu.concatenate %303, %304, %305, %306, %307, %308 in 1 : vector<128x8xf32>, vector<128x24xf32>, vector<128x8xf32>, vector<128x24xf32>, vector<128x8xf32>, vector<128x24xf32> -> vector<128x96xf32>
    %cst_127 = arith.constant dense<0.000000e+00> : vector<96xf32>
    %310 = vector.multi_reduction <add>, %309, %cst_127 [0] : vector<128x96xf32> to vector<96xf32>
    %311 = vector.shape_cast %310 : vector<96xf32> to vector<1x96xf32>
    %cst_128 = arith.constant 7.812500e-03 : f32
    %312 = vector.broadcast %cst_128 : f32 to vector<1x96xf32>
    %313 = arith.mulf %311, %312 : vector<1x96xf32>
    %314 = arith.mulf %309, %309 : vector<128x96xf32>
    %cst_129 = arith.constant dense<0.000000e+00> : vector<96xf32>
    %315 = vector.multi_reduction <add>, %314, %cst_129 [0] : vector<128x96xf32> to vector<96xf32>
    %316 = vector.shape_cast %315 : vector<96xf32> to vector<1x96xf32>
    %cst_130 = arith.constant 7.812500e-03 : f32
    %317 = vector.broadcast %cst_130 : f32 to vector<1x96xf32>
    %318 = arith.mulf %316, %317 : vector<1x96xf32>
    %319 = vector.extract_strided_slice %313 {offsets = [0, 0], sizes = [1, 32], strides = [1, 1]} : vector<1x96xf32> to vector<1x32xf32>
    %320 = vector.extract_strided_slice %313 {offsets = [0, 32], sizes = [1, 32], strides = [1, 1]} : vector<1x96xf32> to vector<1x32xf32>
    %321 = arith.addf %319, %320 : vector<1x32xf32>
    %cst_131 = arith.constant 5.000000e-01 : f32
    %322 = vector.broadcast %cst_131 : f32 to vector<1x32xf32>
    %323 = arith.mulf %322, %321 : vector<1x32xf32>
    %324 = vector.extract_strided_slice %318 {offsets = [0, 0], sizes = [1, 32], strides = [1, 1]} : vector<1x96xf32> to vector<1x32xf32>
    %325 = vector.extract_strided_slice %318 {offsets = [0, 32], sizes = [1, 32], strides = [1, 1]} : vector<1x96xf32> to vector<1x32xf32>
    %326 = arith.addf %324, %325 : vector<1x32xf32>
    %cst_132 = arith.constant 5.000000e-01 : f32
    %327 = vector.broadcast %cst_132 : f32 to vector<1x32xf32>
    %328 = arith.mulf %327, %326 : vector<1x32xf32>
    %329 = vector.extract_strided_slice %313 {offsets = [0, 64], sizes = [1, 32], strides = [1, 1]} : vector<1x96xf32> to vector<1x32xf32>
    %330 = vector.extract_strided_slice %318 {offsets = [0, 64], sizes = [1, 32], strides = [1, 1]} : vector<1x96xf32> to vector<1x32xf32>
    %331 = tpu.concatenate %323, %323, %329 in 1 : vector<1x32xf32>, vector<1x32xf32>, vector<1x32xf32> -> vector<1x96xf32>
    %332 = arith.mulf %323, %323 : vector<1x32xf32>
    %333 = arith.subf %328, %332 : vector<1x32xf32>
    %334 = arith.mulf %323, %323 : vector<1x32xf32>
    %335 = arith.subf %328, %334 : vector<1x32xf32>
    %336 = arith.mulf %329, %329 : vector<1x32xf32>
    %337 = arith.subf %330, %336 : vector<1x32xf32>
    %338 = tpu.concatenate %333, %335, %337 in 1 : vector<1x32xf32>, vector<1x32xf32>, vector<1x32xf32> -> vector<1x96xf32>
    %339 = vector.broadcast %331 : vector<1x96xf32> to vector<128x96xf32>
    %340 = arith.subf %309, %339 : vector<128x96xf32>
    %cst_133 = arith.constant 9.99999974E-6 : f32
    %341 = vector.broadcast %cst_133 : f32 to vector<1x96xf32>
    %342 = arith.addf %338, %341 : vector<1x96xf32>
    %343 = math.rsqrt %342 : vector<1x96xf32>
    %344 = vector.broadcast %343 : vector<1x96xf32> to vector<128x96xf32>
    %345 = arith.mulf %340, %344 : vector<128x96xf32>
    %c0_134 = arith.constant 0 : index
    %c0_135 = arith.constant 0 : index
    %346 = vector.load %arg6[%c0_134, %c0_135] : memref<1x96xf32, #tpu.memory_space<vmem>>, vector<1x96xf32>
    %347 = vector.broadcast %346 : vector<1x96xf32> to vector<128x96xf32>
    %348 = arith.mulf %345, %347 : vector<128x96xf32>
    %c0_136 = arith.constant 0 : index
    %c0_137 = arith.constant 0 : index
    %349 = vector.load %arg7[%c0_136, %c0_137] : memref<1x96xf32, #tpu.memory_space<vmem>>, vector<1x96xf32>
    %350 = vector.broadcast %349 : vector<1x96xf32> to vector<128x96xf32>
    %351 = arith.addf %348, %350 : vector<128x96xf32>
    %cst_138 = arith.constant 3.000000e+00 : f32
    %352 = vector.broadcast %cst_138 : f32 to vector<128x96xf32>
    %353 = arith.addf %351, %352 : vector<128x96xf32>
    %cst_139 = arith.constant 0.000000e+00 : f32
    %cst_140 = arith.constant 6.000000e+00 : f32
    %354 = vector.broadcast %cst_139 : f32 to vector<128x96xf32>
    %355 = arith.maximumf %354, %353 : vector<128x96xf32>
    %356 = vector.broadcast %cst_140 : f32 to vector<128x96xf32>
    %357 = arith.minimumf %356, %355 : vector<128x96xf32>
    %358 = arith.mulf %351, %357 : vector<128x96xf32>
    %cst_141 = arith.constant 0.166666672 : f32
    %359 = vector.broadcast %cst_141 : f32 to vector<128x96xf32>
    %360 = arith.mulf %358, %359 : vector<128x96xf32>
    %361 = vector.extract_strided_slice %302 {offsets = [0, 72], sizes = [128, 8], strides = [1, 1]} : vector<128x88xf32> to vector<128x8xf32>
    %c0_142 = arith.constant 0 : index
    %c0_143 = arith.constant 0 : index
    %362 = vector.load %arg8[%c0_142, %c0_143] : memref<1x16xf32, #tpu.memory_space<vmem>>, vector<1x8xf32>
    %c0_144 = arith.constant 0 : index
    %c0_145 = arith.constant 0 : index
    %363 = vector.load %arg9[%c0_144, %c0_145] : memref<1x16xf32, #tpu.memory_space<vmem>>, vector<1x8xf32>
    %cst_146 = arith.constant dense<0.000000e+00> : vector<128xf32>
    %364 = vector.multi_reduction <add>, %361, %cst_146 [1] : vector<128x8xf32> to vector<128xf32>
    %365 = vector.shape_cast %364 : vector<128xf32> to vector<128x1xf32>
    %cst_147 = arith.constant 8.000000e+00 : f32
    %366 = vector.broadcast %cst_147 : f32 to vector<128x1xf32>
    %367 = arith.divf %365, %366 : vector<128x1xf32>
    %368 = vector.broadcast %367 : vector<128x1xf32> to vector<128x8xf32>
    %369 = arith.subf %361, %368 : vector<128x8xf32>
    %370 = arith.mulf %369, %369 : vector<128x8xf32>
    %cst_148 = arith.constant dense<0.000000e+00> : vector<128xf32>
    %371 = vector.multi_reduction <add>, %370, %cst_148 [1] : vector<128x8xf32> to vector<128xf32>
    %372 = vector.shape_cast %371 : vector<128xf32> to vector<128x1xf32>
    %cst_149 = arith.constant 8.000000e+00 : f32
    %373 = vector.broadcast %cst_149 : f32 to vector<128x1xf32>
    %374 = arith.divf %372, %373 : vector<128x1xf32>
    %375 = vector.broadcast %367 : vector<128x1xf32> to vector<128x8xf32>
    %376 = arith.subf %361, %375 : vector<128x8xf32>
    %cst_150 = arith.constant 9.99999974E-6 : f32
    %377 = vector.broadcast %cst_150 : f32 to vector<128x1xf32>
    %378 = arith.addf %374, %377 : vector<128x1xf32>
    %379 = math.rsqrt %378 : vector<128x1xf32>
    %380 = vector.broadcast %379 : vector<128x1xf32> to vector<128x8xf32>
    %381 = arith.mulf %376, %380 : vector<128x8xf32>
    %382 = vector.broadcast %362 : vector<1x8xf32> to vector<128x8xf32>
    %383 = arith.mulf %381, %382 : vector<128x8xf32>
    %384 = vector.broadcast %363 : vector<1x8xf32> to vector<128x8xf32>
    %385 = arith.addf %383, %384 : vector<128x8xf32>
    %cst_151 = arith.constant 3.000000e+00 : f32
    %386 = vector.broadcast %cst_151 : f32 to vector<128x8xf32>
    %387 = arith.addf %385, %386 : vector<128x8xf32>
    %cst_152 = arith.constant 0.000000e+00 : f32
    %cst_153 = arith.constant 6.000000e+00 : f32
    %388 = vector.broadcast %cst_152 : f32 to vector<128x8xf32>
    %389 = arith.maximumf %388, %387 : vector<128x8xf32>
    %390 = vector.broadcast %cst_153 : f32 to vector<128x8xf32>
    %391 = arith.minimumf %390, %389 : vector<128x8xf32>
    %392 = arith.mulf %385, %391 : vector<128x8xf32>
    %cst_154 = arith.constant 0.166666672 : f32
    %393 = vector.broadcast %cst_154 : f32 to vector<128x8xf32>
    %394 = arith.mulf %392, %393 : vector<128x8xf32>
    %395 = vector.extract_strided_slice %302 {offsets = [0, 80], sizes = [128, 8], strides = [1, 1]} : vector<128x88xf32> to vector<128x8xf32>
    %c0_155 = arith.constant 0 : index
    %c8_156 = arith.constant 8 : index
    %396 = vector.load %arg8[%c0_155, %c8_156] : memref<1x16xf32, #tpu.memory_space<vmem>>, vector<1x8xf32>
    %c0_157 = arith.constant 0 : index
    %c8_158 = arith.constant 8 : index
    %397 = vector.load %arg9[%c0_157, %c8_158] : memref<1x16xf32, #tpu.memory_space<vmem>>, vector<1x8xf32>
    %cst_159 = arith.constant dense<0.000000e+00> : vector<128xf32>
    %398 = vector.multi_reduction <add>, %395, %cst_159 [1] : vector<128x8xf32> to vector<128xf32>
    %399 = vector.shape_cast %398 : vector<128xf32> to vector<128x1xf32>
    %cst_160 = arith.constant 8.000000e+00 : f32
    %400 = vector.broadcast %cst_160 : f32 to vector<128x1xf32>
    %401 = arith.divf %399, %400 : vector<128x1xf32>
    %402 = vector.broadcast %401 : vector<128x1xf32> to vector<128x8xf32>
    %403 = arith.subf %395, %402 : vector<128x8xf32>
    %404 = arith.mulf %403, %403 : vector<128x8xf32>
    %cst_161 = arith.constant dense<0.000000e+00> : vector<128xf32>
    %405 = vector.multi_reduction <add>, %404, %cst_161 [1] : vector<128x8xf32> to vector<128xf32>
    %406 = vector.shape_cast %405 : vector<128xf32> to vector<128x1xf32>
    %cst_162 = arith.constant 8.000000e+00 : f32
    %407 = vector.broadcast %cst_162 : f32 to vector<128x1xf32>
    %408 = arith.divf %406, %407 : vector<128x1xf32>
    %409 = vector.broadcast %401 : vector<128x1xf32> to vector<128x8xf32>
    %410 = arith.subf %395, %409 : vector<128x8xf32>
    %cst_163 = arith.constant 9.99999974E-6 : f32
    %411 = vector.broadcast %cst_163 : f32 to vector<128x1xf32>
    %412 = arith.addf %408, %411 : vector<128x1xf32>
    %413 = math.rsqrt %412 : vector<128x1xf32>
    %414 = vector.broadcast %413 : vector<128x1xf32> to vector<128x8xf32>
    %415 = arith.mulf %410, %414 : vector<128x8xf32>
    %416 = vector.broadcast %396 : vector<1x8xf32> to vector<128x8xf32>
    %417 = arith.mulf %415, %416 : vector<128x8xf32>
    %418 = vector.broadcast %397 : vector<1x8xf32> to vector<128x8xf32>
    %419 = arith.addf %417, %418 : vector<128x8xf32>
    %cst_164 = arith.constant 3.000000e+00 : f32
    %420 = vector.broadcast %cst_164 : f32 to vector<128x8xf32>
    %421 = arith.addf %419, %420 : vector<128x8xf32>
    %cst_165 = arith.constant 0.000000e+00 : f32
    %cst_166 = arith.constant 6.000000e+00 : f32
    %422 = vector.broadcast %cst_165 : f32 to vector<128x8xf32>
    %423 = arith.maximumf %422, %421 : vector<128x8xf32>
    %424 = vector.broadcast %cst_166 : f32 to vector<128x8xf32>
    %425 = arith.minimumf %424, %423 : vector<128x8xf32>
    %426 = arith.mulf %419, %425 : vector<128x8xf32>
    %cst_167 = arith.constant 0.166666672 : f32
    %427 = vector.broadcast %cst_167 : f32 to vector<128x8xf32>
    %428 = arith.mulf %426, %427 : vector<128x8xf32>
    %429 = arith.addf %394, %428 : vector<128x8xf32>
    %cst_168 = arith.constant 0.000000e+00 : f32
    %430 = vector.broadcast %cst_168 : f32 to vector<2x128x32xf32>
    %c0_169 = arith.constant 0 : index
    %c0_170 = arith.constant 0 : index
    %c0_171 = arith.constant 0 : index
    %431 = vector.load %arg17[%c0_169, %c0_170, %c0_171] : memref<2x128x32xf32, #tpu.memory_space<vmem>>, vector<2x128x32xf32>
    tpu.vector_store %arg17[%c0_169, %c0_170, %c0_171], %430 {strides = array<i32>} : memref<2x128x32xf32, #tpu.memory_space<vmem>>, vector<2x128x32xf32>,
    %432 = vector.extract_strided_slice %360 {offsets = [0, 32], sizes = [128, 32], strides = [1, 1]} : vector<128x96xf32> to vector<128x32xf32>
    %433 = vector.shape_cast %432 : vector<128x32xf32> to vector<2x64x32xf32>
    %c0_172 = arith.constant 0 : index
    %c32_173 = arith.constant 32 : index
    %c0_174 = arith.constant 0 : index
    %434 = vector.load %arg17[%c0_172, %c32_173, %c0_174] : memref<2x128x32xf32, #tpu.memory_space<vmem>>, vector<2x64x32xf32>
    tpu.vector_store %arg17[%c0_172, %c32_173, %c0_174], %433 {strides = array<i32>} : memref<2x128x32xf32, #tpu.memory_space<vmem>>, vector<2x64x32xf32>,
    %c0_175 = arith.constant 0 : index
    %c0_176 = arith.constant 0 : index
    %c0_177 = arith.constant 0 : index
    %435 = vector.load %arg10[%c0_175, %c0_176, %c0_177] : memref<7x7x32xf32, #tpu.memory_space<vmem>>, vector<7x7x32xf32>
    %cst_178 = arith.constant 0.000000e+00 : f32
    %436 = vector.broadcast %cst_178 : f32 to vector<2x64x32xf32>
    %cst_179 = arith.constant 0.000000e+00 : f32
    %437 = vector.broadcast %cst_179 : f32 to vector<2x64x32xf32>
    %c0_180 = arith.constant 0 : index
    %c5_181 = arith.constant 5 : index
    %c0_182 = arith.constant 0 : index
    %438 = vector.load %arg17[%c0_180, %c5_181, %c0_182] : memref<2x128x32xf32, #tpu.memory_space<vmem>>, vector<2x64x32xf32>
    %439 = vector.extract_strided_slice %435 {offsets = [0, 0, 0], sizes = [1, 1, 32], strides = [1, 1, 1]} : vector<7x7x32xf32> to vector<1x1x32xf32>
    %440 = vector.broadcast %439 : vector<1x1x32xf32> to vector<2x64x32xf32>
    %441 = arith.mulf %438, %440 : vector<2x64x32xf32>
    %442 = arith.addf %437, %441 : vector<2x64x32xf32>
    %c0_183 = arith.constant 0 : index
    %c13_184 = arith.constant 13 : index
    %c0_185 = arith.constant 0 : index
    %443 = vector.load %arg17[%c0_183, %c13_184, %c0_185] : memref<2x128x32xf32, #tpu.memory_space<vmem>>, vector<2x64x32xf32>
    %444 = vector.extract_strided_slice %435 {offsets = [1, 0, 0], sizes = [1, 1, 32], strides = [1, 1, 1]} : vector<7x7x32xf32> to vector<1x1x32xf32>
    %445 = vector.broadcast %444 : vector<1x1x32xf32> to vector<2x64x32xf32>
    %446 = arith.mulf %443, %445 : vector<2x64x32xf32>
    %447 = arith.addf %442, %446 : vector<2x64x32xf32>
    %c0_186 = arith.constant 0 : index
    %c21_187 = arith.constant 21 : index
    %c0_188 = arith.constant 0 : index
    %448 = vector.load %arg17[%c0_186, %c21_187, %c0_188] : memref<2x128x32xf32, #tpu.memory_space<vmem>>, vector<2x64x32xf32>
    %449 = vector.extract_strided_slice %435 {offsets = [2, 0, 0], sizes = [1, 1, 32], strides = [1, 1, 1]} : vector<7x7x32xf32> to vector<1x1x32xf32>
    %450 = vector.broadcast %449 : vector<1x1x32xf32> to vector<2x64x32xf32>
    %451 = arith.mulf %448, %450 : vector<2x64x32xf32>
    %452 = arith.addf %447, %451 : vector<2x64x32xf32>
    %c0_189 = arith.constant 0 : index
    %c29_190 = arith.constant 29 : index
    %c0_191 = arith.constant 0 : index
    %453 = vector.load %arg17[%c0_189, %c29_190, %c0_191] : memref<2x128x32xf32, #tpu.memory_space<vmem>>, vector<2x64x32xf32>
    %454 = vector.extract_strided_slice %435 {offsets = [3, 0, 0], sizes = [1, 1, 32], strides = [1, 1, 1]} : vector<7x7x32xf32> to vector<1x1x32xf32>
    %455 = vector.broadcast %454 : vector<1x1x32xf32> to vector<2x64x32xf32>
    %456 = arith.mulf %453, %455 : vector<2x64x32xf32>
    %457 = arith.addf %452, %456 : vector<2x64x32xf32>
    %c0_192 = arith.constant 0 : index
    %c37_193 = arith.constant 37 : index
    %c0_194 = arith.constant 0 : index
    %458 = vector.load %arg17[%c0_192, %c37_193, %c0_194] : memref<2x128x32xf32, #tpu.memory_space<vmem>>, vector<2x64x32xf32>
    %459 = vector.extract_strided_slice %435 {offsets = [4, 0, 0], sizes = [1, 1, 32], strides = [1, 1, 1]} : vector<7x7x32xf32> to vector<1x1x32xf32>
    %460 = vector.broadcast %459 : vector<1x1x32xf32> to vector<2x64x32xf32>
    %461 = arith.mulf %458, %460 : vector<2x64x32xf32>
    %462 = arith.addf %457, %461 : vector<2x64x32xf32>
    %c0_195 = arith.constant 0 : index
    %c45_196 = arith.constant 45 : index
    %c0_197 = arith.constant 0 : index
    %463 = vector.load %arg17[%c0_195, %c45_196, %c0_197] : memref<2x128x32xf32, #tpu.memory_space<vmem>>, vector<2x64x32xf32>
    %464 = vector.extract_strided_slice %435 {offsets = [5, 0, 0], sizes = [1, 1, 32], strides = [1, 1, 1]} : vector<7x7x32xf32> to vector<1x1x32xf32>
    %465 = vector.broadcast %464 : vector<1x1x32xf32> to vector<2x64x32xf32>
    %466 = arith.mulf %463, %465 : vector<2x64x32xf32>
    %467 = arith.addf %462, %466 : vector<2x64x32xf32>
    %c0_198 = arith.constant 0 : index
    %c53_199 = arith.constant 53 : index
    %c0_200 = arith.constant 0 : index
    %468 = vector.load %arg17[%c0_198, %c53_199, %c0_200] : memref<2x128x32xf32, #tpu.memory_space<vmem>>, vector<2x64x32xf32>
    %469 = vector.extract_strided_slice %435 {offsets = [6, 0, 0], sizes = [1, 1, 32], strides = [1, 1, 1]} : vector<7x7x32xf32> to vector<1x1x32xf32>
    %470 = vector.broadcast %469 : vector<1x1x32xf32> to vector<2x64x32xf32>
    %471 = arith.mulf %468, %470 : vector<2x64x32xf32>
    %472 = arith.addf %467, %471 : vector<2x64x32xf32>
    %473 = vector.extract_strided_slice %17 {offsets = [0, 0, 0], sizes = [1, 64, 1], strides = [1, 1, 1]} : vector<7x64x1xf32> to vector<1x64x1xf32>
    %474 = vector.broadcast %473 : vector<1x64x1xf32> to vector<2x64x32xf32>
    %475 = arith.mulf %472, %474 : vector<2x64x32xf32>
    %476 = arith.addf %436, %475 : vector<2x64x32xf32>
    %cst_201 = arith.constant 0.000000e+00 : f32
    %477 = vector.broadcast %cst_201 : f32 to vector<2x64x32xf32>
    %c0_202 = arith.constant 0 : index
    %c6_203 = arith.constant 6 : index
    %c0_204 = arith.constant 0 : index
    %478 = vector.load %arg17[%c0_202, %c6_203, %c0_204] : memref<2x128x32xf32, #tpu.memory_space<vmem>>, vector<2x64x32xf32>
    %479 = vector.extract_strided_slice %435 {offsets = [0, 1, 0], sizes = [1, 1, 32], strides = [1, 1, 1]} : vector<7x7x32xf32> to vector<1x1x32xf32>
    %480 = vector.broadcast %479 : vector<1x1x32xf32> to vector<2x64x32xf32>
    %481 = arith.mulf %478, %480 : vector<2x64x32xf32>
    %482 = arith.addf %477, %481 : vector<2x64x32xf32>
    %c0_205 = arith.constant 0 : index
    %c14_206 = arith.constant 14 : index
    %c0_207 = arith.constant 0 : index
    %483 = vector.load %arg17[%c0_205, %c14_206, %c0_207] : memref<2x128x32xf32, #tpu.memory_space<vmem>>, vector<2x64x32xf32>
    %484 = vector.extract_strided_slice %435 {offsets = [1, 1, 0], sizes = [1, 1, 32], strides = [1, 1, 1]} : vector<7x7x32xf32> to vector<1x1x32xf32>
    %485 = vector.broadcast %484 : vector<1x1x32xf32> to vector<2x64x32xf32>
    %486 = arith.mulf %483, %485 : vector<2x64x32xf32>
    %487 = arith.addf %482, %486 : vector<2x64x32xf32>
    %c0_208 = arith.constant 0 : index
    %c22_209 = arith.constant 22 : index
    %c0_210 = arith.constant 0 : index
    %488 = vector.load %arg17[%c0_208, %c22_209, %c0_210] : memref<2x128x32xf32, #tpu.memory_space<vmem>>, vector<2x64x32xf32>
    %489 = vector.extract_strided_slice %435 {offsets = [2, 1, 0], sizes = [1, 1, 32], strides = [1, 1, 1]} : vector<7x7x32xf32> to vector<1x1x32xf32>
    %490 = vector.broadcast %489 : vector<1x1x32xf32> to vector<2x64x32xf32>
    %491 = arith.mulf %488, %490 : vector<2x64x32xf32>
    %492 = arith.addf %487, %491 : vector<2x64x32xf32>
    %c0_211 = arith.constant 0 : index
    %c30_212 = arith.constant 30 : index
    %c0_213 = arith.constant 0 : index
    %493 = vector.load %arg17[%c0_211, %c30_212, %c0_213] : memref<2x128x32xf32, #tpu.memory_space<vmem>>, vector<2x64x32xf32>
    %494 = vector.extract_strided_slice %435 {offsets = [3, 1, 0], sizes = [1, 1, 32], strides = [1, 1, 1]} : vector<7x7x32xf32> to vector<1x1x32xf32>
    %495 = vector.broadcast %494 : vector<1x1x32xf32> to vector<2x64x32xf32>
    %496 = arith.mulf %493, %495 : vector<2x64x32xf32>
    %497 = arith.addf %492, %496 : vector<2x64x32xf32>
    %c0_214 = arith.constant 0 : index
    %c38_215 = arith.constant 38 : index
    %c0_216 = arith.constant 0 : index
    %498 = vector.load %arg17[%c0_214, %c38_215, %c0_216] : memref<2x128x32xf32, #tpu.memory_space<vmem>>, vector<2x64x32xf32>
    %499 = vector.extract_strided_slice %435 {offsets = [4, 1, 0], sizes = [1, 1, 32], strides = [1, 1, 1]} : vector<7x7x32xf32> to vector<1x1x32xf32>
    %500 = vector.broadcast %499 : vector<1x1x32xf32> to vector<2x64x32xf32>
    %501 = arith.mulf %498, %500 : vector<2x64x32xf32>
    %502 = arith.addf %497, %501 : vector<2x64x32xf32>
    %c0_217 = arith.constant 0 : index
    %c46_218 = arith.constant 46 : index
    %c0_219 = arith.constant 0 : index
    %503 = vector.load %arg17[%c0_217, %c46_218, %c0_219] : memref<2x128x32xf32, #tpu.memory_space<vmem>>, vector<2x64x32xf32>
    %504 = vector.extract_strided_slice %435 {offsets = [5, 1, 0], sizes = [1, 1, 32], strides = [1, 1, 1]} : vector<7x7x32xf32> to vector<1x1x32xf32>
    %505 = vector.broadcast %504 : vector<1x1x32xf32> to vector<2x64x32xf32>
    %506 = arith.mulf %503, %505 : vector<2x64x32xf32>
    %507 = arith.addf %502, %506 : vector<2x64x32xf32>
    %c0_220 = arith.constant 0 : index
    %c54_221 = arith.constant 54 : index
    %c0_222 = arith.constant 0 : index
    %508 = vector.load %arg17[%c0_220, %c54_221, %c0_222] : memref<2x128x32xf32, #tpu.memory_space<vmem>>, vector<2x64x32xf32>
    %509 = vector.extract_strided_slice %435 {offsets = [6, 1, 0], sizes = [1, 1, 32], strides = [1, 1, 1]} : vector<7x7x32xf32> to vector<1x1x32xf32>
    %510 = vector.broadcast %509 : vector<1x1x32xf32> to vector<2x64x32xf32>
    %511 = arith.mulf %508, %510 : vector<2x64x32xf32>
    %512 = arith.addf %507, %511 : vector<2x64x32xf32>
    %513 = vector.extract_strided_slice %17 {offsets = [1, 0, 0], sizes = [1, 64, 1], strides = [1, 1, 1]} : vector<7x64x1xf32> to vector<1x64x1xf32>
    %514 = vector.broadcast %513 : vector<1x64x1xf32> to vector<2x64x32xf32>
    %515 = arith.mulf %512, %514 : vector<2x64x32xf32>
    %516 = arith.addf %476, %515 : vector<2x64x32xf32>
    %cst_223 = arith.constant 0.000000e+00 : f32
    %517 = vector.broadcast %cst_223 : f32 to vector<2x64x32xf32>
    %c0_224 = arith.constant 0 : index
    %c7_225 = arith.constant 7 : index
    %c0_226 = arith.constant 0 : index
    %518 = vector.load %arg17[%c0_224, %c7_225, %c0_226] : memref<2x128x32xf32, #tpu.memory_space<vmem>>, vector<2x64x32xf32>
    %519 = vector.extract_strided_slice %435 {offsets = [0, 2, 0], sizes = [1, 1, 32], strides = [1, 1, 1]} : vector<7x7x32xf32> to vector<1x1x32xf32>
    %520 = vector.broadcast %519 : vector<1x1x32xf32> to vector<2x64x32xf32>
    %521 = arith.mulf %518, %520 : vector<2x64x32xf32>
    %522 = arith.addf %517, %521 : vector<2x64x32xf32>
    %c0_227 = arith.constant 0 : index
    %c15_228 = arith.constant 15 : index
    %c0_229 = arith.constant 0 : index
    %523 = vector.load %arg17[%c0_227, %c15_228, %c0_229] : memref<2x128x32xf32, #tpu.memory_space<vmem>>, vector<2x64x32xf32>
    %524 = vector.extract_strided_slice %435 {offsets = [1, 2, 0], sizes = [1, 1, 32], strides = [1, 1, 1]} : vector<7x7x32xf32> to vector<1x1x32xf32>
    %525 = vector.broadcast %524 : vector<1x1x32xf32> to vector<2x64x32xf32>
    %526 = arith.mulf %523, %525 : vector<2x64x32xf32>
    %527 = arith.addf %522, %526 : vector<2x64x32xf32>
    %c0_230 = arith.constant 0 : index
    %c23_231 = arith.constant 23 : index
    %c0_232 = arith.constant 0 : index
    %528 = vector.load %arg17[%c0_230, %c23_231, %c0_232] : memref<2x128x32xf32, #tpu.memory_space<vmem>>, vector<2x64x32xf32>
    %529 = vector.extract_strided_slice %435 {offsets = [2, 2, 0], sizes = [1, 1, 32], strides = [1, 1, 1]} : vector<7x7x32xf32> to vector<1x1x32xf32>
    %530 = vector.broadcast %529 : vector<1x1x32xf32> to vector<2x64x32xf32>
    %531 = arith.mulf %528, %530 : vector<2x64x32xf32>
    %532 = arith.addf %527, %531 : vector<2x64x32xf32>
    %c0_233 = arith.constant 0 : index
    %c31_234 = arith.constant 31 : index
    %c0_235 = arith.constant 0 : index
    %533 = vector.load %arg17[%c0_233, %c31_234, %c0_235] : memref<2x128x32xf32, #tpu.memory_space<vmem>>, vector<2x64x32xf32>
    %534 = vector.extract_strided_slice %435 {offsets = [3, 2, 0], sizes = [1, 1, 32], strides = [1, 1, 1]} : vector<7x7x32xf32> to vector<1x1x32xf32>
    %535 = vector.broadcast %534 : vector<1x1x32xf32> to vector<2x64x32xf32>
    %536 = arith.mulf %533, %535 : vector<2x64x32xf32>
    %537 = arith.addf %532, %536 : vector<2x64x32xf32>
    %c0_236 = arith.constant 0 : index
    %c39_237 = arith.constant 39 : index
    %c0_238 = arith.constant 0 : index
    %538 = vector.load %arg17[%c0_236, %c39_237, %c0_238] : memref<2x128x32xf32, #tpu.memory_space<vmem>>, vector<2x64x32xf32>
    %539 = vector.extract_strided_slice %435 {offsets = [4, 2, 0], sizes = [1, 1, 32], strides = [1, 1, 1]} : vector<7x7x32xf32> to vector<1x1x32xf32>
    %540 = vector.broadcast %539 : vector<1x1x32xf32> to vector<2x64x32xf32>
    %541 = arith.mulf %538, %540 : vector<2x64x32xf32>
    %542 = arith.addf %537, %541 : vector<2x64x32xf32>
    %c0_239 = arith.constant 0 : index
    %c47_240 = arith.constant 47 : index
    %c0_241 = arith.constant 0 : index
    %543 = vector.load %arg17[%c0_239, %c47_240, %c0_241] : memref<2x128x32xf32, #tpu.memory_space<vmem>>, vector<2x64x32xf32>
    %544 = vector.extract_strided_slice %435 {offsets = [5, 2, 0], sizes = [1, 1, 32], strides = [1, 1, 1]} : vector<7x7x32xf32> to vector<1x1x32xf32>
    %545 = vector.broadcast %544 : vector<1x1x32xf32> to vector<2x64x32xf32>
    %546 = arith.mulf %543, %545 : vector<2x64x32xf32>
    %547 = arith.addf %542, %546 : vector<2x64x32xf32>
    %c0_242 = arith.constant 0 : index
    %c55_243 = arith.constant 55 : index
    %c0_244 = arith.constant 0 : index
    %548 = vector.load %arg17[%c0_242, %c55_243, %c0_244] : memref<2x128x32xf32, #tpu.memory_space<vmem>>, vector<2x64x32xf32>
    %549 = vector.extract_strided_slice %435 {offsets = [6, 2, 0], sizes = [1, 1, 32], strides = [1, 1, 1]} : vector<7x7x32xf32> to vector<1x1x32xf32>
    %550 = vector.broadcast %549 : vector<1x1x32xf32> to vector<2x64x32xf32>
    %551 = arith.mulf %548, %550 : vector<2x64x32xf32>
    %552 = arith.addf %547, %551 : vector<2x64x32xf32>
    %553 = vector.extract_strided_slice %17 {offsets = [2, 0, 0], sizes = [1, 64, 1], strides = [1, 1, 1]} : vector<7x64x1xf32> to vector<1x64x1xf32>
    %554 = vector.broadcast %553 : vector<1x64x1xf32> to vector<2x64x32xf32>
    %555 = arith.mulf %552, %554 : vector<2x64x32xf32>
    %556 = arith.addf %516, %555 : vector<2x64x32xf32>
    %cst_245 = arith.constant 0.000000e+00 : f32
    %557 = vector.broadcast %cst_245 : f32 to vector<2x64x32xf32>
    %c0_246 = arith.constant 0 : index
    %c8_247 = arith.constant 8 : index
    %c0_248 = arith.constant 0 : index
    %558 = vector.load %arg17[%c0_246, %c8_247, %c0_248] : memref<2x128x32xf32, #tpu.memory_space<vmem>>, vector<2x64x32xf32>
    %559 = vector.extract_strided_slice %435 {offsets = [0, 3, 0], sizes = [1, 1, 32], strides = [1, 1, 1]} : vector<7x7x32xf32> to vector<1x1x32xf32>
    %560 = vector.broadcast %559 : vector<1x1x32xf32> to vector<2x64x32xf32>
    %561 = arith.mulf %558, %560 : vector<2x64x32xf32>
    %562 = arith.addf %557, %561 : vector<2x64x32xf32>
    %c0_249 = arith.constant 0 : index
    %c16_250 = arith.constant 16 : index
    %c0_251 = arith.constant 0 : index
    %563 = vector.load %arg17[%c0_249, %c16_250, %c0_251] : memref<2x128x32xf32, #tpu.memory_space<vmem>>, vector<2x64x32xf32>
    %564 = vector.extract_strided_slice %435 {offsets = [1, 3, 0], sizes = [1, 1, 32], strides = [1, 1, 1]} : vector<7x7x32xf32> to vector<1x1x32xf32>
    %565 = vector.broadcast %564 : vector<1x1x32xf32> to vector<2x64x32xf32>
    %566 = arith.mulf %563, %565 : vector<2x64x32xf32>
    %567 = arith.addf %562, %566 : vector<2x64x32xf32>
    %c0_252 = arith.constant 0 : index
    %c24_253 = arith.constant 24 : index
    %c0_254 = arith.constant 0 : index
    %568 = vector.load %arg17[%c0_252, %c24_253, %c0_254] : memref<2x128x32xf32, #tpu.memory_space<vmem>>, vector<2x64x32xf32>
    %569 = vector.extract_strided_slice %435 {offsets = [2, 3, 0], sizes = [1, 1, 32], strides = [1, 1, 1]} : vector<7x7x32xf32> to vector<1x1x32xf32>
    %570 = vector.broadcast %569 : vector<1x1x32xf32> to vector<2x64x32xf32>
    %571 = arith.mulf %568, %570 : vector<2x64x32xf32>
    %572 = arith.addf %567, %571 : vector<2x64x32xf32>
    %c0_255 = arith.constant 0 : index
    %c32_256 = arith.constant 32 : index
    %c0_257 = arith.constant 0 : index
    %573 = vector.load %arg17[%c0_255, %c32_256, %c0_257] : memref<2x128x32xf32, #tpu.memory_space<vmem>>, vector<2x64x32xf32>
    %574 = vector.extract_strided_slice %435 {offsets = [3, 3, 0], sizes = [1, 1, 32], strides = [1, 1, 1]} : vector<7x7x32xf32> to vector<1x1x32xf32>
    %575 = vector.broadcast %574 : vector<1x1x32xf32> to vector<2x64x32xf32>
    %576 = arith.mulf %573, %575 : vector<2x64x32xf32>
    %577 = arith.addf %572, %576 : vector<2x64x32xf32>
    %c0_258 = arith.constant 0 : index
    %c40_259 = arith.constant 40 : index
    %c0_260 = arith.constant 0 : index
    %578 = vector.load %arg17[%c0_258, %c40_259, %c0_260] : memref<2x128x32xf32, #tpu.memory_space<vmem>>, vector<2x64x32xf32>
    %579 = vector.extract_strided_slice %435 {offsets = [4, 3, 0], sizes = [1, 1, 32], strides = [1, 1, 1]} : vector<7x7x32xf32> to vector<1x1x32xf32>
    %580 = vector.broadcast %579 : vector<1x1x32xf32> to vector<2x64x32xf32>
    %581 = arith.mulf %578, %580 : vector<2x64x32xf32>
    %582 = arith.addf %577, %581 : vector<2x64x32xf32>
    %c0_261 = arith.constant 0 : index
    %c48_262 = arith.constant 48 : index
    %c0_263 = arith.constant 0 : index
    %583 = vector.load %arg17[%c0_261, %c48_262, %c0_263] : memref<2x128x32xf32, #tpu.memory_space<vmem>>, vector<2x64x32xf32>
    %584 = vector.extract_strided_slice %435 {offsets = [5, 3, 0], sizes = [1, 1, 32], strides = [1, 1, 1]} : vector<7x7x32xf32> to vector<1x1x32xf32>
    %585 = vector.broadcast %584 : vector<1x1x32xf32> to vector<2x64x32xf32>
    %586 = arith.mulf %583, %585 : vector<2x64x32xf32>
    %587 = arith.addf %582, %586 : vector<2x64x32xf32>
    %c0_264 = arith.constant 0 : index
    %c56_265 = arith.constant 56 : index
    %c0_266 = arith.constant 0 : index
    %588 = vector.load %arg17[%c0_264, %c56_265, %c0_266] : memref<2x128x32xf32, #tpu.memory_space<vmem>>, vector<2x64x32xf32>
    %589 = vector.extract_strided_slice %435 {offsets = [6, 3, 0], sizes = [1, 1, 32], strides = [1, 1, 1]} : vector<7x7x32xf32> to vector<1x1x32xf32>
    %590 = vector.broadcast %589 : vector<1x1x32xf32> to vector<2x64x32xf32>
    %591 = arith.mulf %588, %590 : vector<2x64x32xf32>
    %592 = arith.addf %587, %591 : vector<2x64x32xf32>
    %593 = vector.extract_strided_slice %17 {offsets = [3, 0, 0], sizes = [1, 64, 1], strides = [1, 1, 1]} : vector<7x64x1xf32> to vector<1x64x1xf32>
    %594 = vector.broadcast %593 : vector<1x64x1xf32> to vector<2x64x32xf32>
    %595 = arith.mulf %592, %594 : vector<2x64x32xf32>
    %596 = arith.addf %556, %595 : vector<2x64x32xf32>
    %cst_267 = arith.constant 0.000000e+00 : f32
    %597 = vector.broadcast %cst_267 : f32 to vector<2x64x32xf32>
    %c0_268 = arith.constant 0 : index
    %c9_269 = arith.constant 9 : index
    %c0_270 = arith.constant 0 : index
    %598 = vector.load %arg17[%c0_268, %c9_269, %c0_270] : memref<2x128x32xf32, #tpu.memory_space<vmem>>, vector<2x64x32xf32>
    %599 = vector.extract_strided_slice %435 {offsets = [0, 4, 0], sizes = [1, 1, 32], strides = [1, 1, 1]} : vector<7x7x32xf32> to vector<1x1x32xf32>
    %600 = vector.broadcast %599 : vector<1x1x32xf32> to vector<2x64x32xf32>
    %601 = arith.mulf %598, %600 : vector<2x64x32xf32>
    %602 = arith.addf %597, %601 : vector<2x64x32xf32>
    %c0_271 = arith.constant 0 : index
    %c17_272 = arith.constant 17 : index
    %c0_273 = arith.constant 0 : index
    %603 = vector.load %arg17[%c0_271, %c17_272, %c0_273] : memref<2x128x32xf32, #tpu.memory_space<vmem>>, vector<2x64x32xf32>
    %604 = vector.extract_strided_slice %435 {offsets = [1, 4, 0], sizes = [1, 1, 32], strides = [1, 1, 1]} : vector<7x7x32xf32> to vector<1x1x32xf32>
    %605 = vector.broadcast %604 : vector<1x1x32xf32> to vector<2x64x32xf32>
    %606 = arith.mulf %603, %605 : vector<2x64x32xf32>
    %607 = arith.addf %602, %606 : vector<2x64x32xf32>
    %c0_274 = arith.constant 0 : index
    %c25_275 = arith.constant 25 : index
    %c0_276 = arith.constant 0 : index
    %608 = vector.load %arg17[%c0_274, %c25_275, %c0_276] : memref<2x128x32xf32, #tpu.memory_space<vmem>>, vector<2x64x32xf32>
    %609 = vector.extract_strided_slice %435 {offsets = [2, 4, 0], sizes = [1, 1, 32], strides = [1, 1, 1]} : vector<7x7x32xf32> to vector<1x1x32xf32>
    %610 = vector.broadcast %609 : vector<1x1x32xf32> to vector<2x64x32xf32>
    %611 = arith.mulf %608, %610 : vector<2x64x32xf32>
    %612 = arith.addf %607, %611 : vector<2x64x32xf32>
    %c0_277 = arith.constant 0 : index
    %c33_278 = arith.constant 33 : index
    %c0_279 = arith.constant 0 : index
    %613 = vector.load %arg17[%c0_277, %c33_278, %c0_279] : memref<2x128x32xf32, #tpu.memory_space<vmem>>, vector<2x64x32xf32>
    %614 = vector.extract_strided_slice %435 {offsets = [3, 4, 0], sizes = [1, 1, 32], strides = [1, 1, 1]} : vector<7x7x32xf32> to vector<1x1x32xf32>
    %615 = vector.broadcast %614 : vector<1x1x32xf32> to vector<2x64x32xf32>
    %616 = arith.mulf %613, %615 : vector<2x64x32xf32>
    %617 = arith.addf %612, %616 : vector<2x64x32xf32>
    %c0_280 = arith.constant 0 : index
    %c41_281 = arith.constant 41 : index
    %c0_282 = arith.constant 0 : index
    %618 = vector.load %arg17[%c0_280, %c41_281, %c0_282] : memref<2x128x32xf32, #tpu.memory_space<vmem>>, vector<2x64x32xf32>
    %619 = vector.extract_strided_slice %435 {offsets = [4, 4, 0], sizes = [1, 1, 32], strides = [1, 1, 1]} : vector<7x7x32xf32> to vector<1x1x32xf32>
    %620 = vector.broadcast %619 : vector<1x1x32xf32> to vector<2x64x32xf32>
    %621 = arith.mulf %618, %620 : vector<2x64x32xf32>
    %622 = arith.addf %617, %621 : vector<2x64x32xf32>
    %c0_283 = arith.constant 0 : index
    %c49_284 = arith.constant 49 : index
    %c0_285 = arith.constant 0 : index
    %623 = vector.load %arg17[%c0_283, %c49_284, %c0_285] : memref<2x128x32xf32, #tpu.memory_space<vmem>>, vector<2x64x32xf32>
    %624 = vector.extract_strided_slice %435 {offsets = [5, 4, 0], sizes = [1, 1, 32], strides = [1, 1, 1]} : vector<7x7x32xf32> to vector<1x1x32xf32>
    %625 = vector.broadcast %624 : vector<1x1x32xf32> to vector<2x64x32xf32>
    %626 = arith.mulf %623, %625 : vector<2x64x32xf32>
    %627 = arith.addf %622, %626 : vector<2x64x32xf32>
    %c0_286 = arith.constant 0 : index
    %c57_287 = arith.constant 57 : index
    %c0_288 = arith.constant 0 : index
    %628 = vector.load %arg17[%c0_286, %c57_287, %c0_288] : memref<2x128x32xf32, #tpu.memory_space<vmem>>, vector<2x64x32xf32>
    %629 = vector.extract_strided_slice %435 {offsets = [6, 4, 0], sizes = [1, 1, 32], strides = [1, 1, 1]} : vector<7x7x32xf32> to vector<1x1x32xf32>
    %630 = vector.broadcast %629 : vector<1x1x32xf32> to vector<2x64x32xf32>
    %631 = arith.mulf %628, %630 : vector<2x64x32xf32>
    %632 = arith.addf %627, %631 : vector<2x64x32xf32>
    %633 = vector.extract_strided_slice %17 {offsets = [4, 0, 0], sizes = [1, 64, 1], strides = [1, 1, 1]} : vector<7x64x1xf32> to vector<1x64x1xf32>
    %634 = vector.broadcast %633 : vector<1x64x1xf32> to vector<2x64x32xf32>
    %635 = arith.mulf %632, %634 : vector<2x64x32xf32>
    %636 = arith.addf %596, %635 : vector<2x64x32xf32>
    %cst_289 = arith.constant 0.000000e+00 : f32
    %637 = vector.broadcast %cst_289 : f32 to vector<2x64x32xf32>
    %c0_290 = arith.constant 0 : index
    %c10_291 = arith.constant 10 : index
    %c0_292 = arith.constant 0 : index
    %638 = vector.load %arg17[%c0_290, %c10_291, %c0_292] : memref<2x128x32xf32, #tpu.memory_space<vmem>>, vector<2x64x32xf32>
    %639 = vector.extract_strided_slice %435 {offsets = [0, 5, 0], sizes = [1, 1, 32], strides = [1, 1, 1]} : vector<7x7x32xf32> to vector<1x1x32xf32>
    %640 = vector.broadcast %639 : vector<1x1x32xf32> to vector<2x64x32xf32>
    %641 = arith.mulf %638, %640 : vector<2x64x32xf32>
    %642 = arith.addf %637, %641 : vector<2x64x32xf32>
    %c0_293 = arith.constant 0 : index
    %c18_294 = arith.constant 18 : index
    %c0_295 = arith.constant 0 : index
    %643 = vector.load %arg17[%c0_293, %c18_294, %c0_295] : memref<2x128x32xf32, #tpu.memory_space<vmem>>, vector<2x64x32xf32>
    %644 = vector.extract_strided_slice %435 {offsets = [1, 5, 0], sizes = [1, 1, 32], strides = [1, 1, 1]} : vector<7x7x32xf32> to vector<1x1x32xf32>
    %645 = vector.broadcast %644 : vector<1x1x32xf32> to vector<2x64x32xf32>
    %646 = arith.mulf %643, %645 : vector<2x64x32xf32>
    %647 = arith.addf %642, %646 : vector<2x64x32xf32>
    %c0_296 = arith.constant 0 : index
    %c26_297 = arith.constant 26 : index
    %c0_298 = arith.constant 0 : index
    %648 = vector.load %arg17[%c0_296, %c26_297, %c0_298] : memref<2x128x32xf32, #tpu.memory_space<vmem>>, vector<2x64x32xf32>
    %649 = vector.extract_strided_slice %435 {offsets = [2, 5, 0], sizes = [1, 1, 32], strides = [1, 1, 1]} : vector<7x7x32xf32> to vector<1x1x32xf32>
    %650 = vector.broadcast %649 : vector<1x1x32xf32> to vector<2x64x32xf32>
    %651 = arith.mulf %648, %650 : vector<2x64x32xf32>
    %652 = arith.addf %647, %651 : vector<2x64x32xf32>
    %c0_299 = arith.constant 0 : index
    %c34_300 = arith.constant 34 : index
    %c0_301 = arith.constant 0 : index
    %653 = vector.load %arg17[%c0_299, %c34_300, %c0_301] : memref<2x128x32xf32, #tpu.memory_space<vmem>>, vector<2x64x32xf32>
    %654 = vector.extract_strided_slice %435 {offsets = [3, 5, 0], sizes = [1, 1, 32], strides = [1, 1, 1]} : vector<7x7x32xf32> to vector<1x1x32xf32>
    %655 = vector.broadcast %654 : vector<1x1x32xf32> to vector<2x64x32xf32>
    %656 = arith.mulf %653, %655 : vector<2x64x32xf32>
    %657 = arith.addf %652, %656 : vector<2x64x32xf32>
    %c0_302 = arith.constant 0 : index
    %c42_303 = arith.constant 42 : index
    %c0_304 = arith.constant 0 : index
    %658 = vector.load %arg17[%c0_302, %c42_303, %c0_304] : memref<2x128x32xf32, #tpu.memory_space<vmem>>, vector<2x64x32xf32>
    %659 = vector.extract_strided_slice %435 {offsets = [4, 5, 0], sizes = [1, 1, 32], strides = [1, 1, 1]} : vector<7x7x32xf32> to vector<1x1x32xf32>
    %660 = vector.broadcast %659 : vector<1x1x32xf32> to vector<2x64x32xf32>
    %661 = arith.mulf %658, %660 : vector<2x64x32xf32>
    %662 = arith.addf %657, %661 : vector<2x64x32xf32>
    %c0_305 = arith.constant 0 : index
    %c50_306 = arith.constant 50 : index
    %c0_307 = arith.constant 0 : index
    %663 = vector.load %arg17[%c0_305, %c50_306, %c0_307] : memref<2x128x32xf32, #tpu.memory_space<vmem>>, vector<2x64x32xf32>
    %664 = vector.extract_strided_slice %435 {offsets = [5, 5, 0], sizes = [1, 1, 32], strides = [1, 1, 1]} : vector<7x7x32xf32> to vector<1x1x32xf32>
    %665 = vector.broadcast %664 : vector<1x1x32xf32> to vector<2x64x32xf32>
    %666 = arith.mulf %663, %665 : vector<2x64x32xf32>
    %667 = arith.addf %662, %666 : vector<2x64x32xf32>
    %c0_308 = arith.constant 0 : index
    %c58_309 = arith.constant 58 : index
    %c0_310 = arith.constant 0 : index
    %668 = vector.load %arg17[%c0_308, %c58_309, %c0_310] : memref<2x128x32xf32, #tpu.memory_space<vmem>>, vector<2x64x32xf32>
    %669 = vector.extract_strided_slice %435 {offsets = [6, 5, 0], sizes = [1, 1, 32], strides = [1, 1, 1]} : vector<7x7x32xf32> to vector<1x1x32xf32>
    %670 = vector.broadcast %669 : vector<1x1x32xf32> to vector<2x64x32xf32>
    %671 = arith.mulf %668, %670 : vector<2x64x32xf32>
    %672 = arith.addf %667, %671 : vector<2x64x32xf32>
    %673 = vector.extract_strided_slice %17 {offsets = [5, 0, 0], sizes = [1, 64, 1], strides = [1, 1, 1]} : vector<7x64x1xf32> to vector<1x64x1xf32>
    %674 = vector.broadcast %673 : vector<1x64x1xf32> to vector<2x64x32xf32>
    %675 = arith.mulf %672, %674 : vector<2x64x32xf32>
    %676 = arith.addf %636, %675 : vector<2x64x32xf32>
    %cst_311 = arith.constant 0.000000e+00 : f32
    %677 = vector.broadcast %cst_311 : f32 to vector<2x64x32xf32>
    %c0_312 = arith.constant 0 : index
    %c11_313 = arith.constant 11 : index
    %c0_314 = arith.constant 0 : index
    %678 = vector.load %arg17[%c0_312, %c11_313, %c0_314] : memref<2x128x32xf32, #tpu.memory_space<vmem>>, vector<2x64x32xf32>
    %679 = vector.extract_strided_slice %435 {offsets = [0, 6, 0], sizes = [1, 1, 32], strides = [1, 1, 1]} : vector<7x7x32xf32> to vector<1x1x32xf32>
    %680 = vector.broadcast %679 : vector<1x1x32xf32> to vector<2x64x32xf32>
    %681 = arith.mulf %678, %680 : vector<2x64x32xf32>
    %682 = arith.addf %677, %681 : vector<2x64x32xf32>
    %c0_315 = arith.constant 0 : index
    %c19_316 = arith.constant 19 : index
    %c0_317 = arith.constant 0 : index
    %683 = vector.load %arg17[%c0_315, %c19_316, %c0_317] : memref<2x128x32xf32, #tpu.memory_space<vmem>>, vector<2x64x32xf32>
    %684 = vector.extract_strided_slice %435 {offsets = [1, 6, 0], sizes = [1, 1, 32], strides = [1, 1, 1]} : vector<7x7x32xf32> to vector<1x1x32xf32>
    %685 = vector.broadcast %684 : vector<1x1x32xf32> to vector<2x64x32xf32>
    %686 = arith.mulf %683, %685 : vector<2x64x32xf32>
    %687 = arith.addf %682, %686 : vector<2x64x32xf32>
    %c0_318 = arith.constant 0 : index
    %c27_319 = arith.constant 27 : index
    %c0_320 = arith.constant 0 : index
    %688 = vector.load %arg17[%c0_318, %c27_319, %c0_320] : memref<2x128x32xf32, #tpu.memory_space<vmem>>, vector<2x64x32xf32>
    %689 = vector.extract_strided_slice %435 {offsets = [2, 6, 0], sizes = [1, 1, 32], strides = [1, 1, 1]} : vector<7x7x32xf32> to vector<1x1x32xf32>
    %690 = vector.broadcast %689 : vector<1x1x32xf32> to vector<2x64x32xf32>
    %691 = arith.mulf %688, %690 : vector<2x64x32xf32>
    %692 = arith.addf %687, %691 : vector<2x64x32xf32>
    %c0_321 = arith.constant 0 : index
    %c35_322 = arith.constant 35 : index
    %c0_323 = arith.constant 0 : index
    %693 = vector.load %arg17[%c0_321, %c35_322, %c0_323] : memref<2x128x32xf32, #tpu.memory_space<vmem>>, vector<2x64x32xf32>
    %694 = vector.extract_strided_slice %435 {offsets = [3, 6, 0], sizes = [1, 1, 32], strides = [1, 1, 1]} : vector<7x7x32xf32> to vector<1x1x32xf32>
    %695 = vector.broadcast %694 : vector<1x1x32xf32> to vector<2x64x32xf32>
    %696 = arith.mulf %693, %695 : vector<2x64x32xf32>
    %697 = arith.addf %692, %696 : vector<2x64x32xf32>
    %c0_324 = arith.constant 0 : index
    %c43_325 = arith.constant 43 : index
    %c0_326 = arith.constant 0 : index
    %698 = vector.load %arg17[%c0_324, %c43_325, %c0_326] : memref<2x128x32xf32, #tpu.memory_space<vmem>>, vector<2x64x32xf32>
    %699 = vector.extract_strided_slice %435 {offsets = [4, 6, 0], sizes = [1, 1, 32], strides = [1, 1, 1]} : vector<7x7x32xf32> to vector<1x1x32xf32>
    %700 = vector.broadcast %699 : vector<1x1x32xf32> to vector<2x64x32xf32>
    %701 = arith.mulf %698, %700 : vector<2x64x32xf32>
    %702 = arith.addf %697, %701 : vector<2x64x32xf32>
    %c0_327 = arith.constant 0 : index
    %c51_328 = arith.constant 51 : index
    %c0_329 = arith.constant 0 : index
    %703 = vector.load %arg17[%c0_327, %c51_328, %c0_329] : memref<2x128x32xf32, #tpu.memory_space<vmem>>, vector<2x64x32xf32>
    %704 = vector.extract_strided_slice %435 {offsets = [5, 6, 0], sizes = [1, 1, 32], strides = [1, 1, 1]} : vector<7x7x32xf32> to vector<1x1x32xf32>
    %705 = vector.broadcast %704 : vector<1x1x32xf32> to vector<2x64x32xf32>
    %706 = arith.mulf %703, %705 : vector<2x64x32xf32>
    %707 = arith.addf %702, %706 : vector<2x64x32xf32>
    %c0_330 = arith.constant 0 : index
    %c59_331 = arith.constant 59 : index
    %c0_332 = arith.constant 0 : index
    %708 = vector.load %arg17[%c0_330, %c59_331, %c0_332] : memref<2x128x32xf32, #tpu.memory_space<vmem>>, vector<2x64x32xf32>
    %709 = vector.extract_strided_slice %435 {offsets = [6, 6, 0], sizes = [1, 1, 32], strides = [1, 1, 1]} : vector<7x7x32xf32> to vector<1x1x32xf32>
    %710 = vector.broadcast %709 : vector<1x1x32xf32> to vector<2x64x32xf32>
    %711 = arith.mulf %708, %710 : vector<2x64x32xf32>
    %712 = arith.addf %707, %711 : vector<2x64x32xf32>
    %713 = vector.extract_strided_slice %17 {offsets = [6, 0, 0], sizes = [1, 64, 1], strides = [1, 1, 1]} : vector<7x64x1xf32> to vector<1x64x1xf32>
    %714 = vector.broadcast %713 : vector<1x64x1xf32> to vector<2x64x32xf32>
    %715 = arith.mulf %712, %714 : vector<2x64x32xf32>
    %716 = arith.addf %676, %715 : vector<2x64x32xf32>
    %717 = vector.shape_cast %716 : vector<2x64x32xf32> to vector<128x32xf32>
    %c0_333 = arith.constant 0 : index
    %c0_334 = arith.constant 0 : index
    %718 = vector.load %arg11[%c0_333, %c0_334] : memref<1x32xf32, #tpu.memory_space<vmem>>, vector<1x32xf32>
    %719 = vector.broadcast %718 : vector<1x32xf32> to vector<128x32xf32>
    %720 = arith.addf %717, %719 : vector<128x32xf32>
    %c0_335 = arith.constant 0 : index
    %c0_336 = arith.constant 0 : index
    %721 = vector.load %arg12[%c0_335, %c0_336] : memref<32x32xf32, #tpu.memory_space<vmem>>, vector<32x32xf32>
    %722 = vector.extract_strided_slice %360 {offsets = [0, 0], sizes = [64, 32], strides = [1, 1]} : vector<128x96xf32> to vector<64x32xf32>
    %723 = vector.extract_strided_slice %360 {offsets = [0, 32], sizes = [64, 32], strides = [1, 1]} : vector<128x96xf32> to vector<64x32xf32>
    %724 = vector.extract_strided_slice %360 {offsets = [0, 64], sizes = [64, 32], strides = [1, 1]} : vector<128x96xf32> to vector<64x32xf32>
    %cst_337 = arith.constant dense<0xFF800000> : vector<32xf32>
    %725 = vector.multi_reduction <maximumf>, %722, %cst_337 [0] : vector<64x32xf32> to vector<32xf32>
    %726 = vector.shape_cast %725 : vector<32xf32> to vector<1x32xf32>
    %727 = vector.broadcast %726 : vector<1x32xf32> to vector<64x32xf32>
    %728 = arith.subf %722, %727 : vector<64x32xf32>
    %729 = math.exp %728 : vector<64x32xf32>
    %cst_338 = arith.constant dense<0.000000e+00> : vector<32xf32>
    %730 = vector.multi_reduction <add>, %729, %cst_338 [0] : vector<64x32xf32> to vector<32xf32>
    %731 = vector.shape_cast %730 : vector<32xf32> to vector<1x32xf32>
    %732 = tpu.reciprocal %731 {approx = true} : vector<1x32xf32> -> vector<1x32xf32>
    %733 = vector.broadcast %732 : vector<1x32xf32> to vector<64x32xf32>
    %734 = arith.mulf %729, %733 : vector<64x32xf32>
    %735 = arith.truncf %734 : vector<64x32xf32> to vector<64x32xbf16>
    %736 = arith.truncf %723 : vector<64x32xf32> to vector<64x32xbf16>
    %cst_339 = arith.constant dense<0.000000e+00> : vector<32x32xf32>
    %737 = tpu.matmul %735, %736, %cst_339 {dimension_numbers = #tpu.dot_dimension_numbers<[0], [0], [1], [1], [0, 1, 1, 1], [], []>} : vector<64x32xbf16>, vector<64x32xbf16>, vector<32x32xf32> -> vector<32x32xf32>
    %738 = arith.mulf %737, %721 : vector<32x32xf32>
    %739 = arith.truncf %724 : vector<64x32xf32> to vector<64x32xbf16>
    %740 = arith.truncf %738 : vector<32x32xf32> to vector<32x32xbf16>
    %cst_340 = arith.constant dense<0.000000e+00> : vector<64x32xf32>
    %741 = tpu.matmul %739, %740, %cst_340 {dimension_numbers = #tpu.dot_dimension_numbers<[1], [0], [0], [1], [0, 0, 1, 1], [], []>} : vector<64x32xbf16>, vector<32x32xbf16>, vector<64x32xf32> -> vector<64x32xf32>
    %cst_341 = arith.constant 0.44721359 : f32
    %742 = vector.broadcast %cst_341 : f32 to vector<64x32xf32>
    %743 = arith.mulf %742, %741 : vector<64x32xf32>
    %744 = vector.extract_strided_slice %720 {offsets = [0, 0], sizes = [64, 32], strides = [1, 1]} : vector<128x32xf32> to vector<64x32xf32>
    %745 = arith.mulf %724, %744 : vector<64x32xf32>
    %746 = arith.addf %743, %745 : vector<64x32xf32>
    %747 = vector.extract_strided_slice %360 {offsets = [64, 0], sizes = [64, 32], strides = [1, 1]} : vector<128x96xf32> to vector<64x32xf32>
    %748 = vector.extract_strided_slice %360 {offsets = [64, 32], sizes = [64, 32], strides = [1, 1]} : vector<128x96xf32> to vector<64x32xf32>
    %749 = vector.extract_strided_slice %360 {offsets = [64, 64], sizes = [64, 32], strides = [1, 1]} : vector<128x96xf32> to vector<64x32xf32>
    %cst_342 = arith.constant dense<0xFF800000> : vector<32xf32>
    %750 = vector.multi_reduction <maximumf>, %747, %cst_342 [0] : vector<64x32xf32> to vector<32xf32>
    %751 = vector.shape_cast %750 : vector<32xf32> to vector<1x32xf32>
    %752 = vector.broadcast %751 : vector<1x32xf32> to vector<64x32xf32>
    %753 = arith.subf %747, %752 : vector<64x32xf32>
    %754 = math.exp %753 : vector<64x32xf32>
    %cst_343 = arith.constant dense<0.000000e+00> : vector<32xf32>
    %755 = vector.multi_reduction <add>, %754, %cst_343 [0] : vector<64x32xf32> to vector<32xf32>
    %756 = vector.shape_cast %755 : vector<32xf32> to vector<1x32xf32>
    %757 = tpu.reciprocal %756 {approx = true} : vector<1x32xf32> -> vector<1x32xf32>
    %758 = vector.broadcast %757 : vector<1x32xf32> to vector<64x32xf32>
    %759 = arith.mulf %754, %758 : vector<64x32xf32>
    %760 = arith.truncf %759 : vector<64x32xf32> to vector<64x32xbf16>
    %761 = arith.truncf %748 : vector<64x32xf32> to vector<64x32xbf16>
    %cst_344 = arith.constant dense<0.000000e+00> : vector<32x32xf32>
    %762 = tpu.matmul %760, %761, %cst_344 {dimension_numbers = #tpu.dot_dimension_numbers<[0], [0], [1], [1], [0, 1, 1, 1], [], []>} : vector<64x32xbf16>, vector<64x32xbf16>, vector<32x32xf32> -> vector<32x32xf32>
    %763 = arith.mulf %762, %721 : vector<32x32xf32>
    %764 = arith.truncf %749 : vector<64x32xf32> to vector<64x32xbf16>
    %765 = arith.truncf %763 : vector<32x32xf32> to vector<32x32xbf16>
    %cst_345 = arith.constant dense<0.000000e+00> : vector<64x32xf32>
    %766 = tpu.matmul %764, %765, %cst_345 {dimension_numbers = #tpu.dot_dimension_numbers<[1], [0], [0], [1], [0, 0, 1, 1], [], []>} : vector<64x32xbf16>, vector<32x32xbf16>, vector<64x32xf32> -> vector<64x32xf32>
    %cst_346 = arith.constant 0.44721359 : f32
    %767 = vector.broadcast %cst_346 : f32 to vector<64x32xf32>
    %768 = arith.mulf %767, %766 : vector<64x32xf32>
    %769 = vector.extract_strided_slice %720 {offsets = [64, 0], sizes = [64, 32], strides = [1, 1]} : vector<128x32xf32> to vector<64x32xf32>
    %770 = arith.mulf %749, %769 : vector<64x32xf32>
    %771 = arith.addf %768, %770 : vector<64x32xf32>
    %772 = tpu.concatenate %746, %771 in 0 : vector<64x32xf32>, vector<64x32xf32> -> vector<128x32xf32>
    %773 = tpu.concatenate %772, %429 in 1 : vector<128x32xf32>, vector<128x8xf32> -> vector<128x40xf32>
    %774 = arith.truncf %773 : vector<128x40xf32> to vector<128x40xbf16>
    %c0_347 = arith.constant 0 : index
    %c0_348 = arith.constant 0 : index
    %775 = vector.load %arg13[%c0_347, %c0_348] : memref<40x40xbf16, #tpu.memory_space<vmem>>, vector<40x40xbf16>
    %cst_349 = arith.constant dense<0.000000e+00> : vector<128x40xf32>
    %776 = tpu.matmul %774, %775, %cst_349 {dimension_numbers = #tpu.dot_dimension_numbers<[1], [0], [0], [1], [0, 0, 1, 1], [], []>} : vector<128x40xbf16>, vector<40x40xbf16>, vector<128x40xf32> -> vector<128x40xf32>
    %c0_350 = arith.constant 0 : index
    %c0_351 = arith.constant 0 : index
    %777 = vector.load %arg14[%c0_350, %c0_351] : memref<1x40xf32, #tpu.memory_space<vmem>>, vector<1x40xf32>
    %778 = vector.broadcast %777 : vector<1x40xf32> to vector<128x40xf32>
    %779 = arith.addf %776, %778 : vector<128x40xf32>
    %780 = vector.shape_cast %779 : vector<128x40xf32> to vector<2x64x40xf32>
    %c0_352 = arith.constant 0 : index
    %c0_353 = arith.constant 0 : index
    %c0_354 = arith.constant 0 : index
    %781 = vector.load %arg15[%c0_352, %c0_353, %c0_354] : memref<2x64x40xf32, #tpu.memory_space<vmem>>, vector<2x64x40xf32>
    tpu.vector_store %arg15[%c0_352, %c0_353, %c0_354], %780 {strides = array<i32>} : memref<2x64x40xf32, #tpu.memory_space<vmem>>, vector<2x64x40xf32>,
    return
  }
}

</mosaic_0001>

<llo_original>
// kernel: _lambda_.1
$region0: #{_lambda_.1}
  #allocation0 [shape = 'u32[]', space=smem, size = 0x4, offset = 0x4, fixed_abs, tag = 'smem constant byte address 0x4 - core index']
  #allocation1 [shape = 'u32[144,128]{1,0:T(1,128)}', space=vmem, size = 0x12000, scoped, tag = 'internal scratch']
  #allocation2 [shape = 'f32[2,128,96]{2,1,0:T(8,128)}', space=vmem, size = 0x20000, scoped, tag = 'scratch operand']
  #allocation3 [shape = 'f32[2,128,32]{2,1,0:T(8,128)}', space=vmem, size = 0x20000, scoped, tag = 'scratch operand']
  %s0 = inlined_call_operand.vmem [shape: f32[128,40], index: 0, kind: input, shape index: {}]
  %s1 = inlined_call_operand.vmem [shape: f32[128,40], index: 1, kind: input, shape index: {}]
  %s2 = inlined_call_operand.vmem [shape: bf16[40,80], index: 2, kind: input, shape index: {}]
  %s3 = inlined_call_operand.vmem [shape: f32[7,7,96], index: 3, kind: input, shape index: {}]
  %s4 = inlined_call_operand.vmem [shape: f32[7,64,1], index: 4, kind: input, shape index: {}]
  %s5 = inlined_call_operand.vmem [shape: bf16[96,88], index: 5, kind: input, shape index: {}]
  %s6 = inlined_call_operand.vmem [shape: f32[1,96], index: 6, kind: input, shape index: {}]
  %s7 = inlined_call_operand.vmem [shape: f32[1,96], index: 7, kind: input, shape index: {}]
  %s8 = inlined_call_operand.vmem [shape: f32[1,16], index: 8, kind: input, shape index: {}]
  %s9 = inlined_call_operand.vmem [shape: f32[1,16], index: 9, kind: input, shape index: {}]
  %s10 = inlined_call_operand.vmem [shape: f32[7,7,32], index: 10, kind: input, shape index: {}]
  %s11 = inlined_call_operand.vmem [shape: f32[1,32], index: 11, kind: input, shape index: {}]
  %s12 = inlined_call_operand.vmem [shape: f32[32,32], index: 12, kind: input, shape index: {}]
  %s13 = inlined_call_operand.vmem [shape: bf16[40,40], index: 13, kind: input, shape index: {}]
  %s14 = inlined_call_operand.vmem [shape: f32[1,40], index: 14, kind: input, shape index: {}]
  %s15 = inlined_call_operand.vmem [shape: f32[2,64,40], index: 15, kind: output, shape index: {}]
  %s16 = sld [smem:[#allocation0]]
  $region70: #{_lambda_.1} parent=0
    _
  %s18 = ssub.s32 1, %s16
  %s19 = scalar_select 0, %s18, %s16
  // Predicated region
  $region2: #{_lambda_.1} parent=0 // pred_check
    _
  $region3: #{_lambda_.1} parent=0 // pred_check_branch
    %21 = sbr.rel (0) target = $region5
  $region4: #{_lambda_.1} parent=0 // pred_region
    _
  $region5: #{_lambda_.1} parent=0 // pred_fallthru
    _
  // Predicated region
  $region6: #{_lambda_.1} parent=0 // pred_check
    _
  $region7: #{_lambda_.1} parent=0 // pred_check_branch
    %23 = sbr.rel (0) target = $region9
  $region8: #{_lambda_.1} parent=0 // pred_region
    _
  $region9: #{_lambda_.1} parent=0 // pred_fallthru
    _
  // Predicated region
  $region10: #{_lambda_.1} parent=0 // pred_check
    _
  $region11: #{_lambda_.1} parent=0 // pred_check_branch
    %25 = sbr.rel (0) target = $region13
  $region12: #{_lambda_.1} parent=0 // pred_region
    _
  $region13: #{_lambda_.1} parent=0 // pred_fallthru
    _
  // Predicated region
  $region14: #{_lambda_.1} parent=0 // pred_check
    _
  $region15: #{_lambda_.1} parent=0 // pred_check_branch
    %27 = sbr.rel (0) target = $region17
  $region16: #{_lambda_.1} parent=0 // pred_region
    _
  $region17: #{_lambda_.1} parent=0 // pred_fallthru
    _
  // Predicated region
  $region18: #{_lambda_.1} parent=0 // pred_check
    _
  $region19: #{_lambda_.1} parent=0 // pred_check_branch
    %29 = sbr.rel (0) target = $region21
  $region20: #{_lambda_.1} parent=0 // pred_region
    _
  $region21: #{_lambda_.1} parent=0 // pred_fallthru
    _
  // Predicated region
  $region22: #{_lambda_.1} parent=0 // pred_check
    _
  $region23: #{_lambda_.1} parent=0 // pred_check_branch
    %31 = sbr.rel (0) target = $region25
  $region24: #{_lambda_.1} parent=0 // pred_region
    _
  $region25: #{_lambda_.1} parent=0 // pred_fallthru
    _
  // Predicated region
  $region26: #{_lambda_.1} parent=0 // pred_check
    _
  $region27: #{_lambda_.1} parent=0 // pred_check_branch
    %33 = sbr.rel (0) target = $region29
  $region28: #{_lambda_.1} parent=0 // pred_region
    _
  $region29: #{_lambda_.1} parent=0 // pred_fallthru
    _
  // Predicated region
  $region30: #{_lambda_.1} parent=0 // pred_check
    _
  $region31: #{_lambda_.1} parent=0 // pred_check_branch
    %35 = sbr.rel (0) target = $region33
  $region32: #{_lambda_.1} parent=0 // pred_region
    _
  $region33: #{_lambda_.1} parent=0 // pred_fallthru
    _
  // Predicated region
  $region34: #{_lambda_.1} parent=0 // pred_check
    _
  $region35: #{_lambda_.1} parent=0 // pred_check_branch
    %37 = sbr.rel (0) target = $region37
  $region36: #{_lambda_.1} parent=0 // pred_region
    _
  $region37: #{_lambda_.1} parent=0 // pred_fallthru
    _
  // Predicated region
  $region38: #{_lambda_.1} parent=0 // pred_check
    _
  $region39: #{_lambda_.1} parent=0 // pred_check_branch
    %39 = sbr.rel (0) target = $region41
  $region40: #{_lambda_.1} parent=0 // pred_region
    _
  $region41: #{_lambda_.1} parent=0 // pred_fallthru
    _
  // Predicated region
  $region42: #{_lambda_.1} parent=0 // pred_check
    _
  $region43: #{_lambda_.1} parent=0 // pred_check_branch
    %41 = sbr.rel (0) target = $region45
  $region44: #{_lambda_.1} parent=0 // pred_region
    _
  $region45: #{_lambda_.1} parent=0 // pred_fallthru
    _
  // Predicated region
  $region46: #{_lambda_.1} parent=0 // pred_check
    _
  $region47: #{_lambda_.1} parent=0 // pred_check_branch
    %43 = sbr.rel (0) target = $region49
  $region48: #{_lambda_.1} parent=0 // pred_region
    _
  $region49: #{_lambda_.1} parent=0 // pred_fallthru
    _
  // Predicated region
  $region50: #{_lambda_.1} parent=0 // pred_check
    _
  $region51: #{_lambda_.1} parent=0 // pred_check_branch
    %45 = sbr.rel (0) target = $region53
  $region52: #{_lambda_.1} parent=0 // pred_region
    _
  $region53: #{_lambda_.1} parent=0 // pred_fallthru
    _
  // Predicated region
  $region54: #{_lambda_.1} parent=0 // pred_check
    _
  $region55: #{_lambda_.1} parent=0 // pred_check_branch
    %47 = sbr.rel (0) target = $region57
  $region56: #{_lambda_.1} parent=0 // pred_region
    _
  $region57: #{_lambda_.1} parent=0 // pred_fallthru
    _
  // Predicated region
  $region58: #{_lambda_.1} parent=0 // pred_check
    _
  $region59: #{_lambda_.1} parent=0 // pred_check_branch
    %49 = sbr.rel (0) target = $region61
  $region60: #{_lambda_.1} parent=0 // pred_region
    _
  $region61: #{_lambda_.1} parent=0 // pred_fallthru
    _
  %v51 = vld [vmem:[%s0] sm:$0xff]
  %v52 = vld [vmem:[%s0 + $0x8] sm:$0xff]
  %v53 = vld [vmem:[%s0 + $0x10] sm:$0xff]
  %v54 = vld [vmem:[%s0 + $0x18] sm:$0xff]
  %v55 = vld [vmem:[%s0 + $0x20] sm:$0xff]
  %v56 = vld [vmem:[%s0 + $0x28] sm:$0xff]
  %v57 = vld [vmem:[%s0 + $0x30] sm:$0xff]
  %v58 = vld [vmem:[%s0 + $0x38] sm:$0xff]
  %v59 = vld [vmem:[%s0 + $0x40] sm:$0xff]
  %v60 = vld [vmem:[%s0 + $0x48] sm:$0xff]
  %v61 = vld [vmem:[%s0 + $0x50] sm:$0xff]
  %v62 = vld [vmem:[%s0 + $0x58] sm:$0xff]
  %v63 = vld [vmem:[%s0 + $0x60] sm:$0xff]
  %v64 = vld [vmem:[%s0 + $0x68] sm:$0xff]
  %v65 = vld [vmem:[%s0 + $0x70] sm:$0xff]
  %v66 = vld [vmem:[%s0 + $0x78] sm:$0xff]
  %v67 = vld [vmem:[%s1] sm:$0xff]
  %v68 = vld [vmem:[%s1 + $0x8] sm:$0xff]
  %v69 = vld [vmem:[%s1 + $0x10] sm:$0xff]
  %v70 = vld [vmem:[%s1 + $0x18] sm:$0xff]
  %v71 = vld [vmem:[%s1 + $0x20] sm:$0xff]
  %v72 = vld [vmem:[%s1 + $0x28] sm:$0xff]
  %v73 = vld [vmem:[%s1 + $0x30] sm:$0xff]
  %v74 = vld [vmem:[%s1 + $0x38] sm:$0xff]
  %v75 = vld [vmem:[%s1 + $0x40] sm:$0xff]
  %v76 = vld [vmem:[%s1 + $0x48] sm:$0xff]
  %v77 = vld [vmem:[%s1 + $0x50] sm:$0xff]
  %v78 = vld [vmem:[%s1 + $0x58] sm:$0xff]
  %v79 = vld [vmem:[%s1 + $0x60] sm:$0xff]
  %v80 = vld [vmem:[%s1 + $0x68] sm:$0xff]
  %v81 = vld [vmem:[%s1 + $0x70] sm:$0xff]
  %v82 = vld [vmem:[%s1 + $0x78] sm:$0xff]
  %v83 = vpack.c.bf16 %v52, %v51
  %v84 = vpack.c.bf16 %v54, %v53
  %v85 = vpack.c.bf16 %v56, %v55
  %v86 = vpack.c.bf16 %v58, %v57
  %v87 = vpack.c.bf16 %v60, %v59
  %v88 = vpack.c.bf16 %v62, %v61
  %v89 = vpack.c.bf16 %v64, %v63
  %v90 = vpack.c.bf16 %v66, %v65
  %v91 = vld [vmem:[%s2] sm:$0xf]
  %v92 = vld [vmem:[%s2 + $0x4] sm:$0xf]
  %v93 = vld [vmem:[%s2 + $0x8] sm:$0xf]
  %v94 = vld [vmem:[%s2 + $0xc] sm:$0xf]
  %v95 = vld [vmem:[%s2 + $0x10] sm:$0xf]
  %v101 = vunpack.c.l.b16 %v91
  %v102 = vunpack.c.l.b16 %v92
  %v103 = vunpack.c.l.b16 %v93
  %v104 = vunpack.c.l.b16 %v94
  %v105 = vunpack.c.l.b16 %v95
  %v106 = vpack.c.b16 %v102, %v101
  %v107 = vpack.c.b16 %v104, %v103
  %v108 = vpack.c.b16 %v105, %v105
  %vm111 = vcmask 326656
  %v113 = vsel %vm111, %v83, 0
  %v116 = vsel %vm111, %v84, 0
  %v119 = vsel %vm111, %v85, 0
  %v122 = vsel %vm111, %v86, 0
  %v125 = vsel %vm111, %v87, 0
  %v128 = vsel %vm111, %v88, 0
  %v131 = vsel %vm111, %v89, 0
  %v134 = vsel %vm111, %v90, 0
  %vm136 = vcmask 1043456
  %v138 = vsel %vm136, %v108, 0
  %140 = vmatprep.subr.bf16.mxu0 0
  %141 = vmatpush1.bf16.msra.mxu0 %v106
  %142 = vmatprep.subr.bf16.mxu0 0
  %143 = vmatpush1.bf16.msra.mxu0 %v107
  %144 = vmatprep.subr.bf16.mxu0 0
  %145 = vmatpush1.bf16.msra.mxu0 %v138
  %146 = vmatprep.subr.bf16.mxu0 0
  %147 = vmatpush1.bf16.msra.mxu0 0
  %148 = vmatprep.subr.bf16.mxu0 0
  %149 = vmatpush1.bf16.msra.mxu0 0
  %150 = vmatprep.subr.bf16.mxu0 0
  %151 = vmatpush1.bf16.msra.mxu0 0
  %152 = vmatprep.subr.bf16.mxu0 0
  %153 = vmatpush1.bf16.msra.mxu0 0
  %154 = vmatprep.subr.bf16.mxu0 0
  %155 = vmatpush1.bf16.msra.mxu0 0
  %156 = vmatprep.subr.bf16.mxu0 0
  %157 = vmatpush1.bf16.msra.mxu0 0
  %158 = vmatprep.subr.bf16.mxu0 0
  %159 = vmatpush1.bf16.msra.mxu0 0
  %160 = vmatprep.subr.bf16.mxu0 0
  %161 = vmatpush1.bf16.msra.mxu0 0
  %162 = vmatprep.subr.bf16.mxu0 0
  %163 = vmatpush1.bf16.msra.mxu0 0
  %164 = vmatprep.subr.bf16.mxu0 0
  %165 = vmatpush1.bf16.msra.mxu0 0
  %166 = vmatprep.subr.bf16.mxu0 0
  %167 = vmatpush1.bf16.msra.mxu0 0
  %168 = vmatprep.subr.bf16.mxu0 0
  %169 = vmatpush1.bf16.msra.mxu0 0
  %170 = vmatprep.subr.bf16.mxu0 0
  %171 = vmatpush1.bf16.msra.mxu0 0
  %172 = vmatprep.mubr.bf16.mxu0 0
  %173 = vmatmul.mubr.bf16.gmra.mrb[0].mxu0 %v113
  %v174 = vpop.f32.mrb[0].mxu0
  %v175 = vadd.f32 0.0, %v174
  %v176 = vpop.f32.mrb[0].mxu0
  %v177 = vpop.f32.mrb[0].mxu0
  %v178 = vadd.f32 0.0, %v177
  %v179 = vpop.f32.mrb[0].mxu0
  %180 = vmatprep.mubr.bf16.mxu0 0
  %181 = vmatmul.mubr.bf16.gmra.mrb[0].mxu0 %v116
  %v182 = vpop.f32.mrb[0].mxu0
  %v183 = vadd.f32 0.0, %v182
  %v184 = vpop.f32.mrb[0].mxu0
  %v185 = vpop.f32.mrb[0].mxu0
  %v186 = vadd.f32 0.0, %v185
  %v187 = vpop.f32.mrb[0].mxu0
  %188 = vmatprep.mubr.bf16.mxu0 0
  %189 = vmatmul.mubr.bf16.gmra.mrb[0].mxu0 %v119
  %v190 = vpop.f32.mrb[0].mxu0
  %v191 = vadd.f32 0.0, %v190
  %v192 = vpop.f32.mrb[0].mxu0
  %v193 = vpop.f32.mrb[0].mxu0
  %v194 = vadd.f32 0.0, %v193
  %v195 = vpop.f32.mrb[0].mxu0
  %196 = vmatprep.mubr.bf16.mxu0 0
  %197 = vmatmul.mubr.bf16.gmra.mrb[0].mxu0 %v122
  %v198 = vpop.f32.mrb[0].mxu0
  %v199 = vadd.f32 0.0, %v198
  %v200 = vpop.f32.mrb[0].mxu0
  %v201 = vpop.f32.mrb[0].mxu0
  %v202 = vadd.f32 0.0, %v201
  %v203 = vpop.f32.mrb[0].mxu0
  %204 = vmatprep.mubr.bf16.mxu0 0
  %205 = vmatmul.mubr.bf16.gmra.mrb[0].mxu0 %v125
  %v206 = vpop.f32.mrb[0].mxu0
  %v207 = vadd.f32 0.0, %v206
  %v208 = vpop.f32.mrb[0].mxu0
  %v209 = vpop.f32.mrb[0].mxu0
  %v210 = vadd.f32 0.0, %v209
  %v211 = vpop.f32.mrb[0].mxu0
  %212 = vmatprep.mubr.bf16.mxu0 0
  %213 = vmatmul.mubr.bf16.gmra.mrb[0].mxu0 %v128
  %v214 = vpop.f32.mrb[0].mxu0
  %v215 = vadd.f32 0.0, %v214
  %v216 = vpop.f32.mrb[0].mxu0
  %v217 = vpop.f32.mrb[0].mxu0
  %v218 = vadd.f32 0.0, %v217
  %v219 = vpop.f32.mrb[0].mxu0
  %220 = vmatprep.mubr.bf16.mxu0 0
  %221 = vmatmul.mubr.bf16.gmra.mrb[0].mxu0 %v131
  %v222 = vpop.f32.mrb[0].mxu0
  %v223 = vadd.f32 0.0, %v222
  %v224 = vpop.f32.mrb[0].mxu0
  %v225 = vpop.f32.mrb[0].mxu0
  %v226 = vadd.f32 0.0, %v225
  %v227 = vpop.f32.mrb[0].mxu0
  %228 = vmatprep.mubr.bf16.mxu0 0
  %229 = vmatmul.mubr.bf16.gmra.mrb[0].mxu0 %v134
  %v230 = vpop.f32.mrb[0].mxu0
  %v231 = vadd.f32 0.0, %v230
  %v232 = vpop.f32.mrb[0].mxu0
  %v233 = vpop.f32.mrb[0].mxu0
  %v234 = vadd.f32 0.0, %v233
  %v235 = vpop.f32.mrb[0].mxu0
  %236 = vdwg.mxu0
  %vm237 = vcmask 785408
  %238 = vst.msk [vmem:[#allocation2] sm:$0xff] %vm237, 0.0
  %239 = vst.msk [vmem:[#allocation2 + $0x8] sm:$0xff] %vm237, 0.0
  %240 = vst.msk [vmem:[#allocation2 + $0x10] sm:$0xff] %vm237, 0.0
  %241 = vst.msk [vmem:[#allocation2 + $0x18] sm:$0xff] %vm237, 0.0
  %242 = vst.msk [vmem:[#allocation2 + $0x20] sm:$0xff] %vm237, 0.0
  %243 = vst.msk [vmem:[#allocation2 + $0x28] sm:$0xff] %vm237, 0.0
  %244 = vst.msk [vmem:[#allocation2 + $0x30] sm:$0xff] %vm237, 0.0
  %245 = vst.msk [vmem:[#allocation2 + $0x38] sm:$0xff] %vm237, 0.0
  %246 = vst.msk [vmem:[#allocation2 + $0x40] sm:$0xff] %vm237, 0.0
  %247 = vst.msk [vmem:[#allocation2 + $0x48] sm:$0xff] %vm237, 0.0
  %248 = vst.msk [vmem:[#allocation2 + $0x50] sm:$0xff] %vm237, 0.0
  %249 = vst.msk [vmem:[#allocation2 + $0x58] sm:$0xff] %vm237, 0.0
  %250 = vst.msk [vmem:[#allocation2 + $0x60] sm:$0xff] %vm237, 0.0
  %251 = vst.msk [vmem:[#allocation2 + $0x68] sm:$0xff] %vm237, 0.0
  %252 = vst.msk [vmem:[#allocation2 + $0x70] sm:$0xff] %vm237, 0.0
  %253 = vst.msk [vmem:[#allocation2 + $0x78] sm:$0xff] %vm237, 0.0
  %254 = vst.msk [vmem:[#allocation2 + $0x80] sm:$0xff] %vm237, 0.0
  %255 = vst.msk [vmem:[#allocation2 + $0x88] sm:$0xff] %vm237, 0.0
  %256 = vst.msk [vmem:[#allocation2 + $0x90] sm:$0xff] %vm237, 0.0
  %257 = vst.msk [vmem:[#allocation2 + $0x98] sm:$0xff] %vm237, 0.0
  %258 = vst.msk [vmem:[#allocation2 + $0xa0] sm:$0xff] %vm237, 0.0
  %259 = vst.msk [vmem:[#allocation2 + $0xa8] sm:$0xff] %vm237, 0.0
  %260 = vst.msk [vmem:[#allocation2 + $0xb0] sm:$0xff] %vm237, 0.0
  %261 = vst.msk [vmem:[#allocation2 + $0xb8] sm:$0xff] %vm237, 0.0
  %262 = vst.msk [vmem:[#allocation2 + $0xc0] sm:$0xff] %vm237, 0.0
  %263 = vst.msk [vmem:[#allocation2 + $0xc8] sm:$0xff] %vm237, 0.0
  %264 = vst.msk [vmem:[#allocation2 + $0xd0] sm:$0xff] %vm237, 0.0
  %265 = vst.msk [vmem:[#allocation2 + $0xd8] sm:$0xff] %vm237, 0.0
  %266 = vst.msk [vmem:[#allocation2 + $0xe0] sm:$0xff] %vm237, 0.0
  %267 = vst.msk [vmem:[#allocation2 + $0xe8] sm:$0xff] %vm237, 0.0
  %268 = vst.msk [vmem:[#allocation2 + $0xf0] sm:$0xff] %vm237, 0.0
  %269 = vst.msk [vmem:[#allocation2 + $0xf8] sm:$0xff] %vm237, 0.0
  %286 = vrot.lane.b32.xlu0 %v175, 120
  %v287 = vpop.permute.xlu0 %286
  %288 = vrot.lane.b32.xlu0 %v178, 120
  %v289 = vpop.permute.xlu0 %288
  %290 = vrot.lane.b32.xlu0 %v183, 120
  %v291 = vpop.permute.xlu0 %290
  %292 = vrot.lane.b32.xlu0 %v186, 120
  %v293 = vpop.permute.xlu0 %292
  %294 = vrot.lane.b32.xlu0 %v191, 120
  %v295 = vpop.permute.xlu0 %294
  %296 = vrot.lane.b32.xlu0 %v194, 120
  %v297 = vpop.permute.xlu0 %296
  %298 = vrot.lane.b32.xlu0 %v199, 120
  %v299 = vpop.permute.xlu0 %298
  %300 = vrot.lane.b32.xlu0 %v202, 120
  %v301 = vpop.permute.xlu0 %300
  %302 = vrot.lane.b32.xlu0 %v207, 120
  %v303 = vpop.permute.xlu0 %302
  %304 = vrot.lane.b32.xlu0 %v210, 120
  %v305 = vpop.permute.xlu0 %304
  %306 = vrot.lane.b32.xlu0 %v215, 120
  %v307 = vpop.permute.xlu0 %306
  %308 = vrot.lane.b32.xlu0 %v218, 120
  %v309 = vpop.permute.xlu0 %308
  %310 = vrot.lane.b32.xlu0 %v223, 120
  %v311 = vpop.permute.xlu0 %310
  %312 = vrot.lane.b32.xlu0 %v226, 120
  %v313 = vpop.permute.xlu0 %312
  %314 = vrot.lane.b32.xlu0 %v231, 120
  %v315 = vpop.permute.xlu0 %314
  %316 = vrot.lane.b32.xlu0 %v234, 120
  %v317 = vpop.permute.xlu0 %316
  %334 = vrot.lane.b32.xlu0 %v175, 104
  %v335 = vpop.permute.xlu0 %334
  %336 = vrot.lane.b32.xlu0 %v178, 104
  %v337 = vpop.permute.xlu0 %336
  %338 = vrot.lane.b32.xlu0 %v183, 104
  %v339 = vpop.permute.xlu0 %338
  %340 = vrot.lane.b32.xlu0 %v186, 104
  %v341 = vpop.permute.xlu0 %340
  %342 = vrot.lane.b32.xlu0 %v191, 104
  %v343 = vpop.permute.xlu0 %342
  %344 = vrot.lane.b32.xlu0 %v194, 104
  %v345 = vpop.permute.xlu0 %344
  %346 = vrot.lane.b32.xlu0 %v199, 104
  %v347 = vpop.permute.xlu0 %346
  %348 = vrot.lane.b32.xlu0 %v202, 104
  %v349 = vpop.permute.xlu0 %348
  %350 = vrot.lane.b32.xlu0 %v207, 104
  %v351 = vpop.permute.xlu0 %350
  %352 = vrot.lane.b32.xlu0 %v210, 104
  %v353 = vpop.permute.xlu0 %352
  %354 = vrot.lane.b32.xlu0 %v215, 104
  %v355 = vpop.permute.xlu0 %354
  %356 = vrot.lane.b32.xlu0 %v218, 104
  %v357 = vpop.permute.xlu0 %356
  %358 = vrot.lane.b32.xlu0 %v223, 104
  %v359 = vpop.permute.xlu0 %358
  %360 = vrot.lane.b32.xlu0 %v226, 104
  %v361 = vpop.permute.xlu0 %360
  %362 = vrot.lane.b32.xlu0 %v231, 104
  %v363 = vpop.permute.xlu0 %362
  %364 = vrot.lane.b32.xlu0 %v234, 104
  %v365 = vpop.permute.xlu0 %364
  %398 = vrot.lane.b32.xlu0 %v67, 40
  %v399 = vpop.permute.xlu0 %398
  %400 = vrot.lane.b32.xlu0 %v68, 40
  %v401 = vpop.permute.xlu0 %400
  %402 = vrot.lane.b32.xlu0 %v69, 40
  %v403 = vpop.permute.xlu0 %402
  %404 = vrot.lane.b32.xlu0 %v70, 40
  %v405 = vpop.permute.xlu0 %404
  %406 = vrot.lane.b32.xlu0 %v71, 40
  %v407 = vpop.permute.xlu0 %406
  %408 = vrot.lane.b32.xlu0 %v72, 40
  %v409 = vpop.permute.xlu0 %408
  %410 = vrot.lane.b32.xlu0 %v73, 40
  %v411 = vpop.permute.xlu0 %410
  %412 = vrot.lane.b32.xlu0 %v74, 40
  %v413 = vpop.permute.xlu0 %412
  %414 = vrot.lane.b32.xlu0 %v75, 40
  %v415 = vpop.permute.xlu0 %414
  %416 = vrot.lane.b32.xlu0 %v76, 40
  %v417 = vpop.permute.xlu0 %416
  %418 = vrot.lane.b32.xlu0 %v77, 40
  %v419 = vpop.permute.xlu0 %418
  %420 = vrot.lane.b32.xlu0 %v78, 40
  %v421 = vpop.permute.xlu0 %420
  %422 = vrot.lane.b32.xlu0 %v79, 40
  %v423 = vpop.permute.xlu0 %422
  %424 = vrot.lane.b32.xlu0 %v80, 40
  %v425 = vpop.permute.xlu0 %424
  %426 = vrot.lane.b32.xlu0 %v81, 40
  %v427 = vpop.permute.xlu0 %426
  %428 = vrot.lane.b32.xlu0 %v82, 40
  %v429 = vpop.permute.xlu0 %428
  %446 = vrot.lane.b32.xlu0 %v175, 40
  %v447 = vpop.permute.xlu0 %446
  %448 = vrot.lane.b32.xlu0 %v178, 40
  %v449 = vpop.permute.xlu0 %448
  %450 = vrot.lane.b32.xlu0 %v183, 40
  %v451 = vpop.permute.xlu0 %450
  %452 = vrot.lane.b32.xlu0 %v186, 40
  %v453 = vpop.permute.xlu0 %452
  %454 = vrot.lane.b32.xlu0 %v191, 40
  %v455 = vpop.permute.xlu0 %454
  %456 = vrot.lane.b32.xlu0 %v194, 40
  %v457 = vpop.permute.xlu0 %456
  %458 = vrot.lane.b32.xlu0 %v199, 40
  %v459 = vpop.permute.xlu0 %458
  %460 = vrot.lane.b32.xlu0 %v202, 40
  %v461 = vpop.permute.xlu0 %460
  %462 = vrot.lane.b32.xlu0 %v207, 40
  %v463 = vpop.permute.xlu0 %462
  %464 = vrot.lane.b32.xlu0 %v210, 40
  %v465 = vpop.permute.xlu0 %464
  %466 = vrot.lane.b32.xlu0 %v215, 40
  %v467 = vpop.permute.xlu0 %466
  %468 = vrot.lane.b32.xlu0 %v218, 40
  %v469 = vpop.permute.xlu0 %468
  %470 = vrot.lane.b32.xlu0 %v223, 40
  %v471 = vpop.permute.xlu0 %470
  %472 = vrot.lane.b32.xlu0 %v226, 40
  %v473 = vpop.permute.xlu0 %472
  %474 = vrot.lane.b32.xlu0 %v231, 40
  %v475 = vpop.permute.xlu0 %474
  %476 = vrot.lane.b32.xlu0 %v234, 40
  %v477 = vpop.permute.xlu0 %476
  %494 = vrot.lane.b32.xlu0 %v175, 8
  %v495 = vpop.permute.xlu0 %494
  %496 = vrot.lane.b32.xlu0 %v178, 8
  %v497 = vpop.permute.xlu0 %496
  %498 = vrot.lane.b32.xlu0 %v183, 8
  %v499 = vpop.permute.xlu0 %498
  %500 = vrot.lane.b32.xlu0 %v186, 8
  %v501 = vpop.permute.xlu0 %500
  %502 = vrot.lane.b32.xlu0 %v191, 8
  %v503 = vpop.permute.xlu0 %502
  %504 = vrot.lane.b32.xlu0 %v194, 8
  %v505 = vpop.permute.xlu0 %504
  %506 = vrot.lane.b32.xlu0 %v199, 8
  %v507 = vpop.permute.xlu0 %506
  %508 = vrot.lane.b32.xlu0 %v202, 8
  %v509 = vpop.permute.xlu0 %508
  %510 = vrot.lane.b32.xlu0 %v207, 8
  %v511 = vpop.permute.xlu0 %510
  %512 = vrot.lane.b32.xlu0 %v210, 8
  %v513 = vpop.permute.xlu0 %512
  %514 = vrot.lane.b32.xlu0 %v215, 8
  %v515 = vpop.permute.xlu0 %514
  %516 = vrot.lane.b32.xlu0 %v218, 8
  %v517 = vpop.permute.xlu0 %516
  %518 = vrot.lane.b32.xlu0 %v223, 8
  %v519 = vpop.permute.xlu0 %518
  %520 = vrot.lane.b32.xlu0 %v226, 8
  %v521 = vpop.permute.xlu0 %520
  %522 = vrot.lane.b32.xlu0 %v231, 8
  %v523 = vpop.permute.xlu0 %522
  %524 = vrot.lane.b32.xlu0 %v234, 8
  %v525 = vpop.permute.xlu0 %524
  %542 = vrot.lane.b32.xlu0 %v67, 56
  %v543 = vpop.permute.xlu0 %542
  %544 = vrot.lane.b32.xlu0 %v68, 56
  %v545 = vpop.permute.xlu0 %544
  %546 = vrot.lane.b32.xlu0 %v69, 56
  %v547 = vpop.permute.xlu0 %546
  %548 = vrot.lane.b32.xlu0 %v70, 56
  %v549 = vpop.permute.xlu0 %548
  %550 = vrot.lane.b32.xlu0 %v71, 56
  %v551 = vpop.permute.xlu0 %550
  %552 = vrot.lane.b32.xlu0 %v72, 56
  %v553 = vpop.permute.xlu0 %552
  %554 = vrot.lane.b32.xlu0 %v73, 56
  %v555 = vpop.permute.xlu0 %554
  %556 = vrot.lane.b32.xlu0 %v74, 56
  %v557 = vpop.permute.xlu0 %556
  %558 = vrot.lane.b32.xlu0 %v75, 56
  %v559 = vpop.permute.xlu0 %558
  %560 = vrot.lane.b32.xlu0 %v76, 56
  %v561 = vpop.permute.xlu0 %560
  %562 = vrot.lane.b32.xlu0 %v77, 56
  %v563 = vpop.permute.xlu0 %562
  %564 = vrot.lane.b32.xlu0 %v78, 56
  %v565 = vpop.permute.xlu0 %564
  %566 = vrot.lane.b32.xlu0 %v79, 56
  %v567 = vpop.permute.xlu0 %566
  %568 = vrot.lane.b32.xlu0 %v80, 56
  %v569 = vpop.permute.xlu0 %568
  %570 = vrot.lane.b32.xlu0 %v81, 56
  %v571 = vpop.permute.xlu0 %570
  %572 = vrot.lane.b32.xlu0 %v82, 56
  %v573 = vpop.permute.xlu0 %572
  %vm590 = vcmask 195584
  %v591 = vsel %vm590, %v287, %v335
  %v592 = vsel %vm590, %v289, %v337
  %v593 = vsel %vm590, %v291, %v339
  %v594 = vsel %vm590, %v293, %v341
  %v595 = vsel %vm590, %v295, %v343
  %v596 = vsel %vm590, %v297, %v345
  %v597 = vsel %vm590, %v299, %v347
  %v598 = vsel %vm590, %v301, %v349
  %v599 = vsel %vm590, %v303, %v351
  %v600 = vsel %vm590, %v305, %v353
  %v601 = vsel %vm590, %v307, %v355
  %v602 = vsel %vm590, %v309, %v357
  %v603 = vsel %vm590, %v311, %v359
  %v604 = vsel %vm590, %v313, %v361
  %v605 = vsel %vm590, %v315, %v363
  %v606 = vsel %vm590, %v317, %v365
  %vm607 = vcmask 392192
  %v608 = vsel %vm607, %v591, %v399
  %v609 = vsel %vm607, %v592, %v401
  %v610 = vsel %vm607, %v593, %v403
  %v611 = vsel %vm607, %v594, %v405
  %v612 = vsel %vm607, %v595, %v407
  %v613 = vsel %vm607, %v596, %v409
  %v614 = vsel %vm607, %v597, %v411
  %v615 = vsel %vm607, %v598, %v413
  %v616 = vsel %vm607, %v599, %v415
  %v617 = vsel %vm607, %v600, %v417
  %v618 = vsel %vm607, %v601, %v419
  %v619 = vsel %vm607, %v602, %v421
  %v620 = vsel %vm607, %v603, %v423
  %v621 = vsel %vm607, %v604, %v425
  %v622 = vsel %vm607, %v605, %v427
  %v623 = vsel %vm607, %v606, %v429
  %vm624 = vcmask 588800
  %v625 = vsel %vm624, %v608, %v447
  %v626 = vsel %vm624, %v609, %v449
  %v627 = vsel %vm624, %v610, %v451
  %v628 = vsel %vm624, %v611, %v453
  %v629 = vsel %vm624, %v612, %v455
  %v630 = vsel %vm624, %v613, %v457
  %v631 = vsel %vm624, %v614, %v459
  %v632 = vsel %vm624, %v615, %v461
  %v633 = vsel %vm624, %v616, %v463
  %v634 = vsel %vm624, %v617, %v465
  %v635 = vsel %vm624, %v618, %v467
  %v636 = vsel %vm624, %v619, %v469
  %v637 = vsel %vm624, %v620, %v471
  %v638 = vsel %vm624, %v621, %v473
  %v639 = vsel %vm624, %v622, %v475
  %v640 = vsel %vm624, %v623, %v477
  %vm641 = vcmask 654336
  %v642 = vsel %vm641, %v625, %v495
  %v643 = vsel %vm641, %v626, %v497
  %v644 = vsel %vm641, %v627, %v499
  %v645 = vsel %vm641, %v628, %v501
  %v646 = vsel %vm641, %v629, %v503
  %v647 = vsel %vm641, %v630, %v505
  %v648 = vsel %vm641, %v631, %v507
  %v649 = vsel %vm641, %v632, %v509
  %v650 = vsel %vm641, %v633, %v511
  %v651 = vsel %vm641, %v634, %v513
  %v652 = vsel %vm641, %v635, %v515
  %v653 = vsel %vm641, %v636, %v517
  %v654 = vsel %vm641, %v637, %v519
  %v655 = vsel %vm641, %v638, %v521
  %v656 = vsel %vm641, %v639, %v523
  %v657 = vsel %vm641, %v640, %v525
  %vm658 = vcmask 719872
  %v659 = vsel %vm658, %v642, %v543
  %v660 = vsel %vm658, %v643, %v545
  %v661 = vsel %vm658, %v644, %v547
  %v662 = vsel %vm658, %v645, %v549
  %v663 = vsel %vm658, %v646, %v551
  %v664 = vsel %vm658, %v647, %v553
  %v665 = vsel %vm658, %v648, %v555
  %v666 = vsel %vm658, %v649, %v557
  %v667 = vsel %vm658, %v650, %v559
  %v668 = vsel %vm658, %v651, %v561
  %v669 = vsel %vm658, %v652, %v563
  %v670 = vsel %vm658, %v653, %v565
  %v671 = vsel %vm658, %v654, %v567
  %v672 = vsel %vm658, %v655, %v569
  %v673 = vsel %vm658, %v656, %v571
  %v674 = vsel %vm658, %v657, %v573
  %675 = vst.msk [vmem:[#allocation2 + $0x20] sm:$0xff] %vm237, %v659
  %676 = vst.msk [vmem:[#allocation2 + $0x28] sm:$0xff] %vm237, %v660
  %677 = vst.msk [vmem:[#allocation2 + $0x30] sm:$0xff] %vm237, %v661
  %678 = vst.msk [vmem:[#allocation2 + $0x38] sm:$0xff] %vm237, %v662
  %679 = vst.msk [vmem:[#allocation2 + $0x40] sm:$0xff] %vm237, %v663
  %680 = vst.msk [vmem:[#allocation2 + $0x48] sm:$0xff] %vm237, %v664
  %681 = vst.msk [vmem:[#allocation2 + $0x50] sm:$0xff] %vm237, %v665
  %682 = vst.msk [vmem:[#allocation2 + $0x58] sm:$0xff] %vm237, %v666
  %683 = vst.msk [vmem:[#allocation2 + $0xa0] sm:$0xff] %vm237, %v667
  %684 = vst.msk [vmem:[#allocation2 + $0xa8] sm:$0xff] %vm237, %v668
  %685 = vst.msk [vmem:[#allocation2 + $0xb0] sm:$0xff] %vm237, %v669
  %686 = vst.msk [vmem:[#allocation2 + $0xb8] sm:$0xff] %vm237, %v670
  %687 = vst.msk [vmem:[#allocation2 + $0xc0] sm:$0xff] %vm237, %v671
  %688 = vst.msk [vmem:[#allocation2 + $0xc8] sm:$0xff] %vm237, %v672
  %689 = vst.msk [vmem:[#allocation2 + $0xd0] sm:$0xff] %vm237, %v673
  %690 = vst.msk [vmem:[#allocation2 + $0xd8] sm:$0xff] %vm237, %v674
  %v691 = vld [vmem:[%s3] sm:$0x7f]
  %v692 = vld [vmem:[%s3 + $0x8] sm:$0x7f]
  %v693 = vld [vmem:[%s3 + $0x10] sm:$0x7f]
  %v694 = vld [vmem:[%s3 + $0x18] sm:$0x7f]
  %v695 = vld [vmem:[%s3 + $0x20] sm:$0x7f]
  %v696 = vld [vmem:[%s3 + $0x28] sm:$0x7f]
  %v697 = vld [vmem:[%s3 + $0x30] sm:$0x7f]
  %v698 = vld [vmem:[%s4] sm:$0xff]
  %v699 = vld [vmem:[%s4 + $0x8] sm:$0xff]
  %v700 = vld [vmem:[%s4 + $0x10] sm:$0xff]
  %v701 = vld [vmem:[%s4 + $0x18] sm:$0xff]
  %v702 = vld [vmem:[%s4 + $0x20] sm:$0xff]
  %v703 = vld [vmem:[%s4 + $0x28] sm:$0xff]
  %v704 = vld [vmem:[%s4 + $0x30] sm:$0xff]
  %v705 = vld [vmem:[%s4 + $0x38] sm:$0xff]
  %v706 = vld [vmem:[%s4 + $0x40] sm:$0xff]
  %v707 = vld [vmem:[%s4 + $0x48] sm:$0xff]
  %v708 = vld [vmem:[%s4 + $0x50] sm:$0xff]
  %v709 = vld [vmem:[%s4 + $0x58] sm:$0xff]
  %v710 = vld [vmem:[%s4 + $0x60] sm:$0xff]
  %v711 = vld [vmem:[%s4 + $0x68] sm:$0xff]
  %v712 = vld [vmem:[%s4 + $0x70] sm:$0xff]
  %v713 = vld [vmem:[%s4 + $0x78] sm:$0xff]
  %v714 = vld [vmem:[%s4 + $0x80] sm:$0xff]
  %v715 = vld [vmem:[%s4 + $0x88] sm:$0xff]
  %v716 = vld [vmem:[%s4 + $0x90] sm:$0xff]
  %v717 = vld [vmem:[%s4 + $0x98] sm:$0xff]
  %v718 = vld [vmem:[%s4 + $0xa0] sm:$0xff]
  %v719 = vld [vmem:[%s4 + $0xa8] sm:$0xff]
  %v720 = vld [vmem:[%s4 + $0xb0] sm:$0xff]
  %v721 = vld [vmem:[%s4 + $0xb8] sm:$0xff]
  %v722 = vld [vmem:[%s4 + $0xc0] sm:$0xff]
  %v723 = vld [vmem:[%s4 + $0xc8] sm:$0xff]
  %v724 = vld [vmem:[%s4 + $0xd0] sm:$0xff]
  %v725 = vld [vmem:[%s4 + $0xd8] sm:$0xff]
  %v726 = vld [vmem:[%s4 + $0xe0] sm:$0xff]
  %v727 = vld [vmem:[%s4 + $0xe8] sm:$0xff]
  %v728 = vld [vmem:[%s4 + $0xf0] sm:$0xff]
  %v729 = vld [vmem:[%s4 + $0xf8] sm:$0xff]
  %v730 = vld [vmem:[%s4 + $0x100] sm:$0xff]
  %v731 = vld [vmem:[%s4 + $0x108] sm:$0xff]
  %v732 = vld [vmem:[%s4 + $0x110] sm:$0xff]
  %v733 = vld [vmem:[%s4 + $0x118] sm:$0xff]
  %v734 = vld [vmem:[%s4 + $0x120] sm:$0xff]
  %v735 = vld [vmem:[%s4 + $0x128] sm:$0xff]
  %v736 = vld [vmem:[%s4 + $0x130] sm:$0xff]
  %v737 = vld [vmem:[%s4 + $0x138] sm:$0xff]
  %v738 = vld [vmem:[%s4 + $0x140] sm:$0xff]
  %v739 = vld [vmem:[%s4 + $0x148] sm:$0xff]
  %v740 = vld [vmem:[%s4 + $0x150] sm:$0xff]
  %v741 = vld [vmem:[%s4 + $0x158] sm:$0xff]
  %v742 = vld [vmem:[%s4 + $0x160] sm:$0xff]
  %v743 = vld [vmem:[%s4 + $0x168] sm:$0xff]
  %v744 = vld [vmem:[%s4 + $0x170] sm:$0xff]
  %v745 = vld [vmem:[%s4 + $0x178] sm:$0xff]
  %v746 = vld [vmem:[%s4 + $0x180] sm:$0xff]
  %v747 = vld [vmem:[%s4 + $0x188] sm:$0xff]
  %v748 = vld [vmem:[%s4 + $0x190] sm:$0xff]
  %v749 = vld [vmem:[%s4 + $0x198] sm:$0xff]
  %v750 = vld [vmem:[%s4 + $0x1a0] sm:$0xff]
  %v751 = vld [vmem:[%s4 + $0x1a8] sm:$0xff]
  %v752 = vld [vmem:[%s4 + $0x1b0] sm:$0xff]
  %v753 = vld [vmem:[%s4 + $0x1b8] sm:$0xff]
  %v754 = vld [vmem:[#allocation2 + $0x5] sm:$0xff]
  %v755 = vld [vmem:[#allocation2 + $0xd] sm:$0xff]
  %v756 = vld [vmem:[#allocation2 + $0x15] sm:$0xff]
  %v757 = vld [vmem:[#allocation2 + $0x1d] sm:$0xff]
  %v758 = vld [vmem:[#allocation2 + $0x25] sm:$0xff]
  %v759 = vld [vmem:[#allocation2 + $0x2d] sm:$0xff]
  %v760 = vld [vmem:[#allocation2 + $0x35] sm:$0xff]
  %v761 = vld [vmem:[#allocation2 + $0x3d] sm:$0xff]
  %v762 = vld [vmem:[#allocation2 + $0x85] sm:$0xff]
  %v763 = vld [vmem:[#allocation2 + $0x8d] sm:$0xff]
  %v764 = vld [vmem:[#allocation2 + $0x95] sm:$0xff]
  %v765 = vld [vmem:[#allocation2 + $0x9d] sm:$0xff]
  %v766 = vld [vmem:[#allocation2 + $0xa5] sm:$0xff]
  %v767 = vld [vmem:[#allocation2 + $0xad] sm:$0xff]
  %v768 = vld [vmem:[#allocation2 + $0xb5] sm:$0xff]
  %v769 = vld [vmem:[#allocation2 + $0xbd] sm:$0xff]
  %v770 = vlaneseq
  %v771 = vshrl.u32 %v770, 7
  %v772 = vsub.s32 0, %v771
  %v773 = vrot.slane %v691, %v772
  %v774 = vmul.f32 %v754, %v773
  %v775 = vmul.f32 %v755, %v773
  %v776 = vmul.f32 %v756, %v773
  %v777 = vmul.f32 %v757, %v773
  %v778 = vmul.f32 %v758, %v773
  %v779 = vmul.f32 %v759, %v773
  %v780 = vmul.f32 %v760, %v773
  %v781 = vmul.f32 %v761, %v773
  %v782 = vmul.f32 %v762, %v773
  %v783 = vmul.f32 %v763, %v773
  %v784 = vmul.f32 %v764, %v773
  %v785 = vmul.f32 %v765, %v773
  %v786 = vmul.f32 %v766, %v773
  %v787 = vmul.f32 %v767, %v773
  %v788 = vmul.f32 %v768, %v773
  %v789 = vmul.f32 %v769, %v773
  %v790 = vadd.f32 %v774, 0.0
  %v791 = vadd.f32 %v775, 0.0
  %v792 = vadd.f32 %v776, 0.0
  %v793 = vadd.f32 %v777, 0.0
  %v794 = vadd.f32 %v778, 0.0
  %v795 = vadd.f32 %v779, 0.0
  %v796 = vadd.f32 %v780, 0.0
  %v797 = vadd.f32 %v781, 0.0
  %v798 = vadd.f32 %v782, 0.0
  %v799 = vadd.f32 %v783, 0.0
  %v800 = vadd.f32 %v784, 0.0
  %v801 = vadd.f32 %v785, 0.0
  %v802 = vadd.f32 %v786, 0.0
  %v803 = vadd.f32 %v787, 0.0
  %v804 = vadd.f32 %v788, 0.0
  %v805 = vadd.f32 %v789, 0.0
  %v806 = vld [vmem:[#allocation2 + $0x45] sm:$0xff]
  %v807 = vld [vmem:[#allocation2 + $0xc5] sm:$0xff]
  %v808 = vlaneseq
  %v809 = vshrl.u32 %v808, 7
  %v810 = vsub.s32 0, %v809
  %v811 = vrot.slane %v692, %v810
  %v812 = vmul.f32 %v755, %v811
  %v813 = vmul.f32 %v756, %v811
  %v814 = vmul.f32 %v757, %v811
  %v815 = vmul.f32 %v758, %v811
  %v816 = vmul.f32 %v759, %v811
  %v817 = vmul.f32 %v760, %v811
  %v818 = vmul.f32 %v761, %v811
  %v819 = vmul.f32 %v806, %v811
  %v820 = vmul.f32 %v763, %v811
  %v821 = vmul.f32 %v764, %v811
  %v822 = vmul.f32 %v765, %v811
  %v823 = vmul.f32 %v766, %v811
  %v824 = vmul.f32 %v767, %v811
  %v825 = vmul.f32 %v768, %v811
  %v826 = vmul.f32 %v769, %v811
  %v827 = vmul.f32 %v807, %v811
  %v828 = vadd.f32 %v790, %v812
  %v829 = vadd.f32 %v791, %v813
  %v830 = vadd.f32 %v792, %v814
  %v831 = vadd.f32 %v793, %v815
  %v832 = vadd.f32 %v794, %v816
  %v833 = vadd.f32 %v795, %v817
  %v834 = vadd.f32 %v796, %v818
  %v835 = vadd.f32 %v797, %v819
  %v836 = vadd.f32 %v798, %v820
  %v837 = vadd.f32 %v799, %v821
  %v838 = vadd.f32 %v800, %v822
  %v839 = vadd.f32 %v801, %v823
  %v840 = vadd.f32 %v802, %v824
  %v841 = vadd.f32 %v803, %v825
  %v842 = vadd.f32 %v804, %v826
  %v843 = vadd.f32 %v805, %v827
  %v844 = vld [vmem:[#allocation2 + $0x4d] sm:$0xff]
  %v845 = vld [vmem:[#allocation2 + $0xcd] sm:$0xff]
  %v846 = vlaneseq
  %v847 = vshrl.u32 %v846, 7
  %v848 = vsub.s32 0, %v847
  %v849 = vrot.slane %v693, %v848
  %v850 = vmul.f32 %v756, %v849
  %v851 = vmul.f32 %v757, %v849
  %v852 = vmul.f32 %v758, %v849
  %v853 = vmul.f32 %v759, %v849
  %v854 = vmul.f32 %v760, %v849
  %v855 = vmul.f32 %v761, %v849
  %v856 = vmul.f32 %v806, %v849
  %v857 = vmul.f32 %v844, %v849
  %v858 = vmul.f32 %v764, %v849
  %v859 = vmul.f32 %v765, %v849
  %v860 = vmul.f32 %v766, %v849
  %v861 = vmul.f32 %v767, %v849
  %v862 = vmul.f32 %v768, %v849
  %v863 = vmul.f32 %v769, %v849
  %v864 = vmul.f32 %v807, %v849
  %v865 = vmul.f32 %v845, %v849
  %v866 = vadd.f32 %v828, %v850
  %v867 = vadd.f32 %v829, %v851
  %v868 = vadd.f32 %v830, %v852
  %v869 = vadd.f32 %v831, %v853
  %v870 = vadd.f32 %v832, %v854
  %v871 = vadd.f32 %v833, %v855
  %v872 = vadd.f32 %v834, %v856
  %v873 = vadd.f32 %v835, %v857
  %v874 = vadd.f32 %v836, %v858
  %v875 = vadd.f32 %v837, %v859
  %v876 = vadd.f32 %v838, %v860
  %v877 = vadd.f32 %v839, %v861
  %v878 = vadd.f32 %v840, %v862
  %v879 = vadd.f32 %v841, %v863
  %v880 = vadd.f32 %v842, %v864
  %v881 = vadd.f32 %v843, %v865
  %v882 = vld [vmem:[#allocation2 + $0x55] sm:$0xff]
  %v883 = vld [vmem:[#allocation2 + $0xd5] sm:$0xff]
  %v884 = vlaneseq
  %v885 = vshrl.u32 %v884, 7
  %v886 = vsub.s32 0, %v885
  %v887 = vrot.slane %v694, %v886
  %v888 = vmul.f32 %v757, %v887
  %v889 = vmul.f32 %v758, %v887
  %v890 = vmul.f32 %v759, %v887
  %v891 = vmul.f32 %v760, %v887
  %v892 = vmul.f32 %v761, %v887
  %v893 = vmul.f32 %v806, %v887
  %v894 = vmul.f32 %v844, %v887
  %v895 = vmul.f32 %v882, %v887
  %v896 = vmul.f32 %v765, %v887
  %v897 = vmul.f32 %v766, %v887
  %v898 = vmul.f32 %v767, %v887
  %v899 = vmul.f32 %v768, %v887
  %v900 = vmul.f32 %v769, %v887
  %v901 = vmul.f32 %v807, %v887
  %v902 = vmul.f32 %v845, %v887
  %v903 = vmul.f32 %v883, %v887
  %v904 = vadd.f32 %v866, %v888
  %v905 = vadd.f32 %v867, %v889
  %v906 = vadd.f32 %v868, %v890
  %v907 = vadd.f32 %v869, %v891
  %v908 = vadd.f32 %v870, %v892
  %v909 = vadd.f32 %v871, %v893
  %v910 = vadd.f32 %v872, %v894
  %v911 = vadd.f32 %v873, %v895
  %v912 = vadd.f32 %v874, %v896
  %v913 = vadd.f32 %v875, %v897
  %v914 = vadd.f32 %v876, %v898
  %v915 = vadd.f32 %v877, %v899
  %v916 = vadd.f32 %v878, %v900
  %v917 = vadd.f32 %v879, %v901
  %v918 = vadd.f32 %v880, %v902
  %v919 = vadd.f32 %v881, %v903
  %v920 = vld [vmem:[#allocation2 + $0x5d] sm:$0xff]
  %v921 = vld [vmem:[#allocation2 + $0xdd] sm:$0xff]
  %v922 = vlaneseq
  %v923 = vshrl.u32 %v922, 7
  %v924 = vsub.s32 0, %v923
  %v925 = vrot.slane %v695, %v924
  %v926 = vmul.f32 %v758, %v925
  %v927 = vmul.f32 %v759, %v925
  %v928 = vmul.f32 %v760, %v925
  %v929 = vmul.f32 %v761, %v925
  %v930 = vmul.f32 %v806, %v925
  %v931 = vmul.f32 %v844, %v925
  %v932 = vmul.f32 %v882, %v925
  %v933 = vmul.f32 %v920, %v925
  %v934 = vmul.f32 %v766, %v925
  %v935 = vmul.f32 %v767, %v925
  %v936 = vmul.f32 %v768, %v925
  %v937 = vmul.f32 %v769, %v925
  %v938 = vmul.f32 %v807, %v925
  %v939 = vmul.f32 %v845, %v925
  %v940 = vmul.f32 %v883, %v925
  %v941 = vmul.f32 %v921, %v925
  %v942 = vadd.f32 %v904, %v926
  %v943 = vadd.f32 %v905, %v927
  %v944 = vadd.f32 %v906, %v928
  %v945 = vadd.f32 %v907, %v929
  %v946 = vadd.f32 %v908, %v930
  %v947 = vadd.f32 %v909, %v931
  %v948 = vadd.f32 %v910, %v932
  %v949 = vadd.f32 %v911, %v933
  %v950 = vadd.f32 %v912, %v934
  %v951 = vadd.f32 %v913, %v935
  %v952 = vadd.f32 %v914, %v936
  %v953 = vadd.f32 %v915, %v937
  %v954 = vadd.f32 %v916, %v938
  %v955 = vadd.f32 %v917, %v939
  %v956 = vadd.f32 %v918, %v940
  %v957 = vadd.f32 %v919, %v941
  %v958 = vld [vmem:[#allocation2 + $0x65] sm:$0xff]
  %v959 = vld [vmem:[#allocation2 + $0xe5] sm:$0xff]
  %v960 = vlaneseq
  %v961 = vshrl.u32 %v960, 7
  %v962 = vsub.s32 0, %v961
  %v963 = vrot.slane %v696, %v962
  %v964 = vmul.f32 %v759, %v963
  %v965 = vmul.f32 %v760, %v963
  %v966 = vmul.f32 %v761, %v963
  %v967 = vmul.f32 %v806, %v963
  %v968 = vmul.f32 %v844, %v963
  %v969 = vmul.f32 %v882, %v963
  %v970 = vmul.f32 %v920, %v963
  %v971 = vmul.f32 %v958, %v963
  %v972 = vmul.f32 %v767, %v963
  %v973 = vmul.f32 %v768, %v963
  %v974 = vmul.f32 %v769, %v963
  %v975 = vmul.f32 %v807, %v963
  %v976 = vmul.f32 %v845, %v963
  %v977 = vmul.f32 %v883, %v963
  %v978 = vmul.f32 %v921, %v963
  %v979 = vmul.f32 %v959, %v963
  %v980 = vadd.f32 %v942, %v964
  %v981 = vadd.f32 %v943, %v965
  %v982 = vadd.f32 %v944, %v966
  %v983 = vadd.f32 %v945, %v967
  %v984 = vadd.f32 %v946, %v968
  %v985 = vadd.f32 %v947, %v969
  %v986 = vadd.f32 %v948, %v970
  %v987 = vadd.f32 %v949, %v971
  %v988 = vadd.f32 %v950, %v972
  %v989 = vadd.f32 %v951, %v973
  %v990 = vadd.f32 %v952, %v974
  %v991 = vadd.f32 %v953, %v975
  %v992 = vadd.f32 %v954, %v976
  %v993 = vadd.f32 %v955, %v977
  %v994 = vadd.f32 %v956, %v978
  %v995 = vadd.f32 %v957, %v979
  %v996 = vld [vmem:[#allocation2 + $0x6d] sm:$0xff]
  %v997 = vld [vmem:[#allocation2 + $0xed] sm:$0xff]
  %v998 = vlaneseq
  %v999 = vshrl.u32 %v998, 7
  %v1000 = vsub.s32 0, %v999
  %v1001 = vrot.slane %v697, %v1000
  %v1002 = vmul.f32 %v760, %v1001
  %v1003 = vmul.f32 %v761, %v1001
  %v1004 = vmul.f32 %v806, %v1001
  %v1005 = vmul.f32 %v844, %v1001
  %v1006 = vmul.f32 %v882, %v1001
  %v1007 = vmul.f32 %v920, %v1001
  %v1008 = vmul.f32 %v958, %v1001
  %v1009 = vmul.f32 %v996, %v1001
  %v1010 = vmul.f32 %v768, %v1001
  %v1011 = vmul.f32 %v769, %v1001
  %v1012 = vmul.f32 %v807, %v1001
  %v1013 = vmul.f32 %v845, %v1001
  %v1014 = vmul.f32 %v883, %v1001
  %v1015 = vmul.f32 %v921, %v1001
  %v1016 = vmul.f32 %v959, %v1001
  %v1017 = vmul.f32 %v997, %v1001
  %v1018 = vadd.f32 %v980, %v1002
  %v1019 = vadd.f32 %v981, %v1003
  %v1020 = vadd.f32 %v982, %v1004
  %v1021 = vadd.f32 %v983, %v1005
  %v1022 = vadd.f32 %v984, %v1006
  %v1023 = vadd.f32 %v985, %v1007
  %v1024 = vadd.f32 %v986, %v1008
  %v1025 = vadd.f32 %v987, %v1009
  %v1026 = vadd.f32 %v988, %v1010
  %v1027 = vadd.f32 %v989, %v1011
  %v1028 = vadd.f32 %v990, %v1012
  %v1029 = vadd.f32 %v991, %v1013
  %v1030 = vadd.f32 %v992, %v1014
  %v1031 = vadd.f32 %v993, %v1015
  %v1032 = vadd.f32 %v994, %v1016
  %v1033 = vadd.f32 %v995, %v1017
  %1035 = vset.pattern.permute.xlu0 0
  %1036 = vperm.xlu0 %1035, %v698
  %v1037 = vpop.permute.xlu0 %1036
  %1040 = vset.pattern.permute.xlu0 0
  %1041 = vperm.xlu0 %1040, %v699
  %v1042 = vpop.permute.xlu0 %1041
  %1045 = vset.pattern.permute.xlu0 0
  %1046 = vperm.xlu0 %1045, %v700
  %v1047 = vpop.permute.xlu0 %1046
  %1050 = vset.pattern.permute.xlu0 0
  %1051 = vperm.xlu0 %1050, %v701
  %v1052 = vpop.permute.xlu0 %1051
  %1055 = vset.pattern.permute.xlu0 0
  %1056 = vperm.xlu0 %1055, %v702
  %v1057 = vpop.permute.xlu0 %1056
  %1060 = vset.pattern.permute.xlu0 0
  %1061 = vperm.xlu0 %1060, %v703
  %v1062 = vpop.permute.xlu0 %1061
  %1065 = vset.pattern.permute.xlu0 0
  %1066 = vperm.xlu0 %1065, %v704
  %v1067 = vpop.permute.xlu0 %1066
  %1070 = vset.pattern.permute.xlu0 0
  %1071 = vperm.xlu0 %1070, %v705
  %v1072 = vpop.permute.xlu0 %1071
  %v1074 = vmul.f32 %v1018, %v1037
  %v1075 = vmul.f32 %v1019, %v1042
  %v1076 = vmul.f32 %v1020, %v1047
  %v1077 = vmul.f32 %v1021, %v1052
  %v1078 = vmul.f32 %v1022, %v1057
  %v1079 = vmul.f32 %v1023, %v1062
  %v1080 = vmul.f32 %v1024, %v1067
  %v1081 = vmul.f32 %v1025, %v1072
  %v1082 = vmul.f32 %v1026, %v1037
  %v1083 = vmul.f32 %v1027, %v1042
  %v1084 = vmul.f32 %v1028, %v1047
  %v1085 = vmul.f32 %v1029, %v1052
  %v1086 = vmul.f32 %v1030, %v1057
  %v1087 = vmul.f32 %v1031, %v1062
  %v1088 = vmul.f32 %v1032, %v1067
  %v1089 = vmul.f32 %v1033, %v1072
  %v1090 = vadd.f32 %v1074, 0.0
  %v1091 = vadd.f32 %v1075, 0.0
  %v1092 = vadd.f32 %v1076, 0.0
  %v1093 = vadd.f32 %v1077, 0.0
  %v1094 = vadd.f32 %v1078, 0.0
  %v1095 = vadd.f32 %v1079, 0.0
  %v1096 = vadd.f32 %v1080, 0.0
  %v1097 = vadd.f32 %v1081, 0.0
  %v1098 = vadd.f32 %v1082, 0.0
  %v1099 = vadd.f32 %v1083, 0.0
  %v1100 = vadd.f32 %v1084, 0.0
  %v1101 = vadd.f32 %v1085, 0.0
  %v1102 = vadd.f32 %v1086, 0.0
  %v1103 = vadd.f32 %v1087, 0.0
  %v1104 = vadd.f32 %v1088, 0.0
  %v1105 = vadd.f32 %v1089, 0.0
  %v1106 = vld [vmem:[#allocation2 + $0x6] sm:$0xff]
  %v1107 = vld [vmem:[#allocation2 + $0xe] sm:$0xff]
  %v1108 = vld [vmem:[#allocation2 + $0x16] sm:$0xff]
  %v1109 = vld [vmem:[#allocation2 + $0x1e] sm:$0xff]
  %v1110 = vld [vmem:[#allocation2 + $0x26] sm:$0xff]
  %v1111 = vld [vmem:[#allocation2 + $0x2e] sm:$0xff]
  %v1112 = vld [vmem:[#allocation2 + $0x36] sm:$0xff]
  %v1113 = vld [vmem:[#allocation2 + $0x3e] sm:$0xff]
  %v1114 = vld [vmem:[#allocation2 + $0x86] sm:$0xff]
  %v1115 = vld [vmem:[#allocation2 + $0x8e] sm:$0xff]
  %v1116 = vld [vmem:[#allocation2 + $0x96] sm:$0xff]
  %v1117 = vld [vmem:[#allocation2 + $0x9e] sm:$0xff]
  %v1118 = vld [vmem:[#allocation2 + $0xa6] sm:$0xff]
  %v1119 = vld [vmem:[#allocation2 + $0xae] sm:$0xff]
  %v1120 = vld [vmem:[#allocation2 + $0xb6] sm:$0xff]
  %v1121 = vld [vmem:[#allocation2 + $0xbe] sm:$0xff]
  %v1122 = vlaneseq
  %v1123 = vshrl.u32 %v1122, 7
  %v1124 = vsub.s32 1, %v1123
  %v1125 = vrot.slane %v691, %v1124
  %v1126 = vmul.f32 %v1106, %v1125
  %v1127 = vmul.f32 %v1107, %v1125
  %v1128 = vmul.f32 %v1108, %v1125
  %v1129 = vmul.f32 %v1109, %v1125
  %v1130 = vmul.f32 %v1110, %v1125
  %v1131 = vmul.f32 %v1111, %v1125
  %v1132 = vmul.f32 %v1112, %v1125
  %v1133 = vmul.f32 %v1113, %v1125
  %v1134 = vmul.f32 %v1114, %v1125
  %v1135 = vmul.f32 %v1115, %v1125
  %v1136 = vmul.f32 %v1116, %v1125
  %v1137 = vmul.f32 %v1117, %v1125
  %v1138 = vmul.f32 %v1118, %v1125
  %v1139 = vmul.f32 %v1119, %v1125
  %v1140 = vmul.f32 %v1120, %v1125
  %v1141 = vmul.f32 %v1121, %v1125
  %v1142 = vadd.f32 %v1126, 0.0
  %v1143 = vadd.f32 %v1127, 0.0
  %v1144 = vadd.f32 %v1128, 0.0
  %v1145 = vadd.f32 %v1129, 0.0
  %v1146 = vadd.f32 %v1130, 0.0
  %v1147 = vadd.f32 %v1131, 0.0
  %v1148 = vadd.f32 %v1132, 0.0
  %v1149 = vadd.f32 %v1133, 0.0
  %v1150 = vadd.f32 %v1134, 0.0
  %v1151 = vadd.f32 %v1135, 0.0
  %v1152 = vadd.f32 %v1136, 0.0
  %v1153 = vadd.f32 %v1137, 0.0
  %v1154 = vadd.f32 %v1138, 0.0
  %v1155 = vadd.f32 %v1139, 0.0
  %v1156 = vadd.f32 %v1140, 0.0
  %v1157 = vadd.f32 %v1141, 0.0
  %v1158 = vld [vmem:[#allocation2 + $0x46] sm:$0xff]
  %v1159 = vld [vmem:[#allocation2 + $0xc6] sm:$0xff]
  %v1160 = vlaneseq
  %v1161 = vshrl.u32 %v1160, 7
  %v1162 = vsub.s32 1, %v1161
  %v1163 = vrot.slane %v692, %v1162
  %v1164 = vmul.f32 %v1107, %v1163
  %v1165 = vmul.f32 %v1108, %v1163
  %v1166 = vmul.f32 %v1109, %v1163
  %v1167 = vmul.f32 %v1110, %v1163
  %v1168 = vmul.f32 %v1111, %v1163
  %v1169 = vmul.f32 %v1112, %v1163
  %v1170 = vmul.f32 %v1113, %v1163
  %v1171 = vmul.f32 %v1158, %v1163
  %v1172 = vmul.f32 %v1115, %v1163
  %v1173 = vmul.f32 %v1116, %v1163
  %v1174 = vmul.f32 %v1117, %v1163
  %v1175 = vmul.f32 %v1118, %v1163
  %v1176 = vmul.f32 %v1119, %v1163
  %v1177 = vmul.f32 %v1120, %v1163
  %v1178 = vmul.f32 %v1121, %v1163
  %v1179 = vmul.f32 %v1159, %v1163
  %v1180 = vadd.f32 %v1142, %v1164
  %v1181 = vadd.f32 %v1143, %v1165
  %v1182 = vadd.f32 %v1144, %v1166
  %v1183 = vadd.f32 %v1145, %v1167
  %v1184 = vadd.f32 %v1146, %v1168
  %v1185 = vadd.f32 %v1147, %v1169
  %v1186 = vadd.f32 %v1148, %v1170
  %v1187 = vadd.f32 %v1149, %v1171
  %v1188 = vadd.f32 %v1150, %v1172
  %v1189 = vadd.f32 %v1151, %v1173
  %v1190 = vadd.f32 %v1152, %v1174
  %v1191 = vadd.f32 %v1153, %v1175
  %v1192 = vadd.f32 %v1154, %v1176
  %v1193 = vadd.f32 %v1155, %v1177
  %v1194 = vadd.f32 %v1156, %v1178
  %v1195 = vadd.f32 %v1157, %v1179
  %v1196 = vld [vmem:[#allocation2 + $0x4e] sm:$0xff]
  %v1197 = vld [vmem:[#allocation2 + $0xce] sm:$0xff]
  %v1198 = vlaneseq
  %v1199 = vshrl.u32 %v1198, 7
  %v1200 = vsub.s32 1, %v1199
  %v1201 = vrot.slane %v693, %v1200
  %v1202 = vmul.f32 %v1108, %v1201
  %v1203 = vmul.f32 %v1109, %v1201
  %v1204 = vmul.f32 %v1110, %v1201
  %v1205 = vmul.f32 %v1111, %v1201
  %v1206 = vmul.f32 %v1112, %v1201
  %v1207 = vmul.f32 %v1113, %v1201
  %v1208 = vmul.f32 %v1158, %v1201
  %v1209 = vmul.f32 %v1196, %v1201
  %v1210 = vmul.f32 %v1116, %v1201
  %v1211 = vmul.f32 %v1117, %v1201
  %v1212 = vmul.f32 %v1118, %v1201
  %v1213 = vmul.f32 %v1119, %v1201
  %v1214 = vmul.f32 %v1120, %v1201
  %v1215 = vmul.f32 %v1121, %v1201
  %v1216 = vmul.f32 %v1159, %v1201
  %v1217 = vmul.f32 %v1197, %v1201
  %v1218 = vadd.f32 %v1180, %v1202
  %v1219 = vadd.f32 %v1181, %v1203
  %v1220 = vadd.f32 %v1182, %v1204
  %v1221 = vadd.f32 %v1183, %v1205
  %v1222 = vadd.f32 %v1184, %v1206
  %v1223 = vadd.f32 %v1185, %v1207
  %v1224 = vadd.f32 %v1186, %v1208
  %v1225 = vadd.f32 %v1187, %v1209
  %v1226 = vadd.f32 %v1188, %v1210
  %v1227 = vadd.f32 %v1189, %v1211
  %v1228 = vadd.f32 %v1190, %v1212
  %v1229 = vadd.f32 %v1191, %v1213
  %v1230 = vadd.f32 %v1192, %v1214
  %v1231 = vadd.f32 %v1193, %v1215
  %v1232 = vadd.f32 %v1194, %v1216
  %v1233 = vadd.f32 %v1195, %v1217
  %v1234 = vld [vmem:[#allocation2 + $0x56] sm:$0xff]
  %v1235 = vld [vmem:[#allocation2 + $0xd6] sm:$0xff]
  %v1236 = vlaneseq
  %v1237 = vshrl.u32 %v1236, 7
  %v1238 = vsub.s32 1, %v1237
  %v1239 = vrot.slane %v694, %v1238
  %v1240 = vmul.f32 %v1109, %v1239
  %v1241 = vmul.f32 %v1110, %v1239
  %v1242 = vmul.f32 %v1111, %v1239
  %v1243 = vmul.f32 %v1112, %v1239
  %v1244 = vmul.f32 %v1113, %v1239
  %v1245 = vmul.f32 %v1158, %v1239
  %v1246 = vmul.f32 %v1196, %v1239
  %v1247 = vmul.f32 %v1234, %v1239
  %v1248 = vmul.f32 %v1117, %v1239
  %v1249 = vmul.f32 %v1118, %v1239
  %v1250 = vmul.f32 %v1119, %v1239
  %v1251 = vmul.f32 %v1120, %v1239
  %v1252 = vmul.f32 %v1121, %v1239
  %v1253 = vmul.f32 %v1159, %v1239
  %v1254 = vmul.f32 %v1197, %v1239
  %v1255 = vmul.f32 %v1235, %v1239
  %v1256 = vadd.f32 %v1218, %v1240
  %v1257 = vadd.f32 %v1219, %v1241
  %v1258 = vadd.f32 %v1220, %v1242
  %v1259 = vadd.f32 %v1221, %v1243
  %v1260 = vadd.f32 %v1222, %v1244
  %v1261 = vadd.f32 %v1223, %v1245
  %v1262 = vadd.f32 %v1224, %v1246
  %v1263 = vadd.f32 %v1225, %v1247
  %v1264 = vadd.f32 %v1226, %v1248
  %v1265 = vadd.f32 %v1227, %v1249
  %v1266 = vadd.f32 %v1228, %v1250
  %v1267 = vadd.f32 %v1229, %v1251
  %v1268 = vadd.f32 %v1230, %v1252
  %v1269 = vadd.f32 %v1231, %v1253
  %v1270 = vadd.f32 %v1232, %v1254
  %v1271 = vadd.f32 %v1233, %v1255
  %v1272 = vld [vmem:[#allocation2 + $0x5e] sm:$0xff]
  %v1273 = vld [vmem:[#allocation2 + $0xde] sm:$0xff]
  %v1274 = vlaneseq
  %v1275 = vshrl.u32 %v1274, 7
  %v1276 = vsub.s32 1, %v1275
  %v1277 = vrot.slane %v695, %v1276
  %v1278 = vmul.f32 %v1110, %v1277
  %v1279 = vmul.f32 %v1111, %v1277
  %v1280 = vmul.f32 %v1112, %v1277
  %v1281 = vmul.f32 %v1113, %v1277
  %v1282 = vmul.f32 %v1158, %v1277
  %v1283 = vmul.f32 %v1196, %v1277
  %v1284 = vmul.f32 %v1234, %v1277
  %v1285 = vmul.f32 %v1272, %v1277
  %v1286 = vmul.f32 %v1118, %v1277
  %v1287 = vmul.f32 %v1119, %v1277
  %v1288 = vmul.f32 %v1120, %v1277
  %v1289 = vmul.f32 %v1121, %v1277
  %v1290 = vmul.f32 %v1159, %v1277
  %v1291 = vmul.f32 %v1197, %v1277
  %v1292 = vmul.f32 %v1235, %v1277
  %v1293 = vmul.f32 %v1273, %v1277
  %v1294 = vadd.f32 %v1256, %v1278
  %v1295 = vadd.f32 %v1257, %v1279
  %v1296 = vadd.f32 %v1258, %v1280
  %v1297 = vadd.f32 %v1259, %v1281
  %v1298 = vadd.f32 %v1260, %v1282
  %v1299 = vadd.f32 %v1261, %v1283
  %v1300 = vadd.f32 %v1262, %v1284
  %v1301 = vadd.f32 %v1263, %v1285
  %v1302 = vadd.f32 %v1264, %v1286
  %v1303 = vadd.f32 %v1265, %v1287
  %v1304 = vadd.f32 %v1266, %v1288
  %v1305 = vadd.f32 %v1267, %v1289
  %v1306 = vadd.f32 %v1268, %v1290
  %v1307 = vadd.f32 %v1269, %v1291
  %v1308 = vadd.f32 %v1270, %v1292
  %v1309 = vadd.f32 %v1271, %v1293
  %v1310 = vld [vmem:[#allocation2 + $0x66] sm:$0xff]
  %v1311 = vld [vmem:[#allocation2 + $0xe6] sm:$0xff]
  %v1312 = vlaneseq
  %v1313 = vshrl.u32 %v1312, 7
  %v1314 = vsub.s32 1, %v1313
  %v1315 = vrot.slane %v696, %v1314
  %v1316 = vmul.f32 %v1111, %v1315
  %v1317 = vmul.f32 %v1112, %v1315
  %v1318 = vmul.f32 %v1113, %v1315
  %v1319 = vmul.f32 %v1158, %v1315
  %v1320 = vmul.f32 %v1196, %v1315
  %v1321 = vmul.f32 %v1234, %v1315
  %v1322 = vmul.f32 %v1272, %v1315
  %v1323 = vmul.f32 %v1310, %v1315
  %v1324 = vmul.f32 %v1119, %v1315
  %v1325 = vmul.f32 %v1120, %v1315
  %v1326 = vmul.f32 %v1121, %v1315
  %v1327 = vmul.f32 %v1159, %v1315
  %v1328 = vmul.f32 %v1197, %v1315
  %v1329 = vmul.f32 %v1235, %v1315
  %v1330 = vmul.f32 %v1273, %v1315
  %v1331 = vmul.f32 %v1311, %v1315
  %v1332 = vadd.f32 %v1294, %v1316
  %v1333 = vadd.f32 %v1295, %v1317
  %v1334 = vadd.f32 %v1296, %v1318
  %v1335 = vadd.f32 %v1297, %v1319
  %v1336 = vadd.f32 %v1298, %v1320
  %v1337 = vadd.f32 %v1299, %v1321
  %v1338 = vadd.f32 %v1300, %v1322
  %v1339 = vadd.f32 %v1301, %v1323
  %v1340 = vadd.f32 %v1302, %v1324
  %v1341 = vadd.f32 %v1303, %v1325
  %v1342 = vadd.f32 %v1304, %v1326
  %v1343 = vadd.f32 %v1305, %v1327
  %v1344 = vadd.f32 %v1306, %v1328
  %v1345 = vadd.f32 %v1307, %v1329
  %v1346 = vadd.f32 %v1308, %v1330
  %v1347 = vadd.f32 %v1309, %v1331
  %v1348 = vld [vmem:[#allocation2 + $0x6e] sm:$0xff]
  %v1349 = vld [vmem:[#allocation2 + $0xee] sm:$0xff]
  %v1350 = vlaneseq
  %v1351 = vshrl.u32 %v1350, 7
  %v1352 = vsub.s32 1, %v1351
  %v1353 = vrot.slane %v697, %v1352
  %v1354 = vmul.f32 %v1112, %v1353
  %v1355 = vmul.f32 %v1113, %v1353
  %v1356 = vmul.f32 %v1158, %v1353
  %v1357 = vmul.f32 %v1196, %v1353
  %v1358 = vmul.f32 %v1234, %v1353
  %v1359 = vmul.f32 %v1272, %v1353
  %v1360 = vmul.f32 %v1310, %v1353
  %v1361 = vmul.f32 %v1348, %v1353
  %v1362 = vmul.f32 %v1120, %v1353
  %v1363 = vmul.f32 %v1121, %v1353
  %v1364 = vmul.f32 %v1159, %v1353
  %v1365 = vmul.f32 %v1197, %v1353
  %v1366 = vmul.f32 %v1235, %v1353
  %v1367 = vmul.f32 %v1273, %v1353
  %v1368 = vmul.f32 %v1311, %v1353
  %v1369 = vmul.f32 %v1349, %v1353
  %v1370 = vadd.f32 %v1332, %v1354
  %v1371 = vadd.f32 %v1333, %v1355
  %v1372 = vadd.f32 %v1334, %v1356
  %v1373 = vadd.f32 %v1335, %v1357
  %v1374 = vadd.f32 %v1336, %v1358
  %v1375 = vadd.f32 %v1337, %v1359
  %v1376 = vadd.f32 %v1338, %v1360
  %v1377 = vadd.f32 %v1339, %v1361
  %v1378 = vadd.f32 %v1340, %v1362
  %v1379 = vadd.f32 %v1341, %v1363
  %v1380 = vadd.f32 %v1342, %v1364
  %v1381 = vadd.f32 %v1343, %v1365
  %v1382 = vadd.f32 %v1344, %v1366
  %v1383 = vadd.f32 %v1345, %v1367
  %v1384 = vadd.f32 %v1346, %v1368
  %v1385 = vadd.f32 %v1347, %v1369
  %1387 = vset.pattern.permute.xlu0 0
  %1388 = vperm.xlu0 %1387, %v706
  %v1389 = vpop.permute.xlu0 %1388
  %1392 = vset.pattern.permute.xlu0 0
  %1393 = vperm.xlu0 %1392, %v707
  %v1394 = vpop.permute.xlu0 %1393
  %1397 = vset.pattern.permute.xlu0 0
  %1398 = vperm.xlu0 %1397, %v708
  %v1399 = vpop.permute.xlu0 %1398
  %1402 = vset.pattern.permute.xlu0 0
  %1403 = vperm.xlu0 %1402, %v709
  %v1404 = vpop.permute.xlu0 %1403
  %1407 = vset.pattern.permute.xlu0 0
  %1408 = vperm.xlu0 %1407, %v710
  %v1409 = vpop.permute.xlu0 %1408
  %1412 = vset.pattern.permute.xlu0 0
  %1413 = vperm.xlu0 %1412, %v711
  %v1414 = vpop.permute.xlu0 %1413
  %1417 = vset.pattern.permute.xlu0 0
  %1418 = vperm.xlu0 %1417, %v712
  %v1419 = vpop.permute.xlu0 %1418
  %1422 = vset.pattern.permute.xlu0 0
  %1423 = vperm.xlu0 %1422, %v713
  %v1424 = vpop.permute.xlu0 %1423
  %v1426 = vmul.f32 %v1370, %v1389
  %v1427 = vmul.f32 %v1371, %v1394
  %v1428 = vmul.f32 %v1372, %v1399
  %v1429 = vmul.f32 %v1373, %v1404
  %v1430 = vmul.f32 %v1374, %v1409
  %v1431 = vmul.f32 %v1375, %v1414
  %v1432 = vmul.f32 %v1376, %v1419
  %v1433 = vmul.f32 %v1377, %v1424
  %v1434 = vmul.f32 %v1378, %v1389
  %v1435 = vmul.f32 %v1379, %v1394
  %v1436 = vmul.f32 %v1380, %v1399
  %v1437 = vmul.f32 %v1381, %v1404
  %v1438 = vmul.f32 %v1382, %v1409
  %v1439 = vmul.f32 %v1383, %v1414
  %v1440 = vmul.f32 %v1384, %v1419
  %v1441 = vmul.f32 %v1385, %v1424
  %v1442 = vadd.f32 %v1090, %v1426
  %v1443 = vadd.f32 %v1091, %v1427
  %v1444 = vadd.f32 %v1092, %v1428
  %v1445 = vadd.f32 %v1093, %v1429
  %v1446 = vadd.f32 %v1094, %v1430
  %v1447 = vadd.f32 %v1095, %v1431
  %v1448 = vadd.f32 %v1096, %v1432
  %v1449 = vadd.f32 %v1097, %v1433
  %v1450 = vadd.f32 %v1098, %v1434
  %v1451 = vadd.f32 %v1099, %v1435
  %v1452 = vadd.f32 %v1100, %v1436
  %v1453 = vadd.f32 %v1101, %v1437
  %v1454 = vadd.f32 %v1102, %v1438
  %v1455 = vadd.f32 %v1103, %v1439
  %v1456 = vadd.f32 %v1104, %v1440
  %v1457 = vadd.f32 %v1105, %v1441
  %v1458 = vld [vmem:[#allocation2 + $0x7] sm:$0xff]
  %v1459 = vld [vmem:[#allocation2 + $0xf] sm:$0xff]
  %v1460 = vld [vmem:[#allocation2 + $0x17] sm:$0xff]
  %v1461 = vld [vmem:[#allocation2 + $0x1f] sm:$0xff]
  %v1462 = vld [vmem:[#allocation2 + $0x27] sm:$0xff]
  %v1463 = vld [vmem:[#allocation2 + $0x2f] sm:$0xff]
  %v1464 = vld [vmem:[#allocation2 + $0x37] sm:$0xff]
  %v1465 = vld [vmem:[#allocation2 + $0x3f] sm:$0xff]
  %v1466 = vld [vmem:[#allocation2 + $0x87] sm:$0xff]
  %v1467 = vld [vmem:[#allocation2 + $0x8f] sm:$0xff]
  %v1468 = vld [vmem:[#allocation2 + $0x97] sm:$0xff]
  %v1469 = vld [vmem:[#allocation2 + $0x9f] sm:$0xff]
  %v1470 = vld [vmem:[#allocation2 + $0xa7] sm:$0xff]
  %v1471 = vld [vmem:[#allocation2 + $0xaf] sm:$0xff]
  %v1472 = vld [vmem:[#allocation2 + $0xb7] sm:$0xff]
  %v1473 = vld [vmem:[#allocation2 + $0xbf] sm:$0xff]
  %v1474 = vlaneseq
  %v1475 = vshrl.u32 %v1474, 7
  %v1476 = vsub.s32 2, %v1475
  %v1477 = vrot.slane %v691, %v1476
  %v1478 = vmul.f32 %v1458, %v1477
  %v1479 = vmul.f32 %v1459, %v1477
  %v1480 = vmul.f32 %v1460, %v1477
  %v1481 = vmul.f32 %v1461, %v1477
  %v1482 = vmul.f32 %v1462, %v1477
  %v1483 = vmul.f32 %v1463, %v1477
  %v1484 = vmul.f32 %v1464, %v1477
  %v1485 = vmul.f32 %v1465, %v1477
  %v1486 = vmul.f32 %v1466, %v1477
  %v1487 = vmul.f32 %v1467, %v1477
  %v1488 = vmul.f32 %v1468, %v1477
  %v1489 = vmul.f32 %v1469, %v1477
  %v1490 = vmul.f32 %v1470, %v1477
  %v1491 = vmul.f32 %v1471, %v1477
  %v1492 = vmul.f32 %v1472, %v1477
  %v1493 = vmul.f32 %v1473, %v1477
  %v1494 = vadd.f32 %v1478, 0.0
  %v1495 = vadd.f32 %v1479, 0.0
  %v1496 = vadd.f32 %v1480, 0.0
  %v1497 = vadd.f32 %v1481, 0.0
  %v1498 = vadd.f32 %v1482, 0.0
  %v1499 = vadd.f32 %v1483, 0.0
  %v1500 = vadd.f32 %v1484, 0.0
  %v1501 = vadd.f32 %v1485, 0.0
  %v1502 = vadd.f32 %v1486, 0.0
  %v1503 = vadd.f32 %v1487, 0.0
  %v1504 = vadd.f32 %v1488, 0.0
  %v1505 = vadd.f32 %v1489, 0.0
  %v1506 = vadd.f32 %v1490, 0.0
  %v1507 = vadd.f32 %v1491, 0.0
  %v1508 = vadd.f32 %v1492, 0.0
  %v1509 = vadd.f32 %v1493, 0.0
  %v1510 = vld [vmem:[#allocation2 + $0x47] sm:$0xff]
  %v1511 = vld [vmem:[#allocation2 + $0xc7] sm:$0xff]
  %v1512 = vlaneseq
  %v1513 = vshrl.u32 %v1512, 7
  %v1514 = vsub.s32 2, %v1513
  %v1515 = vrot.slane %v692, %v1514
  %v1516 = vmul.f32 %v1459, %v1515
  %v1517 = vmul.f32 %v1460, %v1515
  %v1518 = vmul.f32 %v1461, %v1515
  %v1519 = vmul.f32 %v1462, %v1515
  %v1520 = vmul.f32 %v1463, %v1515
  %v1521 = vmul.f32 %v1464, %v1515
  %v1522 = vmul.f32 %v1465, %v1515
  %v1523 = vmul.f32 %v1510, %v1515
  %v1524 = vmul.f32 %v1467, %v1515
  %v1525 = vmul.f32 %v1468, %v1515
  %v1526 = vmul.f32 %v1469, %v1515
  %v1527 = vmul.f32 %v1470, %v1515
  %v1528 = vmul.f32 %v1471, %v1515
  %v1529 = vmul.f32 %v1472, %v1515
  %v1530 = vmul.f32 %v1473, %v1515
  %v1531 = vmul.f32 %v1511, %v1515
  %v1532 = vadd.f32 %v1494, %v1516
  %v1533 = vadd.f32 %v1495, %v1517
  %v1534 = vadd.f32 %v1496, %v1518
  %v1535 = vadd.f32 %v1497, %v1519
  %v1536 = vadd.f32 %v1498, %v1520
  %v1537 = vadd.f32 %v1499, %v1521
  %v1538 = vadd.f32 %v1500, %v1522
  %v1539 = vadd.f32 %v1501, %v1523
  %v1540 = vadd.f32 %v1502, %v1524
  %v1541 = vadd.f32 %v1503, %v1525
  %v1542 = vadd.f32 %v1504, %v1526
  %v1543 = vadd.f32 %v1505, %v1527
  %v1544 = vadd.f32 %v1506, %v1528
  %v1545 = vadd.f32 %v1507, %v1529
  %v1546 = vadd.f32 %v1508, %v1530
  %v1547 = vadd.f32 %v1509, %v1531
  %v1548 = vld [vmem:[#allocation2 + $0x4f] sm:$0xff]
  %v1549 = vld [vmem:[#allocation2 + $0xcf] sm:$0xff]
  %v1550 = vlaneseq
  %v1551 = vshrl.u32 %v1550, 7
  %v1552 = vsub.s32 2, %v1551
  %v1553 = vrot.slane %v693, %v1552
  %v1554 = vmul.f32 %v1460, %v1553
  %v1555 = vmul.f32 %v1461, %v1553
  %v1556 = vmul.f32 %v1462, %v1553
  %v1557 = vmul.f32 %v1463, %v1553
  %v1558 = vmul.f32 %v1464, %v1553
  %v1559 = vmul.f32 %v1465, %v1553
  %v1560 = vmul.f32 %v1510, %v1553
  %v1561 = vmul.f32 %v1548, %v1553
  %v1562 = vmul.f32 %v1468, %v1553
  %v1563 = vmul.f32 %v1469, %v1553
  %v1564 = vmul.f32 %v1470, %v1553
  %v1565 = vmul.f32 %v1471, %v1553
  %v1566 = vmul.f32 %v1472, %v1553
  %v1567 = vmul.f32 %v1473, %v1553
  %v1568 = vmul.f32 %v1511, %v1553
  %v1569 = vmul.f32 %v1549, %v1553
  %v1570 = vadd.f32 %v1532, %v1554
  %v1571 = vadd.f32 %v1533, %v1555
  %v1572 = vadd.f32 %v1534, %v1556
  %v1573 = vadd.f32 %v1535, %v1557
  %v1574 = vadd.f32 %v1536, %v1558
  %v1575 = vadd.f32 %v1537, %v1559
  %v1576 = vadd.f32 %v1538, %v1560
  %v1577 = vadd.f32 %v1539, %v1561
  %v1578 = vadd.f32 %v1540, %v1562
  %v1579 = vadd.f32 %v1541, %v1563
  %v1580 = vadd.f32 %v1542, %v1564
  %v1581 = vadd.f32 %v1543, %v1565
  %v1582 = vadd.f32 %v1544, %v1566
  %v1583 = vadd.f32 %v1545, %v1567
  %v1584 = vadd.f32 %v1546, %v1568
  %v1585 = vadd.f32 %v1547, %v1569
  %v1586 = vld [vmem:[#allocation2 + $0x57] sm:$0xff]
  %v1587 = vld [vmem:[#allocation2 + $0xd7] sm:$0xff]
  %v1588 = vlaneseq
  %v1589 = vshrl.u32 %v1588, 7
  %v1590 = vsub.s32 2, %v1589
  %v1591 = vrot.slane %v694, %v1590
  %v1592 = vmul.f32 %v1461, %v1591
  %v1593 = vmul.f32 %v1462, %v1591
  %v1594 = vmul.f32 %v1463, %v1591
  %v1595 = vmul.f32 %v1464, %v1591
  %v1596 = vmul.f32 %v1465, %v1591
  %v1597 = vmul.f32 %v1510, %v1591
  %v1598 = vmul.f32 %v1548, %v1591
  %v1599 = vmul.f32 %v1586, %v1591
  %v1600 = vmul.f32 %v1469, %v1591
  %v1601 = vmul.f32 %v1470, %v1591
  %v1602 = vmul.f32 %v1471, %v1591
  %v1603 = vmul.f32 %v1472, %v1591
  %v1604 = vmul.f32 %v1473, %v1591
  %v1605 = vmul.f32 %v1511, %v1591
  %v1606 = vmul.f32 %v1549, %v1591
  %v1607 = vmul.f32 %v1587, %v1591
  %v1608 = vadd.f32 %v1570, %v1592
  %v1609 = vadd.f32 %v1571, %v1593
  %v1610 = vadd.f32 %v1572, %v1594
  %v1611 = vadd.f32 %v1573, %v1595
  %v1612 = vadd.f32 %v1574, %v1596
  %v1613 = vadd.f32 %v1575, %v1597
  %v1614 = vadd.f32 %v1576, %v1598
  %v1615 = vadd.f32 %v1577, %v1599
  %v1616 = vadd.f32 %v1578, %v1600
  %v1617 = vadd.f32 %v1579, %v1601
  %v1618 = vadd.f32 %v1580, %v1602
  %v1619 = vadd.f32 %v1581, %v1603
  %v1620 = vadd.f32 %v1582, %v1604
  %v1621 = vadd.f32 %v1583, %v1605
  %v1622 = vadd.f32 %v1584, %v1606
  %v1623 = vadd.f32 %v1585, %v1607
  %v1624 = vld [vmem:[#allocation2 + $0x5f] sm:$0xff]
  %v1625 = vld [vmem:[#allocation2 + $0xdf] sm:$0xff]
  %v1626 = vlaneseq
  %v1627 = vshrl.u32 %v1626, 7
  %v1628 = vsub.s32 2, %v1627
  %v1629 = vrot.slane %v695, %v1628
  %v1630 = vmul.f32 %v1462, %v1629
  %v1631 = vmul.f32 %v1463, %v1629
  %v1632 = vmul.f32 %v1464, %v1629
  %v1633 = vmul.f32 %v1465, %v1629
  %v1634 = vmul.f32 %v1510, %v1629
  %v1635 = vmul.f32 %v1548, %v1629
  %v1636 = vmul.f32 %v1586, %v1629
  %v1637 = vmul.f32 %v1624, %v1629
  %v1638 = vmul.f32 %v1470, %v1629
  %v1639 = vmul.f32 %v1471, %v1629
  %v1640 = vmul.f32 %v1472, %v1629
  %v1641 = vmul.f32 %v1473, %v1629
  %v1642 = vmul.f32 %v1511, %v1629
  %v1643 = vmul.f32 %v1549, %v1629
  %v1644 = vmul.f32 %v1587, %v1629
  %v1645 = vmul.f32 %v1625, %v1629
  %v1646 = vadd.f32 %v1608, %v1630
  %v1647 = vadd.f32 %v1609, %v1631
  %v1648 = vadd.f32 %v1610, %v1632
  %v1649 = vadd.f32 %v1611, %v1633
  %v1650 = vadd.f32 %v1612, %v1634
  %v1651 = vadd.f32 %v1613, %v1635
  %v1652 = vadd.f32 %v1614, %v1636
  %v1653 = vadd.f32 %v1615, %v1637
  %v1654 = vadd.f32 %v1616, %v1638
  %v1655 = vadd.f32 %v1617, %v1639
  %v1656 = vadd.f32 %v1618, %v1640
  %v1657 = vadd.f32 %v1619, %v1641
  %v1658 = vadd.f32 %v1620, %v1642
  %v1659 = vadd.f32 %v1621, %v1643
  %v1660 = vadd.f32 %v1622, %v1644
  %v1661 = vadd.f32 %v1623, %v1645
  %v1662 = vld [vmem:[#allocation2 + $0x67] sm:$0xff]
  %v1663 = vld [vmem:[#allocation2 + $0xe7] sm:$0xff]
  %v1664 = vlaneseq
  %v1665 = vshrl.u32 %v1664, 7
  %v1666 = vsub.s32 2, %v1665
  %v1667 = vrot.slane %v696, %v1666
  %v1668 = vmul.f32 %v1463, %v1667
  %v1669 = vmul.f32 %v1464, %v1667
  %v1670 = vmul.f32 %v1465, %v1667
  %v1671 = vmul.f32 %v1510, %v1667
  %v1672 = vmul.f32 %v1548, %v1667
  %v1673 = vmul.f32 %v1586, %v1667
  %v1674 = vmul.f32 %v1624, %v1667
  %v1675 = vmul.f32 %v1662, %v1667
  %v1676 = vmul.f32 %v1471, %v1667
  %v1677 = vmul.f32 %v1472, %v1667
  %v1678 = vmul.f32 %v1473, %v1667
  %v1679 = vmul.f32 %v1511, %v1667
  %v1680 = vmul.f32 %v1549, %v1667
  %v1681 = vmul.f32 %v1587, %v1667
  %v1682 = vmul.f32 %v1625, %v1667
  %v1683 = vmul.f32 %v1663, %v1667
  %v1684 = vadd.f32 %v1646, %v1668
  %v1685 = vadd.f32 %v1647, %v1669
  %v1686 = vadd.f32 %v1648, %v1670
  %v1687 = vadd.f32 %v1649, %v1671
  %v1688 = vadd.f32 %v1650, %v1672
  %v1689 = vadd.f32 %v1651, %v1673
  %v1690 = vadd.f32 %v1652, %v1674
  %v1691 = vadd.f32 %v1653, %v1675
  %v1692 = vadd.f32 %v1654, %v1676
  %v1693 = vadd.f32 %v1655, %v1677
  %v1694 = vadd.f32 %v1656, %v1678
  %v1695 = vadd.f32 %v1657, %v1679
  %v1696 = vadd.f32 %v1658, %v1680
  %v1697 = vadd.f32 %v1659, %v1681
  %v1698 = vadd.f32 %v1660, %v1682
  %v1699 = vadd.f32 %v1661, %v1683
  %v1700 = vld [vmem:[#allocation2 + $0x6f] sm:$0xff]
  %v1701 = vld [vmem:[#allocation2 + $0xef] sm:$0xff]
  %v1702 = vlaneseq
  %v1703 = vshrl.u32 %v1702, 7
  %v1704 = vsub.s32 2, %v1703
  %v1705 = vrot.slane %v697, %v1704
  %v1706 = vmul.f32 %v1464, %v1705
  %v1707 = vmul.f32 %v1465, %v1705
  %v1708 = vmul.f32 %v1510, %v1705
  %v1709 = vmul.f32 %v1548, %v1705
  %v1710 = vmul.f32 %v1586, %v1705
  %v1711 = vmul.f32 %v1624, %v1705
  %v1712 = vmul.f32 %v1662, %v1705
  %v1713 = vmul.f32 %v1700, %v1705
  %v1714 = vmul.f32 %v1472, %v1705
  %v1715 = vmul.f32 %v1473, %v1705
  %v1716 = vmul.f32 %v1511, %v1705
  %v1717 = vmul.f32 %v1549, %v1705
  %v1718 = vmul.f32 %v1587, %v1705
  %v1719 = vmul.f32 %v1625, %v1705
  %v1720 = vmul.f32 %v1663, %v1705
  %v1721 = vmul.f32 %v1701, %v1705
  %v1722 = vadd.f32 %v1684, %v1706
  %v1723 = vadd.f32 %v1685, %v1707
  %v1724 = vadd.f32 %v1686, %v1708
  %v1725 = vadd.f32 %v1687, %v1709
  %v1726 = vadd.f32 %v1688, %v1710
  %v1727 = vadd.f32 %v1689, %v1711
  %v1728 = vadd.f32 %v1690, %v1712
  %v1729 = vadd.f32 %v1691, %v1713
  %v1730 = vadd.f32 %v1692, %v1714
  %v1731 = vadd.f32 %v1693, %v1715
  %v1732 = vadd.f32 %v1694, %v1716
  %v1733 = vadd.f32 %v1695, %v1717
  %v1734 = vadd.f32 %v1696, %v1718
  %v1735 = vadd.f32 %v1697, %v1719
  %v1736 = vadd.f32 %v1698, %v1720
  %v1737 = vadd.f32 %v1699, %v1721
  %1739 = vset.pattern.permute.xlu0 0
  %1740 = vperm.xlu0 %1739, %v714
  %v1741 = vpop.permute.xlu0 %1740
  %1744 = vset.pattern.permute.xlu0 0
  %1745 = vperm.xlu0 %1744, %v715
  %v1746 = vpop.permute.xlu0 %1745
  %1749 = vset.pattern.permute.xlu0 0
  %1750 = vperm.xlu0 %1749, %v716
  %v1751 = vpop.permute.xlu0 %1750
  %1754 = vset.pattern.permute.xlu0 0
  %1755 = vperm.xlu0 %1754, %v717
  %v1756 = vpop.permute.xlu0 %1755
  %1759 = vset.pattern.permute.xlu0 0
  %1760 = vperm.xlu0 %1759, %v718
  %v1761 = vpop.permute.xlu0 %1760
  %1764 = vset.pattern.permute.xlu0 0
  %1765 = vperm.xlu0 %1764, %v719
  %v1766 = vpop.permute.xlu0 %1765
  %1769 = vset.pattern.permute.xlu0 0
  %1770 = vperm.xlu0 %1769, %v720
  %v1771 = vpop.permute.xlu0 %1770
  %1774 = vset.pattern.permute.xlu0 0
  %1775 = vperm.xlu0 %1774, %v721
  %v1776 = vpop.permute.xlu0 %1775
  %v1778 = vmul.f32 %v1722, %v1741
  %v1779 = vmul.f32 %v1723, %v1746
  %v1780 = vmul.f32 %v1724, %v1751
  %v1781 = vmul.f32 %v1725, %v1756
  %v1782 = vmul.f32 %v1726, %v1761
  %v1783 = vmul.f32 %v1727, %v1766
  %v1784 = vmul.f32 %v1728, %v1771
  %v1785 = vmul.f32 %v1729, %v1776
  %v1786 = vmul.f32 %v1730, %v1741
  %v1787 = vmul.f32 %v1731, %v1746
  %v1788 = vmul.f32 %v1732, %v1751
  %v1789 = vmul.f32 %v1733, %v1756
  %v1790 = vmul.f32 %v1734, %v1761
  %v1791 = vmul.f32 %v1735, %v1766
  %v1792 = vmul.f32 %v1736, %v1771
  %v1793 = vmul.f32 %v1737, %v1776
  %v1794 = vadd.f32 %v1442, %v1778
  %v1795 = vadd.f32 %v1443, %v1779
  %v1796 = vadd.f32 %v1444, %v1780
  %v1797 = vadd.f32 %v1445, %v1781
  %v1798 = vadd.f32 %v1446, %v1782
  %v1799 = vadd.f32 %v1447, %v1783
  %v1800 = vadd.f32 %v1448, %v1784
  %v1801 = vadd.f32 %v1449, %v1785
  %v1802 = vadd.f32 %v1450, %v1786
  %v1803 = vadd.f32 %v1451, %v1787
  %v1804 = vadd.f32 %v1452, %v1788
  %v1805 = vadd.f32 %v1453, %v1789
  %v1806 = vadd.f32 %v1454, %v1790
  %v1807 = vadd.f32 %v1455, %v1791
  %v1808 = vadd.f32 %v1456, %v1792
  %v1809 = vadd.f32 %v1457, %v1793
  %v1810 = vld [vmem:[#allocation2 + $0x8] sm:$0xff]
  %v1811 = vld [vmem:[#allocation2 + $0x10] sm:$0xff]
  %v1812 = vld [vmem:[#allocation2 + $0x18] sm:$0xff]
  %v1813 = vld [vmem:[#allocation2 + $0x20] sm:$0xff]
  %v1814 = vld [vmem:[#allocation2 + $0x28] sm:$0xff]
  %v1815 = vld [vmem:[#allocation2 + $0x30] sm:$0xff]
  %v1816 = vld [vmem:[#allocation2 + $0x38] sm:$0xff]
  %v1817 = vld [vmem:[#allocation2 + $0x40] sm:$0xff]
  %v1818 = vld [vmem:[#allocation2 + $0x88] sm:$0xff]
  %v1819 = vld [vmem:[#allocation2 + $0x90] sm:$0xff]
  %v1820 = vld [vmem:[#allocation2 + $0x98] sm:$0xff]
  %v1821 = vld [vmem:[#allocation2 + $0xa0] sm:$0xff]
  %v1822 = vld [vmem:[#allocation2 + $0xa8] sm:$0xff]
  %v1823 = vld [vmem:[#allocation2 + $0xb0] sm:$0xff]
  %v1824 = vld [vmem:[#allocation2 + $0xb8] sm:$0xff]
  %v1825 = vld [vmem:[#allocation2 + $0xc0] sm:$0xff]
  %v1826 = vlaneseq
  %v1827 = vshrl.u32 %v1826, 7
  %v1828 = vsub.s32 3, %v1827
  %v1829 = vrot.slane %v691, %v1828
  %v1830 = vmul.f32 %v1810, %v1829
  %v1831 = vmul.f32 %v1811, %v1829
  %v1832 = vmul.f32 %v1812, %v1829
  %v1833 = vmul.f32 %v1813, %v1829
  %v1834 = vmul.f32 %v1814, %v1829
  %v1835 = vmul.f32 %v1815, %v1829
  %v1836 = vmul.f32 %v1816, %v1829
  %v1837 = vmul.f32 %v1817, %v1829
  %v1838 = vmul.f32 %v1818, %v1829
  %v1839 = vmul.f32 %v1819, %v1829
  %v1840 = vmul.f32 %v1820, %v1829
  %v1841 = vmul.f32 %v1821, %v1829
  %v1842 = vmul.f32 %v1822, %v1829
  %v1843 = vmul.f32 %v1823, %v1829
  %v1844 = vmul.f32 %v1824, %v1829
  %v1845 = vmul.f32 %v1825, %v1829
  %v1846 = vadd.f32 %v1830, 0.0
  %v1847 = vadd.f32 %v1831, 0.0
  %v1848 = vadd.f32 %v1832, 0.0
  %v1849 = vadd.f32 %v1833, 0.0
  %v1850 = vadd.f32 %v1834, 0.0
  %v1851 = vadd.f32 %v1835, 0.0
  %v1852 = vadd.f32 %v1836, 0.0
  %v1853 = vadd.f32 %v1837, 0.0
  %v1854 = vadd.f32 %v1838, 0.0
  %v1855 = vadd.f32 %v1839, 0.0
  %v1856 = vadd.f32 %v1840, 0.0
  %v1857 = vadd.f32 %v1841, 0.0
  %v1858 = vadd.f32 %v1842, 0.0
  %v1859 = vadd.f32 %v1843, 0.0
  %v1860 = vadd.f32 %v1844, 0.0
  %v1861 = vadd.f32 %v1845, 0.0
  %v1862 = vld [vmem:[#allocation2 + $0x48] sm:$0xff]
  %v1863 = vld [vmem:[#allocation2 + $0xc8] sm:$0xff]
  %v1864 = vlaneseq
  %v1865 = vshrl.u32 %v1864, 7
  %v1866 = vsub.s32 3, %v1865
  %v1867 = vrot.slane %v692, %v1866
  %v1868 = vmul.f32 %v1811, %v1867
  %v1869 = vmul.f32 %v1812, %v1867
  %v1870 = vmul.f32 %v1813, %v1867
  %v1871 = vmul.f32 %v1814, %v1867
  %v1872 = vmul.f32 %v1815, %v1867
  %v1873 = vmul.f32 %v1816, %v1867
  %v1874 = vmul.f32 %v1817, %v1867
  %v1875 = vmul.f32 %v1862, %v1867
  %v1876 = vmul.f32 %v1819, %v1867
  %v1877 = vmul.f32 %v1820, %v1867
  %v1878 = vmul.f32 %v1821, %v1867
  %v1879 = vmul.f32 %v1822, %v1867
  %v1880 = vmul.f32 %v1823, %v1867
  %v1881 = vmul.f32 %v1824, %v1867
  %v1882 = vmul.f32 %v1825, %v1867
  %v1883 = vmul.f32 %v1863, %v1867
  %v1884 = vadd.f32 %v1846, %v1868
  %v1885 = vadd.f32 %v1847, %v1869
  %v1886 = vadd.f32 %v1848, %v1870
  %v1887 = vadd.f32 %v1849, %v1871
  %v1888 = vadd.f32 %v1850, %v1872
  %v1889 = vadd.f32 %v1851, %v1873
  %v1890 = vadd.f32 %v1852, %v1874
  %v1891 = vadd.f32 %v1853, %v1875
  %v1892 = vadd.f32 %v1854, %v1876
  %v1893 = vadd.f32 %v1855, %v1877
  %v1894 = vadd.f32 %v1856, %v1878
  %v1895 = vadd.f32 %v1857, %v1879
  %v1896 = vadd.f32 %v1858, %v1880
  %v1897 = vadd.f32 %v1859, %v1881
  %v1898 = vadd.f32 %v1860, %v1882
  %v1899 = vadd.f32 %v1861, %v1883
  %v1900 = vld [vmem:[#allocation2 + $0x50] sm:$0xff]
  %v1901 = vld [vmem:[#allocation2 + $0xd0] sm:$0xff]
  %v1902 = vlaneseq
  %v1903 = vshrl.u32 %v1902, 7
  %v1904 = vsub.s32 3, %v1903
  %v1905 = vrot.slane %v693, %v1904
  %v1906 = vmul.f32 %v1812, %v1905
  %v1907 = vmul.f32 %v1813, %v1905
  %v1908 = vmul.f32 %v1814, %v1905
  %v1909 = vmul.f32 %v1815, %v1905
  %v1910 = vmul.f32 %v1816, %v1905
  %v1911 = vmul.f32 %v1817, %v1905
  %v1912 = vmul.f32 %v1862, %v1905
  %v1913 = vmul.f32 %v1900, %v1905
  %v1914 = vmul.f32 %v1820, %v1905
  %v1915 = vmul.f32 %v1821, %v1905
  %v1916 = vmul.f32 %v1822, %v1905
  %v1917 = vmul.f32 %v1823, %v1905
  %v1918 = vmul.f32 %v1824, %v1905
  %v1919 = vmul.f32 %v1825, %v1905
  %v1920 = vmul.f32 %v1863, %v1905
  %v1921 = vmul.f32 %v1901, %v1905
  %v1922 = vadd.f32 %v1884, %v1906
  %v1923 = vadd.f32 %v1885, %v1907
  %v1924 = vadd.f32 %v1886, %v1908
  %v1925 = vadd.f32 %v1887, %v1909
  %v1926 = vadd.f32 %v1888, %v1910
  %v1927 = vadd.f32 %v1889, %v1911
  %v1928 = vadd.f32 %v1890, %v1912
  %v1929 = vadd.f32 %v1891, %v1913
  %v1930 = vadd.f32 %v1892, %v1914
  %v1931 = vadd.f32 %v1893, %v1915
  %v1932 = vadd.f32 %v1894, %v1916
  %v1933 = vadd.f32 %v1895, %v1917
  %v1934 = vadd.f32 %v1896, %v1918
  %v1935 = vadd.f32 %v1897, %v1919
  %v1936 = vadd.f32 %v1898, %v1920
  %v1937 = vadd.f32 %v1899, %v1921
  %v1938 = vld [vmem:[#allocation2 + $0x58] sm:$0xff]
  %v1939 = vld [vmem:[#allocation2 + $0xd8] sm:$0xff]
  %v1940 = vlaneseq
  %v1941 = vshrl.u32 %v1940, 7
  %v1942 = vsub.s32 3, %v1941
  %v1943 = vrot.slane %v694, %v1942
  %v1944 = vmul.f32 %v1813, %v1943
  %v1945 = vmul.f32 %v1814, %v1943
  %v1946 = vmul.f32 %v1815, %v1943
  %v1947 = vmul.f32 %v1816, %v1943
  %v1948 = vmul.f32 %v1817, %v1943
  %v1949 = vmul.f32 %v1862, %v1943
  %v1950 = vmul.f32 %v1900, %v1943
  %v1951 = vmul.f32 %v1938, %v1943
  %v1952 = vmul.f32 %v1821, %v1943
  %v1953 = vmul.f32 %v1822, %v1943
  %v1954 = vmul.f32 %v1823, %v1943
  %v1955 = vmul.f32 %v1824, %v1943
  %v1956 = vmul.f32 %v1825, %v1943
  %v1957 = vmul.f32 %v1863, %v1943
  %v1958 = vmul.f32 %v1901, %v1943
  %v1959 = vmul.f32 %v1939, %v1943
  %v1960 = vadd.f32 %v1922, %v1944
  %v1961 = vadd.f32 %v1923, %v1945
  %v1962 = vadd.f32 %v1924, %v1946
  %v1963 = vadd.f32 %v1925, %v1947
  %v1964 = vadd.f32 %v1926, %v1948
  %v1965 = vadd.f32 %v1927, %v1949
  %v1966 = vadd.f32 %v1928, %v1950
  %v1967 = vadd.f32 %v1929, %v1951
  %v1968 = vadd.f32 %v1930, %v1952
  %v1969 = vadd.f32 %v1931, %v1953
  %v1970 = vadd.f32 %v1932, %v1954
  %v1971 = vadd.f32 %v1933, %v1955
  %v1972 = vadd.f32 %v1934, %v1956
  %v1973 = vadd.f32 %v1935, %v1957
  %v1974 = vadd.f32 %v1936, %v1958
  %v1975 = vadd.f32 %v1937, %v1959
  %v1976 = vld [vmem:[#allocation2 + $0x60] sm:$0xff]
  %v1977 = vld [vmem:[#allocation2 + $0xe0] sm:$0xff]
  %v1978 = vlaneseq
  %v1979 = vshrl.u32 %v1978, 7
  %v1980 = vsub.s32 3, %v1979
  %v1981 = vrot.slane %v695, %v1980
  %v1982 = vmul.f32 %v1814, %v1981
  %v1983 = vmul.f32 %v1815, %v1981
  %v1984 = vmul.f32 %v1816, %v1981
  %v1985 = vmul.f32 %v1817, %v1981
  %v1986 = vmul.f32 %v1862, %v1981
  %v1987 = vmul.f32 %v1900, %v1981
  %v1988 = vmul.f32 %v1938, %v1981
  %v1989 = vmul.f32 %v1976, %v1981
  %v1990 = vmul.f32 %v1822, %v1981
  %v1991 = vmul.f32 %v1823, %v1981
  %v1992 = vmul.f32 %v1824, %v1981
  %v1993 = vmul.f32 %v1825, %v1981
  %v1994 = vmul.f32 %v1863, %v1981
  %v1995 = vmul.f32 %v1901, %v1981
  %v1996 = vmul.f32 %v1939, %v1981
  %v1997 = vmul.f32 %v1977, %v1981
  %v1998 = vadd.f32 %v1960, %v1982
  %v1999 = vadd.f32 %v1961, %v1983
  %v2000 = vadd.f32 %v1962, %v1984
  %v2001 = vadd.f32 %v1963, %v1985
  %v2002 = vadd.f32 %v1964, %v1986
  %v2003 = vadd.f32 %v1965, %v1987
  %v2004 = vadd.f32 %v1966, %v1988
  %v2005 = vadd.f32 %v1967, %v1989
  %v2006 = vadd.f32 %v1968, %v1990
  %v2007 = vadd.f32 %v1969, %v1991
  %v2008 = vadd.f32 %v1970, %v1992
  %v2009 = vadd.f32 %v1971, %v1993
  %v2010 = vadd.f32 %v1972, %v1994
  %v2011 = vadd.f32 %v1973, %v1995
  %v2012 = vadd.f32 %v1974, %v1996
  %v2013 = vadd.f32 %v1975, %v1997
  %v2014 = vld [vmem:[#allocation2 + $0x68] sm:$0xff]
  %v2015 = vld [vmem:[#allocation2 + $0xe8] sm:$0xff]
  %v2016 = vlaneseq
  %v2017 = vshrl.u32 %v2016, 7
  %v2018 = vsub.s32 3, %v2017
  %v2019 = vrot.slane %v696, %v2018
  %v2020 = vmul.f32 %v1815, %v2019
  %v2021 = vmul.f32 %v1816, %v2019
  %v2022 = vmul.f32 %v1817, %v2019
  %v2023 = vmul.f32 %v1862, %v2019
  %v2024 = vmul.f32 %v1900, %v2019
  %v2025 = vmul.f32 %v1938, %v2019
  %v2026 = vmul.f32 %v1976, %v2019
  %v2027 = vmul.f32 %v2014, %v2019
  %v2028 = vmul.f32 %v1823, %v2019
  %v2029 = vmul.f32 %v1824, %v2019
  %v2030 = vmul.f32 %v1825, %v2019
  %v2031 = vmul.f32 %v1863, %v2019
  %v2032 = vmul.f32 %v1901, %v2019
  %v2033 = vmul.f32 %v1939, %v2019
  %v2034 = vmul.f32 %v1977, %v2019
  %v2035 = vmul.f32 %v2015, %v2019
  %v2036 = vadd.f32 %v1998, %v2020
  %v2037 = vadd.f32 %v1999, %v2021
  %v2038 = vadd.f32 %v2000, %v2022
  %v2039 = vadd.f32 %v2001, %v2023
  %v2040 = vadd.f32 %v2002, %v2024
  %v2041 = vadd.f32 %v2003, %v2025
  %v2042 = vadd.f32 %v2004, %v2026
  %v2043 = vadd.f32 %v2005, %v2027
  %v2044 = vadd.f32 %v2006, %v2028
  %v2045 = vadd.f32 %v2007, %v2029
  %v2046 = vadd.f32 %v2008, %v2030
  %v2047 = vadd.f32 %v2009, %v2031
  %v2048 = vadd.f32 %v2010, %v2032
  %v2049 = vadd.f32 %v2011, %v2033
  %v2050 = vadd.f32 %v2012, %v2034
  %v2051 = vadd.f32 %v2013, %v2035
  %v2052 = vld [vmem:[#allocation2 + $0x70] sm:$0xff]
  %v2053 = vld [vmem:[#allocation2 + $0xf0] sm:$0xff]
  %v2054 = vlaneseq
  %v2055 = vshrl.u32 %v2054, 7
  %v2056 = vsub.s32 3, %v2055
  %v2057 = vrot.slane %v697, %v2056
  %v2058 = vmul.f32 %v1816, %v2057
  %v2059 = vmul.f32 %v1817, %v2057
  %v2060 = vmul.f32 %v1862, %v2057
  %v2061 = vmul.f32 %v1900, %v2057
  %v2062 = vmul.f32 %v1938, %v2057
  %v2063 = vmul.f32 %v1976, %v2057
  %v2064 = vmul.f32 %v2014, %v2057
  %v2065 = vmul.f32 %v2052, %v2057
  %v2066 = vmul.f32 %v1824, %v2057
  %v2067 = vmul.f32 %v1825, %v2057
  %v2068 = vmul.f32 %v1863, %v2057
  %v2069 = vmul.f32 %v1901, %v2057
  %v2070 = vmul.f32 %v1939, %v2057
  %v2071 = vmul.f32 %v1977, %v2057
  %v2072 = vmul.f32 %v2015, %v2057
  %v2073 = vmul.f32 %v2053, %v2057
  %v2074 = vadd.f32 %v2036, %v2058
  %v2075 = vadd.f32 %v2037, %v2059
  %v2076 = vadd.f32 %v2038, %v2060
  %v2077 = vadd.f32 %v2039, %v2061
  %v2078 = vadd.f32 %v2040, %v2062
  %v2079 = vadd.f32 %v2041, %v2063
  %v2080 = vadd.f32 %v2042, %v2064
  %v2081 = vadd.f32 %v2043, %v2065
  %v2082 = vadd.f32 %v2044, %v2066
  %v2083 = vadd.f32 %v2045, %v2067
  %v2084 = vadd.f32 %v2046, %v2068
  %v2085 = vadd.f32 %v2047, %v2069
  %v2086 = vadd.f32 %v2048, %v2070
  %v2087 = vadd.f32 %v2049, %v2071
  %v2088 = vadd.f32 %v2050, %v2072
  %v2089 = vadd.f32 %v2051, %v2073
  %2091 = vset.pattern.permute.xlu0 0
  %2092 = vperm.xlu0 %2091, %v722
  %v2093 = vpop.permute.xlu0 %2092
  %2096 = vset.pattern.permute.xlu0 0
  %2097 = vperm.xlu0 %2096, %v723
  %v2098 = vpop.permute.xlu0 %2097
  %2101 = vset.pattern.permute.xlu0 0
  %2102 = vperm.xlu0 %2101, %v724
  %v2103 = vpop.permute.xlu0 %2102
  %2106 = vset.pattern.permute.xlu0 0
  %2107 = vperm.xlu0 %2106, %v725
  %v2108 = vpop.permute.xlu0 %2107
  %2111 = vset.pattern.permute.xlu0 0
  %2112 = vperm.xlu0 %2111, %v726
  %v2113 = vpop.permute.xlu0 %2112
  %2116 = vset.pattern.permute.xlu0 0
  %2117 = vperm.xlu0 %2116, %v727
  %v2118 = vpop.permute.xlu0 %2117
  %2121 = vset.pattern.permute.xlu0 0
  %2122 = vperm.xlu0 %2121, %v728
  %v2123 = vpop.permute.xlu0 %2122
  %2126 = vset.pattern.permute.xlu0 0
  %2127 = vperm.xlu0 %2126, %v729
  %v2128 = vpop.permute.xlu0 %2127
  %v2130 = vmul.f32 %v2074, %v2093
  %v2131 = vmul.f32 %v2075, %v2098
  %v2132 = vmul.f32 %v2076, %v2103
  %v2133 = vmul.f32 %v2077, %v2108
  %v2134 = vmul.f32 %v2078, %v2113
  %v2135 = vmul.f32 %v2079, %v2118
  %v2136 = vmul.f32 %v2080, %v2123
  %v2137 = vmul.f32 %v2081, %v2128
  %v2138 = vmul.f32 %v2082, %v2093
  %v2139 = vmul.f32 %v2083, %v2098
  %v2140 = vmul.f32 %v2084, %v2103
  %v2141 = vmul.f32 %v2085, %v2108
  %v2142 = vmul.f32 %v2086, %v2113
  %v2143 = vmul.f32 %v2087, %v2118
  %v2144 = vmul.f32 %v2088, %v2123
  %v2145 = vmul.f32 %v2089, %v2128
  %v2146 = vadd.f32 %v1794, %v2130
  %v2147 = vadd.f32 %v1795, %v2131
  %v2148 = vadd.f32 %v1796, %v2132
  %v2149 = vadd.f32 %v1797, %v2133
  %v2150 = vadd.f32 %v1798, %v2134
  %v2151 = vadd.f32 %v1799, %v2135
  %v2152 = vadd.f32 %v1800, %v2136
  %v2153 = vadd.f32 %v1801, %v2137
  %v2154 = vadd.f32 %v1802, %v2138
  %v2155 = vadd.f32 %v1803, %v2139
  %v2156 = vadd.f32 %v1804, %v2140
  %v2157 = vadd.f32 %v1805, %v2141
  %v2158 = vadd.f32 %v1806, %v2142
  %v2159 = vadd.f32 %v1807, %v2143
  %v2160 = vadd.f32 %v1808, %v2144
  %v2161 = vadd.f32 %v1809, %v2145
  %v2162 = vld [vmem:[#allocation2 + $0x9] sm:$0xff]
  %v2163 = vld [vmem:[#allocation2 + $0x11] sm:$0xff]
  %v2164 = vld [vmem:[#allocation2 + $0x19] sm:$0xff]
  %v2165 = vld [vmem:[#allocation2 + $0x21] sm:$0xff]
  %v2166 = vld [vmem:[#allocation2 + $0x29] sm:$0xff]
  %v2167 = vld [vmem:[#allocation2 + $0x31] sm:$0xff]
  %v2168 = vld [vmem:[#allocation2 + $0x39] sm:$0xff]
  %v2169 = vld [vmem:[#allocation2 + $0x41] sm:$0xff]
  %v2170 = vld [vmem:[#allocation2 + $0x89] sm:$0xff]
  %v2171 = vld [vmem:[#allocation2 + $0x91] sm:$0xff]
  %v2172 = vld [vmem:[#allocation2 + $0x99] sm:$0xff]
  %v2173 = vld [vmem:[#allocation2 + $0xa1] sm:$0xff]
  %v2174 = vld [vmem:[#allocation2 + $0xa9] sm:$0xff]
  %v2175 = vld [vmem:[#allocation2 + $0xb1] sm:$0xff]
  %v2176 = vld [vmem:[#allocation2 + $0xb9] sm:$0xff]
  %v2177 = vld [vmem:[#allocation2 + $0xc1] sm:$0xff]
  %v2178 = vlaneseq
  %v2179 = vshrl.u32 %v2178, 7
  %v2180 = vsub.s32 4, %v2179
  %v2181 = vrot.slane %v691, %v2180
  %v2182 = vmul.f32 %v2162, %v2181
  %v2183 = vmul.f32 %v2163, %v2181
  %v2184 = vmul.f32 %v2164, %v2181
  %v2185 = vmul.f32 %v2165, %v2181
  %v2186 = vmul.f32 %v2166, %v2181
  %v2187 = vmul.f32 %v2167, %v2181
  %v2188 = vmul.f32 %v2168, %v2181
  %v2189 = vmul.f32 %v2169, %v2181
  %v2190 = vmul.f32 %v2170, %v2181
  %v2191 = vmul.f32 %v2171, %v2181
  %v2192 = vmul.f32 %v2172, %v2181
  %v2193 = vmul.f32 %v2173, %v2181
  %v2194 = vmul.f32 %v2174, %v2181
  %v2195 = vmul.f32 %v2175, %v2181
  %v2196 = vmul.f32 %v2176, %v2181
  %v2197 = vmul.f32 %v2177, %v2181
  %v2198 = vadd.f32 %v2182, 0.0
  %v2199 = vadd.f32 %v2183, 0.0
  %v2200 = vadd.f32 %v2184, 0.0
  %v2201 = vadd.f32 %v2185, 0.0
  %v2202 = vadd.f32 %v2186, 0.0
  %v2203 = vadd.f32 %v2187, 0.0
  %v2204 = vadd.f32 %v2188, 0.0
  %v2205 = vadd.f32 %v2189, 0.0
  %v2206 = vadd.f32 %v2190, 0.0
  %v2207 = vadd.f32 %v2191, 0.0
  %v2208 = vadd.f32 %v2192, 0.0
  %v2209 = vadd.f32 %v2193, 0.0
  %v2210 = vadd.f32 %v2194, 0.0
  %v2211 = vadd.f32 %v2195, 0.0
  %v2212 = vadd.f32 %v2196, 0.0
  %v2213 = vadd.f32 %v2197, 0.0
  %v2214 = vld [vmem:[#allocation2 + $0x49] sm:$0xff]
  %v2215 = vld [vmem:[#allocation2 + $0xc9] sm:$0xff]
  %v2216 = vlaneseq
  %v2217 = vshrl.u32 %v2216, 7
  %v2218 = vsub.s32 4, %v2217
  %v2219 = vrot.slane %v692, %v2218
  %v2220 = vmul.f32 %v2163, %v2219
  %v2221 = vmul.f32 %v2164, %v2219
  %v2222 = vmul.f32 %v2165, %v2219
  %v2223 = vmul.f32 %v2166, %v2219
  %v2224 = vmul.f32 %v2167, %v2219
  %v2225 = vmul.f32 %v2168, %v2219
  %v2226 = vmul.f32 %v2169, %v2219
  %v2227 = vmul.f32 %v2214, %v2219
  %v2228 = vmul.f32 %v2171, %v2219
  %v2229 = vmul.f32 %v2172, %v2219
  %v2230 = vmul.f32 %v2173, %v2219
  %v2231 = vmul.f32 %v2174, %v2219
  %v2232 = vmul.f32 %v2175, %v2219
  %v2233 = vmul.f32 %v2176, %v2219
  %v2234 = vmul.f32 %v2177, %v2219
  %v2235 = vmul.f32 %v2215, %v2219
  %v2236 = vadd.f32 %v2198, %v2220
  %v2237 = vadd.f32 %v2199, %v2221
  %v2238 = vadd.f32 %v2200, %v2222
  %v2239 = vadd.f32 %v2201, %v2223
  %v2240 = vadd.f32 %v2202, %v2224
  %v2241 = vadd.f32 %v2203, %v2225
  %v2242 = vadd.f32 %v2204, %v2226
  %v2243 = vadd.f32 %v2205, %v2227
  %v2244 = vadd.f32 %v2206, %v2228
  %v2245 = vadd.f32 %v2207, %v2229
  %v2246 = vadd.f32 %v2208, %v2230
  %v2247 = vadd.f32 %v2209, %v2231
  %v2248 = vadd.f32 %v2210, %v2232
  %v2249 = vadd.f32 %v2211, %v2233
  %v2250 = vadd.f32 %v2212, %v2234
  %v2251 = vadd.f32 %v2213, %v2235
  %v2252 = vld [vmem:[#allocation2 + $0x51] sm:$0xff]
  %v2253 = vld [vmem:[#allocation2 + $0xd1] sm:$0xff]
  %v2254 = vlaneseq
  %v2255 = vshrl.u32 %v2254, 7
  %v2256 = vsub.s32 4, %v2255
  %v2257 = vrot.slane %v693, %v2256
  %v2258 = vmul.f32 %v2164, %v2257
  %v2259 = vmul.f32 %v2165, %v2257
  %v2260 = vmul.f32 %v2166, %v2257
  %v2261 = vmul.f32 %v2167, %v2257
  %v2262 = vmul.f32 %v2168, %v2257
  %v2263 = vmul.f32 %v2169, %v2257
  %v2264 = vmul.f32 %v2214, %v2257
  %v2265 = vmul.f32 %v2252, %v2257
  %v2266 = vmul.f32 %v2172, %v2257
  %v2267 = vmul.f32 %v2173, %v2257
  %v2268 = vmul.f32 %v2174, %v2257
  %v2269 = vmul.f32 %v2175, %v2257
  %v2270 = vmul.f32 %v2176, %v2257
  %v2271 = vmul.f32 %v2177, %v2257
  %v2272 = vmul.f32 %v2215, %v2257
  %v2273 = vmul.f32 %v2253, %v2257
  %v2274 = vadd.f32 %v2236, %v2258
  %v2275 = vadd.f32 %v2237, %v2259
  %v2276 = vadd.f32 %v2238, %v2260
  %v2277 = vadd.f32 %v2239, %v2261
  %v2278 = vadd.f32 %v2240, %v2262
  %v2279 = vadd.f32 %v2241, %v2263
  %v2280 = vadd.f32 %v2242, %v2264
  %v2281 = vadd.f32 %v2243, %v2265
  %v2282 = vadd.f32 %v2244, %v2266
  %v2283 = vadd.f32 %v2245, %v2267
  %v2284 = vadd.f32 %v2246, %v2268
  %v2285 = vadd.f32 %v2247, %v2269
  %v2286 = vadd.f32 %v2248, %v2270
  %v2287 = vadd.f32 %v2249, %v2271
  %v2288 = vadd.f32 %v2250, %v2272
  %v2289 = vadd.f32 %v2251, %v2273
  %v2290 = vld [vmem:[#allocation2 + $0x59] sm:$0xff]
  %v2291 = vld [vmem:[#allocation2 + $0xd9] sm:$0xff]
  %v2292 = vlaneseq
  %v2293 = vshrl.u32 %v2292, 7
  %v2294 = vsub.s32 4, %v2293
  %v2295 = vrot.slane %v694, %v2294
  %v2296 = vmul.f32 %v2165, %v2295
  %v2297 = vmul.f32 %v2166, %v2295
  %v2298 = vmul.f32 %v2167, %v2295
  %v2299 = vmul.f32 %v2168, %v2295
  %v2300 = vmul.f32 %v2169, %v2295
  %v2301 = vmul.f32 %v2214, %v2295
  %v2302 = vmul.f32 %v2252, %v2295
  %v2303 = vmul.f32 %v2290, %v2295
  %v2304 = vmul.f32 %v2173, %v2295
  %v2305 = vmul.f32 %v2174, %v2295
  %v2306 = vmul.f32 %v2175, %v2295
  %v2307 = vmul.f32 %v2176, %v2295
  %v2308 = vmul.f32 %v2177, %v2295
  %v2309 = vmul.f32 %v2215, %v2295
  %v2310 = vmul.f32 %v2253, %v2295
  %v2311 = vmul.f32 %v2291, %v2295
  %v2312 = vadd.f32 %v2274, %v2296
  %v2313 = vadd.f32 %v2275, %v2297
  %v2314 = vadd.f32 %v2276, %v2298
  %v2315 = vadd.f32 %v2277, %v2299
  %v2316 = vadd.f32 %v2278, %v2300
  %v2317 = vadd.f32 %v2279, %v2301
  %v2318 = vadd.f32 %v2280, %v2302
  %v2319 = vadd.f32 %v2281, %v2303
  %v2320 = vadd.f32 %v2282, %v2304
  %v2321 = vadd.f32 %v2283, %v2305
  %v2322 = vadd.f32 %v2284, %v2306
  %v2323 = vadd.f32 %v2285, %v2307
  %v2324 = vadd.f32 %v2286, %v2308
  %v2325 = vadd.f32 %v2287, %v2309
  %v2326 = vadd.f32 %v2288, %v2310
  %v2327 = vadd.f32 %v2289, %v2311
  %v2328 = vld [vmem:[#allocation2 + $0x61] sm:$0xff]
  %v2329 = vld [vmem:[#allocation2 + $0xe1] sm:$0xff]
  %v2330 = vlaneseq
  %v2331 = vshrl.u32 %v2330, 7
  %v2332 = vsub.s32 4, %v2331
  %v2333 = vrot.slane %v695, %v2332
  %v2334 = vmul.f32 %v2166, %v2333
  %v2335 = vmul.f32 %v2167, %v2333
  %v2336 = vmul.f32 %v2168, %v2333
  %v2337 = vmul.f32 %v2169, %v2333
  %v2338 = vmul.f32 %v2214, %v2333
  %v2339 = vmul.f32 %v2252, %v2333
  %v2340 = vmul.f32 %v2290, %v2333
  %v2341 = vmul.f32 %v2328, %v2333
  %v2342 = vmul.f32 %v2174, %v2333
  %v2343 = vmul.f32 %v2175, %v2333
  %v2344 = vmul.f32 %v2176, %v2333
  %v2345 = vmul.f32 %v2177, %v2333
  %v2346 = vmul.f32 %v2215, %v2333
  %v2347 = vmul.f32 %v2253, %v2333
  %v2348 = vmul.f32 %v2291, %v2333
  %v2349 = vmul.f32 %v2329, %v2333
  %v2350 = vadd.f32 %v2312, %v2334
  %v2351 = vadd.f32 %v2313, %v2335
  %v2352 = vadd.f32 %v2314, %v2336
  %v2353 = vadd.f32 %v2315, %v2337
  %v2354 = vadd.f32 %v2316, %v2338
  %v2355 = vadd.f32 %v2317, %v2339
  %v2356 = vadd.f32 %v2318, %v2340
  %v2357 = vadd.f32 %v2319, %v2341
  %v2358 = vadd.f32 %v2320, %v2342
  %v2359 = vadd.f32 %v2321, %v2343
  %v2360 = vadd.f32 %v2322, %v2344
  %v2361 = vadd.f32 %v2323, %v2345
  %v2362 = vadd.f32 %v2324, %v2346
  %v2363 = vadd.f32 %v2325, %v2347
  %v2364 = vadd.f32 %v2326, %v2348
  %v2365 = vadd.f32 %v2327, %v2349
  %v2366 = vld [vmem:[#allocation2 + $0x69] sm:$0xff]
  %v2367 = vld [vmem:[#allocation2 + $0xe9] sm:$0xff]
  %v2368 = vlaneseq
  %v2369 = vshrl.u32 %v2368, 7
  %v2370 = vsub.s32 4, %v2369
  %v2371 = vrot.slane %v696, %v2370
  %v2372 = vmul.f32 %v2167, %v2371
  %v2373 = vmul.f32 %v2168, %v2371
  %v2374 = vmul.f32 %v2169, %v2371
  %v2375 = vmul.f32 %v2214, %v2371
  %v2376 = vmul.f32 %v2252, %v2371
  %v2377 = vmul.f32 %v2290, %v2371
  %v2378 = vmul.f32 %v2328, %v2371
  %v2379 = vmul.f32 %v2366, %v2371
  %v2380 = vmul.f32 %v2175, %v2371
  %v2381 = vmul.f32 %v2176, %v2371
  %v2382 = vmul.f32 %v2177, %v2371
  %v2383 = vmul.f32 %v2215, %v2371
  %v2384 = vmul.f32 %v2253, %v2371
  %v2385 = vmul.f32 %v2291, %v2371
  %v2386 = vmul.f32 %v2329, %v2371
  %v2387 = vmul.f32 %v2367, %v2371
  %v2388 = vadd.f32 %v2350, %v2372
  %v2389 = vadd.f32 %v2351, %v2373
  %v2390 = vadd.f32 %v2352, %v2374
  %v2391 = vadd.f32 %v2353, %v2375
  %v2392 = vadd.f32 %v2354, %v2376
  %v2393 = vadd.f32 %v2355, %v2377
  %v2394 = vadd.f32 %v2356, %v2378
  %v2395 = vadd.f32 %v2357, %v2379
  %v2396 = vadd.f32 %v2358, %v2380
  %v2397 = vadd.f32 %v2359, %v2381
  %v2398 = vadd.f32 %v2360, %v2382
  %v2399 = vadd.f32 %v2361, %v2383
  %v2400 = vadd.f32 %v2362, %v2384
  %v2401 = vadd.f32 %v2363, %v2385
  %v2402 = vadd.f32 %v2364, %v2386
  %v2403 = vadd.f32 %v2365, %v2387
  %v2404 = vld [vmem:[#allocation2 + $0x71] sm:$0xff]
  %v2405 = vld [vmem:[#allocation2 + $0xf1] sm:$0xff]
  %v2406 = vlaneseq
  %v2407 = vshrl.u32 %v2406, 7
  %v2408 = vsub.s32 4, %v2407
  %v2409 = vrot.slane %v697, %v2408
  %v2410 = vmul.f32 %v2168, %v2409
  %v2411 = vmul.f32 %v2169, %v2409
  %v2412 = vmul.f32 %v2214, %v2409
  %v2413 = vmul.f32 %v2252, %v2409
  %v2414 = vmul.f32 %v2290, %v2409
  %v2415 = vmul.f32 %v2328, %v2409
  %v2416 = vmul.f32 %v2366, %v2409
  %v2417 = vmul.f32 %v2404, %v2409
  %v2418 = vmul.f32 %v2176, %v2409
  %v2419 = vmul.f32 %v2177, %v2409
  %v2420 = vmul.f32 %v2215, %v2409
  %v2421 = vmul.f32 %v2253, %v2409
  %v2422 = vmul.f32 %v2291, %v2409
  %v2423 = vmul.f32 %v2329, %v2409
  %v2424 = vmul.f32 %v2367, %v2409
  %v2425 = vmul.f32 %v2405, %v2409
  %v2426 = vadd.f32 %v2388, %v2410
  %v2427 = vadd.f32 %v2389, %v2411
  %v2428 = vadd.f32 %v2390, %v2412
  %v2429 = vadd.f32 %v2391, %v2413
  %v2430 = vadd.f32 %v2392, %v2414
  %v2431 = vadd.f32 %v2393, %v2415
  %v2432 = vadd.f32 %v2394, %v2416
  %v2433 = vadd.f32 %v2395, %v2417
  %v2434 = vadd.f32 %v2396, %v2418
  %v2435 = vadd.f32 %v2397, %v2419
  %v2436 = vadd.f32 %v2398, %v2420
  %v2437 = vadd.f32 %v2399, %v2421
  %v2438 = vadd.f32 %v2400, %v2422
  %v2439 = vadd.f32 %v2401, %v2423
  %v2440 = vadd.f32 %v2402, %v2424
  %v2441 = vadd.f32 %v2403, %v2425
  %2443 = vset.pattern.permute.xlu0 0
  %2444 = vperm.xlu0 %2443, %v730
  %v2445 = vpop.permute.xlu0 %2444
  %2448 = vset.pattern.permute.xlu0 0
  %2449 = vperm.xlu0 %2448, %v731
  %v2450 = vpop.permute.xlu0 %2449
  %2453 = vset.pattern.permute.xlu0 0
  %2454 = vperm.xlu0 %2453, %v732
  %v2455 = vpop.permute.xlu0 %2454
  %2458 = vset.pattern.permute.xlu0 0
  %2459 = vperm.xlu0 %2458, %v733
  %v2460 = vpop.permute.xlu0 %2459
  %2463 = vset.pattern.permute.xlu0 0
  %2464 = vperm.xlu0 %2463, %v734
  %v2465 = vpop.permute.xlu0 %2464
  %2468 = vset.pattern.permute.xlu0 0
  %2469 = vperm.xlu0 %2468, %v735
  %v2470 = vpop.permute.xlu0 %2469
  %2473 = vset.pattern.permute.xlu0 0
  %2474 = vperm.xlu0 %2473, %v736
  %v2475 = vpop.permute.xlu0 %2474
  %2478 = vset.pattern.permute.xlu0 0
  %2479 = vperm.xlu0 %2478, %v737
  %v2480 = vpop.permute.xlu0 %2479
  %v2482 = vmul.f32 %v2426, %v2445
  %v2483 = vmul.f32 %v2427, %v2450
  %v2484 = vmul.f32 %v2428, %v2455
  %v2485 = vmul.f32 %v2429, %v2460
  %v2486 = vmul.f32 %v2430, %v2465
  %v2487 = vmul.f32 %v2431, %v2470
  %v2488 = vmul.f32 %v2432, %v2475
  %v2489 = vmul.f32 %v2433, %v2480
  %v2490 = vmul.f32 %v2434, %v2445
  %v2491 = vmul.f32 %v2435, %v2450
  %v2492 = vmul.f32 %v2436, %v2455
  %v2493 = vmul.f32 %v2437, %v2460
  %v2494 = vmul.f32 %v2438, %v2465
  %v2495 = vmul.f32 %v2439, %v2470
  %v2496 = vmul.f32 %v2440, %v2475
  %v2497 = vmul.f32 %v2441, %v2480
  %v2498 = vadd.f32 %v2146, %v2482
  %v2499 = vadd.f32 %v2147, %v2483
  %v2500 = vadd.f32 %v2148, %v2484
  %v2501 = vadd.f32 %v2149, %v2485
  %v2502 = vadd.f32 %v2150, %v2486
  %v2503 = vadd.f32 %v2151, %v2487
  %v2504 = vadd.f32 %v2152, %v2488
  %v2505 = vadd.f32 %v2153, %v2489
  %v2506 = vadd.f32 %v2154, %v2490
  %v2507 = vadd.f32 %v2155, %v2491
  %v2508 = vadd.f32 %v2156, %v2492
  %v2509 = vadd.f32 %v2157, %v2493
  %v2510 = vadd.f32 %v2158, %v2494
  %v2511 = vadd.f32 %v2159, %v2495
  %v2512 = vadd.f32 %v2160, %v2496
  %v2513 = vadd.f32 %v2161, %v2497
  %v2514 = vld [vmem:[#allocation2 + $0xa] sm:$0xff]
  %v2515 = vld [vmem:[#allocation2 + $0x12] sm:$0xff]
  %v2516 = vld [vmem:[#allocation2 + $0x1a] sm:$0xff]
  %v2517 = vld [vmem:[#allocation2 + $0x22] sm:$0xff]
  %v2518 = vld [vmem:[#allocation2 + $0x2a] sm:$0xff]
  %v2519 = vld [vmem:[#allocation2 + $0x32] sm:$0xff]
  %v2520 = vld [vmem:[#allocation2 + $0x3a] sm:$0xff]
  %v2521 = vld [vmem:[#allocation2 + $0x42] sm:$0xff]
  %v2522 = vld [vmem:[#allocation2 + $0x8a] sm:$0xff]
  %v2523 = vld [vmem:[#allocation2 + $0x92] sm:$0xff]
  %v2524 = vld [vmem:[#allocation2 + $0x9a] sm:$0xff]
  %v2525 = vld [vmem:[#allocation2 + $0xa2] sm:$0xff]
  %v2526 = vld [vmem:[#allocation2 + $0xaa] sm:$0xff]
  %v2527 = vld [vmem:[#allocation2 + $0xb2] sm:$0xff]
  %v2528 = vld [vmem:[#allocation2 + $0xba] sm:$0xff]
  %v2529 = vld [vmem:[#allocation2 + $0xc2] sm:$0xff]
  %v2530 = vlaneseq
  %v2531 = vshrl.u32 %v2530, 7
  %v2532 = vsub.s32 5, %v2531
  %v2533 = vrot.slane %v691, %v2532
  %v2534 = vmul.f32 %v2514, %v2533
  %v2535 = vmul.f32 %v2515, %v2533
  %v2536 = vmul.f32 %v2516, %v2533
  %v2537 = vmul.f32 %v2517, %v2533
  %v2538 = vmul.f32 %v2518, %v2533
  %v2539 = vmul.f32 %v2519, %v2533
  %v2540 = vmul.f32 %v2520, %v2533
  %v2541 = vmul.f32 %v2521, %v2533
  %v2542 = vmul.f32 %v2522, %v2533
  %v2543 = vmul.f32 %v2523, %v2533
  %v2544 = vmul.f32 %v2524, %v2533
  %v2545 = vmul.f32 %v2525, %v2533
  %v2546 = vmul.f32 %v2526, %v2533
  %v2547 = vmul.f32 %v2527, %v2533
  %v2548 = vmul.f32 %v2528, %v2533
  %v2549 = vmul.f32 %v2529, %v2533
  %v2550 = vadd.f32 %v2534, 0.0
  %v2551 = vadd.f32 %v2535, 0.0
  %v2552 = vadd.f32 %v2536, 0.0
  %v2553 = vadd.f32 %v2537, 0.0
  %v2554 = vadd.f32 %v2538, 0.0
  %v2555 = vadd.f32 %v2539, 0.0
  %v2556 = vadd.f32 %v2540, 0.0
  %v2557 = vadd.f32 %v2541, 0.0
  %v2558 = vadd.f32 %v2542, 0.0
  %v2559 = vadd.f32 %v2543, 0.0
  %v2560 = vadd.f32 %v2544, 0.0
  %v2561 = vadd.f32 %v2545, 0.0
  %v2562 = vadd.f32 %v2546, 0.0
  %v2563 = vadd.f32 %v2547, 0.0
  %v2564 = vadd.f32 %v2548, 0.0
  %v2565 = vadd.f32 %v2549, 0.0
  %v2566 = vld [vmem:[#allocation2 + $0x4a] sm:$0xff]
  %v2567 = vld [vmem:[#allocation2 + $0xca] sm:$0xff]
  %v2568 = vlaneseq
  %v2569 = vshrl.u32 %v2568, 7
  %v2570 = vsub.s32 5, %v2569
  %v2571 = vrot.slane %v692, %v2570
  %v2572 = vmul.f32 %v2515, %v2571
  %v2573 = vmul.f32 %v2516, %v2571
  %v2574 = vmul.f32 %v2517, %v2571
  %v2575 = vmul.f32 %v2518, %v2571
  %v2576 = vmul.f32 %v2519, %v2571
  %v2577 = vmul.f32 %v2520, %v2571
  %v2578 = vmul.f32 %v2521, %v2571
  %v2579 = vmul.f32 %v2566, %v2571
  %v2580 = vmul.f32 %v2523, %v2571
  %v2581 = vmul.f32 %v2524, %v2571
  %v2582 = vmul.f32 %v2525, %v2571
  %v2583 = vmul.f32 %v2526, %v2571
  %v2584 = vmul.f32 %v2527, %v2571
  %v2585 = vmul.f32 %v2528, %v2571
  %v2586 = vmul.f32 %v2529, %v2571
  %v2587 = vmul.f32 %v2567, %v2571
  %v2588 = vadd.f32 %v2550, %v2572
  %v2589 = vadd.f32 %v2551, %v2573
  %v2590 = vadd.f32 %v2552, %v2574
  %v2591 = vadd.f32 %v2553, %v2575
  %v2592 = vadd.f32 %v2554, %v2576
  %v2593 = vadd.f32 %v2555, %v2577
  %v2594 = vadd.f32 %v2556, %v2578
  %v2595 = vadd.f32 %v2557, %v2579
  %v2596 = vadd.f32 %v2558, %v2580
  %v2597 = vadd.f32 %v2559, %v2581
  %v2598 = vadd.f32 %v2560, %v2582
  %v2599 = vadd.f32 %v2561, %v2583
  %v2600 = vadd.f32 %v2562, %v2584
  %v2601 = vadd.f32 %v2563, %v2585
  %v2602 = vadd.f32 %v2564, %v2586
  %v2603 = vadd.f32 %v2565, %v2587
  %v2604 = vld [vmem:[#allocation2 + $0x52] sm:$0xff]
  %v2605 = vld [vmem:[#allocation2 + $0xd2] sm:$0xff]
  %v2606 = vlaneseq
  %v2607 = vshrl.u32 %v2606, 7
  %v2608 = vsub.s32 5, %v2607
  %v2609 = vrot.slane %v693, %v2608
  %v2610 = vmul.f32 %v2516, %v2609
  %v2611 = vmul.f32 %v2517, %v2609
  %v2612 = vmul.f32 %v2518, %v2609
  %v2613 = vmul.f32 %v2519, %v2609
  %v2614 = vmul.f32 %v2520, %v2609
  %v2615 = vmul.f32 %v2521, %v2609
  %v2616 = vmul.f32 %v2566, %v2609
  %v2617 = vmul.f32 %v2604, %v2609
  %v2618 = vmul.f32 %v2524, %v2609
  %v2619 = vmul.f32 %v2525, %v2609
  %v2620 = vmul.f32 %v2526, %v2609
  %v2621 = vmul.f32 %v2527, %v2609
  %v2622 = vmul.f32 %v2528, %v2609
  %v2623 = vmul.f32 %v2529, %v2609
  %v2624 = vmul.f32 %v2567, %v2609
  %v2625 = vmul.f32 %v2605, %v2609
  %v2626 = vadd.f32 %v2588, %v2610
  %v2627 = vadd.f32 %v2589, %v2611
  %v2628 = vadd.f32 %v2590, %v2612
  %v2629 = vadd.f32 %v2591, %v2613
  %v2630 = vadd.f32 %v2592, %v2614
  %v2631 = vadd.f32 %v2593, %v2615
  %v2632 = vadd.f32 %v2594, %v2616
  %v2633 = vadd.f32 %v2595, %v2617
  %v2634 = vadd.f32 %v2596, %v2618
  %v2635 = vadd.f32 %v2597, %v2619
  %v2636 = vadd.f32 %v2598, %v2620
  %v2637 = vadd.f32 %v2599, %v2621
  %v2638 = vadd.f32 %v2600, %v2622
  %v2639 = vadd.f32 %v2601, %v2623
  %v2640 = vadd.f32 %v2602, %v2624
  %v2641 = vadd.f32 %v2603, %v2625
  %v2642 = vld [vmem:[#allocation2 + $0x5a] sm:$0xff]
  %v2643 = vld [vmem:[#allocation2 + $0xda] sm:$0xff]
  %v2644 = vlaneseq
  %v2645 = vshrl.u32 %v2644, 7
  %v2646 = vsub.s32 5, %v2645
  %v2647 = vrot.slane %v694, %v2646
  %v2648 = vmul.f32 %v2517, %v2647
  %v2649 = vmul.f32 %v2518, %v2647
  %v2650 = vmul.f32 %v2519, %v2647
  %v2651 = vmul.f32 %v2520, %v2647
  %v2652 = vmul.f32 %v2521, %v2647
  %v2653 = vmul.f32 %v2566, %v2647
  %v2654 = vmul.f32 %v2604, %v2647
  %v2655 = vmul.f32 %v2642, %v2647
  %v2656 = vmul.f32 %v2525, %v2647
  %v2657 = vmul.f32 %v2526, %v2647
  %v2658 = vmul.f32 %v2527, %v2647
  %v2659 = vmul.f32 %v2528, %v2647
  %v2660 = vmul.f32 %v2529, %v2647
  %v2661 = vmul.f32 %v2567, %v2647
  %v2662 = vmul.f32 %v2605, %v2647
  %v2663 = vmul.f32 %v2643, %v2647
  %v2664 = vadd.f32 %v2626, %v2648
  %v2665 = vadd.f32 %v2627, %v2649
  %v2666 = vadd.f32 %v2628, %v2650
  %v2667 = vadd.f32 %v2629, %v2651
  %v2668 = vadd.f32 %v2630, %v2652
  %v2669 = vadd.f32 %v2631, %v2653
  %v2670 = vadd.f32 %v2632, %v2654
  %v2671 = vadd.f32 %v2633, %v2655
  %v2672 = vadd.f32 %v2634, %v2656
  %v2673 = vadd.f32 %v2635, %v2657
  %v2674 = vadd.f32 %v2636, %v2658
  %v2675 = vadd.f32 %v2637, %v2659
  %v2676 = vadd.f32 %v2638, %v2660
  %v2677 = vadd.f32 %v2639, %v2661
  %v2678 = vadd.f32 %v2640, %v2662
  %v2679 = vadd.f32 %v2641, %v2663
  %v2680 = vld [vmem:[#allocation2 + $0x62] sm:$0xff]
  %v2681 = vld [vmem:[#allocation2 + $0xe2] sm:$0xff]
  %v2682 = vlaneseq
  %v2683 = vshrl.u32 %v2682, 7
  %v2684 = vsub.s32 5, %v2683
  %v2685 = vrot.slane %v695, %v2684
  %v2686 = vmul.f32 %v2518, %v2685
  %v2687 = vmul.f32 %v2519, %v2685
  %v2688 = vmul.f32 %v2520, %v2685
  %v2689 = vmul.f32 %v2521, %v2685
  %v2690 = vmul.f32 %v2566, %v2685
  %v2691 = vmul.f32 %v2604, %v2685
  %v2692 = vmul.f32 %v2642, %v2685
  %v2693 = vmul.f32 %v2680, %v2685
  %v2694 = vmul.f32 %v2526, %v2685
  %v2695 = vmul.f32 %v2527, %v2685
  %v2696 = vmul.f32 %v2528, %v2685
  %v2697 = vmul.f32 %v2529, %v2685
  %v2698 = vmul.f32 %v2567, %v2685
  %v2699 = vmul.f32 %v2605, %v2685
  %v2700 = vmul.f32 %v2643, %v2685
  %v2701 = vmul.f32 %v2681, %v2685
  %v2702 = vadd.f32 %v2664, %v2686
  %v2703 = vadd.f32 %v2665, %v2687
  %v2704 = vadd.f32 %v2666, %v2688
  %v2705 = vadd.f32 %v2667, %v2689
  %v2706 = vadd.f32 %v2668, %v2690
  %v2707 = vadd.f32 %v2669, %v2691
  %v2708 = vadd.f32 %v2670, %v2692
  %v2709 = vadd.f32 %v2671, %v2693
  %v2710 = vadd.f32 %v2672, %v2694
  %v2711 = vadd.f32 %v2673, %v2695
  %v2712 = vadd.f32 %v2674, %v2696
  %v2713 = vadd.f32 %v2675, %v2697
  %v2714 = vadd.f32 %v2676, %v2698
  %v2715 = vadd.f32 %v2677, %v2699
  %v2716 = vadd.f32 %v2678, %v2700
  %v2717 = vadd.f32 %v2679, %v2701
  %v2718 = vld [vmem:[#allocation2 + $0x6a] sm:$0xff]
  %v2719 = vld [vmem:[#allocation2 + $0xea] sm:$0xff]
  %v2720 = vlaneseq
  %v2721 = vshrl.u32 %v2720, 7
  %v2722 = vsub.s32 5, %v2721
  %v2723 = vrot.slane %v696, %v2722
  %v2724 = vmul.f32 %v2519, %v2723
  %v2725 = vmul.f32 %v2520, %v2723
  %v2726 = vmul.f32 %v2521, %v2723
  %v2727 = vmul.f32 %v2566, %v2723
  %v2728 = vmul.f32 %v2604, %v2723
  %v2729 = vmul.f32 %v2642, %v2723
  %v2730 = vmul.f32 %v2680, %v2723
  %v2731 = vmul.f32 %v2718, %v2723
  %v2732 = vmul.f32 %v2527, %v2723
  %v2733 = vmul.f32 %v2528, %v2723
  %v2734 = vmul.f32 %v2529, %v2723
  %v2735 = vmul.f32 %v2567, %v2723
  %v2736 = vmul.f32 %v2605, %v2723
  %v2737 = vmul.f32 %v2643, %v2723
  %v2738 = vmul.f32 %v2681, %v2723
  %v2739 = vmul.f32 %v2719, %v2723
  %v2740 = vadd.f32 %v2702, %v2724
  %v2741 = vadd.f32 %v2703, %v2725
  %v2742 = vadd.f32 %v2704, %v2726
  %v2743 = vadd.f32 %v2705, %v2727
  %v2744 = vadd.f32 %v2706, %v2728
  %v2745 = vadd.f32 %v2707, %v2729
  %v2746 = vadd.f32 %v2708, %v2730
  %v2747 = vadd.f32 %v2709, %v2731
  %v2748 = vadd.f32 %v2710, %v2732
  %v2749 = vadd.f32 %v2711, %v2733
  %v2750 = vadd.f32 %v2712, %v2734
  %v2751 = vadd.f32 %v2713, %v2735
  %v2752 = vadd.f32 %v2714, %v2736
  %v2753 = vadd.f32 %v2715, %v2737
  %v2754 = vadd.f32 %v2716, %v2738
  %v2755 = vadd.f32 %v2717, %v2739
  %v2756 = vld [vmem:[#allocation2 + $0x72] sm:$0xff]
  %v2757 = vld [vmem:[#allocation2 + $0xf2] sm:$0xff]
  %v2758 = vlaneseq
  %v2759 = vshrl.u32 %v2758, 7
  %v2760 = vsub.s32 5, %v2759
  %v2761 = vrot.slane %v697, %v2760
  %v2762 = vmul.f32 %v2520, %v2761
  %v2763 = vmul.f32 %v2521, %v2761
  %v2764 = vmul.f32 %v2566, %v2761
  %v2765 = vmul.f32 %v2604, %v2761
  %v2766 = vmul.f32 %v2642, %v2761
  %v2767 = vmul.f32 %v2680, %v2761
  %v2768 = vmul.f32 %v2718, %v2761
  %v2769 = vmul.f32 %v2756, %v2761
  %v2770 = vmul.f32 %v2528, %v2761
  %v2771 = vmul.f32 %v2529, %v2761
  %v2772 = vmul.f32 %v2567, %v2761
  %v2773 = vmul.f32 %v2605, %v2761
  %v2774 = vmul.f32 %v2643, %v2761
  %v2775 = vmul.f32 %v2681, %v2761
  %v2776 = vmul.f32 %v2719, %v2761
  %v2777 = vmul.f32 %v2757, %v2761
  %v2778 = vadd.f32 %v2740, %v2762
  %v2779 = vadd.f32 %v2741, %v2763
  %v2780 = vadd.f32 %v2742, %v2764
  %v2781 = vadd.f32 %v2743, %v2765
  %v2782 = vadd.f32 %v2744, %v2766
  %v2783 = vadd.f32 %v2745, %v2767
  %v2784 = vadd.f32 %v2746, %v2768
  %v2785 = vadd.f32 %v2747, %v2769
  %v2786 = vadd.f32 %v2748, %v2770
  %v2787 = vadd.f32 %v2749, %v2771
  %v2788 = vadd.f32 %v2750, %v2772
  %v2789 = vadd.f32 %v2751, %v2773
  %v2790 = vadd.f32 %v2752, %v2774
  %v2791 = vadd.f32 %v2753, %v2775
  %v2792 = vadd.f32 %v2754, %v2776
  %v2793 = vadd.f32 %v2755, %v2777
  %2795 = vset.pattern.permute.xlu0 0
  %2796 = vperm.xlu0 %2795, %v738
  %v2797 = vpop.permute.xlu0 %2796
  %2800 = vset.pattern.permute.xlu0 0
  %2801 = vperm.xlu0 %2800, %v739
  %v2802 = vpop.permute.xlu0 %2801
  %2805 = vset.pattern.permute.xlu0 0
  %2806 = vperm.xlu0 %2805, %v740
  %v2807 = vpop.permute.xlu0 %2806
  %2810 = vset.pattern.permute.xlu0 0
  %2811 = vperm.xlu0 %2810, %v741
  %v2812 = vpop.permute.xlu0 %2811
  %2815 = vset.pattern.permute.xlu0 0
  %2816 = vperm.xlu0 %2815, %v742
  %v2817 = vpop.permute.xlu0 %2816
  %2820 = vset.pattern.permute.xlu0 0
  %2821 = vperm.xlu0 %2820, %v743
  %v2822 = vpop.permute.xlu0 %2821
  %2825 = vset.pattern.permute.xlu0 0
  %2826 = vperm.xlu0 %2825, %v744
  %v2827 = vpop.permute.xlu0 %2826
  %2830 = vset.pattern.permute.xlu0 0
  %2831 = vperm.xlu0 %2830, %v745
  %v2832 = vpop.permute.xlu0 %2831
  %v2834 = vmul.f32 %v2778, %v2797
  %v2835 = vmul.f32 %v2779, %v2802
  %v2836 = vmul.f32 %v2780, %v2807
  %v2837 = vmul.f32 %v2781, %v2812
  %v2838 = vmul.f32 %v2782, %v2817
  %v2839 = vmul.f32 %v2783, %v2822
  %v2840 = vmul.f32 %v2784, %v2827
  %v2841 = vmul.f32 %v2785, %v2832
  %v2842 = vmul.f32 %v2786, %v2797
  %v2843 = vmul.f32 %v2787, %v2802
  %v2844 = vmul.f32 %v2788, %v2807
  %v2845 = vmul.f32 %v2789, %v2812
  %v2846 = vmul.f32 %v2790, %v2817
  %v2847 = vmul.f32 %v2791, %v2822
  %v2848 = vmul.f32 %v2792, %v2827
  %v2849 = vmul.f32 %v2793, %v2832
  %v2850 = vadd.f32 %v2498, %v2834
  %v2851 = vadd.f32 %v2499, %v2835
  %v2852 = vadd.f32 %v2500, %v2836
  %v2853 = vadd.f32 %v2501, %v2837
  %v2854 = vadd.f32 %v2502, %v2838
  %v2855 = vadd.f32 %v2503, %v2839
  %v2856 = vadd.f32 %v2504, %v2840
  %v2857 = vadd.f32 %v2505, %v2841
  %v2858 = vadd.f32 %v2506, %v2842
  %v2859 = vadd.f32 %v2507, %v2843
  %v2860 = vadd.f32 %v2508, %v2844
  %v2861 = vadd.f32 %v2509, %v2845
  %v2862 = vadd.f32 %v2510, %v2846
  %v2863 = vadd.f32 %v2511, %v2847
  %v2864 = vadd.f32 %v2512, %v2848
  %v2865 = vadd.f32 %v2513, %v2849
  %v2866 = vld [vmem:[#allocation2 + $0xb] sm:$0xff]
  %v2867 = vld [vmem:[#allocation2 + $0x13] sm:$0xff]
  %v2868 = vld [vmem:[#allocation2 + $0x1b] sm:$0xff]
  %v2869 = vld [vmem:[#allocation2 + $0x23] sm:$0xff]
  %v2870 = vld [vmem:[#allocation2 + $0x2b] sm:$0xff]
  %v2871 = vld [vmem:[#allocation2 + $0x33] sm:$0xff]
  %v2872 = vld [vmem:[#allocation2 + $0x3b] sm:$0xff]
  %v2873 = vld [vmem:[#allocation2 + $0x43] sm:$0xff]
  %v2874 = vld [vmem:[#allocation2 + $0x8b] sm:$0xff]
  %v2875 = vld [vmem:[#allocation2 + $0x93] sm:$0xff]
  %v2876 = vld [vmem:[#allocation2 + $0x9b] sm:$0xff]
  %v2877 = vld [vmem:[#allocation2 + $0xa3] sm:$0xff]
  %v2878 = vld [vmem:[#allocation2 + $0xab] sm:$0xff]
  %v2879 = vld [vmem:[#allocation2 + $0xb3] sm:$0xff]
  %v2880 = vld [vmem:[#allocation2 + $0xbb] sm:$0xff]
  %v2881 = vld [vmem:[#allocation2 + $0xc3] sm:$0xff]
  %v2882 = vlaneseq
  %v2883 = vshrl.u32 %v2882, 7
  %v2884 = vsub.s32 6, %v2883
  %v2885 = vrot.slane %v691, %v2884
  %v2886 = vmul.f32 %v2866, %v2885
  %v2887 = vmul.f32 %v2867, %v2885
  %v2888 = vmul.f32 %v2868, %v2885
  %v2889 = vmul.f32 %v2869, %v2885
  %v2890 = vmul.f32 %v2870, %v2885
  %v2891 = vmul.f32 %v2871, %v2885
  %v2892 = vmul.f32 %v2872, %v2885
  %v2893 = vmul.f32 %v2873, %v2885
  %v2894 = vmul.f32 %v2874, %v2885
  %v2895 = vmul.f32 %v2875, %v2885
  %v2896 = vmul.f32 %v2876, %v2885
  %v2897 = vmul.f32 %v2877, %v2885
  %v2898 = vmul.f32 %v2878, %v2885
  %v2899 = vmul.f32 %v2879, %v2885
  %v2900 = vmul.f32 %v2880, %v2885
  %v2901 = vmul.f32 %v2881, %v2885
  %v2902 = vadd.f32 %v2886, 0.0
  %v2903 = vadd.f32 %v2887, 0.0
  %v2904 = vadd.f32 %v2888, 0.0
  %v2905 = vadd.f32 %v2889, 0.0
  %v2906 = vadd.f32 %v2890, 0.0
  %v2907 = vadd.f32 %v2891, 0.0
  %v2908 = vadd.f32 %v2892, 0.0
  %v2909 = vadd.f32 %v2893, 0.0
  %v2910 = vadd.f32 %v2894, 0.0
  %v2911 = vadd.f32 %v2895, 0.0
  %v2912 = vadd.f32 %v2896, 0.0
  %v2913 = vadd.f32 %v2897, 0.0
  %v2914 = vadd.f32 %v2898, 0.0
  %v2915 = vadd.f32 %v2899, 0.0
  %v2916 = vadd.f32 %v2900, 0.0
  %v2917 = vadd.f32 %v2901, 0.0
  %v2918 = vld [vmem:[#allocation2 + $0x4b] sm:$0xff]
  %v2919 = vld [vmem:[#allocation2 + $0xcb] sm:$0xff]
  %v2920 = vlaneseq
  %v2921 = vshrl.u32 %v2920, 7
  %v2922 = vsub.s32 6, %v2921
  %v2923 = vrot.slane %v692, %v2922
  %v2924 = vmul.f32 %v2867, %v2923
  %v2925 = vmul.f32 %v2868, %v2923
  %v2926 = vmul.f32 %v2869, %v2923
  %v2927 = vmul.f32 %v2870, %v2923
  %v2928 = vmul.f32 %v2871, %v2923
  %v2929 = vmul.f32 %v2872, %v2923
  %v2930 = vmul.f32 %v2873, %v2923
  %v2931 = vmul.f32 %v2918, %v2923
  %v2932 = vmul.f32 %v2875, %v2923
  %v2933 = vmul.f32 %v2876, %v2923
  %v2934 = vmul.f32 %v2877, %v2923
  %v2935 = vmul.f32 %v2878, %v2923
  %v2936 = vmul.f32 %v2879, %v2923
  %v2937 = vmul.f32 %v2880, %v2923
  %v2938 = vmul.f32 %v2881, %v2923
  %v2939 = vmul.f32 %v2919, %v2923
  %v2940 = vadd.f32 %v2902, %v2924
  %v2941 = vadd.f32 %v2903, %v2925
  %v2942 = vadd.f32 %v2904, %v2926
  %v2943 = vadd.f32 %v2905, %v2927
  %v2944 = vadd.f32 %v2906, %v2928
  %v2945 = vadd.f32 %v2907, %v2929
  %v2946 = vadd.f32 %v2908, %v2930
  %v2947 = vadd.f32 %v2909, %v2931
  %v2948 = vadd.f32 %v2910, %v2932
  %v2949 = vadd.f32 %v2911, %v2933
  %v2950 = vadd.f32 %v2912, %v2934
  %v2951 = vadd.f32 %v2913, %v2935
  %v2952 = vadd.f32 %v2914, %v2936
  %v2953 = vadd.f32 %v2915, %v2937
  %v2954 = vadd.f32 %v2916, %v2938
  %v2955 = vadd.f32 %v2917, %v2939
  %v2956 = vld [vmem:[#allocation2 + $0x53] sm:$0xff]
  %v2957 = vld [vmem:[#allocation2 + $0xd3] sm:$0xff]
  %v2958 = vlaneseq
  %v2959 = vshrl.u32 %v2958, 7
  %v2960 = vsub.s32 6, %v2959
  %v2961 = vrot.slane %v693, %v2960
  %v2962 = vmul.f32 %v2868, %v2961
  %v2963 = vmul.f32 %v2869, %v2961
  %v2964 = vmul.f32 %v2870, %v2961
  %v2965 = vmul.f32 %v2871, %v2961
  %v2966 = vmul.f32 %v2872, %v2961
  %v2967 = vmul.f32 %v2873, %v2961
  %v2968 = vmul.f32 %v2918, %v2961
  %v2969 = vmul.f32 %v2956, %v2961
  %v2970 = vmul.f32 %v2876, %v2961
  %v2971 = vmul.f32 %v2877, %v2961
  %v2972 = vmul.f32 %v2878, %v2961
  %v2973 = vmul.f32 %v2879, %v2961
  %v2974 = vmul.f32 %v2880, %v2961
  %v2975 = vmul.f32 %v2881, %v2961
  %v2976 = vmul.f32 %v2919, %v2961
  %v2977 = vmul.f32 %v2957, %v2961
  %v2978 = vadd.f32 %v2940, %v2962
  %v2979 = vadd.f32 %v2941, %v2963
  %v2980 = vadd.f32 %v2942, %v2964
  %v2981 = vadd.f32 %v2943, %v2965
  %v2982 = vadd.f32 %v2944, %v2966
  %v2983 = vadd.f32 %v2945, %v2967
  %v2984 = vadd.f32 %v2946, %v2968
  %v2985 = vadd.f32 %v2947, %v2969
  %v2986 = vadd.f32 %v2948, %v2970
  %v2987 = vadd.f32 %v2949, %v2971
  %v2988 = vadd.f32 %v2950, %v2972
  %v2989 = vadd.f32 %v2951, %v2973
  %v2990 = vadd.f32 %v2952, %v2974
  %v2991 = vadd.f32 %v2953, %v2975
  %v2992 = vadd.f32 %v2954, %v2976
  %v2993 = vadd.f32 %v2955, %v2977
  %v2994 = vld [vmem:[#allocation2 + $0x5b] sm:$0xff]
  %v2995 = vld [vmem:[#allocation2 + $0xdb] sm:$0xff]
  %v2996 = vlaneseq
  %v2997 = vshrl.u32 %v2996, 7
  %v2998 = vsub.s32 6, %v2997
  %v2999 = vrot.slane %v694, %v2998
  %v3000 = vmul.f32 %v2869, %v2999
  %v3001 = vmul.f32 %v2870, %v2999
  %v3002 = vmul.f32 %v2871, %v2999
  %v3003 = vmul.f32 %v2872, %v2999
  %v3004 = vmul.f32 %v2873, %v2999
  %v3005 = vmul.f32 %v2918, %v2999
  %v3006 = vmul.f32 %v2956, %v2999
  %v3007 = vmul.f32 %v2994, %v2999
  %v3008 = vmul.f32 %v2877, %v2999
  %v3009 = vmul.f32 %v2878, %v2999
  %v3010 = vmul.f32 %v2879, %v2999
  %v3011 = vmul.f32 %v2880, %v2999
  %v3012 = vmul.f32 %v2881, %v2999
  %v3013 = vmul.f32 %v2919, %v2999
  %v3014 = vmul.f32 %v2957, %v2999
  %v3015 = vmul.f32 %v2995, %v2999
  %v3016 = vadd.f32 %v2978, %v3000
  %v3017 = vadd.f32 %v2979, %v3001
  %v3018 = vadd.f32 %v2980, %v3002
  %v3019 = vadd.f32 %v2981, %v3003
  %v3020 = vadd.f32 %v2982, %v3004
  %v3021 = vadd.f32 %v2983, %v3005
  %v3022 = vadd.f32 %v2984, %v3006
  %v3023 = vadd.f32 %v2985, %v3007
  %v3024 = vadd.f32 %v2986, %v3008
  %v3025 = vadd.f32 %v2987, %v3009
  %v3026 = vadd.f32 %v2988, %v3010
  %v3027 = vadd.f32 %v2989, %v3011
  %v3028 = vadd.f32 %v2990, %v3012
  %v3029 = vadd.f32 %v2991, %v3013
  %v3030 = vadd.f32 %v2992, %v3014
  %v3031 = vadd.f32 %v2993, %v3015
  %v3032 = vld [vmem:[#allocation2 + $0x63] sm:$0xff]
  %v3033 = vld [vmem:[#allocation2 + $0xe3] sm:$0xff]
  %v3034 = vlaneseq
  %v3035 = vshrl.u32 %v3034, 7
  %v3036 = vsub.s32 6, %v3035
  %v3037 = vrot.slane %v695, %v3036
  %v3038 = vmul.f32 %v2870, %v3037
  %v3039 = vmul.f32 %v2871, %v3037
  %v3040 = vmul.f32 %v2872, %v3037
  %v3041 = vmul.f32 %v2873, %v3037
  %v3042 = vmul.f32 %v2918, %v3037
  %v3043 = vmul.f32 %v2956, %v3037
  %v3044 = vmul.f32 %v2994, %v3037
  %v3045 = vmul.f32 %v3032, %v3037
  %v3046 = vmul.f32 %v2878, %v3037
  %v3047 = vmul.f32 %v2879, %v3037
  %v3048 = vmul.f32 %v2880, %v3037
  %v3049 = vmul.f32 %v2881, %v3037
  %v3050 = vmul.f32 %v2919, %v3037
  %v3051 = vmul.f32 %v2957, %v3037
  %v3052 = vmul.f32 %v2995, %v3037
  %v3053 = vmul.f32 %v3033, %v3037
  %v3054 = vadd.f32 %v3016, %v3038
  %v3055 = vadd.f32 %v3017, %v3039
  %v3056 = vadd.f32 %v3018, %v3040
  %v3057 = vadd.f32 %v3019, %v3041
  %v3058 = vadd.f32 %v3020, %v3042
  %v3059 = vadd.f32 %v3021, %v3043
  %v3060 = vadd.f32 %v3022, %v3044
  %v3061 = vadd.f32 %v3023, %v3045
  %v3062 = vadd.f32 %v3024, %v3046
  %v3063 = vadd.f32 %v3025, %v3047
  %v3064 = vadd.f32 %v3026, %v3048
  %v3065 = vadd.f32 %v3027, %v3049
  %v3066 = vadd.f32 %v3028, %v3050
  %v3067 = vadd.f32 %v3029, %v3051
  %v3068 = vadd.f32 %v3030, %v3052
  %v3069 = vadd.f32 %v3031, %v3053
  %v3070 = vld [vmem:[#allocation2 + $0x6b] sm:$0xff]
  %v3071 = vld [vmem:[#allocation2 + $0xeb] sm:$0xff]
  %v3072 = vlaneseq
  %v3073 = vshrl.u32 %v3072, 7
  %v3074 = vsub.s32 6, %v3073
  %v3075 = vrot.slane %v696, %v3074
  %v3076 = vmul.f32 %v2871, %v3075
  %v3077 = vmul.f32 %v2872, %v3075
  %v3078 = vmul.f32 %v2873, %v3075
  %v3079 = vmul.f32 %v2918, %v3075
  %v3080 = vmul.f32 %v2956, %v3075
  %v3081 = vmul.f32 %v2994, %v3075
  %v3082 = vmul.f32 %v3032, %v3075
  %v3083 = vmul.f32 %v3070, %v3075
  %v3084 = vmul.f32 %v2879, %v3075
  %v3085 = vmul.f32 %v2880, %v3075
  %v3086 = vmul.f32 %v2881, %v3075
  %v3087 = vmul.f32 %v2919, %v3075
  %v3088 = vmul.f32 %v2957, %v3075
  %v3089 = vmul.f32 %v2995, %v3075
  %v3090 = vmul.f32 %v3033, %v3075
  %v3091 = vmul.f32 %v3071, %v3075
  %v3092 = vadd.f32 %v3054, %v3076
  %v3093 = vadd.f32 %v3055, %v3077
  %v3094 = vadd.f32 %v3056, %v3078
  %v3095 = vadd.f32 %v3057, %v3079
  %v3096 = vadd.f32 %v3058, %v3080
  %v3097 = vadd.f32 %v3059, %v3081
  %v3098 = vadd.f32 %v3060, %v3082
  %v3099 = vadd.f32 %v3061, %v3083
  %v3100 = vadd.f32 %v3062, %v3084
  %v3101 = vadd.f32 %v3063, %v3085
  %v3102 = vadd.f32 %v3064, %v3086
  %v3103 = vadd.f32 %v3065, %v3087
  %v3104 = vadd.f32 %v3066, %v3088
  %v3105 = vadd.f32 %v3067, %v3089
  %v3106 = vadd.f32 %v3068, %v3090
  %v3107 = vadd.f32 %v3069, %v3091
  %v3108 = vld [vmem:[#allocation2 + $0x73] sm:$0xff]
  %v3109 = vld [vmem:[#allocation2 + $0xf3] sm:$0xff]
  %v3110 = vlaneseq
  %v3111 = vshrl.u32 %v3110, 7
  %v3112 = vsub.s32 6, %v3111
  %v3113 = vrot.slane %v697, %v3112
  %v3114 = vmul.f32 %v2872, %v3113
  %v3115 = vmul.f32 %v2873, %v3113
  %v3116 = vmul.f32 %v2918, %v3113
  %v3117 = vmul.f32 %v2956, %v3113
  %v3118 = vmul.f32 %v2994, %v3113
  %v3119 = vmul.f32 %v3032, %v3113
  %v3120 = vmul.f32 %v3070, %v3113
  %v3121 = vmul.f32 %v3108, %v3113
  %v3122 = vmul.f32 %v2880, %v3113
  %v3123 = vmul.f32 %v2881, %v3113
  %v3124 = vmul.f32 %v2919, %v3113
  %v3125 = vmul.f32 %v2957, %v3113
  %v3126 = vmul.f32 %v2995, %v3113
  %v3127 = vmul.f32 %v3033, %v3113
  %v3128 = vmul.f32 %v3071, %v3113
  %v3129 = vmul.f32 %v3109, %v3113
  %v3130 = vadd.f32 %v3092, %v3114
  %v3131 = vadd.f32 %v3093, %v3115
  %v3132 = vadd.f32 %v3094, %v3116
  %v3133 = vadd.f32 %v3095, %v3117
  %v3134 = vadd.f32 %v3096, %v3118
  %v3135 = vadd.f32 %v3097, %v3119
  %v3136 = vadd.f32 %v3098, %v3120
  %v3137 = vadd.f32 %v3099, %v3121
  %v3138 = vadd.f32 %v3100, %v3122
  %v3139 = vadd.f32 %v3101, %v3123
  %v3140 = vadd.f32 %v3102, %v3124
  %v3141 = vadd.f32 %v3103, %v3125
  %v3142 = vadd.f32 %v3104, %v3126
  %v3143 = vadd.f32 %v3105, %v3127
  %v3144 = vadd.f32 %v3106, %v3128
  %v3145 = vadd.f32 %v3107, %v3129
  %3147 = vset.pattern.permute.xlu0 0
  %3148 = vperm.xlu0 %3147, %v746
  %v3149 = vpop.permute.xlu0 %3148
  %3152 = vset.pattern.permute.xlu0 0
  %3153 = vperm.xlu0 %3152, %v747
  %v3154 = vpop.permute.xlu0 %3153
  %3157 = vset.pattern.permute.xlu0 0
  %3158 = vperm.xlu0 %3157, %v748
  %v3159 = vpop.permute.xlu0 %3158
  %3162 = vset.pattern.permute.xlu0 0
  %3163 = vperm.xlu0 %3162, %v749
  %v3164 = vpop.permute.xlu0 %3163
  %3167 = vset.pattern.permute.xlu0 0
  %3168 = vperm.xlu0 %3167, %v750
  %v3169 = vpop.permute.xlu0 %3168
  %3172 = vset.pattern.permute.xlu0 0
  %3173 = vperm.xlu0 %3172, %v751
  %v3174 = vpop.permute.xlu0 %3173
  %3177 = vset.pattern.permute.xlu0 0
  %3178 = vperm.xlu0 %3177, %v752
  %v3179 = vpop.permute.xlu0 %3178
  %3182 = vset.pattern.permute.xlu0 0
  %3183 = vperm.xlu0 %3182, %v753
  %v3184 = vpop.permute.xlu0 %3183
  %v3186 = vmul.f32 %v3130, %v3149
  %v3187 = vmul.f32 %v3131, %v3154
  %v3188 = vmul.f32 %v3132, %v3159
  %v3189 = vmul.f32 %v3133, %v3164
  %v3190 = vmul.f32 %v3134, %v3169
  %v3191 = vmul.f32 %v3135, %v3174
  %v3192 = vmul.f32 %v3136, %v3179
  %v3193 = vmul.f32 %v3137, %v3184
  %v3194 = vmul.f32 %v3138, %v3149
  %v3195 = vmul.f32 %v3139, %v3154
  %v3196 = vmul.f32 %v3140, %v3159
  %v3197 = vmul.f32 %v3141, %v3164
  %v3198 = vmul.f32 %v3142, %v3169
  %v3199 = vmul.f32 %v3143, %v3174
  %v3200 = vmul.f32 %v3144, %v3179
  %v3201 = vmul.f32 %v3145, %v3184
  %v3202 = vadd.f32 %v2850, %v3186
  %v3203 = vadd.f32 %v2851, %v3187
  %v3204 = vadd.f32 %v2852, %v3188
  %v3205 = vadd.f32 %v2853, %v3189
  %v3206 = vadd.f32 %v2854, %v3190
  %v3207 = vadd.f32 %v2855, %v3191
  %v3208 = vadd.f32 %v2856, %v3192
  %v3209 = vadd.f32 %v2857, %v3193
  %v3210 = vadd.f32 %v2858, %v3194
  %v3211 = vadd.f32 %v2859, %v3195
  %v3212 = vadd.f32 %v2860, %v3196
  %v3213 = vadd.f32 %v2861, %v3197
  %v3214 = vadd.f32 %v2862, %v3198
  %v3215 = vadd.f32 %v2863, %v3199
  %v3216 = vadd.f32 %v2864, %v3200
  %v3217 = vadd.f32 %v2865, %v3201
  %v3218 = vpack.c.bf16 %v3203, %v3202
  %v3219 = vpack.c.bf16 %v3205, %v3204
  %v3220 = vpack.c.bf16 %v3207, %v3206
  %v3221 = vpack.c.bf16 %v3209, %v3208
  %v3222 = vpack.c.bf16 %v3211, %v3210
  %v3223 = vpack.c.bf16 %v3213, %v3212
  %v3224 = vpack.c.bf16 %v3215, %v3214
  %v3225 = vpack.c.bf16 %v3217, %v3216
  %v3226 = vld [vmem:[%s5] sm:$0xf]
  %v3227 = vld [vmem:[%s5 + $0x4] sm:$0xf]
  %v3228 = vld [vmem:[%s5 + $0x8] sm:$0xf]
  %v3229 = vld [vmem:[%s5 + $0xc] sm:$0xf]
  %v3230 = vld [vmem:[%s5 + $0x10] sm:$0xf]
  %v3231 = vld [vmem:[%s5 + $0x14] sm:$0xf]
  %v3232 = vld [vmem:[%s5 + $0x18] sm:$0xf]
  %v3233 = vld [vmem:[%s5 + $0x1c] sm:$0xf]
  %v3234 = vld [vmem:[%s5 + $0x20] sm:$0xf]
  %v3235 = vld [vmem:[%s5 + $0x24] sm:$0xf]
  %v3236 = vld [vmem:[%s5 + $0x28] sm:$0xf]
  %v3237 = vld [vmem:[%s5 + $0x2c] sm:$0xf]
  %v3250 = vunpack.c.l.b16 %v3226
  %v3251 = vunpack.c.l.b16 %v3227
  %v3252 = vunpack.c.l.b16 %v3228
  %v3253 = vunpack.c.l.b16 %v3229
  %v3254 = vunpack.c.l.b16 %v3230
  %v3255 = vunpack.c.l.b16 %v3231
  %v3256 = vunpack.c.l.b16 %v3232
  %v3257 = vunpack.c.l.b16 %v3233
  %v3258 = vunpack.c.l.b16 %v3234
  %v3259 = vunpack.c.l.b16 %v3235
  %v3260 = vunpack.c.l.b16 %v3236
  %v3261 = vunpack.c.l.b16 %v3237
  %v3262 = vpack.c.b16 %v3251, %v3250
  %v3263 = vpack.c.b16 %v3253, %v3252
  %v3264 = vpack.c.b16 %v3255, %v3254
  %v3265 = vpack.c.b16 %v3257, %v3256
  %v3266 = vpack.c.b16 %v3259, %v3258
  %v3267 = vpack.c.b16 %v3261, %v3260
  %v3275 = vsel %vm237, %v3218, 0
  %v3278 = vsel %vm237, %v3219, 0
  %v3281 = vsel %vm237, %v3220, 0
  %v3284 = vsel %vm237, %v3221, 0
  %v3287 = vsel %vm237, %v3222, 0
  %v3290 = vsel %vm237, %v3223, 0
  %v3293 = vsel %vm237, %v3224, 0
  %v3296 = vsel %vm237, %v3225, 0
  %3298 = vmatprep.subr.bf16.mxu0 0
  %3299 = vmatpush1.bf16.msra.mxu0 %v3262
  %3300 = vmatprep.subr.bf16.mxu0 0
  %3301 = vmatpush1.bf16.msra.mxu0 %v3263
  %3302 = vmatprep.subr.bf16.mxu0 0
  %3303 = vmatpush1.bf16.msra.mxu0 %v3264
  %3304 = vmatprep.subr.bf16.mxu0 0
  %3305 = vmatpush1.bf16.msra.mxu0 %v3265
  %3306 = vmatprep.subr.bf16.mxu0 0
  %3307 = vmatpush1.bf16.msra.mxu0 %v3266
  %3308 = vmatprep.subr.bf16.mxu0 0
  %3309 = vmatpush1.bf16.msra.mxu0 %v3267
  %3310 = vmatprep.subr.bf16.mxu0 0
  %3311 = vmatpush1.bf16.msra.mxu0 0
  %3312 = vmatprep.subr.bf16.mxu0 0
  %3313 = vmatpush1.bf16.msra.mxu0 0
  %3314 = vmatprep.subr.bf16.mxu0 0
  %3315 = vmatpush1.bf16.msra.mxu0 0
  %3316 = vmatprep.subr.bf16.mxu0 0
  %3317 = vmatpush1.bf16.msra.mxu0 0
  %3318 = vmatprep.subr.bf16.mxu0 0
  %3319 = vmatpush1.bf16.msra.mxu0 0
  %3320 = vmatprep.subr.bf16.mxu0 0
  %3321 = vmatpush1.bf16.msra.mxu0 0
  %3322 = vmatprep.subr.bf16.mxu0 0
  %3323 = vmatpush1.bf16.msra.mxu0 0
  %3324 = vmatprep.subr.bf16.mxu0 0
  %3325 = vmatpush1.bf16.msra.mxu0 0
  %3326 = vmatprep.subr.bf16.mxu0 0
  %3327 = vmatpush1.bf16.msra.mxu0 0
  %3328 = vmatprep.subr.bf16.mxu0 0
  %3329 = vmatpush1.bf16.msra.mxu0 0
  %3330 = vmatprep.mubr.bf16.mxu0 0
  %3331 = vmatmul.mubr.bf16.gmra.mrb[0].mxu0 %v3275
  %v3332 = vpop.f32.mrb[0].mxu0
  %v3333 = vadd.f32 0.0, %v3332
  %v3334 = vpop.f32.mrb[0].mxu0
  %v3335 = vpop.f32.mrb[0].mxu0
  %v3336 = vadd.f32 0.0, %v3335
  %v3337 = vpop.f32.mrb[0].mxu0
  %3338 = vmatprep.mubr.bf16.mxu0 0
  %3339 = vmatmul.mubr.bf16.gmra.mrb[0].mxu0 %v3278
  %v3340 = vpop.f32.mrb[0].mxu0
  %v3341 = vadd.f32 0.0, %v3340
  %v3342 = vpop.f32.mrb[0].mxu0
  %v3343 = vpop.f32.mrb[0].mxu0
  %v3344 = vadd.f32 0.0, %v3343
  %v3345 = vpop.f32.mrb[0].mxu0
  %3346 = vmatprep.mubr.bf16.mxu0 0
  %3347 = vmatmul.mubr.bf16.gmra.mrb[0].mxu0 %v3281
  %v3348 = vpop.f32.mrb[0].mxu0
  %v3349 = vadd.f32 0.0, %v3348
  %v3350 = vpop.f32.mrb[0].mxu0
  %v3351 = vpop.f32.mrb[0].mxu0
  %v3352 = vadd.f32 0.0, %v3351
  %v3353 = vpop.f32.mrb[0].mxu0
  %3354 = vmatprep.mubr.bf16.mxu0 0
  %3355 = vmatmul.mubr.bf16.gmra.mrb[0].mxu0 %v3284
  %v3356 = vpop.f32.mrb[0].mxu0
  %v3357 = vadd.f32 0.0, %v3356
  %v3358 = vpop.f32.mrb[0].mxu0
  %v3359 = vpop.f32.mrb[0].mxu0
  %v3360 = vadd.f32 0.0, %v3359
  %v3361 = vpop.f32.mrb[0].mxu0
  %3362 = vmatprep.mubr.bf16.mxu0 0
  %3363 = vmatmul.mubr.bf16.gmra.mrb[0].mxu0 %v3287
  %v3364 = vpop.f32.mrb[0].mxu0
  %v3365 = vadd.f32 0.0, %v3364
  %v3366 = vpop.f32.mrb[0].mxu0
  %v3367 = vpop.f32.mrb[0].mxu0
  %v3368 = vadd.f32 0.0, %v3367
  %v3369 = vpop.f32.mrb[0].mxu0
  %3370 = vmatprep.mubr.bf16.mxu0 0
  %3371 = vmatmul.mubr.bf16.gmra.mrb[0].mxu0 %v3290
  %v3372 = vpop.f32.mrb[0].mxu0
  %v3373 = vadd.f32 0.0, %v3372
  %v3374 = vpop.f32.mrb[0].mxu0
  %v3375 = vpop.f32.mrb[0].mxu0
  %v3376 = vadd.f32 0.0, %v3375
  %v3377 = vpop.f32.mrb[0].mxu0
  %3378 = vmatprep.mubr.bf16.mxu0 0
  %3379 = vmatmul.mubr.bf16.gmra.mrb[0].mxu0 %v3293
  %v3380 = vpop.f32.mrb[0].mxu0
  %v3381 = vadd.f32 0.0, %v3380
  %v3382 = vpop.f32.mrb[0].mxu0
  %v3383 = vpop.f32.mrb[0].mxu0
  %v3384 = vadd.f32 0.0, %v3383
  %v3385 = vpop.f32.mrb[0].mxu0
  %3386 = vmatprep.mubr.bf16.mxu0 0
  %3387 = vmatmul.mubr.bf16.gmra.mrb[0].mxu0 %v3296
  %v3388 = vpop.f32.mrb[0].mxu0
  %v3389 = vadd.f32 0.0, %v3388
  %v3390 = vpop.f32.mrb[0].mxu0
  %v3391 = vpop.f32.mrb[0].mxu0
  %v3392 = vadd.f32 0.0, %v3391
  %v3393 = vpop.f32.mrb[0].mxu0
  %3394 = vdwg.mxu0
  %3411 = vrot.lane.b32.xlu0 %v3333, 8
  %v3412 = vpop.permute.xlu0 %3411
  %3413 = vrot.lane.b32.xlu0 %v3336, 8
  %v3414 = vpop.permute.xlu0 %3413
  %3415 = vrot.lane.b32.xlu0 %v3341, 8
  %v3416 = vpop.permute.xlu0 %3415
  %3417 = vrot.lane.b32.xlu0 %v3344, 8
  %v3418 = vpop.permute.xlu0 %3417
  %3419 = vrot.lane.b32.xlu0 %v3349, 8
  %v3420 = vpop.permute.xlu0 %3419
  %3421 = vrot.lane.b32.xlu0 %v3352, 8
  %v3422 = vpop.permute.xlu0 %3421
  %3423 = vrot.lane.b32.xlu0 %v3357, 8
  %v3424 = vpop.permute.xlu0 %3423
  %3425 = vrot.lane.b32.xlu0 %v3360, 8
  %v3426 = vpop.permute.xlu0 %3425
  %3427 = vrot.lane.b32.xlu0 %v3365, 8
  %v3428 = vpop.permute.xlu0 %3427
  %3429 = vrot.lane.b32.xlu0 %v3368, 8
  %v3430 = vpop.permute.xlu0 %3429
  %3431 = vrot.lane.b32.xlu0 %v3373, 8
  %v3432 = vpop.permute.xlu0 %3431
  %3433 = vrot.lane.b32.xlu0 %v3376, 8
  %v3434 = vpop.permute.xlu0 %3433
  %3435 = vrot.lane.b32.xlu0 %v3381, 8
  %v3436 = vpop.permute.xlu0 %3435
  %3437 = vrot.lane.b32.xlu0 %v3384, 8
  %v3438 = vpop.permute.xlu0 %3437
  %3439 = vrot.lane.b32.xlu0 %v3389, 8
  %v3440 = vpop.permute.xlu0 %3439
  %3441 = vrot.lane.b32.xlu0 %v3392, 8
  %v3442 = vpop.permute.xlu0 %3441
  %3459 = vrot.lane.b32.xlu0 %v3333, 16
  %v3460 = vpop.permute.xlu0 %3459
  %3461 = vrot.lane.b32.xlu0 %v3336, 16
  %v3462 = vpop.permute.xlu0 %3461
  %3463 = vrot.lane.b32.xlu0 %v3341, 16
  %v3464 = vpop.permute.xlu0 %3463
  %3465 = vrot.lane.b32.xlu0 %v3344, 16
  %v3466 = vpop.permute.xlu0 %3465
  %3467 = vrot.lane.b32.xlu0 %v3349, 16
  %v3468 = vpop.permute.xlu0 %3467
  %3469 = vrot.lane.b32.xlu0 %v3352, 16
  %v3470 = vpop.permute.xlu0 %3469
  %3471 = vrot.lane.b32.xlu0 %v3357, 16
  %v3472 = vpop.permute.xlu0 %3471
  %3473 = vrot.lane.b32.xlu0 %v3360, 16
  %v3474 = vpop.permute.xlu0 %3473
  %3475 = vrot.lane.b32.xlu0 %v3365, 16
  %v3476 = vpop.permute.xlu0 %3475
  %3477 = vrot.lane.b32.xlu0 %v3368, 16
  %v3478 = vpop.permute.xlu0 %3477
  %3479 = vrot.lane.b32.xlu0 %v3373, 16
  %v3480 = vpop.permute.xlu0 %3479
  %3481 = vrot.lane.b32.xlu0 %v3376, 16
  %v3482 = vpop.permute.xlu0 %3481
  %3483 = vrot.lane.b32.xlu0 %v3381, 16
  %v3484 = vpop.permute.xlu0 %3483
  %3485 = vrot.lane.b32.xlu0 %v3384, 16
  %v3486 = vpop.permute.xlu0 %3485
  %3487 = vrot.lane.b32.xlu0 %v3389, 16
  %v3488 = vpop.permute.xlu0 %3487
  %3489 = vrot.lane.b32.xlu0 %v3392, 16
  %v3490 = vpop.permute.xlu0 %3489
  %3507 = vrot.lane.b32.xlu0 %v67, 64
  %v3508 = vpop.permute.xlu0 %3507
  %3509 = vrot.lane.b32.xlu0 %v68, 64
  %v3510 = vpop.permute.xlu0 %3509
  %3511 = vrot.lane.b32.xlu0 %v69, 64
  %v3512 = vpop.permute.xlu0 %3511
  %3513 = vrot.lane.b32.xlu0 %v70, 64
  %v3514 = vpop.permute.xlu0 %3513
  %3515 = vrot.lane.b32.xlu0 %v71, 64
  %v3516 = vpop.permute.xlu0 %3515
  %3517 = vrot.lane.b32.xlu0 %v72, 64
  %v3518 = vpop.permute.xlu0 %3517
  %3519 = vrot.lane.b32.xlu0 %v73, 64
  %v3520 = vpop.permute.xlu0 %3519
  %3521 = vrot.lane.b32.xlu0 %v74, 64
  %v3522 = vpop.permute.xlu0 %3521
  %3523 = vrot.lane.b32.xlu0 %v75, 64
  %v3524 = vpop.permute.xlu0 %3523
  %3525 = vrot.lane.b32.xlu0 %v76, 64
  %v3526 = vpop.permute.xlu0 %3525
  %3527 = vrot.lane.b32.xlu0 %v77, 64
  %v3528 = vpop.permute.xlu0 %3527
  %3529 = vrot.lane.b32.xlu0 %v78, 64
  %v3530 = vpop.permute.xlu0 %3529
  %3531 = vrot.lane.b32.xlu0 %v79, 64
  %v3532 = vpop.permute.xlu0 %3531
  %3533 = vrot.lane.b32.xlu0 %v80, 64
  %v3534 = vpop.permute.xlu0 %3533
  %3535 = vrot.lane.b32.xlu0 %v81, 64
  %v3536 = vpop.permute.xlu0 %3535
  %3537 = vrot.lane.b32.xlu0 %v82, 64
  %v3538 = vpop.permute.xlu0 %3537
  %3555 = vrot.lane.b32.xlu0 %v3333, 24
  %v3556 = vpop.permute.xlu0 %3555
  %3557 = vrot.lane.b32.xlu0 %v3336, 24
  %v3558 = vpop.permute.xlu0 %3557
  %3559 = vrot.lane.b32.xlu0 %v3341, 24
  %v3560 = vpop.permute.xlu0 %3559
  %3561 = vrot.lane.b32.xlu0 %v3344, 24
  %v3562 = vpop.permute.xlu0 %3561
  %3563 = vrot.lane.b32.xlu0 %v3349, 24
  %v3564 = vpop.permute.xlu0 %3563
  %3565 = vrot.lane.b32.xlu0 %v3352, 24
  %v3566 = vpop.permute.xlu0 %3565
  %3567 = vrot.lane.b32.xlu0 %v3357, 24
  %v3568 = vpop.permute.xlu0 %3567
  %3569 = vrot.lane.b32.xlu0 %v3360, 24
  %v3570 = vpop.permute.xlu0 %3569
  %3571 = vrot.lane.b32.xlu0 %v3365, 24
  %v3572 = vpop.permute.xlu0 %3571
  %3573 = vrot.lane.b32.xlu0 %v3368, 24
  %v3574 = vpop.permute.xlu0 %3573
  %3575 = vrot.lane.b32.xlu0 %v3373, 24
  %v3576 = vpop.permute.xlu0 %3575
  %3577 = vrot.lane.b32.xlu0 %v3376, 24
  %v3578 = vpop.permute.xlu0 %3577
  %3579 = vrot.lane.b32.xlu0 %v3381, 24
  %v3580 = vpop.permute.xlu0 %3579
  %3581 = vrot.lane.b32.xlu0 %v3384, 24
  %v3582 = vpop.permute.xlu0 %3581
  %3583 = vrot.lane.b32.xlu0 %v3389, 24
  %v3584 = vpop.permute.xlu0 %3583
  %3585 = vrot.lane.b32.xlu0 %v3392, 24
  %v3586 = vpop.permute.xlu0 %3585
  %vm3603 = vcmask 64512
  %v3604 = vsel %vm3603, %v175, %v3412
  %v3605 = vsel %vm3603, %v178, %v3414
  %v3606 = vsel %vm3603, %v183, %v3416
  %v3607 = vsel %vm3603, %v186, %v3418
  %v3608 = vsel %vm3603, %v191, %v3420
  %v3609 = vsel %vm3603, %v194, %v3422
  %v3610 = vsel %vm3603, %v199, %v3424
  %v3611 = vsel %vm3603, %v202, %v3426
  %v3612 = vsel %vm3603, %v207, %v3428
  %v3613 = vsel %vm3603, %v210, %v3430
  %v3614 = vsel %vm3603, %v215, %v3432
  %v3615 = vsel %vm3603, %v218, %v3434
  %v3616 = vsel %vm3603, %v223, %v3436
  %v3617 = vsel %vm3603, %v226, %v3438
  %v3618 = vsel %vm3603, %v231, %v3440
  %v3619 = vsel %vm3603, %v234, %v3442
  %vm3620 = vcmask 261120
  %v3621 = vsel %vm3620, %v3604, %v287
  %v3622 = vsel %vm3620, %v3605, %v289
  %v3623 = vsel %vm3620, %v3606, %v291
  %v3624 = vsel %vm3620, %v3607, %v293
  %v3625 = vsel %vm3620, %v3608, %v295
  %v3626 = vsel %vm3620, %v3609, %v297
  %v3627 = vsel %vm3620, %v3610, %v299
  %v3628 = vsel %vm3620, %v3611, %v301
  %v3629 = vsel %vm3620, %v3612, %v303
  %v3630 = vsel %vm3620, %v3613, %v305
  %v3631 = vsel %vm3620, %v3614, %v307
  %v3632 = vsel %vm3620, %v3615, %v309
  %v3633 = vsel %vm3620, %v3616, %v311
  %v3634 = vsel %vm3620, %v3617, %v313
  %v3635 = vsel %vm3620, %v3618, %v315
  %v3636 = vsel %vm3620, %v3619, %v317
  %v3637 = vsel %vm111, %v3621, %v3460
  %v3638 = vsel %vm111, %v3622, %v3462
  %v3639 = vsel %vm111, %v3623, %v3464
  %v3640 = vsel %vm111, %v3624, %v3466
  %v3641 = vsel %vm111, %v3625, %v3468
  %v3642 = vsel %vm111, %v3626, %v3470
  %v3643 = vsel %vm111, %v3627, %v3472
  %v3644 = vsel %vm111, %v3628, %v3474
  %v3645 = vsel %vm111, %v3629, %v3476
  %v3646 = vsel %vm111, %v3630, %v3478
  %v3647 = vsel %vm111, %v3631, %v3480
  %v3648 = vsel %vm111, %v3632, %v3482
  %v3649 = vsel %vm111, %v3633, %v3484
  %v3650 = vsel %vm111, %v3634, %v3486
  %v3651 = vsel %vm111, %v3635, %v3488
  %v3652 = vsel %vm111, %v3636, %v3490
  %vm3653 = vcmask 523264
  %v3654 = vsel %vm3653, %v3637, %v3508
  %v3655 = vsel %vm3653, %v3638, %v3510
  %v3656 = vsel %vm3653, %v3639, %v3512
  %v3657 = vsel %vm3653, %v3640, %v3514
  %v3658 = vsel %vm3653, %v3641, %v3516
  %v3659 = vsel %vm3653, %v3642, %v3518
  %v3660 = vsel %vm3653, %v3643, %v3520
  %v3661 = vsel %vm3653, %v3644, %v3522
  %v3662 = vsel %vm3653, %v3645, %v3524
  %v3663 = vsel %vm3653, %v3646, %v3526
  %v3664 = vsel %vm3653, %v3647, %v3528
  %v3665 = vsel %vm3653, %v3648, %v3530
  %v3666 = vsel %vm3653, %v3649, %v3532
  %v3667 = vsel %vm3653, %v3650, %v3534
  %v3668 = vsel %vm3653, %v3651, %v3536
  %v3669 = vsel %vm3653, %v3652, %v3538
  %v3670 = vsel %vm624, %v3654, %v3556
  %v3671 = vsel %vm624, %v3655, %v3558
  %v3672 = vsel %vm624, %v3656, %v3560
  %v3673 = vsel %vm624, %v3657, %v3562
  %v3674 = vsel %vm624, %v3658, %v3564
  %v3675 = vsel %vm624, %v3659, %v3566
  %v3676 = vsel %vm624, %v3660, %v3568
  %v3677 = vsel %vm624, %v3661, %v3570
  %v3678 = vsel %vm624, %v3662, %v3572
  %v3679 = vsel %vm624, %v3663, %v3574
  %v3680 = vsel %vm624, %v3664, %v3576
  %v3681 = vsel %vm624, %v3665, %v3578
  %v3682 = vsel %vm624, %v3666, %v3580
  %v3683 = vsel %vm624, %v3667, %v3582
  %v3684 = vsel %vm624, %v3668, %v3584
  %v3685 = vsel %vm624, %v3669, %v3586
  %v3686 = vsel %vm237, %v3670, 0.0
  %v3687 = vsel %vm237, %v3671, 0.0
  %v3688 = vadd.f32 %v3686, %v3687
  %v3689 = vsel %vm237, %v3672, 0.0
  %v3690 = vadd.f32 %v3688, %v3689
  %v3691 = vsel %vm237, %v3673, 0.0
  %v3692 = vadd.f32 %v3690, %v3691
  %v3693 = vsel %vm237, %v3674, 0.0
  %v3694 = vadd.f32 %v3692, %v3693
  %v3695 = vsel %vm237, %v3675, 0.0
  %v3696 = vadd.f32 %v3694, %v3695
  %v3697 = vsel %vm237, %v3676, 0.0
  %v3698 = vadd.f32 %v3696, %v3697
  %v3699 = vsel %vm237, %v3677, 0.0
  %v3700 = vadd.f32 %v3698, %v3699
  %v3701 = vsel %vm237, %v3678, 0.0
  %v3702 = vadd.f32 %v3700, %v3701
  %v3703 = vsel %vm237, %v3679, 0.0
  %v3704 = vadd.f32 %v3702, %v3703
  %v3705 = vsel %vm237, %v3680, 0.0
  %v3706 = vadd.f32 %v3704, %v3705
  %v3707 = vsel %vm237, %v3681, 0.0
  %v3708 = vadd.f32 %v3706, %v3707
  %v3709 = vsel %vm237, %v3682, 0.0
  %v3710 = vadd.f32 %v3708, %v3709
  %v3711 = vsel %vm237, %v3683, 0.0
  %v3712 = vadd.f32 %v3710, %v3711
  %v3713 = vsel %vm237, %v3684, 0.0
  %v3714 = vadd.f32 %v3712, %v3713
  %v3715 = vsel %vm237, %v3685, 0.0
  %v3716 = vadd.f32 %v3714, %v3715
  %v3717 = vrot.slane %v3716, 4
  %v3718 = vadd.f32 %v3716, %v3717
  %v3719 = vrot.slane %v3718, 2
  %v3720 = vadd.f32 %v3718, %v3719
  %v3721 = vrot.slane %v3720, 1
  %v3722 = vadd.f32 %v3720, %v3721
  %v3723 = vmul.f32 %v3722, 0.0078125
  %v3724 = vmul.f32 %v3670, %v3670
  %v3725 = vmul.f32 %v3671, %v3671
  %v3726 = vmul.f32 %v3672, %v3672
  %v3727 = vmul.f32 %v3673, %v3673
  %v3728 = vmul.f32 %v3674, %v3674
  %v3729 = vmul.f32 %v3675, %v3675
  %v3730 = vmul.f32 %v3676, %v3676
  %v3731 = vmul.f32 %v3677, %v3677
  %v3732 = vmul.f32 %v3678, %v3678
  %v3733 = vmul.f32 %v3679, %v3679
  %v3734 = vmul.f32 %v3680, %v3680
  %v3735 = vmul.f32 %v3681, %v3681
  %v3736 = vmul.f32 %v3682, %v3682
  %v3737 = vmul.f32 %v3683, %v3683
  %v3738 = vmul.f32 %v3684, %v3684
  %v3739 = vmul.f32 %v3685, %v3685
  %v3740 = vsel %vm237, %v3724, 0.0
  %v3741 = vsel %vm237, %v3725, 0.0
  %v3742 = vadd.f32 %v3740, %v3741
  %v3743 = vsel %vm237, %v3726, 0.0
  %v3744 = vadd.f32 %v3742, %v3743
  %v3745 = vsel %vm237, %v3727, 0.0
  %v3746 = vadd.f32 %v3744, %v3745
  %v3747 = vsel %vm237, %v3728, 0.0
  %v3748 = vadd.f32 %v3746, %v3747
  %v3749 = vsel %vm237, %v3729, 0.0
  %v3750 = vadd.f32 %v3748, %v3749
  %v3751 = vsel %vm237, %v3730, 0.0
  %v3752 = vadd.f32 %v3750, %v3751
  %v3753 = vsel %vm237, %v3731, 0.0
  %v3754 = vadd.f32 %v3752, %v3753
  %v3755 = vsel %vm237, %v3732, 0.0
  %v3756 = vadd.f32 %v3754, %v3755
  %v3757 = vsel %vm237, %v3733, 0.0
  %v3758 = vadd.f32 %v3756, %v3757
  %v3759 = vsel %vm237, %v3734, 0.0
  %v3760 = vadd.f32 %v3758, %v3759
  %v3761 = vsel %vm237, %v3735, 0.0
  %v3762 = vadd.f32 %v3760, %v3761
  %v3763 = vsel %vm237, %v3736, 0.0
  %v3764 = vadd.f32 %v3762, %v3763
  %v3765 = vsel %vm237, %v3737, 0.0
  %v3766 = vadd.f32 %v3764, %v3765
  %v3767 = vsel %vm237, %v3738, 0.0
  %v3768 = vadd.f32 %v3766, %v3767
  %v3769 = vsel %vm237, %v3739, 0.0
  %v3770 = vadd.f32 %v3768, %v3769
  %v3771 = vrot.slane %v3770, 4
  %v3772 = vadd.f32 %v3770, %v3771
  %v3773 = vrot.slane %v3772, 2
  %v3774 = vadd.f32 %v3772, %v3773
  %v3775 = vrot.slane %v3774, 1
  %v3776 = vadd.f32 %v3774, %v3775
  %v3777 = vmul.f32 %v3776, 0.0078125
  %3779 = vrot.lane.b32.xlu0 %v3723, 96
  %v3780 = vpop.permute.xlu0 %3779
  %v3782 = vadd.f32 %v3723, %v3780
  %v3783 = vmul.f32 %v3782, 0.5
  %3785 = vrot.lane.b32.xlu0 %v3777, 96
  %v3786 = vpop.permute.xlu0 %3785
  %v3788 = vadd.f32 %v3777, %v3786
  %v3789 = vmul.f32 %v3788, 0.5
  %3791 = vrot.lane.b32.xlu0 %v3783, 32
  %v3792 = vpop.permute.xlu0 %3791
  %v3794 = vsel %vm3620, %v3783, %v3792
  %v3795 = vsel %vm3653, %v3794, %v3723
  %v3796 = vmul.f32 %v3783, %v3783
  %v3797 = vsub.f32 %v3789, %v3796
  %v3798 = vmul.f32 %v3723, %v3723
  %v3799 = vsub.f32 %v3777, %v3798
  %3801 = vrot.lane.b32.xlu0 %v3797, 32
  %v3802 = vpop.permute.xlu0 %3801
  %v3804 = vsel %vm3620, %v3797, %v3802
  %v3805 = vsel %vm3653, %v3804, %v3799
  %v3806 = vlaneseq
  %v3807 = vshrl.u32 %v3806, 7
  %v3808 = vsub.s32 0, %v3807
  %v3809 = vrot.slane %v3795, %v3808
  %v3810 = vsub.f32 %v3670, %v3809
  %v3811 = vsub.f32 %v3671, %v3809
  %v3812 = vsub.f32 %v3672, %v3809
  %v3813 = vsub.f32 %v3673, %v3809
  %v3814 = vsub.f32 %v3674, %v3809
  %v3815 = vsub.f32 %v3675, %v3809
  %v3816 = vsub.f32 %v3676, %v3809
  %v3817 = vsub.f32 %v3677, %v3809
  %v3818 = vsub.f32 %v3678, %v3809
  %v3819 = vsub.f32 %v3679, %v3809
  %v3820 = vsub.f32 %v3680, %v3809
  %v3821 = vsub.f32 %v3681, %v3809
  %v3822 = vsub.f32 %v3682, %v3809
  %v3823 = vsub.f32 %v3683, %v3809
  %v3824 = vsub.f32 %v3684, %v3809
  %v3825 = vsub.f32 %v3685, %v3809
  %v3826 = vadd.f32 %v3805, 1e-05
  %v3827 = vrsqrt.pop %v3826
  %v3828 = vlaneseq
  %v3829 = vshrl.u32 %v3828, 7
  %v3830 = vsub.s32 0, %v3829
  %v3831 = vrot.slane %v3827, %v3830
  %v3832 = vmul.f32 %v3810, %v3831
  %v3833 = vmul.f32 %v3811, %v3831
  %v3834 = vmul.f32 %v3812, %v3831
  %v3835 = vmul.f32 %v3813, %v3831
  %v3836 = vmul.f32 %v3814, %v3831
  %v3837 = vmul.f32 %v3815, %v3831
  %v3838 = vmul.f32 %v3816, %v3831
  %v3839 = vmul.f32 %v3817, %v3831
  %v3840 = vmul.f32 %v3818, %v3831
  %v3841 = vmul.f32 %v3819, %v3831
  %v3842 = vmul.f32 %v3820, %v3831
  %v3843 = vmul.f32 %v3821, %v3831
  %v3844 = vmul.f32 %v3822, %v3831
  %v3845 = vmul.f32 %v3823, %v3831
  %v3846 = vmul.f32 %v3824, %v3831
  %v3847 = vmul.f32 %v3825, %v3831
  %v3848 = vld [vmem:[%s6] sm:$0x1]
  %v3850 = vlaneseq
  %v3851 = vshrl.u32 %v3850, 7
  %v3852 = vsub.s32 0, %v3851
  %v3853 = vrot.slane %v3848, %v3852
  %v3855 = vmul.f32 %v3832, %v3853
  %v3856 = vmul.f32 %v3833, %v3853
  %v3857 = vmul.f32 %v3834, %v3853
  %v3858 = vmul.f32 %v3835, %v3853
  %v3859 = vmul.f32 %v3836, %v3853
  %v3860 = vmul.f32 %v3837, %v3853
  %v3861 = vmul.f32 %v3838, %v3853
  %v3862 = vmul.f32 %v3839, %v3853
  %v3863 = vmul.f32 %v3840, %v3853
  %v3864 = vmul.f32 %v3841, %v3853
  %v3865 = vmul.f32 %v3842, %v3853
  %v3866 = vmul.f32 %v3843, %v3853
  %v3867 = vmul.f32 %v3844, %v3853
  %v3868 = vmul.f32 %v3845, %v3853
  %v3869 = vmul.f32 %v3846, %v3853
  %v3870 = vmul.f32 %v3847, %v3853
  %v3871 = vld [vmem:[%s7] sm:$0x1]
  %v3873 = vlaneseq
  %v3874 = vshrl.u32 %v3873, 7
  %v3875 = vsub.s32 0, %v3874
  %v3876 = vrot.slane %v3871, %v3875
  %v3878 = vadd.f32 %v3855, %v3876
  %v3879 = vadd.f32 %v3856, %v3876
  %v3880 = vadd.f32 %v3857, %v3876
  %v3881 = vadd.f32 %v3858, %v3876
  %v3882 = vadd.f32 %v3859, %v3876
  %v3883 = vadd.f32 %v3860, %v3876
  %v3884 = vadd.f32 %v3861, %v3876
  %v3885 = vadd.f32 %v3862, %v3876
  %v3886 = vadd.f32 %v3863, %v3876
  %v3887 = vadd.f32 %v3864, %v3876
  %v3888 = vadd.f32 %v3865, %v3876
  %v3889 = vadd.f32 %v3866, %v3876
  %v3890 = vadd.f32 %v3867, %v3876
  %v3891 = vadd.f32 %v3868, %v3876
  %v3892 = vadd.f32 %v3869, %v3876
  %v3893 = vadd.f32 %v3870, %v3876
  %v3894 = vadd.f32 %v3878, 3.0
  %v3895 = vadd.f32 %v3879, 3.0
  %v3896 = vadd.f32 %v3880, 3.0
  %v3897 = vadd.f32 %v3881, 3.0
  %v3898 = vadd.f32 %v3882, 3.0
  %v3899 = vadd.f32 %v3883, 3.0
  %v3900 = vadd.f32 %v3884, 3.0
  %v3901 = vadd.f32 %v3885, 3.0
  %v3902 = vadd.f32 %v3886, 3.0
  %v3903 = vadd.f32 %v3887, 3.0
  %v3904 = vadd.f32 %v3888, 3.0
  %v3905 = vadd.f32 %v3889, 3.0
  %v3906 = vadd.f32 %v3890, 3.0
  %v3907 = vadd.f32 %v3891, 3.0
  %v3908 = vadd.f32 %v3892, 3.0
  %v3909 = vadd.f32 %v3893, 3.0
  %v3910 = vmax.f32 %v3894, 0.0
  %v3911 = vmax.f32 %v3895, 0.0
  %v3912 = vmax.f32 %v3896, 0.0
  %v3913 = vmax.f32 %v3897, 0.0
  %v3914 = vmax.f32 %v3898, 0.0
  %v3915 = vmax.f32 %v3899, 0.0
  %v3916 = vmax.f32 %v3900, 0.0
  %v3917 = vmax.f32 %v3901, 0.0
  %v3918 = vmax.f32 %v3902, 0.0
  %v3919 = vmax.f32 %v3903, 0.0
  %v3920 = vmax.f32 %v3904, 0.0
  %v3921 = vmax.f32 %v3905, 0.0
  %v3922 = vmax.f32 %v3906, 0.0
  %v3923 = vmax.f32 %v3907, 0.0
  %v3924 = vmax.f32 %v3908, 0.0
  %v3925 = vmax.f32 %v3909, 0.0
  %v3926 = vmin.f32 %v3910, 6.0
  %v3927 = vmin.f32 %v3911, 6.0
  %v3928 = vmin.f32 %v3912, 6.0
  %v3929 = vmin.f32 %v3913, 6.0
  %v3930 = vmin.f32 %v3914, 6.0
  %v3931 = vmin.f32 %v3915, 6.0
  %v3932 = vmin.f32 %v3916, 6.0
  %v3933 = vmin.f32 %v3917, 6.0
  %v3934 = vmin.f32 %v3918, 6.0
  %v3935 = vmin.f32 %v3919, 6.0
  %v3936 = vmin.f32 %v3920, 6.0
  %v3937 = vmin.f32 %v3921, 6.0
  %v3938 = vmin.f32 %v3922, 6.0
  %v3939 = vmin.f32 %v3923, 6.0
  %v3940 = vmin.f32 %v3924, 6.0
  %v3941 = vmin.f32 %v3925, 6.0
  %v3942 = vmul.f32 %v3878, %v3926
  %v3943 = vmul.f32 %v3879, %v3927
  %v3944 = vmul.f32 %v3880, %v3928
  %v3945 = vmul.f32 %v3881, %v3929
  %v3946 = vmul.f32 %v3882, %v3930
  %v3947 = vmul.f32 %v3883, %v3931
  %v3948 = vmul.f32 %v3884, %v3932
  %v3949 = vmul.f32 %v3885, %v3933
  %v3950 = vmul.f32 %v3886, %v3934
  %v3951 = vmul.f32 %v3887, %v3935
  %v3952 = vmul.f32 %v3888, %v3936
  %v3953 = vmul.f32 %v3889, %v3937
  %v3954 = vmul.f32 %v3890, %v3938
  %v3955 = vmul.f32 %v3891, %v3939
  %v3956 = vmul.f32 %v3892, %v3940
  %v3957 = vmul.f32 %v3893, %v3941
  %v3958 = vmul.f32 %v3942, 0.16666667
  %v3959 = vmul.f32 %v3943, 0.16666667
  %v3960 = vmul.f32 %v3944, 0.16666667
  %v3961 = vmul.f32 %v3945, 0.16666667
  %v3962 = vmul.f32 %v3946, 0.16666667
  %v3963 = vmul.f32 %v3947, 0.16666667
  %v3964 = vmul.f32 %v3948, 0.16666667
  %v3965 = vmul.f32 %v3949, 0.16666667
  %v3966 = vmul.f32 %v3950, 0.16666667
  %v3967 = vmul.f32 %v3951, 0.16666667
  %v3968 = vmul.f32 %v3952, 0.16666667
  %v3969 = vmul.f32 %v3953, 0.16666667
  %v3970 = vmul.f32 %v3954, 0.16666667
  %v3971 = vmul.f32 %v3955, 0.16666667
  %v3972 = vmul.f32 %v3956, 0.16666667
  %v3973 = vmul.f32 %v3957, 0.16666667
  %v3974 = vld [vmem:[%s8] sm:$0x1]
  %v3975 = vld [vmem:[%s9] sm:$0x1]
  %3976 = vrot.lane.b32.xlu0 %v3333, 56
  %v3977 = vpop.permute.xlu0 %3976
  %3978 = vrot.lane.b32.xlu0 %v3336, 56
  %v3979 = vpop.permute.xlu0 %3978
  %3980 = vrot.lane.b32.xlu0 %v3341, 56
  %v3981 = vpop.permute.xlu0 %3980
  %3982 = vrot.lane.b32.xlu0 %v3344, 56
  %v3983 = vpop.permute.xlu0 %3982
  %3984 = vrot.lane.b32.xlu0 %v3349, 56
  %v3985 = vpop.permute.xlu0 %3984
  %3986 = vrot.lane.b32.xlu0 %v3352, 56
  %v3987 = vpop.permute.xlu0 %3986
  %3988 = vrot.lane.b32.xlu0 %v3357, 56
  %v3989 = vpop.permute.xlu0 %3988
  %3990 = vrot.lane.b32.xlu0 %v3360, 56
  %v3991 = vpop.permute.xlu0 %3990
  %3992 = vrot.lane.b32.xlu0 %v3365, 56
  %v3993 = vpop.permute.xlu0 %3992
  %3994 = vrot.lane.b32.xlu0 %v3368, 56
  %v3995 = vpop.permute.xlu0 %3994
  %3996 = vrot.lane.b32.xlu0 %v3373, 56
  %v3997 = vpop.permute.xlu0 %3996
  %3998 = vrot.lane.b32.xlu0 %v3376, 56
  %v3999 = vpop.permute.xlu0 %3998
  %4000 = vrot.lane.b32.xlu0 %v3381, 56
  %v4001 = vpop.permute.xlu0 %4000
  %4002 = vrot.lane.b32.xlu0 %v3384, 56
  %v4003 = vpop.permute.xlu0 %4002
  %4004 = vrot.lane.b32.xlu0 %v3389, 56
  %v4005 = vpop.permute.xlu0 %4004
  %4006 = vrot.lane.b32.xlu0 %v3392, 56
  %v4007 = vpop.permute.xlu0 %4006
  %v4024 = vsel %vm3603, %v3977, 0.0
  %4025 = vadd.xlane.f32.xlu0 %v4024
  %v4026 = vpop.xlane.xlu0 %4025
  %v4027 = vsel %vm3603, %v3979, 0.0
  %4028 = vadd.xlane.f32.xlu0 %v4027
  %v4029 = vpop.xlane.xlu0 %4028
  %v4030 = vsel %vm3603, %v3981, 0.0
  %4031 = vadd.xlane.f32.xlu0 %v4030
  %v4032 = vpop.xlane.xlu0 %4031
  %v4033 = vsel %vm3603, %v3983, 0.0
  %4034 = vadd.xlane.f32.xlu0 %v4033
  %v4035 = vpop.xlane.xlu0 %4034
  %v4036 = vsel %vm3603, %v3985, 0.0
  %4037 = vadd.xlane.f32.xlu0 %v4036
  %v4038 = vpop.xlane.xlu0 %4037
  %v4039 = vsel %vm3603, %v3987, 0.0
  %4040 = vadd.xlane.f32.xlu0 %v4039
  %v4041 = vpop.xlane.xlu0 %4040
  %v4042 = vsel %vm3603, %v3989, 0.0
  %4043 = vadd.xlane.f32.xlu0 %v4042
  %v4044 = vpop.xlane.xlu0 %4043
  %v4045 = vsel %vm3603, %v3991, 0.0
  %4046 = vadd.xlane.f32.xlu0 %v4045
  %v4047 = vpop.xlane.xlu0 %4046
  %v4048 = vsel %vm3603, %v3993, 0.0
  %4049 = vadd.xlane.f32.xlu0 %v4048
  %v4050 = vpop.xlane.xlu0 %4049
  %v4051 = vsel %vm3603, %v3995, 0.0
  %4052 = vadd.xlane.f32.xlu0 %v4051
  %v4053 = vpop.xlane.xlu0 %4052
  %v4054 = vsel %vm3603, %v3997, 0.0
  %4055 = vadd.xlane.f32.xlu0 %v4054
  %v4056 = vpop.xlane.xlu0 %4055
  %v4057 = vsel %vm3603, %v3999, 0.0
  %4058 = vadd.xlane.f32.xlu0 %v4057
  %v4059 = vpop.xlane.xlu0 %4058
  %v4060 = vsel %vm3603, %v4001, 0.0
  %4061 = vadd.xlane.f32.xlu0 %v4060
  %v4062 = vpop.xlane.xlu0 %4061
  %v4063 = vsel %vm3603, %v4003, 0.0
  %4064 = vadd.xlane.f32.xlu0 %v4063
  %v4065 = vpop.xlane.xlu0 %4064
  %v4066 = vsel %vm3603, %v4005, 0.0
  %4067 = vadd.xlane.f32.xlu0 %v4066
  %v4068 = vpop.xlane.xlu0 %4067
  %v4069 = vsel %vm3603, %v4007, 0.0
  %4070 = vadd.xlane.f32.xlu0 %v4069
  %v4071 = vpop.xlane.xlu0 %4070
  %v4072 = vrcp.pop 8.0
  %v4073 = vmul.f32 %v4026, %v4072
  %v4074 = vmul.f32 %v4029, %v4072
  %v4075 = vmul.f32 %v4032, %v4072
  %v4076 = vmul.f32 %v4035, %v4072
  %v4077 = vmul.f32 %v4038, %v4072
  %v4078 = vmul.f32 %v4041, %v4072
  %v4079 = vmul.f32 %v4044, %v4072
  %v4080 = vmul.f32 %v4047, %v4072
  %v4081 = vmul.f32 %v4050, %v4072
  %v4082 = vmul.f32 %v4053, %v4072
  %v4083 = vmul.f32 %v4056, %v4072
  %v4084 = vmul.f32 %v4059, %v4072
  %v4085 = vmul.f32 %v4062, %v4072
  %v4086 = vmul.f32 %v4065, %v4072
  %v4087 = vmul.f32 %v4068, %v4072
  %v4088 = vmul.f32 %v4071, %v4072
  %v4089 = vsub.f32 %v3333, %v4073
  %v4090 = vsub.f32 %v3336, %v4074
  %v4091 = vsub.f32 %v3341, %v4075
  %v4092 = vsub.f32 %v3344, %v4076
  %v4093 = vsub.f32 %v3349, %v4077
  %v4094 = vsub.f32 %v3352, %v4078
  %v4095 = vsub.f32 %v3357, %v4079
  %v4096 = vsub.f32 %v3360, %v4080
  %v4097 = vsub.f32 %v3365, %v4081
  %v4098 = vsub.f32 %v3368, %v4082
  %v4099 = vsub.f32 %v3373, %v4083
  %v4100 = vsub.f32 %v3376, %v4084
  %v4101 = vsub.f32 %v3381, %v4085
  %v4102 = vsub.f32 %v3384, %v4086
  %v4103 = vsub.f32 %v3389, %v4087
  %v4104 = vsub.f32 %v3392, %v4088
  %v4105 = vmul.f32 %v4089, %v4089
  %v4106 = vmul.f32 %v4090, %v4090
  %v4107 = vmul.f32 %v4091, %v4091
  %v4108 = vmul.f32 %v4092, %v4092
  %v4109 = vmul.f32 %v4093, %v4093
  %v4110 = vmul.f32 %v4094, %v4094
  %v4111 = vmul.f32 %v4095, %v4095
  %v4112 = vmul.f32 %v4096, %v4096
  %v4113 = vmul.f32 %v4097, %v4097
  %v4114 = vmul.f32 %v4098, %v4098
  %v4115 = vmul.f32 %v4099, %v4099
  %v4116 = vmul.f32 %v4100, %v4100
  %v4117 = vmul.f32 %v4101, %v4101
  %v4118 = vmul.f32 %v4102, %v4102
  %v4119 = vmul.f32 %v4103, %v4103
  %v4120 = vmul.f32 %v4104, %v4104
  %4137 = vrot.lane.b32.xlu0 %v4105, 56
  %v4138 = vpop.permute.xlu0 %4137
  %4139 = vrot.lane.b32.xlu0 %v4106, 56
  %v4140 = vpop.permute.xlu0 %4139
  %4141 = vrot.lane.b32.xlu0 %v4107, 56
  %v4142 = vpop.permute.xlu0 %4141
  %4143 = vrot.lane.b32.xlu0 %v4108, 56
  %v4144 = vpop.permute.xlu0 %4143
  %4145 = vrot.lane.b32.xlu0 %v4109, 56
  %v4146 = vpop.permute.xlu0 %4145
  %4147 = vrot.lane.b32.xlu0 %v4110, 56
  %v4148 = vpop.permute.xlu0 %4147
  %4149 = vrot.lane.b32.xlu0 %v4111, 56
  %v4150 = vpop.permute.xlu0 %4149
  %4151 = vrot.lane.b32.xlu0 %v4112, 56
  %v4152 = vpop.permute.xlu0 %4151
  %4153 = vrot.lane.b32.xlu0 %v4113, 56
  %v4154 = vpop.permute.xlu0 %4153
  %4155 = vrot.lane.b32.xlu0 %v4114, 56
  %v4156 = vpop.permute.xlu0 %4155
  %4157 = vrot.lane.b32.xlu0 %v4115, 56
  %v4158 = vpop.permute.xlu0 %4157
  %4159 = vrot.lane.b32.xlu0 %v4116, 56
  %v4160 = vpop.permute.xlu0 %4159
  %4161 = vrot.lane.b32.xlu0 %v4117, 56
  %v4162 = vpop.permute.xlu0 %4161
  %4163 = vrot.lane.b32.xlu0 %v4118, 56
  %v4164 = vpop.permute.xlu0 %4163
  %4165 = vrot.lane.b32.xlu0 %v4119, 56
  %v4166 = vpop.permute.xlu0 %4165
  %4167 = vrot.lane.b32.xlu0 %v4120, 56
  %v4168 = vpop.permute.xlu0 %4167
  %v4185 = vsel %vm3603, %v4138, 0.0
  %4186 = vadd.xlane.f32.xlu0 %v4185
  %v4187 = vpop.xlane.xlu0 %4186
  %v4188 = vsel %vm3603, %v4140, 0.0
  %4189 = vadd.xlane.f32.xlu0 %v4188
  %v4190 = vpop.xlane.xlu0 %4189
  %v4191 = vsel %vm3603, %v4142, 0.0
  %4192 = vadd.xlane.f32.xlu0 %v4191
  %v4193 = vpop.xlane.xlu0 %4192
  %v4194 = vsel %vm3603, %v4144, 0.0
  %4195 = vadd.xlane.f32.xlu0 %v4194
  %v4196 = vpop.xlane.xlu0 %4195
  %v4197 = vsel %vm3603, %v4146, 0.0
  %4198 = vadd.xlane.f32.xlu0 %v4197
  %v4199 = vpop.xlane.xlu0 %4198
  %v4200 = vsel %vm3603, %v4148, 0.0
  %4201 = vadd.xlane.f32.xlu0 %v4200
  %v4202 = vpop.xlane.xlu0 %4201
  %v4203 = vsel %vm3603, %v4150, 0.0
  %4204 = vadd.xlane.f32.xlu0 %v4203
  %v4205 = vpop.xlane.xlu0 %4204
  %v4206 = vsel %vm3603, %v4152, 0.0
  %4207 = vadd.xlane.f32.xlu0 %v4206
  %v4208 = vpop.xlane.xlu0 %4207
  %v4209 = vsel %vm3603, %v4154, 0.0
  %4210 = vadd.xlane.f32.xlu0 %v4209
  %v4211 = vpop.xlane.xlu0 %4210
  %v4212 = vsel %vm3603, %v4156, 0.0
  %4213 = vadd.xlane.f32.xlu0 %v4212
  %v4214 = vpop.xlane.xlu0 %4213
  %v4215 = vsel %vm3603, %v4158, 0.0
  %4216 = vadd.xlane.f32.xlu0 %v4215
  %v4217 = vpop.xlane.xlu0 %4216
  %v4218 = vsel %vm3603, %v4160, 0.0
  %4219 = vadd.xlane.f32.xlu0 %v4218
  %v4220 = vpop.xlane.xlu0 %4219
  %v4221 = vsel %vm3603, %v4162, 0.0
  %4222 = vadd.xlane.f32.xlu0 %v4221
  %v4223 = vpop.xlane.xlu0 %4222
  %v4224 = vsel %vm3603, %v4164, 0.0
  %4225 = vadd.xlane.f32.xlu0 %v4224
  %v4226 = vpop.xlane.xlu0 %4225
  %v4227 = vsel %vm3603, %v4166, 0.0
  %4228 = vadd.xlane.f32.xlu0 %v4227
  %v4229 = vpop.xlane.xlu0 %4228
  %v4230 = vsel %vm3603, %v4168, 0.0
  %4231 = vadd.xlane.f32.xlu0 %v4230
  %v4232 = vpop.xlane.xlu0 %4231
  %v4233 = vmul.f32 %v4187, %v4072
  %v4234 = vmul.f32 %v4190, %v4072
  %v4235 = vmul.f32 %v4193, %v4072
  %v4236 = vmul.f32 %v4196, %v4072
  %v4237 = vmul.f32 %v4199, %v4072
  %v4238 = vmul.f32 %v4202, %v4072
  %v4239 = vmul.f32 %v4205, %v4072
  %v4240 = vmul.f32 %v4208, %v4072
  %v4241 = vmul.f32 %v4211, %v4072
  %v4242 = vmul.f32 %v4214, %v4072
  %v4243 = vmul.f32 %v4217, %v4072
  %v4244 = vmul.f32 %v4220, %v4072
  %v4245 = vmul.f32 %v4223, %v4072
  %v4246 = vmul.f32 %v4226, %v4072
  %v4247 = vmul.f32 %v4229, %v4072
  %v4248 = vmul.f32 %v4232, %v4072
  %v4249 = vadd.f32 %v4233, 1e-05
  %v4250 = vadd.f32 %v4234, 1e-05
  %v4251 = vadd.f32 %v4235, 1e-05
  %v4252 = vadd.f32 %v4236, 1e-05
  %v4253 = vadd.f32 %v4237, 1e-05
  %v4254 = vadd.f32 %v4238, 1e-05
  %v4255 = vadd.f32 %v4239, 1e-05
  %v4256 = vadd.f32 %v4240, 1e-05
  %v4257 = vadd.f32 %v4241, 1e-05
  %v4258 = vadd.f32 %v4242, 1e-05
  %v4259 = vadd.f32 %v4243, 1e-05
  %v4260 = vadd.f32 %v4244, 1e-05
  %v4261 = vadd.f32 %v4245, 1e-05
  %v4262 = vadd.f32 %v4246, 1e-05
  %v4263 = vadd.f32 %v4247, 1e-05
  %v4264 = vadd.f32 %v4248, 1e-05
  %v4265 = vrsqrt.pop %v4249
  %v4266 = vrsqrt.pop %v4250
  %v4267 = vrsqrt.pop %v4251
  %v4268 = vrsqrt.pop %v4252
  %v4269 = vrsqrt.pop %v4253
  %v4270 = vrsqrt.pop %v4254
  %v4271 = vrsqrt.pop %v4255
  %v4272 = vrsqrt.pop %v4256
  %v4273 = vrsqrt.pop %v4257
  %v4274 = vrsqrt.pop %v4258
  %v4275 = vrsqrt.pop %v4259
  %v4276 = vrsqrt.pop %v4260
  %v4277 = vrsqrt.pop %v4261
  %v4278 = vrsqrt.pop %v4262
  %v4279 = vrsqrt.pop %v4263
  %v4280 = vrsqrt.pop %v4264
  %v4281 = vmul.f32 %v4089, %v4265
  %v4282 = vmul.f32 %v4090, %v4266
  %v4283 = vmul.f32 %v4091, %v4267
  %v4284 = vmul.f32 %v4092, %v4268
  %v4285 = vmul.f32 %v4093, %v4269
  %v4286 = vmul.f32 %v4094, %v4270
  %v4287 = vmul.f32 %v4095, %v4271
  %v4288 = vmul.f32 %v4096, %v4272
  %v4289 = vmul.f32 %v4097, %v4273
  %v4290 = vmul.f32 %v4098, %v4274
  %v4291 = vmul.f32 %v4099, %v4275
  %v4292 = vmul.f32 %v4100, %v4276
  %v4293 = vmul.f32 %v4101, %v4277
  %v4294 = vmul.f32 %v4102, %v4278
  %v4295 = vmul.f32 %v4103, %v4279
  %v4296 = vmul.f32 %v4104, %v4280
  %v4298 = vlaneseq
  %v4299 = vshrl.u32 %v4298, 7
  %v4300 = vsub.s32 0, %v4299
  %v4301 = vrot.slane %v3974, %v4300
  %4302 = vrot.lane.b32.xlu0 %v4301, 72
  %v4303 = vpop.permute.xlu0 %4302
  %v4305 = vmul.f32 %v4281, %v4303
  %v4306 = vmul.f32 %v4282, %v4303
  %v4307 = vmul.f32 %v4283, %v4303
  %v4308 = vmul.f32 %v4284, %v4303
  %v4309 = vmul.f32 %v4285, %v4303
  %v4310 = vmul.f32 %v4286, %v4303
  %v4311 = vmul.f32 %v4287, %v4303
  %v4312 = vmul.f32 %v4288, %v4303
  %v4313 = vmul.f32 %v4289, %v4303
  %v4314 = vmul.f32 %v4290, %v4303
  %v4315 = vmul.f32 %v4291, %v4303
  %v4316 = vmul.f32 %v4292, %v4303
  %v4317 = vmul.f32 %v4293, %v4303
  %v4318 = vmul.f32 %v4294, %v4303
  %v4319 = vmul.f32 %v4295, %v4303
  %v4320 = vmul.f32 %v4296, %v4303
  %v4322 = vlaneseq
  %v4323 = vshrl.u32 %v4322, 7
  %v4324 = vsub.s32 0, %v4323
  %v4325 = vrot.slane %v3975, %v4324
  %4326 = vrot.lane.b32.xlu0 %v4325, 72
  %v4327 = vpop.permute.xlu0 %4326
  %v4329 = vadd.f32 %v4305, %v4327
  %v4330 = vadd.f32 %v4306, %v4327
  %v4331 = vadd.f32 %v4307, %v4327
  %v4332 = vadd.f32 %v4308, %v4327
  %v4333 = vadd.f32 %v4309, %v4327
  %v4334 = vadd.f32 %v4310, %v4327
  %v4335 = vadd.f32 %v4311, %v4327
  %v4336 = vadd.f32 %v4312, %v4327
  %v4337 = vadd.f32 %v4313, %v4327
  %v4338 = vadd.f32 %v4314, %v4327
  %v4339 = vadd.f32 %v4315, %v4327
  %v4340 = vadd.f32 %v4316, %v4327
  %v4341 = vadd.f32 %v4317, %v4327
  %v4342 = vadd.f32 %v4318, %v4327
  %v4343 = vadd.f32 %v4319, %v4327
  %v4344 = vadd.f32 %v4320, %v4327
  %v4345 = vadd.f32 %v4329, 3.0
  %v4346 = vadd.f32 %v4330, 3.0
  %v4347 = vadd.f32 %v4331, 3.0
  %v4348 = vadd.f32 %v4332, 3.0
  %v4349 = vadd.f32 %v4333, 3.0
  %v4350 = vadd.f32 %v4334, 3.0
  %v4351 = vadd.f32 %v4335, 3.0
  %v4352 = vadd.f32 %v4336, 3.0
  %v4353 = vadd.f32 %v4337, 3.0
  %v4354 = vadd.f32 %v4338, 3.0
  %v4355 = vadd.f32 %v4339, 3.0
  %v4356 = vadd.f32 %v4340, 3.0
  %v4357 = vadd.f32 %v4341, 3.0
  %v4358 = vadd.f32 %v4342, 3.0
  %v4359 = vadd.f32 %v4343, 3.0
  %v4360 = vadd.f32 %v4344, 3.0
  %v4361 = vmax.f32 %v4345, 0.0
  %v4362 = vmax.f32 %v4346, 0.0
  %v4363 = vmax.f32 %v4347, 0.0
  %v4364 = vmax.f32 %v4348, 0.0
  %v4365 = vmax.f32 %v4349, 0.0
  %v4366 = vmax.f32 %v4350, 0.0
  %v4367 = vmax.f32 %v4351, 0.0
  %v4368 = vmax.f32 %v4352, 0.0
  %v4369 = vmax.f32 %v4353, 0.0
  %v4370 = vmax.f32 %v4354, 0.0
  %v4371 = vmax.f32 %v4355, 0.0
  %v4372 = vmax.f32 %v4356, 0.0
  %v4373 = vmax.f32 %v4357, 0.0
  %v4374 = vmax.f32 %v4358, 0.0
  %v4375 = vmax.f32 %v4359, 0.0
  %v4376 = vmax.f32 %v4360, 0.0
  %v4377 = vmin.f32 %v4361, 6.0
  %v4378 = vmin.f32 %v4362, 6.0
  %v4379 = vmin.f32 %v4363, 6.0
  %v4380 = vmin.f32 %v4364, 6.0
  %v4381 = vmin.f32 %v4365, 6.0
  %v4382 = vmin.f32 %v4366, 6.0
  %v4383 = vmin.f32 %v4367, 6.0
  %v4384 = vmin.f32 %v4368, 6.0
  %v4385 = vmin.f32 %v4369, 6.0
  %v4386 = vmin.f32 %v4370, 6.0
  %v4387 = vmin.f32 %v4371, 6.0
  %v4388 = vmin.f32 %v4372, 6.0
  %v4389 = vmin.f32 %v4373, 6.0
  %v4390 = vmin.f32 %v4374, 6.0
  %v4391 = vmin.f32 %v4375, 6.0
  %v4392 = vmin.f32 %v4376, 6.0
  %v4393 = vmul.f32 %v4329, %v4377
  %v4394 = vmul.f32 %v4330, %v4378
  %v4395 = vmul.f32 %v4331, %v4379
  %v4396 = vmul.f32 %v4332, %v4380
  %v4397 = vmul.f32 %v4333, %v4381
  %v4398 = vmul.f32 %v4334, %v4382
  %v4399 = vmul.f32 %v4335, %v4383
  %v4400 = vmul.f32 %v4336, %v4384
  %v4401 = vmul.f32 %v4337, %v4385
  %v4402 = vmul.f32 %v4338, %v4386
  %v4403 = vmul.f32 %v4339, %v4387
  %v4404 = vmul.f32 %v4340, %v4388
  %v4405 = vmul.f32 %v4341, %v4389
  %v4406 = vmul.f32 %v4342, %v4390
  %v4407 = vmul.f32 %v4343, %v4391
  %v4408 = vmul.f32 %v4344, %v4392
  %v4409 = vmul.f32 %v4393, 0.16666667
  %v4410 = vmul.f32 %v4394, 0.16666667
  %v4411 = vmul.f32 %v4395, 0.16666667
  %v4412 = vmul.f32 %v4396, 0.16666667
  %v4413 = vmul.f32 %v4397, 0.16666667
  %v4414 = vmul.f32 %v4398, 0.16666667
  %v4415 = vmul.f32 %v4399, 0.16666667
  %v4416 = vmul.f32 %v4400, 0.16666667
  %v4417 = vmul.f32 %v4401, 0.16666667
  %v4418 = vmul.f32 %v4402, 0.16666667
  %v4419 = vmul.f32 %v4403, 0.16666667
  %v4420 = vmul.f32 %v4404, 0.16666667
  %v4421 = vmul.f32 %v4405, 0.16666667
  %v4422 = vmul.f32 %v4406, 0.16666667
  %v4423 = vmul.f32 %v4407, 0.16666667
  %v4424 = vmul.f32 %v4408, 0.16666667
  %4425 = vrot.lane.b32.xlu0 %v3333, 48
  %v4426 = vpop.permute.xlu0 %4425
  %4427 = vrot.lane.b32.xlu0 %v3336, 48
  %v4428 = vpop.permute.xlu0 %4427
  %4429 = vrot.lane.b32.xlu0 %v3341, 48
  %v4430 = vpop.permute.xlu0 %4429
  %4431 = vrot.lane.b32.xlu0 %v3344, 48
  %v4432 = vpop.permute.xlu0 %4431
  %4433 = vrot.lane.b32.xlu0 %v3349, 48
  %v4434 = vpop.permute.xlu0 %4433
  %4435 = vrot.lane.b32.xlu0 %v3352, 48
  %v4436 = vpop.permute.xlu0 %4435
  %4437 = vrot.lane.b32.xlu0 %v3357, 48
  %v4438 = vpop.permute.xlu0 %4437
  %4439 = vrot.lane.b32.xlu0 %v3360, 48
  %v4440 = vpop.permute.xlu0 %4439
  %4441 = vrot.lane.b32.xlu0 %v3365, 48
  %v4442 = vpop.permute.xlu0 %4441
  %4443 = vrot.lane.b32.xlu0 %v3368, 48
  %v4444 = vpop.permute.xlu0 %4443
  %4445 = vrot.lane.b32.xlu0 %v3373, 48
  %v4446 = vpop.permute.xlu0 %4445
  %4447 = vrot.lane.b32.xlu0 %v3376, 48
  %v4448 = vpop.permute.xlu0 %4447
  %4449 = vrot.lane.b32.xlu0 %v3381, 48
  %v4450 = vpop.permute.xlu0 %4449
  %4451 = vrot.lane.b32.xlu0 %v3384, 48
  %v4452 = vpop.permute.xlu0 %4451
  %4453 = vrot.lane.b32.xlu0 %v3389, 48
  %v4454 = vpop.permute.xlu0 %4453
  %4455 = vrot.lane.b32.xlu0 %v3392, 48
  %v4456 = vpop.permute.xlu0 %4455
  %v4473 = vsel %vm3603, %v4426, 0.0
  %4474 = vadd.xlane.f32.xlu0 %v4473
  %v4475 = vpop.xlane.xlu0 %4474
  %v4476 = vsel %vm3603, %v4428, 0.0
  %4477 = vadd.xlane.f32.xlu0 %v4476
  %v4478 = vpop.xlane.xlu0 %4477
  %v4479 = vsel %vm3603, %v4430, 0.0
  %4480 = vadd.xlane.f32.xlu0 %v4479
  %v4481 = vpop.xlane.xlu0 %4480
  %v4482 = vsel %vm3603, %v4432, 0.0
  %4483 = vadd.xlane.f32.xlu0 %v4482
  %v4484 = vpop.xlane.xlu0 %4483
  %v4485 = vsel %vm3603, %v4434, 0.0
  %4486 = vadd.xlane.f32.xlu0 %v4485
  %v4487 = vpop.xlane.xlu0 %4486
  %v4488 = vsel %vm3603, %v4436, 0.0
  %4489 = vadd.xlane.f32.xlu0 %v4488
  %v4490 = vpop.xlane.xlu0 %4489
  %v4491 = vsel %vm3603, %v4438, 0.0
  %4492 = vadd.xlane.f32.xlu0 %v4491
  %v4493 = vpop.xlane.xlu0 %4492
  %v4494 = vsel %vm3603, %v4440, 0.0
  %4495 = vadd.xlane.f32.xlu0 %v4494
  %v4496 = vpop.xlane.xlu0 %4495
  %v4497 = vsel %vm3603, %v4442, 0.0
  %4498 = vadd.xlane.f32.xlu0 %v4497
  %v4499 = vpop.xlane.xlu0 %4498
  %v4500 = vsel %vm3603, %v4444, 0.0
  %4501 = vadd.xlane.f32.xlu0 %v4500
  %v4502 = vpop.xlane.xlu0 %4501
  %v4503 = vsel %vm3603, %v4446, 0.0
  %4504 = vadd.xlane.f32.xlu0 %v4503
  %v4505 = vpop.xlane.xlu0 %4504
  %v4506 = vsel %vm3603, %v4448, 0.0
  %4507 = vadd.xlane.f32.xlu0 %v4506
  %v4508 = vpop.xlane.xlu0 %4507
  %v4509 = vsel %vm3603, %v4450, 0.0
  %4510 = vadd.xlane.f32.xlu0 %v4509
  %v4511 = vpop.xlane.xlu0 %4510
  %v4512 = vsel %vm3603, %v4452, 0.0
  %4513 = vadd.xlane.f32.xlu0 %v4512
  %v4514 = vpop.xlane.xlu0 %4513
  %v4515 = vsel %vm3603, %v4454, 0.0
  %4516 = vadd.xlane.f32.xlu0 %v4515
  %v4517 = vpop.xlane.xlu0 %4516
  %v4518 = vsel %vm3603, %v4456, 0.0
  %4519 = vadd.xlane.f32.xlu0 %v4518
  %v4520 = vpop.xlane.xlu0 %4519
  %v4521 = vmul.f32 %v4475, %v4072
  %v4522 = vmul.f32 %v4478, %v4072
  %v4523 = vmul.f32 %v4481, %v4072
  %v4524 = vmul.f32 %v4484, %v4072
  %v4525 = vmul.f32 %v4487, %v4072
  %v4526 = vmul.f32 %v4490, %v4072
  %v4527 = vmul.f32 %v4493, %v4072
  %v4528 = vmul.f32 %v4496, %v4072
  %v4529 = vmul.f32 %v4499, %v4072
  %v4530 = vmul.f32 %v4502, %v4072
  %v4531 = vmul.f32 %v4505, %v4072
  %v4532 = vmul.f32 %v4508, %v4072
  %v4533 = vmul.f32 %v4511, %v4072
  %v4534 = vmul.f32 %v4514, %v4072
  %v4535 = vmul.f32 %v4517, %v4072
  %v4536 = vmul.f32 %v4520, %v4072
  %v4537 = vsub.f32 %v3333, %v4521
  %v4538 = vsub.f32 %v3336, %v4522
  %v4539 = vsub.f32 %v3341, %v4523
  %v4540 = vsub.f32 %v3344, %v4524
  %v4541 = vsub.f32 %v3349, %v4525
  %v4542 = vsub.f32 %v3352, %v4526
  %v4543 = vsub.f32 %v3357, %v4527
  %v4544 = vsub.f32 %v3360, %v4528
  %v4545 = vsub.f32 %v3365, %v4529
  %v4546 = vsub.f32 %v3368, %v4530
  %v4547 = vsub.f32 %v3373, %v4531
  %v4548 = vsub.f32 %v3376, %v4532
  %v4549 = vsub.f32 %v3381, %v4533
  %v4550 = vsub.f32 %v3384, %v4534
  %v4551 = vsub.f32 %v3389, %v4535
  %v4552 = vsub.f32 %v3392, %v4536
  %v4553 = vmul.f32 %v4537, %v4537
  %v4554 = vmul.f32 %v4538, %v4538
  %v4555 = vmul.f32 %v4539, %v4539
  %v4556 = vmul.f32 %v4540, %v4540
  %v4557 = vmul.f32 %v4541, %v4541
  %v4558 = vmul.f32 %v4542, %v4542
  %v4559 = vmul.f32 %v4543, %v4543
  %v4560 = vmul.f32 %v4544, %v4544
  %v4561 = vmul.f32 %v4545, %v4545
  %v4562 = vmul.f32 %v4546, %v4546
  %v4563 = vmul.f32 %v4547, %v4547
  %v4564 = vmul.f32 %v4548, %v4548
  %v4565 = vmul.f32 %v4549, %v4549
  %v4566 = vmul.f32 %v4550, %v4550
  %v4567 = vmul.f32 %v4551, %v4551
  %v4568 = vmul.f32 %v4552, %v4552
  %4585 = vrot.lane.b32.xlu0 %v4553, 48
  %v4586 = vpop.permute.xlu0 %4585
  %4587 = vrot.lane.b32.xlu0 %v4554, 48
  %v4588 = vpop.permute.xlu0 %4587
  %4589 = vrot.lane.b32.xlu0 %v4555, 48
  %v4590 = vpop.permute.xlu0 %4589
  %4591 = vrot.lane.b32.xlu0 %v4556, 48
  %v4592 = vpop.permute.xlu0 %4591
  %4593 = vrot.lane.b32.xlu0 %v4557, 48
  %v4594 = vpop.permute.xlu0 %4593
  %4595 = vrot.lane.b32.xlu0 %v4558, 48
  %v4596 = vpop.permute.xlu0 %4595
  %4597 = vrot.lane.b32.xlu0 %v4559, 48
  %v4598 = vpop.permute.xlu0 %4597
  %4599 = vrot.lane.b32.xlu0 %v4560, 48
  %v4600 = vpop.permute.xlu0 %4599
  %4601 = vrot.lane.b32.xlu0 %v4561, 48
  %v4602 = vpop.permute.xlu0 %4601
  %4603 = vrot.lane.b32.xlu0 %v4562, 48
  %v4604 = vpop.permute.xlu0 %4603
  %4605 = vrot.lane.b32.xlu0 %v4563, 48
  %v4606 = vpop.permute.xlu0 %4605
  %4607 = vrot.lane.b32.xlu0 %v4564, 48
  %v4608 = vpop.permute.xlu0 %4607
  %4609 = vrot.lane.b32.xlu0 %v4565, 48
  %v4610 = vpop.permute.xlu0 %4609
  %4611 = vrot.lane.b32.xlu0 %v4566, 48
  %v4612 = vpop.permute.xlu0 %4611
  %4613 = vrot.lane.b32.xlu0 %v4567, 48
  %v4614 = vpop.permute.xlu0 %4613
  %4615 = vrot.lane.b32.xlu0 %v4568, 48
  %v4616 = vpop.permute.xlu0 %4615
  %v4633 = vsel %vm3603, %v4586, 0.0
  %4634 = vadd.xlane.f32.xlu0 %v4633
  %v4635 = vpop.xlane.xlu0 %4634
  %v4636 = vsel %vm3603, %v4588, 0.0
  %4637 = vadd.xlane.f32.xlu0 %v4636
  %v4638 = vpop.xlane.xlu0 %4637
  %v4639 = vsel %vm3603, %v4590, 0.0
  %4640 = vadd.xlane.f32.xlu0 %v4639
  %v4641 = vpop.xlane.xlu0 %4640
  %v4642 = vsel %vm3603, %v4592, 0.0
  %4643 = vadd.xlane.f32.xlu0 %v4642
  %v4644 = vpop.xlane.xlu0 %4643
  %v4645 = vsel %vm3603, %v4594, 0.0
  %4646 = vadd.xlane.f32.xlu0 %v4645
  %v4647 = vpop.xlane.xlu0 %4646
  %v4648 = vsel %vm3603, %v4596, 0.0
  %4649 = vadd.xlane.f32.xlu0 %v4648
  %v4650 = vpop.xlane.xlu0 %4649
  %v4651 = vsel %vm3603, %v4598, 0.0
  %4652 = vadd.xlane.f32.xlu0 %v4651
  %v4653 = vpop.xlane.xlu0 %4652
  %v4654 = vsel %vm3603, %v4600, 0.0
  %4655 = vadd.xlane.f32.xlu0 %v4654
  %v4656 = vpop.xlane.xlu0 %4655
  %v4657 = vsel %vm3603, %v4602, 0.0
  %4658 = vadd.xlane.f32.xlu0 %v4657
  %v4659 = vpop.xlane.xlu0 %4658
  %v4660 = vsel %vm3603, %v4604, 0.0
  %4661 = vadd.xlane.f32.xlu0 %v4660
  %v4662 = vpop.xlane.xlu0 %4661
  %v4663 = vsel %vm3603, %v4606, 0.0
  %4664 = vadd.xlane.f32.xlu0 %v4663
  %v4665 = vpop.xlane.xlu0 %4664
  %v4666 = vsel %vm3603, %v4608, 0.0
  %4667 = vadd.xlane.f32.xlu0 %v4666
  %v4668 = vpop.xlane.xlu0 %4667
  %v4669 = vsel %vm3603, %v4610, 0.0
  %4670 = vadd.xlane.f32.xlu0 %v4669
  %v4671 = vpop.xlane.xlu0 %4670
  %v4672 = vsel %vm3603, %v4612, 0.0
  %4673 = vadd.xlane.f32.xlu0 %v4672
  %v4674 = vpop.xlane.xlu0 %4673
  %v4675 = vsel %vm3603, %v4614, 0.0
  %4676 = vadd.xlane.f32.xlu0 %v4675
  %v4677 = vpop.xlane.xlu0 %4676
  %v4678 = vsel %vm3603, %v4616, 0.0
  %4679 = vadd.xlane.f32.xlu0 %v4678
  %v4680 = vpop.xlane.xlu0 %4679
  %v4681 = vmul.f32 %v4635, %v4072
  %v4682 = vmul.f32 %v4638, %v4072
  %v4683 = vmul.f32 %v4641, %v4072
  %v4684 = vmul.f32 %v4644, %v4072
  %v4685 = vmul.f32 %v4647, %v4072
  %v4686 = vmul.f32 %v4650, %v4072
  %v4687 = vmul.f32 %v4653, %v4072
  %v4688 = vmul.f32 %v4656, %v4072
  %v4689 = vmul.f32 %v4659, %v4072
  %v4690 = vmul.f32 %v4662, %v4072
  %v4691 = vmul.f32 %v4665, %v4072
  %v4692 = vmul.f32 %v4668, %v4072
  %v4693 = vmul.f32 %v4671, %v4072
  %v4694 = vmul.f32 %v4674, %v4072
  %v4695 = vmul.f32 %v4677, %v4072
  %v4696 = vmul.f32 %v4680, %v4072
  %v4697 = vadd.f32 %v4681, 1e-05
  %v4698 = vadd.f32 %v4682, 1e-05
  %v4699 = vadd.f32 %v4683, 1e-05
  %v4700 = vadd.f32 %v4684, 1e-05
  %v4701 = vadd.f32 %v4685, 1e-05
  %v4702 = vadd.f32 %v4686, 1e-05
  %v4703 = vadd.f32 %v4687, 1e-05
  %v4704 = vadd.f32 %v4688, 1e-05
  %v4705 = vadd.f32 %v4689, 1e-05
  %v4706 = vadd.f32 %v4690, 1e-05
  %v4707 = vadd.f32 %v4691, 1e-05
  %v4708 = vadd.f32 %v4692, 1e-05
  %v4709 = vadd.f32 %v4693, 1e-05
  %v4710 = vadd.f32 %v4694, 1e-05
  %v4711 = vadd.f32 %v4695, 1e-05
  %v4712 = vadd.f32 %v4696, 1e-05
  %v4713 = vrsqrt.pop %v4697
  %v4714 = vrsqrt.pop %v4698
  %v4715 = vrsqrt.pop %v4699
  %v4716 = vrsqrt.pop %v4700
  %v4717 = vrsqrt.pop %v4701
  %v4718 = vrsqrt.pop %v4702
  %v4719 = vrsqrt.pop %v4703
  %v4720 = vrsqrt.pop %v4704
  %v4721 = vrsqrt.pop %v4705
  %v4722 = vrsqrt.pop %v4706
  %v4723 = vrsqrt.pop %v4707
  %v4724 = vrsqrt.pop %v4708
  %v4725 = vrsqrt.pop %v4709
  %v4726 = vrsqrt.pop %v4710
  %v4727 = vrsqrt.pop %v4711
  %v4728 = vrsqrt.pop %v4712
  %v4729 = vmul.f32 %v4537, %v4713
  %v4730 = vmul.f32 %v4538, %v4714
  %v4731 = vmul.f32 %v4539, %v4715
  %v4732 = vmul.f32 %v4540, %v4716
  %v4733 = vmul.f32 %v4541, %v4717
  %v4734 = vmul.f32 %v4542, %v4718
  %v4735 = vmul.f32 %v4543, %v4719
  %v4736 = vmul.f32 %v4544, %v4720
  %v4737 = vmul.f32 %v4545, %v4721
  %v4738 = vmul.f32 %v4546, %v4722
  %v4739 = vmul.f32 %v4547, %v4723
  %v4740 = vmul.f32 %v4548, %v4724
  %v4741 = vmul.f32 %v4549, %v4725
  %v4742 = vmul.f32 %v4550, %v4726
  %v4743 = vmul.f32 %v4551, %v4727
  %v4744 = vmul.f32 %v4552, %v4728
  %v4745 = vmul.f32 %v4729, %v4303
  %v4746 = vmul.f32 %v4730, %v4303
  %v4747 = vmul.f32 %v4731, %v4303
  %v4748 = vmul.f32 %v4732, %v4303
  %v4749 = vmul.f32 %v4733, %v4303
  %v4750 = vmul.f32 %v4734, %v4303
  %v4751 = vmul.f32 %v4735, %v4303
  %v4752 = vmul.f32 %v4736, %v4303
  %v4753 = vmul.f32 %v4737, %v4303
  %v4754 = vmul.f32 %v4738, %v4303
  %v4755 = vmul.f32 %v4739, %v4303
  %v4756 = vmul.f32 %v4740, %v4303
  %v4757 = vmul.f32 %v4741, %v4303
  %v4758 = vmul.f32 %v4742, %v4303
  %v4759 = vmul.f32 %v4743, %v4303
  %v4760 = vmul.f32 %v4744, %v4303
  %v4761 = vadd.f32 %v4745, %v4327
  %v4762 = vadd.f32 %v4746, %v4327
  %v4763 = vadd.f32 %v4747, %v4327
  %v4764 = vadd.f32 %v4748, %v4327
  %v4765 = vadd.f32 %v4749, %v4327
  %v4766 = vadd.f32 %v4750, %v4327
  %v4767 = vadd.f32 %v4751, %v4327
  %v4768 = vadd.f32 %v4752, %v4327
  %v4769 = vadd.f32 %v4753, %v4327
  %v4770 = vadd.f32 %v4754, %v4327
  %v4771 = vadd.f32 %v4755, %v4327
  %v4772 = vadd.f32 %v4756, %v4327
  %v4773 = vadd.f32 %v4757, %v4327
  %v4774 = vadd.f32 %v4758, %v4327
  %v4775 = vadd.f32 %v4759, %v4327
  %v4776 = vadd.f32 %v4760, %v4327
  %v4777 = vadd.f32 %v4761, 3.0
  %v4778 = vadd.f32 %v4762, 3.0
  %v4779 = vadd.f32 %v4763, 3.0
  %v4780 = vadd.f32 %v4764, 3.0
  %v4781 = vadd.f32 %v4765, 3.0
  %v4782 = vadd.f32 %v4766, 3.0
  %v4783 = vadd.f32 %v4767, 3.0
  %v4784 = vadd.f32 %v4768, 3.0
  %v4785 = vadd.f32 %v4769, 3.0
  %v4786 = vadd.f32 %v4770, 3.0
  %v4787 = vadd.f32 %v4771, 3.0
  %v4788 = vadd.f32 %v4772, 3.0
  %v4789 = vadd.f32 %v4773, 3.0
  %v4790 = vadd.f32 %v4774, 3.0
  %v4791 = vadd.f32 %v4775, 3.0
  %v4792 = vadd.f32 %v4776, 3.0
  %v4793 = vmax.f32 %v4777, 0.0
  %v4794 = vmax.f32 %v4778, 0.0
  %v4795 = vmax.f32 %v4779, 0.0
  %v4796 = vmax.f32 %v4780, 0.0
  %v4797 = vmax.f32 %v4781, 0.0
  %v4798 = vmax.f32 %v4782, 0.0
  %v4799 = vmax.f32 %v4783, 0.0
  %v4800 = vmax.f32 %v4784, 0.0
  %v4801 = vmax.f32 %v4785, 0.0
  %v4802 = vmax.f32 %v4786, 0.0
  %v4803 = vmax.f32 %v4787, 0.0
  %v4804 = vmax.f32 %v4788, 0.0
  %v4805 = vmax.f32 %v4789, 0.0
  %v4806 = vmax.f32 %v4790, 0.0
  %v4807 = vmax.f32 %v4791, 0.0
  %v4808 = vmax.f32 %v4792, 0.0
  %v4809 = vmin.f32 %v4793, 6.0
  %v4810 = vmin.f32 %v4794, 6.0
  %v4811 = vmin.f32 %v4795, 6.0
  %v4812 = vmin.f32 %v4796, 6.0
  %v4813 = vmin.f32 %v4797, 6.0
  %v4814 = vmin.f32 %v4798, 6.0
  %v4815 = vmin.f32 %v4799, 6.0
  %v4816 = vmin.f32 %v4800, 6.0
  %v4817 = vmin.f32 %v4801, 6.0
  %v4818 = vmin.f32 %v4802, 6.0
  %v4819 = vmin.f32 %v4803, 6.0
  %v4820 = vmin.f32 %v4804, 6.0
  %v4821 = vmin.f32 %v4805, 6.0
  %v4822 = vmin.f32 %v4806, 6.0
  %v4823 = vmin.f32 %v4807, 6.0
  %v4824 = vmin.f32 %v4808, 6.0
  %v4825 = vmul.f32 %v4761, %v4809
  %v4826 = vmul.f32 %v4762, %v4810
  %v4827 = vmul.f32 %v4763, %v4811
  %v4828 = vmul.f32 %v4764, %v4812
  %v4829 = vmul.f32 %v4765, %v4813
  %v4830 = vmul.f32 %v4766, %v4814
  %v4831 = vmul.f32 %v4767, %v4815
  %v4832 = vmul.f32 %v4768, %v4816
  %v4833 = vmul.f32 %v4769, %v4817
  %v4834 = vmul.f32 %v4770, %v4818
  %v4835 = vmul.f32 %v4771, %v4819
  %v4836 = vmul.f32 %v4772, %v4820
  %v4837 = vmul.f32 %v4773, %v4821
  %v4838 = vmul.f32 %v4774, %v4822
  %v4839 = vmul.f32 %v4775, %v4823
  %v4840 = vmul.f32 %v4776, %v4824
  %v4841 = vmul.f32 %v4825, 0.16666667
  %v4842 = vmul.f32 %v4826, 0.16666667
  %v4843 = vmul.f32 %v4827, 0.16666667
  %v4844 = vmul.f32 %v4828, 0.16666667
  %v4845 = vmul.f32 %v4829, 0.16666667
  %v4846 = vmul.f32 %v4830, 0.16666667
  %v4847 = vmul.f32 %v4831, 0.16666667
  %v4848 = vmul.f32 %v4832, 0.16666667
  %v4849 = vmul.f32 %v4833, 0.16666667
  %v4850 = vmul.f32 %v4834, 0.16666667
  %v4851 = vmul.f32 %v4835, 0.16666667
  %v4852 = vmul.f32 %v4836, 0.16666667
  %v4853 = vmul.f32 %v4837, 0.16666667
  %v4854 = vmul.f32 %v4838, 0.16666667
  %v4855 = vmul.f32 %v4839, 0.16666667
  %v4856 = vmul.f32 %v4840, 0.16666667
  %4873 = vrot.lane.b32.xlu0 %v4841, 120
  %v4874 = vpop.permute.xlu0 %4873
  %4875 = vrot.lane.b32.xlu0 %v4842, 120
  %v4876 = vpop.permute.xlu0 %4875
  %4877 = vrot.lane.b32.xlu0 %v4843, 120
  %v4878 = vpop.permute.xlu0 %4877
  %4879 = vrot.lane.b32.xlu0 %v4844, 120
  %v4880 = vpop.permute.xlu0 %4879
  %4881 = vrot.lane.b32.xlu0 %v4845, 120
  %v4882 = vpop.permute.xlu0 %4881
  %4883 = vrot.lane.b32.xlu0 %v4846, 120
  %v4884 = vpop.permute.xlu0 %4883
  %4885 = vrot.lane.b32.xlu0 %v4847, 120
  %v4886 = vpop.permute.xlu0 %4885
  %4887 = vrot.lane.b32.xlu0 %v4848, 120
  %v4888 = vpop.permute.xlu0 %4887
  %4889 = vrot.lane.b32.xlu0 %v4849, 120
  %v4890 = vpop.permute.xlu0 %4889
  %4891 = vrot.lane.b32.xlu0 %v4850, 120
  %v4892 = vpop.permute.xlu0 %4891
  %4893 = vrot.lane.b32.xlu0 %v4851, 120
  %v4894 = vpop.permute.xlu0 %4893
  %4895 = vrot.lane.b32.xlu0 %v4852, 120
  %v4896 = vpop.permute.xlu0 %4895
  %4897 = vrot.lane.b32.xlu0 %v4853, 120
  %v4898 = vpop.permute.xlu0 %4897
  %4899 = vrot.lane.b32.xlu0 %v4854, 120
  %v4900 = vpop.permute.xlu0 %4899
  %4901 = vrot.lane.b32.xlu0 %v4855, 120
  %v4902 = vpop.permute.xlu0 %4901
  %4903 = vrot.lane.b32.xlu0 %v4856, 120
  %v4904 = vpop.permute.xlu0 %4903
  %v4921 = vadd.f32 %v4409, %v4874
  %v4922 = vadd.f32 %v4410, %v4876
  %v4923 = vadd.f32 %v4411, %v4878
  %v4924 = vadd.f32 %v4412, %v4880
  %v4925 = vadd.f32 %v4413, %v4882
  %v4926 = vadd.f32 %v4414, %v4884
  %v4927 = vadd.f32 %v4415, %v4886
  %v4928 = vadd.f32 %v4416, %v4888
  %v4929 = vadd.f32 %v4417, %v4890
  %v4930 = vadd.f32 %v4418, %v4892
  %v4931 = vadd.f32 %v4419, %v4894
  %v4932 = vadd.f32 %v4420, %v4896
  %v4933 = vadd.f32 %v4421, %v4898
  %v4934 = vadd.f32 %v4422, %v4900
  %v4935 = vadd.f32 %v4423, %v4902
  %v4936 = vadd.f32 %v4424, %v4904
  %4937 = vst.msk [vmem:[#allocation3] sm:$0xff] %vm3620, 0.0
  %4938 = vst.msk [vmem:[#allocation3 + $0x8] sm:$0xff] %vm3620, 0.0
  %4939 = vst.msk [vmem:[#allocation3 + $0x10] sm:$0xff] %vm3620, 0.0
  %4940 = vst.msk [vmem:[#allocation3 + $0x18] sm:$0xff] %vm3620, 0.0
  %4941 = vst.msk [vmem:[#allocation3 + $0x20] sm:$0xff] %vm3620, 0.0
  %4942 = vst.msk [vmem:[#allocation3 + $0x28] sm:$0xff] %vm3620, 0.0
  %4943 = vst.msk [vmem:[#allocation3 + $0x30] sm:$0xff] %vm3620, 0.0
  %4944 = vst.msk [vmem:[#allocation3 + $0x38] sm:$0xff] %vm3620, 0.0
  %4945 = vst.msk [vmem:[#allocation3 + $0x40] sm:$0xff] %vm3620, 0.0
  %4946 = vst.msk [vmem:[#allocation3 + $0x48] sm:$0xff] %vm3620, 0.0
  %4947 = vst.msk [vmem:[#allocation3 + $0x50] sm:$0xff] %vm3620, 0.0
  %4948 = vst.msk [vmem:[#allocation3 + $0x58] sm:$0xff] %vm3620, 0.0
  %4949 = vst.msk [vmem:[#allocation3 + $0x60] sm:$0xff] %vm3620, 0.0
  %4950 = vst.msk [vmem:[#allocation3 + $0x68] sm:$0xff] %vm3620, 0.0
  %4951 = vst.msk [vmem:[#allocation3 + $0x70] sm:$0xff] %vm3620, 0.0
  %4952 = vst.msk [vmem:[#allocation3 + $0x78] sm:$0xff] %vm3620, 0.0
  %4953 = vst.msk [vmem:[#allocation3 + $0x80] sm:$0xff] %vm3620, 0.0
  %4954 = vst.msk [vmem:[#allocation3 + $0x88] sm:$0xff] %vm3620, 0.0
  %4955 = vst.msk [vmem:[#allocation3 + $0x90] sm:$0xff] %vm3620, 0.0
  %4956 = vst.msk [vmem:[#allocation3 + $0x98] sm:$0xff] %vm3620, 0.0
  %4957 = vst.msk [vmem:[#allocation3 + $0xa0] sm:$0xff] %vm3620, 0.0
  %4958 = vst.msk [vmem:[#allocation3 + $0xa8] sm:$0xff] %vm3620, 0.0
  %4959 = vst.msk [vmem:[#allocation3 + $0xb0] sm:$0xff] %vm3620, 0.0
  %4960 = vst.msk [vmem:[#allocation3 + $0xb8] sm:$0xff] %vm3620, 0.0
  %4961 = vst.msk [vmem:[#allocation3 + $0xc0] sm:$0xff] %vm3620, 0.0
  %4962 = vst.msk [vmem:[#allocation3 + $0xc8] sm:$0xff] %vm3620, 0.0
  %4963 = vst.msk [vmem:[#allocation3 + $0xd0] sm:$0xff] %vm3620, 0.0
  %4964 = vst.msk [vmem:[#allocation3 + $0xd8] sm:$0xff] %vm3620, 0.0
  %4965 = vst.msk [vmem:[#allocation3 + $0xe0] sm:$0xff] %vm3620, 0.0
  %4966 = vst.msk [vmem:[#allocation3 + $0xe8] sm:$0xff] %vm3620, 0.0
  %4967 = vst.msk [vmem:[#allocation3 + $0xf0] sm:$0xff] %vm3620, 0.0
  %4968 = vst.msk [vmem:[#allocation3 + $0xf8] sm:$0xff] %vm3620, 0.0
  %4985 = vrot.lane.b32.xlu0 %v3958, 96
  %v4986 = vpop.permute.xlu0 %4985
  %4987 = vrot.lane.b32.xlu0 %v3959, 96
  %v4988 = vpop.permute.xlu0 %4987
  %4989 = vrot.lane.b32.xlu0 %v3960, 96
  %v4990 = vpop.permute.xlu0 %4989
  %4991 = vrot.lane.b32.xlu0 %v3961, 96
  %v4992 = vpop.permute.xlu0 %4991
  %4993 = vrot.lane.b32.xlu0 %v3962, 96
  %v4994 = vpop.permute.xlu0 %4993
  %4995 = vrot.lane.b32.xlu0 %v3963, 96
  %v4996 = vpop.permute.xlu0 %4995
  %4997 = vrot.lane.b32.xlu0 %v3964, 96
  %v4998 = vpop.permute.xlu0 %4997
  %4999 = vrot.lane.b32.xlu0 %v3965, 96
  %v5000 = vpop.permute.xlu0 %4999
  %5001 = vrot.lane.b32.xlu0 %v3966, 96
  %v5002 = vpop.permute.xlu0 %5001
  %5003 = vrot.lane.b32.xlu0 %v3967, 96
  %v5004 = vpop.permute.xlu0 %5003
  %5005 = vrot.lane.b32.xlu0 %v3968, 96
  %v5006 = vpop.permute.xlu0 %5005
  %5007 = vrot.lane.b32.xlu0 %v3969, 96
  %v5008 = vpop.permute.xlu0 %5007
  %5009 = vrot.lane.b32.xlu0 %v3970, 96
  %v5010 = vpop.permute.xlu0 %5009
  %5011 = vrot.lane.b32.xlu0 %v3971, 96
  %v5012 = vpop.permute.xlu0 %5011
  %5013 = vrot.lane.b32.xlu0 %v3972, 96
  %v5014 = vpop.permute.xlu0 %5013
  %5015 = vrot.lane.b32.xlu0 %v3973, 96
  %v5016 = vpop.permute.xlu0 %5015
  %5033 = vst.msk [vmem:[#allocation3 + $0x20] sm:$0xff] %vm3620, %v4986
  %5034 = vst.msk [vmem:[#allocation3 + $0x28] sm:$0xff] %vm3620, %v4988
  %5035 = vst.msk [vmem:[#allocation3 + $0x30] sm:$0xff] %vm3620, %v4990
  %5036 = vst.msk [vmem:[#allocation3 + $0x38] sm:$0xff] %vm3620, %v4992
  %5037 = vst.msk [vmem:[#allocation3 + $0x40] sm:$0xff] %vm3620, %v4994
  %5038 = vst.msk [vmem:[#allocation3 + $0x48] sm:$0xff] %vm3620, %v4996
  %5039 = vst.msk [vmem:[#allocation3 + $0x50] sm:$0xff] %vm3620, %v4998
  %5040 = vst.msk [vmem:[#allocation3 + $0x58] sm:$0xff] %vm3620, %v5000
  %5041 = vst.msk [vmem:[#allocation3 + $0xa0] sm:$0xff] %vm3620, %v5002
  %5042 = vst.msk [vmem:[#allocation3 + $0xa8] sm:$0xff] %vm3620, %v5004
  %5043 = vst.msk [vmem:[#allocation3 + $0xb0] sm:$0xff] %vm3620, %v5006
  %5044 = vst.msk [vmem:[#allocation3 + $0xb8] sm:$0xff] %vm3620, %v5008
  %5045 = vst.msk [vmem:[#allocation3 + $0xc0] sm:$0xff] %vm3620, %v5010
  %5046 = vst.msk [vmem:[#allocation3 + $0xc8] sm:$0xff] %vm3620, %v5012
  %5047 = vst.msk [vmem:[#allocation3 + $0xd0] sm:$0xff] %vm3620, %v5014
  %5048 = vst.msk [vmem:[#allocation3 + $0xd8] sm:$0xff] %vm3620, %v5016
  %v5049 = vld [vmem:[%s10] sm:$0x7f]
  %v5050 = vld [vmem:[%s10 + $0x8] sm:$0x7f]
  %v5051 = vld [vmem:[%s10 + $0x10] sm:$0x7f]
  %v5052 = vld [vmem:[%s10 + $0x18] sm:$0x7f]
  %v5053 = vld [vmem:[%s10 + $0x20] sm:$0x7f]
  %v5054 = vld [vmem:[%s10 + $0x28] sm:$0x7f]
  %v5055 = vld [vmem:[%s10 + $0x30] sm:$0x7f]
  %v5056 = vld [vmem:[#allocation3 + $0x5] sm:$0xff]
  %v5057 = vld [vmem:[#allocation3 + $0xd] sm:$0xff]
  %v5058 = vld [vmem:[#allocation3 + $0x15] sm:$0xff]
  %v5059 = vld [vmem:[#allocation3 + $0x1d] sm:$0xff]
  %v5060 = vld [vmem:[#allocation3 + $0x25] sm:$0xff]
  %v5061 = vld [vmem:[#allocation3 + $0x2d] sm:$0xff]
  %v5062 = vld [vmem:[#allocation3 + $0x35] sm:$0xff]
  %v5063 = vld [vmem:[#allocation3 + $0x3d] sm:$0xff]
  %v5064 = vld [vmem:[#allocation3 + $0x85] sm:$0xff]
  %v5065 = vld [vmem:[#allocation3 + $0x8d] sm:$0xff]
  %v5066 = vld [vmem:[#allocation3 + $0x95] sm:$0xff]
  %v5067 = vld [vmem:[#allocation3 + $0x9d] sm:$0xff]
  %v5068 = vld [vmem:[#allocation3 + $0xa5] sm:$0xff]
  %v5069 = vld [vmem:[#allocation3 + $0xad] sm:$0xff]
  %v5070 = vld [vmem:[#allocation3 + $0xb5] sm:$0xff]
  %v5071 = vld [vmem:[#allocation3 + $0xbd] sm:$0xff]
  %v5072 = vlaneseq
  %v5073 = vshrl.u32 %v5072, 7
  %v5074 = vsub.s32 0, %v5073
  %v5075 = vrot.slane %v5049, %v5074
  %v5076 = vmul.f32 %v5056, %v5075
  %v5077 = vmul.f32 %v5057, %v5075
  %v5078 = vmul.f32 %v5058, %v5075
  %v5079 = vmul.f32 %v5059, %v5075
  %v5080 = vmul.f32 %v5060, %v5075
  %v5081 = vmul.f32 %v5061, %v5075
  %v5082 = vmul.f32 %v5062, %v5075
  %v5083 = vmul.f32 %v5063, %v5075
  %v5084 = vmul.f32 %v5064, %v5075
  %v5085 = vmul.f32 %v5065, %v5075
  %v5086 = vmul.f32 %v5066, %v5075
  %v5087 = vmul.f32 %v5067, %v5075
  %v5088 = vmul.f32 %v5068, %v5075
  %v5089 = vmul.f32 %v5069, %v5075
  %v5090 = vmul.f32 %v5070, %v5075
  %v5091 = vmul.f32 %v5071, %v5075
  %v5092 = vadd.f32 %v5076, 0.0
  %v5093 = vadd.f32 %v5077, 0.0
  %v5094 = vadd.f32 %v5078, 0.0
  %v5095 = vadd.f32 %v5079, 0.0
  %v5096 = vadd.f32 %v5080, 0.0
  %v5097 = vadd.f32 %v5081, 0.0
  %v5098 = vadd.f32 %v5082, 0.0
  %v5099 = vadd.f32 %v5083, 0.0
  %v5100 = vadd.f32 %v5084, 0.0
  %v5101 = vadd.f32 %v5085, 0.0
  %v5102 = vadd.f32 %v5086, 0.0
  %v5103 = vadd.f32 %v5087, 0.0
  %v5104 = vadd.f32 %v5088, 0.0
  %v5105 = vadd.f32 %v5089, 0.0
  %v5106 = vadd.f32 %v5090, 0.0
  %v5107 = vadd.f32 %v5091, 0.0
  %v5108 = vld [vmem:[#allocation3 + $0x45] sm:$0xff]
  %v5109 = vld [vmem:[#allocation3 + $0xc5] sm:$0xff]
  %v5110 = vlaneseq
  %v5111 = vshrl.u32 %v5110, 7
  %v5112 = vsub.s32 0, %v5111
  %v5113 = vrot.slane %v5050, %v5112
  %v5114 = vmul.f32 %v5057, %v5113
  %v5115 = vmul.f32 %v5058, %v5113
  %v5116 = vmul.f32 %v5059, %v5113
  %v5117 = vmul.f32 %v5060, %v5113
  %v5118 = vmul.f32 %v5061, %v5113
  %v5119 = vmul.f32 %v5062, %v5113
  %v5120 = vmul.f32 %v5063, %v5113
  %v5121 = vmul.f32 %v5108, %v5113
  %v5122 = vmul.f32 %v5065, %v5113
  %v5123 = vmul.f32 %v5066, %v5113
  %v5124 = vmul.f32 %v5067, %v5113
  %v5125 = vmul.f32 %v5068, %v5113
  %v5126 = vmul.f32 %v5069, %v5113
  %v5127 = vmul.f32 %v5070, %v5113
  %v5128 = vmul.f32 %v5071, %v5113
  %v5129 = vmul.f32 %v5109, %v5113
  %v5130 = vadd.f32 %v5092, %v5114
  %v5131 = vadd.f32 %v5093, %v5115
  %v5132 = vadd.f32 %v5094, %v5116
  %v5133 = vadd.f32 %v5095, %v5117
  %v5134 = vadd.f32 %v5096, %v5118
  %v5135 = vadd.f32 %v5097, %v5119
  %v5136 = vadd.f32 %v5098, %v5120
  %v5137 = vadd.f32 %v5099, %v5121
  %v5138 = vadd.f32 %v5100, %v5122
  %v5139 = vadd.f32 %v5101, %v5123
  %v5140 = vadd.f32 %v5102, %v5124
  %v5141 = vadd.f32 %v5103, %v5125
  %v5142 = vadd.f32 %v5104, %v5126
  %v5143 = vadd.f32 %v5105, %v5127
  %v5144 = vadd.f32 %v5106, %v5128
  %v5145 = vadd.f32 %v5107, %v5129
  %v5146 = vld [vmem:[#allocation3 + $0x4d] sm:$0xff]
  %v5147 = vld [vmem:[#allocation3 + $0xcd] sm:$0xff]
  %v5148 = vlaneseq
  %v5149 = vshrl.u32 %v5148, 7
  %v5150 = vsub.s32 0, %v5149
  %v5151 = vrot.slane %v5051, %v5150
  %v5152 = vmul.f32 %v5058, %v5151
  %v5153 = vmul.f32 %v5059, %v5151
  %v5154 = vmul.f32 %v5060, %v5151
  %v5155 = vmul.f32 %v5061, %v5151
  %v5156 = vmul.f32 %v5062, %v5151
  %v5157 = vmul.f32 %v5063, %v5151
  %v5158 = vmul.f32 %v5108, %v5151
  %v5159 = vmul.f32 %v5146, %v5151
  %v5160 = vmul.f32 %v5066, %v5151
  %v5161 = vmul.f32 %v5067, %v5151
  %v5162 = vmul.f32 %v5068, %v5151
  %v5163 = vmul.f32 %v5069, %v5151
  %v5164 = vmul.f32 %v5070, %v5151
  %v5165 = vmul.f32 %v5071, %v5151
  %v5166 = vmul.f32 %v5109, %v5151
  %v5167 = vmul.f32 %v5147, %v5151
  %v5168 = vadd.f32 %v5130, %v5152
  %v5169 = vadd.f32 %v5131, %v5153
  %v5170 = vadd.f32 %v5132, %v5154
  %v5171 = vadd.f32 %v5133, %v5155
  %v5172 = vadd.f32 %v5134, %v5156
  %v5173 = vadd.f32 %v5135, %v5157
  %v5174 = vadd.f32 %v5136, %v5158
  %v5175 = vadd.f32 %v5137, %v5159
  %v5176 = vadd.f32 %v5138, %v5160
  %v5177 = vadd.f32 %v5139, %v5161
  %v5178 = vadd.f32 %v5140, %v5162
  %v5179 = vadd.f32 %v5141, %v5163
  %v5180 = vadd.f32 %v5142, %v5164
  %v5181 = vadd.f32 %v5143, %v5165
  %v5182 = vadd.f32 %v5144, %v5166
  %v5183 = vadd.f32 %v5145, %v5167
  %v5184 = vld [vmem:[#allocation3 + $0x55] sm:$0xff]
  %v5185 = vld [vmem:[#allocation3 + $0xd5] sm:$0xff]
  %v5186 = vlaneseq
  %v5187 = vshrl.u32 %v5186, 7
  %v5188 = vsub.s32 0, %v5187
  %v5189 = vrot.slane %v5052, %v5188
  %v5190 = vmul.f32 %v5059, %v5189
  %v5191 = vmul.f32 %v5060, %v5189
  %v5192 = vmul.f32 %v5061, %v5189
  %v5193 = vmul.f32 %v5062, %v5189
  %v5194 = vmul.f32 %v5063, %v5189
  %v5195 = vmul.f32 %v5108, %v5189
  %v5196 = vmul.f32 %v5146, %v5189
  %v5197 = vmul.f32 %v5184, %v5189
  %v5198 = vmul.f32 %v5067, %v5189
  %v5199 = vmul.f32 %v5068, %v5189
  %v5200 = vmul.f32 %v5069, %v5189
  %v5201 = vmul.f32 %v5070, %v5189
  %v5202 = vmul.f32 %v5071, %v5189
  %v5203 = vmul.f32 %v5109, %v5189
  %v5204 = vmul.f32 %v5147, %v5189
  %v5205 = vmul.f32 %v5185, %v5189
  %v5206 = vadd.f32 %v5168, %v5190
  %v5207 = vadd.f32 %v5169, %v5191
  %v5208 = vadd.f32 %v5170, %v5192
  %v5209 = vadd.f32 %v5171, %v5193
  %v5210 = vadd.f32 %v5172, %v5194
  %v5211 = vadd.f32 %v5173, %v5195
  %v5212 = vadd.f32 %v5174, %v5196
  %v5213 = vadd.f32 %v5175, %v5197
  %v5214 = vadd.f32 %v5176, %v5198
  %v5215 = vadd.f32 %v5177, %v5199
  %v5216 = vadd.f32 %v5178, %v5200
  %v5217 = vadd.f32 %v5179, %v5201
  %v5218 = vadd.f32 %v5180, %v5202
  %v5219 = vadd.f32 %v5181, %v5203
  %v5220 = vadd.f32 %v5182, %v5204
  %v5221 = vadd.f32 %v5183, %v5205
  %v5222 = vld [vmem:[#allocation3 + $0x5d] sm:$0xff]
  %v5223 = vld [vmem:[#allocation3 + $0xdd] sm:$0xff]
  %v5224 = vlaneseq
  %v5225 = vshrl.u32 %v5224, 7
  %v5226 = vsub.s32 0, %v5225
  %v5227 = vrot.slane %v5053, %v5226
  %v5228 = vmul.f32 %v5060, %v5227
  %v5229 = vmul.f32 %v5061, %v5227
  %v5230 = vmul.f32 %v5062, %v5227
  %v5231 = vmul.f32 %v5063, %v5227
  %v5232 = vmul.f32 %v5108, %v5227
  %v5233 = vmul.f32 %v5146, %v5227
  %v5234 = vmul.f32 %v5184, %v5227
  %v5235 = vmul.f32 %v5222, %v5227
  %v5236 = vmul.f32 %v5068, %v5227
  %v5237 = vmul.f32 %v5069, %v5227
  %v5238 = vmul.f32 %v5070, %v5227
  %v5239 = vmul.f32 %v5071, %v5227
  %v5240 = vmul.f32 %v5109, %v5227
  %v5241 = vmul.f32 %v5147, %v5227
  %v5242 = vmul.f32 %v5185, %v5227
  %v5243 = vmul.f32 %v5223, %v5227
  %v5244 = vadd.f32 %v5206, %v5228
  %v5245 = vadd.f32 %v5207, %v5229
  %v5246 = vadd.f32 %v5208, %v5230
  %v5247 = vadd.f32 %v5209, %v5231
  %v5248 = vadd.f32 %v5210, %v5232
  %v5249 = vadd.f32 %v5211, %v5233
  %v5250 = vadd.f32 %v5212, %v5234
  %v5251 = vadd.f32 %v5213, %v5235
  %v5252 = vadd.f32 %v5214, %v5236
  %v5253 = vadd.f32 %v5215, %v5237
  %v5254 = vadd.f32 %v5216, %v5238
  %v5255 = vadd.f32 %v5217, %v5239
  %v5256 = vadd.f32 %v5218, %v5240
  %v5257 = vadd.f32 %v5219, %v5241
  %v5258 = vadd.f32 %v5220, %v5242
  %v5259 = vadd.f32 %v5221, %v5243
  %v5260 = vld [vmem:[#allocation3 + $0x65] sm:$0xff]
  %v5261 = vld [vmem:[#allocation3 + $0xe5] sm:$0xff]
  %v5262 = vlaneseq
  %v5263 = vshrl.u32 %v5262, 7
  %v5264 = vsub.s32 0, %v5263
  %v5265 = vrot.slane %v5054, %v5264
  %v5266 = vmul.f32 %v5061, %v5265
  %v5267 = vmul.f32 %v5062, %v5265
  %v5268 = vmul.f32 %v5063, %v5265
  %v5269 = vmul.f32 %v5108, %v5265
  %v5270 = vmul.f32 %v5146, %v5265
  %v5271 = vmul.f32 %v5184, %v5265
  %v5272 = vmul.f32 %v5222, %v5265
  %v5273 = vmul.f32 %v5260, %v5265
  %v5274 = vmul.f32 %v5069, %v5265
  %v5275 = vmul.f32 %v5070, %v5265
  %v5276 = vmul.f32 %v5071, %v5265
  %v5277 = vmul.f32 %v5109, %v5265
  %v5278 = vmul.f32 %v5147, %v5265
  %v5279 = vmul.f32 %v5185, %v5265
  %v5280 = vmul.f32 %v5223, %v5265
  %v5281 = vmul.f32 %v5261, %v5265
  %v5282 = vadd.f32 %v5244, %v5266
  %v5283 = vadd.f32 %v5245, %v5267
  %v5284 = vadd.f32 %v5246, %v5268
  %v5285 = vadd.f32 %v5247, %v5269
  %v5286 = vadd.f32 %v5248, %v5270
  %v5287 = vadd.f32 %v5249, %v5271
  %v5288 = vadd.f32 %v5250, %v5272
  %v5289 = vadd.f32 %v5251, %v5273
  %v5290 = vadd.f32 %v5252, %v5274
  %v5291 = vadd.f32 %v5253, %v5275
  %v5292 = vadd.f32 %v5254, %v5276
  %v5293 = vadd.f32 %v5255, %v5277
  %v5294 = vadd.f32 %v5256, %v5278
  %v5295 = vadd.f32 %v5257, %v5279
  %v5296 = vadd.f32 %v5258, %v5280
  %v5297 = vadd.f32 %v5259, %v5281
  %v5298 = vld [vmem:[#allocation3 + $0x6d] sm:$0xff]
  %v5299 = vld [vmem:[#allocation3 + $0xed] sm:$0xff]
  %v5300 = vlaneseq
  %v5301 = vshrl.u32 %v5300, 7
  %v5302 = vsub.s32 0, %v5301
  %v5303 = vrot.slane %v5055, %v5302
  %v5304 = vmul.f32 %v5062, %v5303
  %v5305 = vmul.f32 %v5063, %v5303
  %v5306 = vmul.f32 %v5108, %v5303
  %v5307 = vmul.f32 %v5146, %v5303
  %v5308 = vmul.f32 %v5184, %v5303
  %v5309 = vmul.f32 %v5222, %v5303
  %v5310 = vmul.f32 %v5260, %v5303
  %v5311 = vmul.f32 %v5298, %v5303
  %v5312 = vmul.f32 %v5070, %v5303
  %v5313 = vmul.f32 %v5071, %v5303
  %v5314 = vmul.f32 %v5109, %v5303
  %v5315 = vmul.f32 %v5147, %v5303
  %v5316 = vmul.f32 %v5185, %v5303
  %v5317 = vmul.f32 %v5223, %v5303
  %v5318 = vmul.f32 %v5261, %v5303
  %v5319 = vmul.f32 %v5299, %v5303
  %v5320 = vadd.f32 %v5282, %v5304
  %v5321 = vadd.f32 %v5283, %v5305
  %v5322 = vadd.f32 %v5284, %v5306
  %v5323 = vadd.f32 %v5285, %v5307
  %v5324 = vadd.f32 %v5286, %v5308
  %v5325 = vadd.f32 %v5287, %v5309
  %v5326 = vadd.f32 %v5288, %v5310
  %v5327 = vadd.f32 %v5289, %v5311
  %v5328 = vadd.f32 %v5290, %v5312
  %v5329 = vadd.f32 %v5291, %v5313
  %v5330 = vadd.f32 %v5292, %v5314
  %v5331 = vadd.f32 %v5293, %v5315
  %v5332 = vadd.f32 %v5294, %v5316
  %v5333 = vadd.f32 %v5295, %v5317
  %v5334 = vadd.f32 %v5296, %v5318
  %v5335 = vadd.f32 %v5297, %v5319
  %v5336 = vmul.f32 %v5320, %v1037
  %v5337 = vmul.f32 %v5321, %v1042
  %v5338 = vmul.f32 %v5322, %v1047
  %v5339 = vmul.f32 %v5323, %v1052
  %v5340 = vmul.f32 %v5324, %v1057
  %v5341 = vmul.f32 %v5325, %v1062
  %v5342 = vmul.f32 %v5326, %v1067
  %v5343 = vmul.f32 %v5327, %v1072
  %v5344 = vmul.f32 %v5328, %v1037
  %v5345 = vmul.f32 %v5329, %v1042
  %v5346 = vmul.f32 %v5330, %v1047
  %v5347 = vmul.f32 %v5331, %v1052
  %v5348 = vmul.f32 %v5332, %v1057
  %v5349 = vmul.f32 %v5333, %v1062
  %v5350 = vmul.f32 %v5334, %v1067
  %v5351 = vmul.f32 %v5335, %v1072
  %v5352 = vadd.f32 %v5336, 0.0
  %v5353 = vadd.f32 %v5337, 0.0
  %v5354 = vadd.f32 %v5338, 0.0
  %v5355 = vadd.f32 %v5339, 0.0
  %v5356 = vadd.f32 %v5340, 0.0
  %v5357 = vadd.f32 %v5341, 0.0
  %v5358 = vadd.f32 %v5342, 0.0
  %v5359 = vadd.f32 %v5343, 0.0
  %v5360 = vadd.f32 %v5344, 0.0
  %v5361 = vadd.f32 %v5345, 0.0
  %v5362 = vadd.f32 %v5346, 0.0
  %v5363 = vadd.f32 %v5347, 0.0
  %v5364 = vadd.f32 %v5348, 0.0
  %v5365 = vadd.f32 %v5349, 0.0
  %v5366 = vadd.f32 %v5350, 0.0
  %v5367 = vadd.f32 %v5351, 0.0
  %v5368 = vld [vmem:[#allocation3 + $0x6] sm:$0xff]
  %v5369 = vld [vmem:[#allocation3 + $0xe] sm:$0xff]
  %v5370 = vld [vmem:[#allocation3 + $0x16] sm:$0xff]
  %v5371 = vld [vmem:[#allocation3 + $0x1e] sm:$0xff]
  %v5372 = vld [vmem:[#allocation3 + $0x26] sm:$0xff]
  %v5373 = vld [vmem:[#allocation3 + $0x2e] sm:$0xff]
  %v5374 = vld [vmem:[#allocation3 + $0x36] sm:$0xff]
  %v5375 = vld [vmem:[#allocation3 + $0x3e] sm:$0xff]
  %v5376 = vld [vmem:[#allocation3 + $0x86] sm:$0xff]
  %v5377 = vld [vmem:[#allocation3 + $0x8e] sm:$0xff]
  %v5378 = vld [vmem:[#allocation3 + $0x96] sm:$0xff]
  %v5379 = vld [vmem:[#allocation3 + $0x9e] sm:$0xff]
  %v5380 = vld [vmem:[#allocation3 + $0xa6] sm:$0xff]
  %v5381 = vld [vmem:[#allocation3 + $0xae] sm:$0xff]
  %v5382 = vld [vmem:[#allocation3 + $0xb6] sm:$0xff]
  %v5383 = vld [vmem:[#allocation3 + $0xbe] sm:$0xff]
  %v5384 = vlaneseq
  %v5385 = vshrl.u32 %v5384, 7
  %v5386 = vsub.s32 1, %v5385
  %v5387 = vrot.slane %v5049, %v5386
  %v5388 = vmul.f32 %v5368, %v5387
  %v5389 = vmul.f32 %v5369, %v5387
  %v5390 = vmul.f32 %v5370, %v5387
  %v5391 = vmul.f32 %v5371, %v5387
  %v5392 = vmul.f32 %v5372, %v5387
  %v5393 = vmul.f32 %v5373, %v5387
  %v5394 = vmul.f32 %v5374, %v5387
  %v5395 = vmul.f32 %v5375, %v5387
  %v5396 = vmul.f32 %v5376, %v5387
  %v5397 = vmul.f32 %v5377, %v5387
  %v5398 = vmul.f32 %v5378, %v5387
  %v5399 = vmul.f32 %v5379, %v5387
  %v5400 = vmul.f32 %v5380, %v5387
  %v5401 = vmul.f32 %v5381, %v5387
  %v5402 = vmul.f32 %v5382, %v5387
  %v5403 = vmul.f32 %v5383, %v5387
  %v5404 = vadd.f32 %v5388, 0.0
  %v5405 = vadd.f32 %v5389, 0.0
  %v5406 = vadd.f32 %v5390, 0.0
  %v5407 = vadd.f32 %v5391, 0.0
  %v5408 = vadd.f32 %v5392, 0.0
  %v5409 = vadd.f32 %v5393, 0.0
  %v5410 = vadd.f32 %v5394, 0.0
  %v5411 = vadd.f32 %v5395, 0.0
  %v5412 = vadd.f32 %v5396, 0.0
  %v5413 = vadd.f32 %v5397, 0.0
  %v5414 = vadd.f32 %v5398, 0.0
  %v5415 = vadd.f32 %v5399, 0.0
  %v5416 = vadd.f32 %v5400, 0.0
  %v5417 = vadd.f32 %v5401, 0.0
  %v5418 = vadd.f32 %v5402, 0.0
  %v5419 = vadd.f32 %v5403, 0.0
  %v5420 = vld [vmem:[#allocation3 + $0x46] sm:$0xff]
  %v5421 = vld [vmem:[#allocation3 + $0xc6] sm:$0xff]
  %v5422 = vlaneseq
  %v5423 = vshrl.u32 %v5422, 7
  %v5424 = vsub.s32 1, %v5423
  %v5425 = vrot.slane %v5050, %v5424
  %v5426 = vmul.f32 %v5369, %v5425
  %v5427 = vmul.f32 %v5370, %v5425
  %v5428 = vmul.f32 %v5371, %v5425
  %v5429 = vmul.f32 %v5372, %v5425
  %v5430 = vmul.f32 %v5373, %v5425
  %v5431 = vmul.f32 %v5374, %v5425
  %v5432 = vmul.f32 %v5375, %v5425
  %v5433 = vmul.f32 %v5420, %v5425
  %v5434 = vmul.f32 %v5377, %v5425
  %v5435 = vmul.f32 %v5378, %v5425
  %v5436 = vmul.f32 %v5379, %v5425
  %v5437 = vmul.f32 %v5380, %v5425
  %v5438 = vmul.f32 %v5381, %v5425
  %v5439 = vmul.f32 %v5382, %v5425
  %v5440 = vmul.f32 %v5383, %v5425
  %v5441 = vmul.f32 %v5421, %v5425
  %v5442 = vadd.f32 %v5404, %v5426
  %v5443 = vadd.f32 %v5405, %v5427
  %v5444 = vadd.f32 %v5406, %v5428
  %v5445 = vadd.f32 %v5407, %v5429
  %v5446 = vadd.f32 %v5408, %v5430
  %v5447 = vadd.f32 %v5409, %v5431
  %v5448 = vadd.f32 %v5410, %v5432
  %v5449 = vadd.f32 %v5411, %v5433
  %v5450 = vadd.f32 %v5412, %v5434
  %v5451 = vadd.f32 %v5413, %v5435
  %v5452 = vadd.f32 %v5414, %v5436
  %v5453 = vadd.f32 %v5415, %v5437
  %v5454 = vadd.f32 %v5416, %v5438
  %v5455 = vadd.f32 %v5417, %v5439
  %v5456 = vadd.f32 %v5418, %v5440
  %v5457 = vadd.f32 %v5419, %v5441
  %v5458 = vld [vmem:[#allocation3 + $0x4e] sm:$0xff]
  %v5459 = vld [vmem:[#allocation3 + $0xce] sm:$0xff]
  %v5460 = vlaneseq
  %v5461 = vshrl.u32 %v5460, 7
  %v5462 = vsub.s32 1, %v5461
  %v5463 = vrot.slane %v5051, %v5462
  %v5464 = vmul.f32 %v5370, %v5463
  %v5465 = vmul.f32 %v5371, %v5463
  %v5466 = vmul.f32 %v5372, %v5463
  %v5467 = vmul.f32 %v5373, %v5463
  %v5468 = vmul.f32 %v5374, %v5463
  %v5469 = vmul.f32 %v5375, %v5463
  %v5470 = vmul.f32 %v5420, %v5463
  %v5471 = vmul.f32 %v5458, %v5463
  %v5472 = vmul.f32 %v5378, %v5463
  %v5473 = vmul.f32 %v5379, %v5463
  %v5474 = vmul.f32 %v5380, %v5463
  %v5475 = vmul.f32 %v5381, %v5463
  %v5476 = vmul.f32 %v5382, %v5463
  %v5477 = vmul.f32 %v5383, %v5463
  %v5478 = vmul.f32 %v5421, %v5463
  %v5479 = vmul.f32 %v5459, %v5463
  %v5480 = vadd.f32 %v5442, %v5464
  %v5481 = vadd.f32 %v5443, %v5465
  %v5482 = vadd.f32 %v5444, %v5466
  %v5483 = vadd.f32 %v5445, %v5467
  %v5484 = vadd.f32 %v5446, %v5468
  %v5485 = vadd.f32 %v5447, %v5469
  %v5486 = vadd.f32 %v5448, %v5470
  %v5487 = vadd.f32 %v5449, %v5471
  %v5488 = vadd.f32 %v5450, %v5472
  %v5489 = vadd.f32 %v5451, %v5473
  %v5490 = vadd.f32 %v5452, %v5474
  %v5491 = vadd.f32 %v5453, %v5475
  %v5492 = vadd.f32 %v5454, %v5476
  %v5493 = vadd.f32 %v5455, %v5477
  %v5494 = vadd.f32 %v5456, %v5478
  %v5495 = vadd.f32 %v5457, %v5479
  %v5496 = vld [vmem:[#allocation3 + $0x56] sm:$0xff]
  %v5497 = vld [vmem:[#allocation3 + $0xd6] sm:$0xff]
  %v5498 = vlaneseq
  %v5499 = vshrl.u32 %v5498, 7
  %v5500 = vsub.s32 1, %v5499
  %v5501 = vrot.slane %v5052, %v5500
  %v5502 = vmul.f32 %v5371, %v5501
  %v5503 = vmul.f32 %v5372, %v5501
  %v5504 = vmul.f32 %v5373, %v5501
  %v5505 = vmul.f32 %v5374, %v5501
  %v5506 = vmul.f32 %v5375, %v5501
  %v5507 = vmul.f32 %v5420, %v5501
  %v5508 = vmul.f32 %v5458, %v5501
  %v5509 = vmul.f32 %v5496, %v5501
  %v5510 = vmul.f32 %v5379, %v5501
  %v5511 = vmul.f32 %v5380, %v5501
  %v5512 = vmul.f32 %v5381, %v5501
  %v5513 = vmul.f32 %v5382, %v5501
  %v5514 = vmul.f32 %v5383, %v5501
  %v5515 = vmul.f32 %v5421, %v5501
  %v5516 = vmul.f32 %v5459, %v5501
  %v5517 = vmul.f32 %v5497, %v5501
  %v5518 = vadd.f32 %v5480, %v5502
  %v5519 = vadd.f32 %v5481, %v5503
  %v5520 = vadd.f32 %v5482, %v5504
  %v5521 = vadd.f32 %v5483, %v5505
  %v5522 = vadd.f32 %v5484, %v5506
  %v5523 = vadd.f32 %v5485, %v5507
  %v5524 = vadd.f32 %v5486, %v5508
  %v5525 = vadd.f32 %v5487, %v5509
  %v5526 = vadd.f32 %v5488, %v5510
  %v5527 = vadd.f32 %v5489, %v5511
  %v5528 = vadd.f32 %v5490, %v5512
  %v5529 = vadd.f32 %v5491, %v5513
  %v5530 = vadd.f32 %v5492, %v5514
  %v5531 = vadd.f32 %v5493, %v5515
  %v5532 = vadd.f32 %v5494, %v5516
  %v5533 = vadd.f32 %v5495, %v5517
  %v5534 = vld [vmem:[#allocation3 + $0x5e] sm:$0xff]
  %v5535 = vld [vmem:[#allocation3 + $0xde] sm:$0xff]
  %v5536 = vlaneseq
  %v5537 = vshrl.u32 %v5536, 7
  %v5538 = vsub.s32 1, %v5537
  %v5539 = vrot.slane %v5053, %v5538
  %v5540 = vmul.f32 %v5372, %v5539
  %v5541 = vmul.f32 %v5373, %v5539
  %v5542 = vmul.f32 %v5374, %v5539
  %v5543 = vmul.f32 %v5375, %v5539
  %v5544 = vmul.f32 %v5420, %v5539
  %v5545 = vmul.f32 %v5458, %v5539
  %v5546 = vmul.f32 %v5496, %v5539
  %v5547 = vmul.f32 %v5534, %v5539
  %v5548 = vmul.f32 %v5380, %v5539
  %v5549 = vmul.f32 %v5381, %v5539
  %v5550 = vmul.f32 %v5382, %v5539
  %v5551 = vmul.f32 %v5383, %v5539
  %v5552 = vmul.f32 %v5421, %v5539
  %v5553 = vmul.f32 %v5459, %v5539
  %v5554 = vmul.f32 %v5497, %v5539
  %v5555 = vmul.f32 %v5535, %v5539
  %v5556 = vadd.f32 %v5518, %v5540
  %v5557 = vadd.f32 %v5519, %v5541
  %v5558 = vadd.f32 %v5520, %v5542
  %v5559 = vadd.f32 %v5521, %v5543
  %v5560 = vadd.f32 %v5522, %v5544
  %v5561 = vadd.f32 %v5523, %v5545
  %v5562 = vadd.f32 %v5524, %v5546
  %v5563 = vadd.f32 %v5525, %v5547
  %v5564 = vadd.f32 %v5526, %v5548
  %v5565 = vadd.f32 %v5527, %v5549
  %v5566 = vadd.f32 %v5528, %v5550
  %v5567 = vadd.f32 %v5529, %v5551
  %v5568 = vadd.f32 %v5530, %v5552
  %v5569 = vadd.f32 %v5531, %v5553
  %v5570 = vadd.f32 %v5532, %v5554
  %v5571 = vadd.f32 %v5533, %v5555
  %v5572 = vld [vmem:[#allocation3 + $0x66] sm:$0xff]
  %v5573 = vld [vmem:[#allocation3 + $0xe6] sm:$0xff]
  %v5574 = vlaneseq
  %v5575 = vshrl.u32 %v5574, 7
  %v5576 = vsub.s32 1, %v5575
  %v5577 = vrot.slane %v5054, %v5576
  %v5578 = vmul.f32 %v5373, %v5577
  %v5579 = vmul.f32 %v5374, %v5577
  %v5580 = vmul.f32 %v5375, %v5577
  %v5581 = vmul.f32 %v5420, %v5577
  %v5582 = vmul.f32 %v5458, %v5577
  %v5583 = vmul.f32 %v5496, %v5577
  %v5584 = vmul.f32 %v5534, %v5577
  %v5585 = vmul.f32 %v5572, %v5577
  %v5586 = vmul.f32 %v5381, %v5577
  %v5587 = vmul.f32 %v5382, %v5577
  %v5588 = vmul.f32 %v5383, %v5577
  %v5589 = vmul.f32 %v5421, %v5577
  %v5590 = vmul.f32 %v5459, %v5577
  %v5591 = vmul.f32 %v5497, %v5577
  %v5592 = vmul.f32 %v5535, %v5577
  %v5593 = vmul.f32 %v5573, %v5577
  %v5594 = vadd.f32 %v5556, %v5578
  %v5595 = vadd.f32 %v5557, %v5579
  %v5596 = vadd.f32 %v5558, %v5580
  %v5597 = vadd.f32 %v5559, %v5581
  %v5598 = vadd.f32 %v5560, %v5582
  %v5599 = vadd.f32 %v5561, %v5583
  %v5600 = vadd.f32 %v5562, %v5584
  %v5601 = vadd.f32 %v5563, %v5585
  %v5602 = vadd.f32 %v5564, %v5586
  %v5603 = vadd.f32 %v5565, %v5587
  %v5604 = vadd.f32 %v5566, %v5588
  %v5605 = vadd.f32 %v5567, %v5589
  %v5606 = vadd.f32 %v5568, %v5590
  %v5607 = vadd.f32 %v5569, %v5591
  %v5608 = vadd.f32 %v5570, %v5592
  %v5609 = vadd.f32 %v5571, %v5593
  %v5610 = vld [vmem:[#allocation3 + $0x6e] sm:$0xff]
  %v5611 = vld [vmem:[#allocation3 + $0xee] sm:$0xff]
  %v5612 = vlaneseq
  %v5613 = vshrl.u32 %v5612, 7
  %v5614 = vsub.s32 1, %v5613
  %v5615 = vrot.slane %v5055, %v5614
  %v5616 = vmul.f32 %v5374, %v5615
  %v5617 = vmul.f32 %v5375, %v5615
  %v5618 = vmul.f32 %v5420, %v5615
  %v5619 = vmul.f32 %v5458, %v5615
  %v5620 = vmul.f32 %v5496, %v5615
  %v5621 = vmul.f32 %v5534, %v5615
  %v5622 = vmul.f32 %v5572, %v5615
  %v5623 = vmul.f32 %v5610, %v5615
  %v5624 = vmul.f32 %v5382, %v5615
  %v5625 = vmul.f32 %v5383, %v5615
  %v5626 = vmul.f32 %v5421, %v5615
  %v5627 = vmul.f32 %v5459, %v5615
  %v5628 = vmul.f32 %v5497, %v5615
  %v5629 = vmul.f32 %v5535, %v5615
  %v5630 = vmul.f32 %v5573, %v5615
  %v5631 = vmul.f32 %v5611, %v5615
  %v5632 = vadd.f32 %v5594, %v5616
  %v5633 = vadd.f32 %v5595, %v5617
  %v5634 = vadd.f32 %v5596, %v5618
  %v5635 = vadd.f32 %v5597, %v5619
  %v5636 = vadd.f32 %v5598, %v5620
  %v5637 = vadd.f32 %v5599, %v5621
  %v5638 = vadd.f32 %v5600, %v5622
  %v5639 = vadd.f32 %v5601, %v5623
  %v5640 = vadd.f32 %v5602, %v5624
  %v5641 = vadd.f32 %v5603, %v5625
  %v5642 = vadd.f32 %v5604, %v5626
  %v5643 = vadd.f32 %v5605, %v5627
  %v5644 = vadd.f32 %v5606, %v5628
  %v5645 = vadd.f32 %v5607, %v5629
  %v5646 = vadd.f32 %v5608, %v5630
  %v5647 = vadd.f32 %v5609, %v5631
  %v5648 = vmul.f32 %v5632, %v1389
  %v5649 = vmul.f32 %v5633, %v1394
  %v5650 = vmul.f32 %v5634, %v1399
  %v5651 = vmul.f32 %v5635, %v1404
  %v5652 = vmul.f32 %v5636, %v1409
  %v5653 = vmul.f32 %v5637, %v1414
  %v5654 = vmul.f32 %v5638, %v1419
  %v5655 = vmul.f32 %v5639, %v1424
  %v5656 = vmul.f32 %v5640, %v1389
  %v5657 = vmul.f32 %v5641, %v1394
  %v5658 = vmul.f32 %v5642, %v1399
  %v5659 = vmul.f32 %v5643, %v1404
  %v5660 = vmul.f32 %v5644, %v1409
  %v5661 = vmul.f32 %v5645, %v1414
  %v5662 = vmul.f32 %v5646, %v1419
  %v5663 = vmul.f32 %v5647, %v1424
  %v5664 = vadd.f32 %v5352, %v5648
  %v5665 = vadd.f32 %v5353, %v5649
  %v5666 = vadd.f32 %v5354, %v5650
  %v5667 = vadd.f32 %v5355, %v5651
  %v5668 = vadd.f32 %v5356, %v5652
  %v5669 = vadd.f32 %v5357, %v5653
  %v5670 = vadd.f32 %v5358, %v5654
  %v5671 = vadd.f32 %v5359, %v5655
  %v5672 = vadd.f32 %v5360, %v5656
  %v5673 = vadd.f32 %v5361, %v5657
  %v5674 = vadd.f32 %v5362, %v5658
  %v5675 = vadd.f32 %v5363, %v5659
  %v5676 = vadd.f32 %v5364, %v5660
  %v5677 = vadd.f32 %v5365, %v5661
  %v5678 = vadd.f32 %v5366, %v5662
  %v5679 = vadd.f32 %v5367, %v5663
  %v5680 = vld [vmem:[#allocation3 + $0x7] sm:$0xff]
  %v5681 = vld [vmem:[#allocation3 + $0xf] sm:$0xff]
  %v5682 = vld [vmem:[#allocation3 + $0x17] sm:$0xff]
  %v5683 = vld [vmem:[#allocation3 + $0x1f] sm:$0xff]
  %v5684 = vld [vmem:[#allocation3 + $0x27] sm:$0xff]
  %v5685 = vld [vmem:[#allocation3 + $0x2f] sm:$0xff]
  %v5686 = vld [vmem:[#allocation3 + $0x37] sm:$0xff]
  %v5687 = vld [vmem:[#allocation3 + $0x3f] sm:$0xff]
  %v5688 = vld [vmem:[#allocation3 + $0x87] sm:$0xff]
  %v5689 = vld [vmem:[#allocation3 + $0x8f] sm:$0xff]
  %v5690 = vld [vmem:[#allocation3 + $0x97] sm:$0xff]
  %v5691 = vld [vmem:[#allocation3 + $0x9f] sm:$0xff]
  %v5692 = vld [vmem:[#allocation3 + $0xa7] sm:$0xff]
  %v5693 = vld [vmem:[#allocation3 + $0xaf] sm:$0xff]
  %v5694 = vld [vmem:[#allocation3 + $0xb7] sm:$0xff]
  %v5695 = vld [vmem:[#allocation3 + $0xbf] sm:$0xff]
  %v5696 = vlaneseq
  %v5697 = vshrl.u32 %v5696, 7
  %v5698 = vsub.s32 2, %v5697
  %v5699 = vrot.slane %v5049, %v5698
  %v5700 = vmul.f32 %v5680, %v5699
  %v5701 = vmul.f32 %v5681, %v5699
  %v5702 = vmul.f32 %v5682, %v5699
  %v5703 = vmul.f32 %v5683, %v5699
  %v5704 = vmul.f32 %v5684, %v5699
  %v5705 = vmul.f32 %v5685, %v5699
  %v5706 = vmul.f32 %v5686, %v5699
  %v5707 = vmul.f32 %v5687, %v5699
  %v5708 = vmul.f32 %v5688, %v5699
  %v5709 = vmul.f32 %v5689, %v5699
  %v5710 = vmul.f32 %v5690, %v5699
  %v5711 = vmul.f32 %v5691, %v5699
  %v5712 = vmul.f32 %v5692, %v5699
  %v5713 = vmul.f32 %v5693, %v5699
  %v5714 = vmul.f32 %v5694, %v5699
  %v5715 = vmul.f32 %v5695, %v5699
  %v5716 = vadd.f32 %v5700, 0.0
  %v5717 = vadd.f32 %v5701, 0.0
  %v5718 = vadd.f32 %v5702, 0.0
  %v5719 = vadd.f32 %v5703, 0.0
  %v5720 = vadd.f32 %v5704, 0.0
  %v5721 = vadd.f32 %v5705, 0.0
  %v5722 = vadd.f32 %v5706, 0.0
  %v5723 = vadd.f32 %v5707, 0.0
  %v5724 = vadd.f32 %v5708, 0.0
  %v5725 = vadd.f32 %v5709, 0.0
  %v5726 = vadd.f32 %v5710, 0.0
  %v5727 = vadd.f32 %v5711, 0.0
  %v5728 = vadd.f32 %v5712, 0.0
  %v5729 = vadd.f32 %v5713, 0.0
  %v5730 = vadd.f32 %v5714, 0.0
  %v5731 = vadd.f32 %v5715, 0.0
  %v5732 = vld [vmem:[#allocation3 + $0x47] sm:$0xff]
  %v5733 = vld [vmem:[#allocation3 + $0xc7] sm:$0xff]
  %v5734 = vlaneseq
  %v5735 = vshrl.u32 %v5734, 7
  %v5736 = vsub.s32 2, %v5735
  %v5737 = vrot.slane %v5050, %v5736
  %v5738 = vmul.f32 %v5681, %v5737
  %v5739 = vmul.f32 %v5682, %v5737
  %v5740 = vmul.f32 %v5683, %v5737
  %v5741 = vmul.f32 %v5684, %v5737
  %v5742 = vmul.f32 %v5685, %v5737
  %v5743 = vmul.f32 %v5686, %v5737
  %v5744 = vmul.f32 %v5687, %v5737
  %v5745 = vmul.f32 %v5732, %v5737
  %v5746 = vmul.f32 %v5689, %v5737
  %v5747 = vmul.f32 %v5690, %v5737
  %v5748 = vmul.f32 %v5691, %v5737
  %v5749 = vmul.f32 %v5692, %v5737
  %v5750 = vmul.f32 %v5693, %v5737
  %v5751 = vmul.f32 %v5694, %v5737
  %v5752 = vmul.f32 %v5695, %v5737
  %v5753 = vmul.f32 %v5733, %v5737
  %v5754 = vadd.f32 %v5716, %v5738
  %v5755 = vadd.f32 %v5717, %v5739
  %v5756 = vadd.f32 %v5718, %v5740
  %v5757 = vadd.f32 %v5719, %v5741
  %v5758 = vadd.f32 %v5720, %v5742
  %v5759 = vadd.f32 %v5721, %v5743
  %v5760 = vadd.f32 %v5722, %v5744
  %v5761 = vadd.f32 %v5723, %v5745
  %v5762 = vadd.f32 %v5724, %v5746
  %v5763 = vadd.f32 %v5725, %v5747
  %v5764 = vadd.f32 %v5726, %v5748
  %v5765 = vadd.f32 %v5727, %v5749
  %v5766 = vadd.f32 %v5728, %v5750
  %v5767 = vadd.f32 %v5729, %v5751
  %v5768 = vadd.f32 %v5730, %v5752
  %v5769 = vadd.f32 %v5731, %v5753
  %v5770 = vld [vmem:[#allocation3 + $0x4f] sm:$0xff]
  %v5771 = vld [vmem:[#allocation3 + $0xcf] sm:$0xff]
  %v5772 = vlaneseq
  %v5773 = vshrl.u32 %v5772, 7
  %v5774 = vsub.s32 2, %v5773
  %v5775 = vrot.slane %v5051, %v5774
  %v5776 = vmul.f32 %v5682, %v5775
  %v5777 = vmul.f32 %v5683, %v5775
  %v5778 = vmul.f32 %v5684, %v5775
  %v5779 = vmul.f32 %v5685, %v5775
  %v5780 = vmul.f32 %v5686, %v5775
  %v5781 = vmul.f32 %v5687, %v5775
  %v5782 = vmul.f32 %v5732, %v5775
  %v5783 = vmul.f32 %v5770, %v5775
  %v5784 = vmul.f32 %v5690, %v5775
  %v5785 = vmul.f32 %v5691, %v5775
  %v5786 = vmul.f32 %v5692, %v5775
  %v5787 = vmul.f32 %v5693, %v5775
  %v5788 = vmul.f32 %v5694, %v5775
  %v5789 = vmul.f32 %v5695, %v5775
  %v5790 = vmul.f32 %v5733, %v5775
  %v5791 = vmul.f32 %v5771, %v5775
  %v5792 = vadd.f32 %v5754, %v5776
  %v5793 = vadd.f32 %v5755, %v5777
  %v5794 = vadd.f32 %v5756, %v5778
  %v5795 = vadd.f32 %v5757, %v5779
  %v5796 = vadd.f32 %v5758, %v5780
  %v5797 = vadd.f32 %v5759, %v5781
  %v5798 = vadd.f32 %v5760, %v5782
  %v5799 = vadd.f32 %v5761, %v5783
  %v5800 = vadd.f32 %v5762, %v5784
  %v5801 = vadd.f32 %v5763, %v5785
  %v5802 = vadd.f32 %v5764, %v5786
  %v5803 = vadd.f32 %v5765, %v5787
  %v5804 = vadd.f32 %v5766, %v5788
  %v5805 = vadd.f32 %v5767, %v5789
  %v5806 = vadd.f32 %v5768, %v5790
  %v5807 = vadd.f32 %v5769, %v5791
  %v5808 = vld [vmem:[#allocation3 + $0x57] sm:$0xff]
  %v5809 = vld [vmem:[#allocation3 + $0xd7] sm:$0xff]
  %v5810 = vlaneseq
  %v5811 = vshrl.u32 %v5810, 7
  %v5812 = vsub.s32 2, %v5811
  %v5813 = vrot.slane %v5052, %v5812
  %v5814 = vmul.f32 %v5683, %v5813
  %v5815 = vmul.f32 %v5684, %v5813
  %v5816 = vmul.f32 %v5685, %v5813
  %v5817 = vmul.f32 %v5686, %v5813
  %v5818 = vmul.f32 %v5687, %v5813
  %v5819 = vmul.f32 %v5732, %v5813
  %v5820 = vmul.f32 %v5770, %v5813
  %v5821 = vmul.f32 %v5808, %v5813
  %v5822 = vmul.f32 %v5691, %v5813
  %v5823 = vmul.f32 %v5692, %v5813
  %v5824 = vmul.f32 %v5693, %v5813
  %v5825 = vmul.f32 %v5694, %v5813
  %v5826 = vmul.f32 %v5695, %v5813
  %v5827 = vmul.f32 %v5733, %v5813
  %v5828 = vmul.f32 %v5771, %v5813
  %v5829 = vmul.f32 %v5809, %v5813
  %v5830 = vadd.f32 %v5792, %v5814
  %v5831 = vadd.f32 %v5793, %v5815
  %v5832 = vadd.f32 %v5794, %v5816
  %v5833 = vadd.f32 %v5795, %v5817
  %v5834 = vadd.f32 %v5796, %v5818
  %v5835 = vadd.f32 %v5797, %v5819
  %v5836 = vadd.f32 %v5798, %v5820
  %v5837 = vadd.f32 %v5799, %v5821
  %v5838 = vadd.f32 %v5800, %v5822
  %v5839 = vadd.f32 %v5801, %v5823
  %v5840 = vadd.f32 %v5802, %v5824
  %v5841 = vadd.f32 %v5803, %v5825
  %v5842 = vadd.f32 %v5804, %v5826
  %v5843 = vadd.f32 %v5805, %v5827
  %v5844 = vadd.f32 %v5806, %v5828
  %v5845 = vadd.f32 %v5807, %v5829
  %v5846 = vld [vmem:[#allocation3 + $0x5f] sm:$0xff]
  %v5847 = vld [vmem:[#allocation3 + $0xdf] sm:$0xff]
  %v5848 = vlaneseq
  %v5849 = vshrl.u32 %v5848, 7
  %v5850 = vsub.s32 2, %v5849
  %v5851 = vrot.slane %v5053, %v5850
  %v5852 = vmul.f32 %v5684, %v5851
  %v5853 = vmul.f32 %v5685, %v5851
  %v5854 = vmul.f32 %v5686, %v5851
  %v5855 = vmul.f32 %v5687, %v5851
  %v5856 = vmul.f32 %v5732, %v5851
  %v5857 = vmul.f32 %v5770, %v5851
  %v5858 = vmul.f32 %v5808, %v5851
  %v5859 = vmul.f32 %v5846, %v5851
  %v5860 = vmul.f32 %v5692, %v5851
  %v5861 = vmul.f32 %v5693, %v5851
  %v5862 = vmul.f32 %v5694, %v5851
  %v5863 = vmul.f32 %v5695, %v5851
  %v5864 = vmul.f32 %v5733, %v5851
  %v5865 = vmul.f32 %v5771, %v5851
  %v5866 = vmul.f32 %v5809, %v5851
  %v5867 = vmul.f32 %v5847, %v5851
  %v5868 = vadd.f32 %v5830, %v5852
  %v5869 = vadd.f32 %v5831, %v5853
  %v5870 = vadd.f32 %v5832, %v5854
  %v5871 = vadd.f32 %v5833, %v5855
  %v5872 = vadd.f32 %v5834, %v5856
  %v5873 = vadd.f32 %v5835, %v5857
  %v5874 = vadd.f32 %v5836, %v5858
  %v5875 = vadd.f32 %v5837, %v5859
  %v5876 = vadd.f32 %v5838, %v5860
  %v5877 = vadd.f32 %v5839, %v5861
  %v5878 = vadd.f32 %v5840, %v5862
  %v5879 = vadd.f32 %v5841, %v5863
  %v5880 = vadd.f32 %v5842, %v5864
  %v5881 = vadd.f32 %v5843, %v5865
  %v5882 = vadd.f32 %v5844, %v5866
  %v5883 = vadd.f32 %v5845, %v5867
  %v5884 = vld [vmem:[#allocation3 + $0x67] sm:$0xff]
  %v5885 = vld [vmem:[#allocation3 + $0xe7] sm:$0xff]
  %v5886 = vlaneseq
  %v5887 = vshrl.u32 %v5886, 7
  %v5888 = vsub.s32 2, %v5887
  %v5889 = vrot.slane %v5054, %v5888
  %v5890 = vmul.f32 %v5685, %v5889
  %v5891 = vmul.f32 %v5686, %v5889
  %v5892 = vmul.f32 %v5687, %v5889
  %v5893 = vmul.f32 %v5732, %v5889
  %v5894 = vmul.f32 %v5770, %v5889
  %v5895 = vmul.f32 %v5808, %v5889
  %v5896 = vmul.f32 %v5846, %v5889
  %v5897 = vmul.f32 %v5884, %v5889
  %v5898 = vmul.f32 %v5693, %v5889
  %v5899 = vmul.f32 %v5694, %v5889
  %v5900 = vmul.f32 %v5695, %v5889
  %v5901 = vmul.f32 %v5733, %v5889
  %v5902 = vmul.f32 %v5771, %v5889
  %v5903 = vmul.f32 %v5809, %v5889
  %v5904 = vmul.f32 %v5847, %v5889
  %v5905 = vmul.f32 %v5885, %v5889
  %v5906 = vadd.f32 %v5868, %v5890
  %v5907 = vadd.f32 %v5869, %v5891
  %v5908 = vadd.f32 %v5870, %v5892
  %v5909 = vadd.f32 %v5871, %v5893
  %v5910 = vadd.f32 %v5872, %v5894
  %v5911 = vadd.f32 %v5873, %v5895
  %v5912 = vadd.f32 %v5874, %v5896
  %v5913 = vadd.f32 %v5875, %v5897
  %v5914 = vadd.f32 %v5876, %v5898
  %v5915 = vadd.f32 %v5877, %v5899
  %v5916 = vadd.f32 %v5878, %v5900
  %v5917 = vadd.f32 %v5879, %v5901
  %v5918 = vadd.f32 %v5880, %v5902
  %v5919 = vadd.f32 %v5881, %v5903
  %v5920 = vadd.f32 %v5882, %v5904
  %v5921 = vadd.f32 %v5883, %v5905
  %v5922 = vld [vmem:[#allocation3 + $0x6f] sm:$0xff]
  %v5923 = vld [vmem:[#allocation3 + $0xef] sm:$0xff]
  %v5924 = vlaneseq
  %v5925 = vshrl.u32 %v5924, 7
  %v5926 = vsub.s32 2, %v5925
  %v5927 = vrot.slane %v5055, %v5926
  %v5928 = vmul.f32 %v5686, %v5927
  %v5929 = vmul.f32 %v5687, %v5927
  %v5930 = vmul.f32 %v5732, %v5927
  %v5931 = vmul.f32 %v5770, %v5927
  %v5932 = vmul.f32 %v5808, %v5927
  %v5933 = vmul.f32 %v5846, %v5927
  %v5934 = vmul.f32 %v5884, %v5927
  %v5935 = vmul.f32 %v5922, %v5927
  %v5936 = vmul.f32 %v5694, %v5927
  %v5937 = vmul.f32 %v5695, %v5927
  %v5938 = vmul.f32 %v5733, %v5927
  %v5939 = vmul.f32 %v5771, %v5927
  %v5940 = vmul.f32 %v5809, %v5927
  %v5941 = vmul.f32 %v5847, %v5927
  %v5942 = vmul.f32 %v5885, %v5927
  %v5943 = vmul.f32 %v5923, %v5927
  %v5944 = vadd.f32 %v5906, %v5928
  %v5945 = vadd.f32 %v5907, %v5929
  %v5946 = vadd.f32 %v5908, %v5930
  %v5947 = vadd.f32 %v5909, %v5931
  %v5948 = vadd.f32 %v5910, %v5932
  %v5949 = vadd.f32 %v5911, %v5933
  %v5950 = vadd.f32 %v5912, %v5934
  %v5951 = vadd.f32 %v5913, %v5935
  %v5952 = vadd.f32 %v5914, %v5936
  %v5953 = vadd.f32 %v5915, %v5937
  %v5954 = vadd.f32 %v5916, %v5938
  %v5955 = vadd.f32 %v5917, %v5939
  %v5956 = vadd.f32 %v5918, %v5940
  %v5957 = vadd.f32 %v5919, %v5941
  %v5958 = vadd.f32 %v5920, %v5942
  %v5959 = vadd.f32 %v5921, %v5943
  %v5960 = vmul.f32 %v5944, %v1741
  %v5961 = vmul.f32 %v5945, %v1746
  %v5962 = vmul.f32 %v5946, %v1751
  %v5963 = vmul.f32 %v5947, %v1756
  %v5964 = vmul.f32 %v5948, %v1761
  %v5965 = vmul.f32 %v5949, %v1766
  %v5966 = vmul.f32 %v5950, %v1771
  %v5967 = vmul.f32 %v5951, %v1776
  %v5968 = vmul.f32 %v5952, %v1741
  %v5969 = vmul.f32 %v5953, %v1746
  %v5970 = vmul.f32 %v5954, %v1751
  %v5971 = vmul.f32 %v5955, %v1756
  %v5972 = vmul.f32 %v5956, %v1761
  %v5973 = vmul.f32 %v5957, %v1766
  %v5974 = vmul.f32 %v5958, %v1771
  %v5975 = vmul.f32 %v5959, %v1776
  %v5976 = vadd.f32 %v5664, %v5960
  %v5977 = vadd.f32 %v5665, %v5961
  %v5978 = vadd.f32 %v5666, %v5962
  %v5979 = vadd.f32 %v5667, %v5963
  %v5980 = vadd.f32 %v5668, %v5964
  %v5981 = vadd.f32 %v5669, %v5965
  %v5982 = vadd.f32 %v5670, %v5966
  %v5983 = vadd.f32 %v5671, %v5967
  %v5984 = vadd.f32 %v5672, %v5968
  %v5985 = vadd.f32 %v5673, %v5969
  %v5986 = vadd.f32 %v5674, %v5970
  %v5987 = vadd.f32 %v5675, %v5971
  %v5988 = vadd.f32 %v5676, %v5972
  %v5989 = vadd.f32 %v5677, %v5973
  %v5990 = vadd.f32 %v5678, %v5974
  %v5991 = vadd.f32 %v5679, %v5975
  %v5992 = vld [vmem:[#allocation3 + $0x8] sm:$0xff]
  %v5993 = vld [vmem:[#allocation3 + $0x10] sm:$0xff]
  %v5994 = vld [vmem:[#allocation3 + $0x18] sm:$0xff]
  %v5995 = vld [vmem:[#allocation3 + $0x20] sm:$0xff]
  %v5996 = vld [vmem:[#allocation3 + $0x28] sm:$0xff]
  %v5997 = vld [vmem:[#allocation3 + $0x30] sm:$0xff]
  %v5998 = vld [vmem:[#allocation3 + $0x38] sm:$0xff]
  %v5999 = vld [vmem:[#allocation3 + $0x40] sm:$0xff]
  %v6000 = vld [vmem:[#allocation3 + $0x88] sm:$0xff]
  %v6001 = vld [vmem:[#allocation3 + $0x90] sm:$0xff]
  %v6002 = vld [vmem:[#allocation3 + $0x98] sm:$0xff]
  %v6003 = vld [vmem:[#allocation3 + $0xa0] sm:$0xff]
  %v6004 = vld [vmem:[#allocation3 + $0xa8] sm:$0xff]
  %v6005 = vld [vmem:[#allocation3 + $0xb0] sm:$0xff]
  %v6006 = vld [vmem:[#allocation3 + $0xb8] sm:$0xff]
  %v6007 = vld [vmem:[#allocation3 + $0xc0] sm:$0xff]
  %v6008 = vlaneseq
  %v6009 = vshrl.u32 %v6008, 7
  %v6010 = vsub.s32 3, %v6009
  %v6011 = vrot.slane %v5049, %v6010
  %v6012 = vmul.f32 %v5992, %v6011
  %v6013 = vmul.f32 %v5993, %v6011
  %v6014 = vmul.f32 %v5994, %v6011
  %v6015 = vmul.f32 %v5995, %v6011
  %v6016 = vmul.f32 %v5996, %v6011
  %v6017 = vmul.f32 %v5997, %v6011
  %v6018 = vmul.f32 %v5998, %v6011
  %v6019 = vmul.f32 %v5999, %v6011
  %v6020 = vmul.f32 %v6000, %v6011
  %v6021 = vmul.f32 %v6001, %v6011
  %v6022 = vmul.f32 %v6002, %v6011
  %v6023 = vmul.f32 %v6003, %v6011
  %v6024 = vmul.f32 %v6004, %v6011
  %v6025 = vmul.f32 %v6005, %v6011
  %v6026 = vmul.f32 %v6006, %v6011
  %v6027 = vmul.f32 %v6007, %v6011
  %v6028 = vadd.f32 %v6012, 0.0
  %v6029 = vadd.f32 %v6013, 0.0
  %v6030 = vadd.f32 %v6014, 0.0
  %v6031 = vadd.f32 %v6015, 0.0
  %v6032 = vadd.f32 %v6016, 0.0
  %v6033 = vadd.f32 %v6017, 0.0
  %v6034 = vadd.f32 %v6018, 0.0
  %v6035 = vadd.f32 %v6019, 0.0
  %v6036 = vadd.f32 %v6020, 0.0
  %v6037 = vadd.f32 %v6021, 0.0
  %v6038 = vadd.f32 %v6022, 0.0
  %v6039 = vadd.f32 %v6023, 0.0
  %v6040 = vadd.f32 %v6024, 0.0
  %v6041 = vadd.f32 %v6025, 0.0
  %v6042 = vadd.f32 %v6026, 0.0
  %v6043 = vadd.f32 %v6027, 0.0
  %v6044 = vld [vmem:[#allocation3 + $0x48] sm:$0xff]
  %v6045 = vld [vmem:[#allocation3 + $0xc8] sm:$0xff]
  %v6046 = vlaneseq
  %v6047 = vshrl.u32 %v6046, 7
  %v6048 = vsub.s32 3, %v6047
  %v6049 = vrot.slane %v5050, %v6048
  %v6050 = vmul.f32 %v5993, %v6049
  %v6051 = vmul.f32 %v5994, %v6049
  %v6052 = vmul.f32 %v5995, %v6049
  %v6053 = vmul.f32 %v5996, %v6049
  %v6054 = vmul.f32 %v5997, %v6049
  %v6055 = vmul.f32 %v5998, %v6049
  %v6056 = vmul.f32 %v5999, %v6049
  %v6057 = vmul.f32 %v6044, %v6049
  %v6058 = vmul.f32 %v6001, %v6049
  %v6059 = vmul.f32 %v6002, %v6049
  %v6060 = vmul.f32 %v6003, %v6049
  %v6061 = vmul.f32 %v6004, %v6049
  %v6062 = vmul.f32 %v6005, %v6049
  %v6063 = vmul.f32 %v6006, %v6049
  %v6064 = vmul.f32 %v6007, %v6049
  %v6065 = vmul.f32 %v6045, %v6049
  %v6066 = vadd.f32 %v6028, %v6050
  %v6067 = vadd.f32 %v6029, %v6051
  %v6068 = vadd.f32 %v6030, %v6052
  %v6069 = vadd.f32 %v6031, %v6053
  %v6070 = vadd.f32 %v6032, %v6054
  %v6071 = vadd.f32 %v6033, %v6055
  %v6072 = vadd.f32 %v6034, %v6056
  %v6073 = vadd.f32 %v6035, %v6057
  %v6074 = vadd.f32 %v6036, %v6058
  %v6075 = vadd.f32 %v6037, %v6059
  %v6076 = vadd.f32 %v6038, %v6060
  %v6077 = vadd.f32 %v6039, %v6061
  %v6078 = vadd.f32 %v6040, %v6062
  %v6079 = vadd.f32 %v6041, %v6063
  %v6080 = vadd.f32 %v6042, %v6064
  %v6081 = vadd.f32 %v6043, %v6065
  %v6082 = vld [vmem:[#allocation3 + $0x50] sm:$0xff]
  %v6083 = vld [vmem:[#allocation3 + $0xd0] sm:$0xff]
  %v6084 = vlaneseq
  %v6085 = vshrl.u32 %v6084, 7
  %v6086 = vsub.s32 3, %v6085
  %v6087 = vrot.slane %v5051, %v6086
  %v6088 = vmul.f32 %v5994, %v6087
  %v6089 = vmul.f32 %v5995, %v6087
  %v6090 = vmul.f32 %v5996, %v6087
  %v6091 = vmul.f32 %v5997, %v6087
  %v6092 = vmul.f32 %v5998, %v6087
  %v6093 = vmul.f32 %v5999, %v6087
  %v6094 = vmul.f32 %v6044, %v6087
  %v6095 = vmul.f32 %v6082, %v6087
  %v6096 = vmul.f32 %v6002, %v6087
  %v6097 = vmul.f32 %v6003, %v6087
  %v6098 = vmul.f32 %v6004, %v6087
  %v6099 = vmul.f32 %v6005, %v6087
  %v6100 = vmul.f32 %v6006, %v6087
  %v6101 = vmul.f32 %v6007, %v6087
  %v6102 = vmul.f32 %v6045, %v6087
  %v6103 = vmul.f32 %v6083, %v6087
  %v6104 = vadd.f32 %v6066, %v6088
  %v6105 = vadd.f32 %v6067, %v6089
  %v6106 = vadd.f32 %v6068, %v6090
  %v6107 = vadd.f32 %v6069, %v6091
  %v6108 = vadd.f32 %v6070, %v6092
  %v6109 = vadd.f32 %v6071, %v6093
  %v6110 = vadd.f32 %v6072, %v6094
  %v6111 = vadd.f32 %v6073, %v6095
  %v6112 = vadd.f32 %v6074, %v6096
  %v6113 = vadd.f32 %v6075, %v6097
  %v6114 = vadd.f32 %v6076, %v6098
  %v6115 = vadd.f32 %v6077, %v6099
  %v6116 = vadd.f32 %v6078, %v6100
  %v6117 = vadd.f32 %v6079, %v6101
  %v6118 = vadd.f32 %v6080, %v6102
  %v6119 = vadd.f32 %v6081, %v6103
  %v6120 = vld [vmem:[#allocation3 + $0x58] sm:$0xff]
  %v6121 = vld [vmem:[#allocation3 + $0xd8] sm:$0xff]
  %v6122 = vlaneseq
  %v6123 = vshrl.u32 %v6122, 7
  %v6124 = vsub.s32 3, %v6123
  %v6125 = vrot.slane %v5052, %v6124
  %v6126 = vmul.f32 %v5995, %v6125
  %v6127 = vmul.f32 %v5996, %v6125
  %v6128 = vmul.f32 %v5997, %v6125
  %v6129 = vmul.f32 %v5998, %v6125
  %v6130 = vmul.f32 %v5999, %v6125
  %v6131 = vmul.f32 %v6044, %v6125
  %v6132 = vmul.f32 %v6082, %v6125
  %v6133 = vmul.f32 %v6120, %v6125
  %v6134 = vmul.f32 %v6003, %v6125
  %v6135 = vmul.f32 %v6004, %v6125
  %v6136 = vmul.f32 %v6005, %v6125
  %v6137 = vmul.f32 %v6006, %v6125
  %v6138 = vmul.f32 %v6007, %v6125
  %v6139 = vmul.f32 %v6045, %v6125
  %v6140 = vmul.f32 %v6083, %v6125
  %v6141 = vmul.f32 %v6121, %v6125
  %v6142 = vadd.f32 %v6104, %v6126
  %v6143 = vadd.f32 %v6105, %v6127
  %v6144 = vadd.f32 %v6106, %v6128
  %v6145 = vadd.f32 %v6107, %v6129
  %v6146 = vadd.f32 %v6108, %v6130
  %v6147 = vadd.f32 %v6109, %v6131
  %v6148 = vadd.f32 %v6110, %v6132
  %v6149 = vadd.f32 %v6111, %v6133
  %v6150 = vadd.f32 %v6112, %v6134
  %v6151 = vadd.f32 %v6113, %v6135
  %v6152 = vadd.f32 %v6114, %v6136
  %v6153 = vadd.f32 %v6115, %v6137
  %v6154 = vadd.f32 %v6116, %v6138
  %v6155 = vadd.f32 %v6117, %v6139
  %v6156 = vadd.f32 %v6118, %v6140
  %v6157 = vadd.f32 %v6119, %v6141
  %v6158 = vld [vmem:[#allocation3 + $0x60] sm:$0xff]
  %v6159 = vld [vmem:[#allocation3 + $0xe0] sm:$0xff]
  %v6160 = vlaneseq
  %v6161 = vshrl.u32 %v6160, 7
  %v6162 = vsub.s32 3, %v6161
  %v6163 = vrot.slane %v5053, %v6162
  %v6164 = vmul.f32 %v5996, %v6163
  %v6165 = vmul.f32 %v5997, %v6163
  %v6166 = vmul.f32 %v5998, %v6163
  %v6167 = vmul.f32 %v5999, %v6163
  %v6168 = vmul.f32 %v6044, %v6163
  %v6169 = vmul.f32 %v6082, %v6163
  %v6170 = vmul.f32 %v6120, %v6163
  %v6171 = vmul.f32 %v6158, %v6163
  %v6172 = vmul.f32 %v6004, %v6163
  %v6173 = vmul.f32 %v6005, %v6163
  %v6174 = vmul.f32 %v6006, %v6163
  %v6175 = vmul.f32 %v6007, %v6163
  %v6176 = vmul.f32 %v6045, %v6163
  %v6177 = vmul.f32 %v6083, %v6163
  %v6178 = vmul.f32 %v6121, %v6163
  %v6179 = vmul.f32 %v6159, %v6163
  %v6180 = vadd.f32 %v6142, %v6164
  %v6181 = vadd.f32 %v6143, %v6165
  %v6182 = vadd.f32 %v6144, %v6166
  %v6183 = vadd.f32 %v6145, %v6167
  %v6184 = vadd.f32 %v6146, %v6168
  %v6185 = vadd.f32 %v6147, %v6169
  %v6186 = vadd.f32 %v6148, %v6170
  %v6187 = vadd.f32 %v6149, %v6171
  %v6188 = vadd.f32 %v6150, %v6172
  %v6189 = vadd.f32 %v6151, %v6173
  %v6190 = vadd.f32 %v6152, %v6174
  %v6191 = vadd.f32 %v6153, %v6175
  %v6192 = vadd.f32 %v6154, %v6176
  %v6193 = vadd.f32 %v6155, %v6177
  %v6194 = vadd.f32 %v6156, %v6178
  %v6195 = vadd.f32 %v6157, %v6179
  %v6196 = vld [vmem:[#allocation3 + $0x68] sm:$0xff]
  %v6197 = vld [vmem:[#allocation3 + $0xe8] sm:$0xff]
  %v6198 = vlaneseq
  %v6199 = vshrl.u32 %v6198, 7
  %v6200 = vsub.s32 3, %v6199
  %v6201 = vrot.slane %v5054, %v6200
  %v6202 = vmul.f32 %v5997, %v6201
  %v6203 = vmul.f32 %v5998, %v6201
  %v6204 = vmul.f32 %v5999, %v6201
  %v6205 = vmul.f32 %v6044, %v6201
  %v6206 = vmul.f32 %v6082, %v6201
  %v6207 = vmul.f32 %v6120, %v6201
  %v6208 = vmul.f32 %v6158, %v6201
  %v6209 = vmul.f32 %v6196, %v6201
  %v6210 = vmul.f32 %v6005, %v6201
  %v6211 = vmul.f32 %v6006, %v6201
  %v6212 = vmul.f32 %v6007, %v6201
  %v6213 = vmul.f32 %v6045, %v6201
  %v6214 = vmul.f32 %v6083, %v6201
  %v6215 = vmul.f32 %v6121, %v6201
  %v6216 = vmul.f32 %v6159, %v6201
  %v6217 = vmul.f32 %v6197, %v6201
  %v6218 = vadd.f32 %v6180, %v6202
  %v6219 = vadd.f32 %v6181, %v6203
  %v6220 = vadd.f32 %v6182, %v6204
  %v6221 = vadd.f32 %v6183, %v6205
  %v6222 = vadd.f32 %v6184, %v6206
  %v6223 = vadd.f32 %v6185, %v6207
  %v6224 = vadd.f32 %v6186, %v6208
  %v6225 = vadd.f32 %v6187, %v6209
  %v6226 = vadd.f32 %v6188, %v6210
  %v6227 = vadd.f32 %v6189, %v6211
  %v6228 = vadd.f32 %v6190, %v6212
  %v6229 = vadd.f32 %v6191, %v6213
  %v6230 = vadd.f32 %v6192, %v6214
  %v6231 = vadd.f32 %v6193, %v6215
  %v6232 = vadd.f32 %v6194, %v6216
  %v6233 = vadd.f32 %v6195, %v6217
  %v6234 = vld [vmem:[#allocation3 + $0x70] sm:$0xff]
  %v6235 = vld [vmem:[#allocation3 + $0xf0] sm:$0xff]
  %v6236 = vlaneseq
  %v6237 = vshrl.u32 %v6236, 7
  %v6238 = vsub.s32 3, %v6237
  %v6239 = vrot.slane %v5055, %v6238
  %v6240 = vmul.f32 %v5998, %v6239
  %v6241 = vmul.f32 %v5999, %v6239
  %v6242 = vmul.f32 %v6044, %v6239
  %v6243 = vmul.f32 %v6082, %v6239
  %v6244 = vmul.f32 %v6120, %v6239
  %v6245 = vmul.f32 %v6158, %v6239
  %v6246 = vmul.f32 %v6196, %v6239
  %v6247 = vmul.f32 %v6234, %v6239
  %v6248 = vmul.f32 %v6006, %v6239
  %v6249 = vmul.f32 %v6007, %v6239
  %v6250 = vmul.f32 %v6045, %v6239
  %v6251 = vmul.f32 %v6083, %v6239
  %v6252 = vmul.f32 %v6121, %v6239
  %v6253 = vmul.f32 %v6159, %v6239
  %v6254 = vmul.f32 %v6197, %v6239
  %v6255 = vmul.f32 %v6235, %v6239
  %v6256 = vadd.f32 %v6218, %v6240
  %v6257 = vadd.f32 %v6219, %v6241
  %v6258 = vadd.f32 %v6220, %v6242
  %v6259 = vadd.f32 %v6221, %v6243
  %v6260 = vadd.f32 %v6222, %v6244
  %v6261 = vadd.f32 %v6223, %v6245
  %v6262 = vadd.f32 %v6224, %v6246
  %v6263 = vadd.f32 %v6225, %v6247
  %v6264 = vadd.f32 %v6226, %v6248
  %v6265 = vadd.f32 %v6227, %v6249
  %v6266 = vadd.f32 %v6228, %v6250
  %v6267 = vadd.f32 %v6229, %v6251
  %v6268 = vadd.f32 %v6230, %v6252
  %v6269 = vadd.f32 %v6231, %v6253
  %v6270 = vadd.f32 %v6232, %v6254
  %v6271 = vadd.f32 %v6233, %v6255
  %v6272 = vmul.f32 %v6256, %v2093
  %v6273 = vmul.f32 %v6257, %v2098
  %v6274 = vmul.f32 %v6258, %v2103
  %v6275 = vmul.f32 %v6259, %v2108
  %v6276 = vmul.f32 %v6260, %v2113
  %v6277 = vmul.f32 %v6261, %v2118
  %v6278 = vmul.f32 %v6262, %v2123
  %v6279 = vmul.f32 %v6263, %v2128
  %v6280 = vmul.f32 %v6264, %v2093
  %v6281 = vmul.f32 %v6265, %v2098
  %v6282 = vmul.f32 %v6266, %v2103
  %v6283 = vmul.f32 %v6267, %v2108
  %v6284 = vmul.f32 %v6268, %v2113
  %v6285 = vmul.f32 %v6269, %v2118
  %v6286 = vmul.f32 %v6270, %v2123
  %v6287 = vmul.f32 %v6271, %v2128
  %v6288 = vadd.f32 %v5976, %v6272
  %v6289 = vadd.f32 %v5977, %v6273
  %v6290 = vadd.f32 %v5978, %v6274
  %v6291 = vadd.f32 %v5979, %v6275
  %v6292 = vadd.f32 %v5980, %v6276
  %v6293 = vadd.f32 %v5981, %v6277
  %v6294 = vadd.f32 %v5982, %v6278
  %v6295 = vadd.f32 %v5983, %v6279
  %v6296 = vadd.f32 %v5984, %v6280
  %v6297 = vadd.f32 %v5985, %v6281
  %v6298 = vadd.f32 %v5986, %v6282
  %v6299 = vadd.f32 %v5987, %v6283
  %v6300 = vadd.f32 %v5988, %v6284
  %v6301 = vadd.f32 %v5989, %v6285
  %v6302 = vadd.f32 %v5990, %v6286
  %v6303 = vadd.f32 %v5991, %v6287
  %v6304 = vld [vmem:[#allocation3 + $0x9] sm:$0xff]
  %v6305 = vld [vmem:[#allocation3 + $0x11] sm:$0xff]
  %v6306 = vld [vmem:[#allocation3 + $0x19] sm:$0xff]
  %v6307 = vld [vmem:[#allocation3 + $0x21] sm:$0xff]
  %v6308 = vld [vmem:[#allocation3 + $0x29] sm:$0xff]
  %v6309 = vld [vmem:[#allocation3 + $0x31] sm:$0xff]
  %v6310 = vld [vmem:[#allocation3 + $0x39] sm:$0xff]
  %v6311 = vld [vmem:[#allocation3 + $0x41] sm:$0xff]
  %v6312 = vld [vmem:[#allocation3 + $0x89] sm:$0xff]
  %v6313 = vld [vmem:[#allocation3 + $0x91] sm:$0xff]
  %v6314 = vld [vmem:[#allocation3 + $0x99] sm:$0xff]
  %v6315 = vld [vmem:[#allocation3 + $0xa1] sm:$0xff]
  %v6316 = vld [vmem:[#allocation3 + $0xa9] sm:$0xff]
  %v6317 = vld [vmem:[#allocation3 + $0xb1] sm:$0xff]
  %v6318 = vld [vmem:[#allocation3 + $0xb9] sm:$0xff]
  %v6319 = vld [vmem:[#allocation3 + $0xc1] sm:$0xff]
  %v6320 = vlaneseq
  %v6321 = vshrl.u32 %v6320, 7
  %v6322 = vsub.s32 4, %v6321
  %v6323 = vrot.slane %v5049, %v6322
  %v6324 = vmul.f32 %v6304, %v6323
  %v6325 = vmul.f32 %v6305, %v6323
  %v6326 = vmul.f32 %v6306, %v6323
  %v6327 = vmul.f32 %v6307, %v6323
  %v6328 = vmul.f32 %v6308, %v6323
  %v6329 = vmul.f32 %v6309, %v6323
  %v6330 = vmul.f32 %v6310, %v6323
  %v6331 = vmul.f32 %v6311, %v6323
  %v6332 = vmul.f32 %v6312, %v6323
  %v6333 = vmul.f32 %v6313, %v6323
  %v6334 = vmul.f32 %v6314, %v6323
  %v6335 = vmul.f32 %v6315, %v6323
  %v6336 = vmul.f32 %v6316, %v6323
  %v6337 = vmul.f32 %v6317, %v6323
  %v6338 = vmul.f32 %v6318, %v6323
  %v6339 = vmul.f32 %v6319, %v6323
  %v6340 = vadd.f32 %v6324, 0.0
  %v6341 = vadd.f32 %v6325, 0.0
  %v6342 = vadd.f32 %v6326, 0.0
  %v6343 = vadd.f32 %v6327, 0.0
  %v6344 = vadd.f32 %v6328, 0.0
  %v6345 = vadd.f32 %v6329, 0.0
  %v6346 = vadd.f32 %v6330, 0.0
  %v6347 = vadd.f32 %v6331, 0.0
  %v6348 = vadd.f32 %v6332, 0.0
  %v6349 = vadd.f32 %v6333, 0.0
  %v6350 = vadd.f32 %v6334, 0.0
  %v6351 = vadd.f32 %v6335, 0.0
  %v6352 = vadd.f32 %v6336, 0.0
  %v6353 = vadd.f32 %v6337, 0.0
  %v6354 = vadd.f32 %v6338, 0.0
  %v6355 = vadd.f32 %v6339, 0.0
  %v6356 = vld [vmem:[#allocation3 + $0x49] sm:$0xff]
  %v6357 = vld [vmem:[#allocation3 + $0xc9] sm:$0xff]
  %v6358 = vlaneseq
  %v6359 = vshrl.u32 %v6358, 7
  %v6360 = vsub.s32 4, %v6359
  %v6361 = vrot.slane %v5050, %v6360
  %v6362 = vmul.f32 %v6305, %v6361
  %v6363 = vmul.f32 %v6306, %v6361
  %v6364 = vmul.f32 %v6307, %v6361
  %v6365 = vmul.f32 %v6308, %v6361
  %v6366 = vmul.f32 %v6309, %v6361
  %v6367 = vmul.f32 %v6310, %v6361
  %v6368 = vmul.f32 %v6311, %v6361
  %v6369 = vmul.f32 %v6356, %v6361
  %v6370 = vmul.f32 %v6313, %v6361
  %v6371 = vmul.f32 %v6314, %v6361
  %v6372 = vmul.f32 %v6315, %v6361
  %v6373 = vmul.f32 %v6316, %v6361
  %v6374 = vmul.f32 %v6317, %v6361
  %v6375 = vmul.f32 %v6318, %v6361
  %v6376 = vmul.f32 %v6319, %v6361
  %v6377 = vmul.f32 %v6357, %v6361
  %v6378 = vadd.f32 %v6340, %v6362
  %v6379 = vadd.f32 %v6341, %v6363
  %v6380 = vadd.f32 %v6342, %v6364
  %v6381 = vadd.f32 %v6343, %v6365
  %v6382 = vadd.f32 %v6344, %v6366
  %v6383 = vadd.f32 %v6345, %v6367
  %v6384 = vadd.f32 %v6346, %v6368
  %v6385 = vadd.f32 %v6347, %v6369
  %v6386 = vadd.f32 %v6348, %v6370
  %v6387 = vadd.f32 %v6349, %v6371
  %v6388 = vadd.f32 %v6350, %v6372
  %v6389 = vadd.f32 %v6351, %v6373
  %v6390 = vadd.f32 %v6352, %v6374
  %v6391 = vadd.f32 %v6353, %v6375
  %v6392 = vadd.f32 %v6354, %v6376
  %v6393 = vadd.f32 %v6355, %v6377
  %v6394 = vld [vmem:[#allocation3 + $0x51] sm:$0xff]
  %v6395 = vld [vmem:[#allocation3 + $0xd1] sm:$0xff]
  %v6396 = vlaneseq
  %v6397 = vshrl.u32 %v6396, 7
  %v6398 = vsub.s32 4, %v6397
  %v6399 = vrot.slane %v5051, %v6398
  %v6400 = vmul.f32 %v6306, %v6399
  %v6401 = vmul.f32 %v6307, %v6399
  %v6402 = vmul.f32 %v6308, %v6399
  %v6403 = vmul.f32 %v6309, %v6399
  %v6404 = vmul.f32 %v6310, %v6399
  %v6405 = vmul.f32 %v6311, %v6399
  %v6406 = vmul.f32 %v6356, %v6399
  %v6407 = vmul.f32 %v6394, %v6399
  %v6408 = vmul.f32 %v6314, %v6399
  %v6409 = vmul.f32 %v6315, %v6399
  %v6410 = vmul.f32 %v6316, %v6399
  %v6411 = vmul.f32 %v6317, %v6399
  %v6412 = vmul.f32 %v6318, %v6399
  %v6413 = vmul.f32 %v6319, %v6399
  %v6414 = vmul.f32 %v6357, %v6399
  %v6415 = vmul.f32 %v6395, %v6399
  %v6416 = vadd.f32 %v6378, %v6400
  %v6417 = vadd.f32 %v6379, %v6401
  %v6418 = vadd.f32 %v6380, %v6402
  %v6419 = vadd.f32 %v6381, %v6403
  %v6420 = vadd.f32 %v6382, %v6404
  %v6421 = vadd.f32 %v6383, %v6405
  %v6422 = vadd.f32 %v6384, %v6406
  %v6423 = vadd.f32 %v6385, %v6407
  %v6424 = vadd.f32 %v6386, %v6408
  %v6425 = vadd.f32 %v6387, %v6409
  %v6426 = vadd.f32 %v6388, %v6410
  %v6427 = vadd.f32 %v6389, %v6411
  %v6428 = vadd.f32 %v6390, %v6412
  %v6429 = vadd.f32 %v6391, %v6413
  %v6430 = vadd.f32 %v6392, %v6414
  %v6431 = vadd.f32 %v6393, %v6415
  %v6432 = vld [vmem:[#allocation3 + $0x59] sm:$0xff]
  %v6433 = vld [vmem:[#allocation3 + $0xd9] sm:$0xff]
  %v6434 = vlaneseq
  %v6435 = vshrl.u32 %v6434, 7
  %v6436 = vsub.s32 4, %v6435
  %v6437 = vrot.slane %v5052, %v6436
  %v6438 = vmul.f32 %v6307, %v6437
  %v6439 = vmul.f32 %v6308, %v6437
  %v6440 = vmul.f32 %v6309, %v6437
  %v6441 = vmul.f32 %v6310, %v6437
  %v6442 = vmul.f32 %v6311, %v6437
  %v6443 = vmul.f32 %v6356, %v6437
  %v6444 = vmul.f32 %v6394, %v6437
  %v6445 = vmul.f32 %v6432, %v6437
  %v6446 = vmul.f32 %v6315, %v6437
  %v6447 = vmul.f32 %v6316, %v6437
  %v6448 = vmul.f32 %v6317, %v6437
  %v6449 = vmul.f32 %v6318, %v6437
  %v6450 = vmul.f32 %v6319, %v6437
  %v6451 = vmul.f32 %v6357, %v6437
  %v6452 = vmul.f32 %v6395, %v6437
  %v6453 = vmul.f32 %v6433, %v6437
  %v6454 = vadd.f32 %v6416, %v6438
  %v6455 = vadd.f32 %v6417, %v6439
  %v6456 = vadd.f32 %v6418, %v6440
  %v6457 = vadd.f32 %v6419, %v6441
  %v6458 = vadd.f32 %v6420, %v6442
  %v6459 = vadd.f32 %v6421, %v6443
  %v6460 = vadd.f32 %v6422, %v6444
  %v6461 = vadd.f32 %v6423, %v6445
  %v6462 = vadd.f32 %v6424, %v6446
  %v6463 = vadd.f32 %v6425, %v6447
  %v6464 = vadd.f32 %v6426, %v6448
  %v6465 = vadd.f32 %v6427, %v6449
  %v6466 = vadd.f32 %v6428, %v6450
  %v6467 = vadd.f32 %v6429, %v6451
  %v6468 = vadd.f32 %v6430, %v6452
  %v6469 = vadd.f32 %v6431, %v6453
  %v6470 = vld [vmem:[#allocation3 + $0x61] sm:$0xff]
  %v6471 = vld [vmem:[#allocation3 + $0xe1] sm:$0xff]
  %v6472 = vlaneseq
  %v6473 = vshrl.u32 %v6472, 7
  %v6474 = vsub.s32 4, %v6473
  %v6475 = vrot.slane %v5053, %v6474
  %v6476 = vmul.f32 %v6308, %v6475
  %v6477 = vmul.f32 %v6309, %v6475
  %v6478 = vmul.f32 %v6310, %v6475
  %v6479 = vmul.f32 %v6311, %v6475
  %v6480 = vmul.f32 %v6356, %v6475
  %v6481 = vmul.f32 %v6394, %v6475
  %v6482 = vmul.f32 %v6432, %v6475
  %v6483 = vmul.f32 %v6470, %v6475
  %v6484 = vmul.f32 %v6316, %v6475
  %v6485 = vmul.f32 %v6317, %v6475
  %v6486 = vmul.f32 %v6318, %v6475
  %v6487 = vmul.f32 %v6319, %v6475
  %v6488 = vmul.f32 %v6357, %v6475
  %v6489 = vmul.f32 %v6395, %v6475
  %v6490 = vmul.f32 %v6433, %v6475
  %v6491 = vmul.f32 %v6471, %v6475
  %v6492 = vadd.f32 %v6454, %v6476
  %v6493 = vadd.f32 %v6455, %v6477
  %v6494 = vadd.f32 %v6456, %v6478
  %v6495 = vadd.f32 %v6457, %v6479
  %v6496 = vadd.f32 %v6458, %v6480
  %v6497 = vadd.f32 %v6459, %v6481
  %v6498 = vadd.f32 %v6460, %v6482
  %v6499 = vadd.f32 %v6461, %v6483
  %v6500 = vadd.f32 %v6462, %v6484
  %v6501 = vadd.f32 %v6463, %v6485
  %v6502 = vadd.f32 %v6464, %v6486
  %v6503 = vadd.f32 %v6465, %v6487
  %v6504 = vadd.f32 %v6466, %v6488
  %v6505 = vadd.f32 %v6467, %v6489
  %v6506 = vadd.f32 %v6468, %v6490
  %v6507 = vadd.f32 %v6469, %v6491
  %v6508 = vld [vmem:[#allocation3 + $0x69] sm:$0xff]
  %v6509 = vld [vmem:[#allocation3 + $0xe9] sm:$0xff]
  %v6510 = vlaneseq
  %v6511 = vshrl.u32 %v6510, 7
  %v6512 = vsub.s32 4, %v6511
  %v6513 = vrot.slane %v5054, %v6512
  %v6514 = vmul.f32 %v6309, %v6513
  %v6515 = vmul.f32 %v6310, %v6513
  %v6516 = vmul.f32 %v6311, %v6513
  %v6517 = vmul.f32 %v6356, %v6513
  %v6518 = vmul.f32 %v6394, %v6513
  %v6519 = vmul.f32 %v6432, %v6513
  %v6520 = vmul.f32 %v6470, %v6513
  %v6521 = vmul.f32 %v6508, %v6513
  %v6522 = vmul.f32 %v6317, %v6513
  %v6523 = vmul.f32 %v6318, %v6513
  %v6524 = vmul.f32 %v6319, %v6513
  %v6525 = vmul.f32 %v6357, %v6513
  %v6526 = vmul.f32 %v6395, %v6513
  %v6527 = vmul.f32 %v6433, %v6513
  %v6528 = vmul.f32 %v6471, %v6513
  %v6529 = vmul.f32 %v6509, %v6513
  %v6530 = vadd.f32 %v6492, %v6514
  %v6531 = vadd.f32 %v6493, %v6515
  %v6532 = vadd.f32 %v6494, %v6516
  %v6533 = vadd.f32 %v6495, %v6517
  %v6534 = vadd.f32 %v6496, %v6518
  %v6535 = vadd.f32 %v6497, %v6519
  %v6536 = vadd.f32 %v6498, %v6520
  %v6537 = vadd.f32 %v6499, %v6521
  %v6538 = vadd.f32 %v6500, %v6522
  %v6539 = vadd.f32 %v6501, %v6523
  %v6540 = vadd.f32 %v6502, %v6524
  %v6541 = vadd.f32 %v6503, %v6525
  %v6542 = vadd.f32 %v6504, %v6526
  %v6543 = vadd.f32 %v6505, %v6527
  %v6544 = vadd.f32 %v6506, %v6528
  %v6545 = vadd.f32 %v6507, %v6529
  %v6546 = vld [vmem:[#allocation3 + $0x71] sm:$0xff]
  %v6547 = vld [vmem:[#allocation3 + $0xf1] sm:$0xff]
  %v6548 = vlaneseq
  %v6549 = vshrl.u32 %v6548, 7
  %v6550 = vsub.s32 4, %v6549
  %v6551 = vrot.slane %v5055, %v6550
  %v6552 = vmul.f32 %v6310, %v6551
  %v6553 = vmul.f32 %v6311, %v6551
  %v6554 = vmul.f32 %v6356, %v6551
  %v6555 = vmul.f32 %v6394, %v6551
  %v6556 = vmul.f32 %v6432, %v6551
  %v6557 = vmul.f32 %v6470, %v6551
  %v6558 = vmul.f32 %v6508, %v6551
  %v6559 = vmul.f32 %v6546, %v6551
  %v6560 = vmul.f32 %v6318, %v6551
  %v6561 = vmul.f32 %v6319, %v6551
  %v6562 = vmul.f32 %v6357, %v6551
  %v6563 = vmul.f32 %v6395, %v6551
  %v6564 = vmul.f32 %v6433, %v6551
  %v6565 = vmul.f32 %v6471, %v6551
  %v6566 = vmul.f32 %v6509, %v6551
  %v6567 = vmul.f32 %v6547, %v6551
  %v6568 = vadd.f32 %v6530, %v6552
  %v6569 = vadd.f32 %v6531, %v6553
  %v6570 = vadd.f32 %v6532, %v6554
  %v6571 = vadd.f32 %v6533, %v6555
  %v6572 = vadd.f32 %v6534, %v6556
  %v6573 = vadd.f32 %v6535, %v6557
  %v6574 = vadd.f32 %v6536, %v6558
  %v6575 = vadd.f32 %v6537, %v6559
  %v6576 = vadd.f32 %v6538, %v6560
  %v6577 = vadd.f32 %v6539, %v6561
  %v6578 = vadd.f32 %v6540, %v6562
  %v6579 = vadd.f32 %v6541, %v6563
  %v6580 = vadd.f32 %v6542, %v6564
  %v6581 = vadd.f32 %v6543, %v6565
  %v6582 = vadd.f32 %v6544, %v6566
  %v6583 = vadd.f32 %v6545, %v6567
  %v6584 = vmul.f32 %v6568, %v2445
  %v6585 = vmul.f32 %v6569, %v2450
  %v6586 = vmul.f32 %v6570, %v2455
  %v6587 = vmul.f32 %v6571, %v2460
  %v6588 = vmul.f32 %v6572, %v2465
  %v6589 = vmul.f32 %v6573, %v2470
  %v6590 = vmul.f32 %v6574, %v2475
  %v6591 = vmul.f32 %v6575, %v2480
  %v6592 = vmul.f32 %v6576, %v2445
  %v6593 = vmul.f32 %v6577, %v2450
  %v6594 = vmul.f32 %v6578, %v2455
  %v6595 = vmul.f32 %v6579, %v2460
  %v6596 = vmul.f32 %v6580, %v2465
  %v6597 = vmul.f32 %v6581, %v2470
  %v6598 = vmul.f32 %v6582, %v2475
  %v6599 = vmul.f32 %v6583, %v2480
  %v6600 = vadd.f32 %v6288, %v6584
  %v6601 = vadd.f32 %v6289, %v6585
  %v6602 = vadd.f32 %v6290, %v6586
  %v6603 = vadd.f32 %v6291, %v6587
  %v6604 = vadd.f32 %v6292, %v6588
  %v6605 = vadd.f32 %v6293, %v6589
  %v6606 = vadd.f32 %v6294, %v6590
  %v6607 = vadd.f32 %v6295, %v6591
  %v6608 = vadd.f32 %v6296, %v6592
  %v6609 = vadd.f32 %v6297, %v6593
  %v6610 = vadd.f32 %v6298, %v6594
  %v6611 = vadd.f32 %v6299, %v6595
  %v6612 = vadd.f32 %v6300, %v6596
  %v6613 = vadd.f32 %v6301, %v6597
  %v6614 = vadd.f32 %v6302, %v6598
  %v6615 = vadd.f32 %v6303, %v6599
  %v6616 = vld [vmem:[#allocation3 + $0xa] sm:$0xff]
  %v6617 = vld [vmem:[#allocation3 + $0x12] sm:$0xff]
  %v6618 = vld [vmem:[#allocation3 + $0x1a] sm:$0xff]
  %v6619 = vld [vmem:[#allocation3 + $0x22] sm:$0xff]
  %v6620 = vld [vmem:[#allocation3 + $0x2a] sm:$0xff]
  %v6621 = vld [vmem:[#allocation3 + $0x32] sm:$0xff]
  %v6622 = vld [vmem:[#allocation3 + $0x3a] sm:$0xff]
  %v6623 = vld [vmem:[#allocation3 + $0x42] sm:$0xff]
  %v6624 = vld [vmem:[#allocation3 + $0x8a] sm:$0xff]
  %v6625 = vld [vmem:[#allocation3 + $0x92] sm:$0xff]
  %v6626 = vld [vmem:[#allocation3 + $0x9a] sm:$0xff]
  %v6627 = vld [vmem:[#allocation3 + $0xa2] sm:$0xff]
  %v6628 = vld [vmem:[#allocation3 + $0xaa] sm:$0xff]
  %v6629 = vld [vmem:[#allocation3 + $0xb2] sm:$0xff]
  %v6630 = vld [vmem:[#allocation3 + $0xba] sm:$0xff]
  %v6631 = vld [vmem:[#allocation3 + $0xc2] sm:$0xff]
  %v6632 = vlaneseq
  %v6633 = vshrl.u32 %v6632, 7
  %v6634 = vsub.s32 5, %v6633
  %v6635 = vrot.slane %v5049, %v6634
  %v6636 = vmul.f32 %v6616, %v6635
  %v6637 = vmul.f32 %v6617, %v6635
  %v6638 = vmul.f32 %v6618, %v6635
  %v6639 = vmul.f32 %v6619, %v6635
  %v6640 = vmul.f32 %v6620, %v6635
  %v6641 = vmul.f32 %v6621, %v6635
  %v6642 = vmul.f32 %v6622, %v6635
  %v6643 = vmul.f32 %v6623, %v6635
  %v6644 = vmul.f32 %v6624, %v6635
  %v6645 = vmul.f32 %v6625, %v6635
  %v6646 = vmul.f32 %v6626, %v6635
  %v6647 = vmul.f32 %v6627, %v6635
  %v6648 = vmul.f32 %v6628, %v6635
  %v6649 = vmul.f32 %v6629, %v6635
  %v6650 = vmul.f32 %v6630, %v6635
  %v6651 = vmul.f32 %v6631, %v6635
  %v6652 = vadd.f32 %v6636, 0.0
  %v6653 = vadd.f32 %v6637, 0.0
  %v6654 = vadd.f32 %v6638, 0.0
  %v6655 = vadd.f32 %v6639, 0.0
  %v6656 = vadd.f32 %v6640, 0.0
  %v6657 = vadd.f32 %v6641, 0.0
  %v6658 = vadd.f32 %v6642, 0.0
  %v6659 = vadd.f32 %v6643, 0.0
  %v6660 = vadd.f32 %v6644, 0.0
  %v6661 = vadd.f32 %v6645, 0.0
  %v6662 = vadd.f32 %v6646, 0.0
  %v6663 = vadd.f32 %v6647, 0.0
  %v6664 = vadd.f32 %v6648, 0.0
  %v6665 = vadd.f32 %v6649, 0.0
  %v6666 = vadd.f32 %v6650, 0.0
  %v6667 = vadd.f32 %v6651, 0.0
  %v6668 = vld [vmem:[#allocation3 + $0x4a] sm:$0xff]
  %v6669 = vld [vmem:[#allocation3 + $0xca] sm:$0xff]
  %v6670 = vlaneseq
  %v6671 = vshrl.u32 %v6670, 7
  %v6672 = vsub.s32 5, %v6671
  %v6673 = vrot.slane %v5050, %v6672
  %v6674 = vmul.f32 %v6617, %v6673
  %v6675 = vmul.f32 %v6618, %v6673
  %v6676 = vmul.f32 %v6619, %v6673
  %v6677 = vmul.f32 %v6620, %v6673
  %v6678 = vmul.f32 %v6621, %v6673
  %v6679 = vmul.f32 %v6622, %v6673
  %v6680 = vmul.f32 %v6623, %v6673
  %v6681 = vmul.f32 %v6668, %v6673
  %v6682 = vmul.f32 %v6625, %v6673
  %v6683 = vmul.f32 %v6626, %v6673
  %v6684 = vmul.f32 %v6627, %v6673
  %v6685 = vmul.f32 %v6628, %v6673
  %v6686 = vmul.f32 %v6629, %v6673
  %v6687 = vmul.f32 %v6630, %v6673
  %v6688 = vmul.f32 %v6631, %v6673
  %v6689 = vmul.f32 %v6669, %v6673
  %v6690 = vadd.f32 %v6652, %v6674
  %v6691 = vadd.f32 %v6653, %v6675
  %v6692 = vadd.f32 %v6654, %v6676
  %v6693 = vadd.f32 %v6655, %v6677
  %v6694 = vadd.f32 %v6656, %v6678
  %v6695 = vadd.f32 %v6657, %v6679
  %v6696 = vadd.f32 %v6658, %v6680
  %v6697 = vadd.f32 %v6659, %v6681
  %v6698 = vadd.f32 %v6660, %v6682
  %v6699 = vadd.f32 %v6661, %v6683
  %v6700 = vadd.f32 %v6662, %v6684
  %v6701 = vadd.f32 %v6663, %v6685
  %v6702 = vadd.f32 %v6664, %v6686
  %v6703 = vadd.f32 %v6665, %v6687
  %v6704 = vadd.f32 %v6666, %v6688
  %v6705 = vadd.f32 %v6667, %v6689
  %v6706 = vld [vmem:[#allocation3 + $0x52] sm:$0xff]
  %v6707 = vld [vmem:[#allocation3 + $0xd2] sm:$0xff]
  %v6708 = vlaneseq
  %v6709 = vshrl.u32 %v6708, 7
  %v6710 = vsub.s32 5, %v6709
  %v6711 = vrot.slane %v5051, %v6710
  %v6712 = vmul.f32 %v6618, %v6711
  %v6713 = vmul.f32 %v6619, %v6711
  %v6714 = vmul.f32 %v6620, %v6711
  %v6715 = vmul.f32 %v6621, %v6711
  %v6716 = vmul.f32 %v6622, %v6711
  %v6717 = vmul.f32 %v6623, %v6711
  %v6718 = vmul.f32 %v6668, %v6711
  %v6719 = vmul.f32 %v6706, %v6711
  %v6720 = vmul.f32 %v6626, %v6711
  %v6721 = vmul.f32 %v6627, %v6711
  %v6722 = vmul.f32 %v6628, %v6711
  %v6723 = vmul.f32 %v6629, %v6711
  %v6724 = vmul.f32 %v6630, %v6711
  %v6725 = vmul.f32 %v6631, %v6711
  %v6726 = vmul.f32 %v6669, %v6711
  %v6727 = vmul.f32 %v6707, %v6711
  %v6728 = vadd.f32 %v6690, %v6712
  %v6729 = vadd.f32 %v6691, %v6713
  %v6730 = vadd.f32 %v6692, %v6714
  %v6731 = vadd.f32 %v6693, %v6715
  %v6732 = vadd.f32 %v6694, %v6716
  %v6733 = vadd.f32 %v6695, %v6717
  %v6734 = vadd.f32 %v6696, %v6718
  %v6735 = vadd.f32 %v6697, %v6719
  %v6736 = vadd.f32 %v6698, %v6720
  %v6737 = vadd.f32 %v6699, %v6721
  %v6738 = vadd.f32 %v6700, %v6722
  %v6739 = vadd.f32 %v6701, %v6723
  %v6740 = vadd.f32 %v6702, %v6724
  %v6741 = vadd.f32 %v6703, %v6725
  %v6742 = vadd.f32 %v6704, %v6726
  %v6743 = vadd.f32 %v6705, %v6727
  %v6744 = vld [vmem:[#allocation3 + $0x5a] sm:$0xff]
  %v6745 = vld [vmem:[#allocation3 + $0xda] sm:$0xff]
  %v6746 = vlaneseq
  %v6747 = vshrl.u32 %v6746, 7
  %v6748 = vsub.s32 5, %v6747
  %v6749 = vrot.slane %v5052, %v6748
  %v6750 = vmul.f32 %v6619, %v6749
  %v6751 = vmul.f32 %v6620, %v6749
  %v6752 = vmul.f32 %v6621, %v6749
  %v6753 = vmul.f32 %v6622, %v6749
  %v6754 = vmul.f32 %v6623, %v6749
  %v6755 = vmul.f32 %v6668, %v6749
  %v6756 = vmul.f32 %v6706, %v6749
  %v6757 = vmul.f32 %v6744, %v6749
  %v6758 = vmul.f32 %v6627, %v6749
  %v6759 = vmul.f32 %v6628, %v6749
  %v6760 = vmul.f32 %v6629, %v6749
  %v6761 = vmul.f32 %v6630, %v6749
  %v6762 = vmul.f32 %v6631, %v6749
  %v6763 = vmul.f32 %v6669, %v6749
  %v6764 = vmul.f32 %v6707, %v6749
  %v6765 = vmul.f32 %v6745, %v6749
  %v6766 = vadd.f32 %v6728, %v6750
  %v6767 = vadd.f32 %v6729, %v6751
  %v6768 = vadd.f32 %v6730, %v6752
  %v6769 = vadd.f32 %v6731, %v6753
  %v6770 = vadd.f32 %v6732, %v6754
  %v6771 = vadd.f32 %v6733, %v6755
  %v6772 = vadd.f32 %v6734, %v6756
  %v6773 = vadd.f32 %v6735, %v6757
  %v6774 = vadd.f32 %v6736, %v6758
  %v6775 = vadd.f32 %v6737, %v6759
  %v6776 = vadd.f32 %v6738, %v6760
  %v6777 = vadd.f32 %v6739, %v6761
  %v6778 = vadd.f32 %v6740, %v6762
  %v6779 = vadd.f32 %v6741, %v6763
  %v6780 = vadd.f32 %v6742, %v6764
  %v6781 = vadd.f32 %v6743, %v6765
  %v6782 = vld [vmem:[#allocation3 + $0x62] sm:$0xff]
  %v6783 = vld [vmem:[#allocation3 + $0xe2] sm:$0xff]
  %v6784 = vlaneseq
  %v6785 = vshrl.u32 %v6784, 7
  %v6786 = vsub.s32 5, %v6785
  %v6787 = vrot.slane %v5053, %v6786
  %v6788 = vmul.f32 %v6620, %v6787
  %v6789 = vmul.f32 %v6621, %v6787
  %v6790 = vmul.f32 %v6622, %v6787
  %v6791 = vmul.f32 %v6623, %v6787
  %v6792 = vmul.f32 %v6668, %v6787
  %v6793 = vmul.f32 %v6706, %v6787
  %v6794 = vmul.f32 %v6744, %v6787
  %v6795 = vmul.f32 %v6782, %v6787
  %v6796 = vmul.f32 %v6628, %v6787
  %v6797 = vmul.f32 %v6629, %v6787
  %v6798 = vmul.f32 %v6630, %v6787
  %v6799 = vmul.f32 %v6631, %v6787
  %v6800 = vmul.f32 %v6669, %v6787
  %v6801 = vmul.f32 %v6707, %v6787
  %v6802 = vmul.f32 %v6745, %v6787
  %v6803 = vmul.f32 %v6783, %v6787
  %v6804 = vadd.f32 %v6766, %v6788
  %v6805 = vadd.f32 %v6767, %v6789
  %v6806 = vadd.f32 %v6768, %v6790
  %v6807 = vadd.f32 %v6769, %v6791
  %v6808 = vadd.f32 %v6770, %v6792
  %v6809 = vadd.f32 %v6771, %v6793
  %v6810 = vadd.f32 %v6772, %v6794
  %v6811 = vadd.f32 %v6773, %v6795
  %v6812 = vadd.f32 %v6774, %v6796
  %v6813 = vadd.f32 %v6775, %v6797
  %v6814 = vadd.f32 %v6776, %v6798
  %v6815 = vadd.f32 %v6777, %v6799
  %v6816 = vadd.f32 %v6778, %v6800
  %v6817 = vadd.f32 %v6779, %v6801
  %v6818 = vadd.f32 %v6780, %v6802
  %v6819 = vadd.f32 %v6781, %v6803
  %v6820 = vld [vmem:[#allocation3 + $0x6a] sm:$0xff]
  %v6821 = vld [vmem:[#allocation3 + $0xea] sm:$0xff]
  %v6822 = vlaneseq
  %v6823 = vshrl.u32 %v6822, 7
  %v6824 = vsub.s32 5, %v6823
  %v6825 = vrot.slane %v5054, %v6824
  %v6826 = vmul.f32 %v6621, %v6825
  %v6827 = vmul.f32 %v6622, %v6825
  %v6828 = vmul.f32 %v6623, %v6825
  %v6829 = vmul.f32 %v6668, %v6825
  %v6830 = vmul.f32 %v6706, %v6825
  %v6831 = vmul.f32 %v6744, %v6825
  %v6832 = vmul.f32 %v6782, %v6825
  %v6833 = vmul.f32 %v6820, %v6825
  %v6834 = vmul.f32 %v6629, %v6825
  %v6835 = vmul.f32 %v6630, %v6825
  %v6836 = vmul.f32 %v6631, %v6825
  %v6837 = vmul.f32 %v6669, %v6825
  %v6838 = vmul.f32 %v6707, %v6825
  %v6839 = vmul.f32 %v6745, %v6825
  %v6840 = vmul.f32 %v6783, %v6825
  %v6841 = vmul.f32 %v6821, %v6825
  %v6842 = vadd.f32 %v6804, %v6826
  %v6843 = vadd.f32 %v6805, %v6827
  %v6844 = vadd.f32 %v6806, %v6828
  %v6845 = vadd.f32 %v6807, %v6829
  %v6846 = vadd.f32 %v6808, %v6830
  %v6847 = vadd.f32 %v6809, %v6831
  %v6848 = vadd.f32 %v6810, %v6832
  %v6849 = vadd.f32 %v6811, %v6833
  %v6850 = vadd.f32 %v6812, %v6834
  %v6851 = vadd.f32 %v6813, %v6835
  %v6852 = vadd.f32 %v6814, %v6836
  %v6853 = vadd.f32 %v6815, %v6837
  %v6854 = vadd.f32 %v6816, %v6838
  %v6855 = vadd.f32 %v6817, %v6839
  %v6856 = vadd.f32 %v6818, %v6840
  %v6857 = vadd.f32 %v6819, %v6841
  %v6858 = vld [vmem:[#allocation3 + $0x72] sm:$0xff]
  %v6859 = vld [vmem:[#allocation3 + $0xf2] sm:$0xff]
  %v6860 = vlaneseq
  %v6861 = vshrl.u32 %v6860, 7
  %v6862 = vsub.s32 5, %v6861
  %v6863 = vrot.slane %v5055, %v6862
  %v6864 = vmul.f32 %v6622, %v6863
  %v6865 = vmul.f32 %v6623, %v6863
  %v6866 = vmul.f32 %v6668, %v6863
  %v6867 = vmul.f32 %v6706, %v6863
  %v6868 = vmul.f32 %v6744, %v6863
  %v6869 = vmul.f32 %v6782, %v6863
  %v6870 = vmul.f32 %v6820, %v6863
  %v6871 = vmul.f32 %v6858, %v6863
  %v6872 = vmul.f32 %v6630, %v6863
  %v6873 = vmul.f32 %v6631, %v6863
  %v6874 = vmul.f32 %v6669, %v6863
  %v6875 = vmul.f32 %v6707, %v6863
  %v6876 = vmul.f32 %v6745, %v6863
  %v6877 = vmul.f32 %v6783, %v6863
  %v6878 = vmul.f32 %v6821, %v6863
  %v6879 = vmul.f32 %v6859, %v6863
  %v6880 = vadd.f32 %v6842, %v6864
  %v6881 = vadd.f32 %v6843, %v6865
  %v6882 = vadd.f32 %v6844, %v6866
  %v6883 = vadd.f32 %v6845, %v6867
  %v6884 = vadd.f32 %v6846, %v6868
  %v6885 = vadd.f32 %v6847, %v6869
  %v6886 = vadd.f32 %v6848, %v6870
  %v6887 = vadd.f32 %v6849, %v6871
  %v6888 = vadd.f32 %v6850, %v6872
  %v6889 = vadd.f32 %v6851, %v6873
  %v6890 = vadd.f32 %v6852, %v6874
  %v6891 = vadd.f32 %v6853, %v6875
  %v6892 = vadd.f32 %v6854, %v6876
  %v6893 = vadd.f32 %v6855, %v6877
  %v6894 = vadd.f32 %v6856, %v6878
  %v6895 = vadd.f32 %v6857, %v6879
  %v6896 = vmul.f32 %v6880, %v2797
  %v6897 = vmul.f32 %v6881, %v2802
  %v6898 = vmul.f32 %v6882, %v2807
  %v6899 = vmul.f32 %v6883, %v2812
  %v6900 = vmul.f32 %v6884, %v2817
  %v6901 = vmul.f32 %v6885, %v2822
  %v6902 = vmul.f32 %v6886, %v2827
  %v6903 = vmul.f32 %v6887, %v2832
  %v6904 = vmul.f32 %v6888, %v2797
  %v6905 = vmul.f32 %v6889, %v2802
  %v6906 = vmul.f32 %v6890, %v2807
  %v6907 = vmul.f32 %v6891, %v2812
  %v6908 = vmul.f32 %v6892, %v2817
  %v6909 = vmul.f32 %v6893, %v2822
  %v6910 = vmul.f32 %v6894, %v2827
  %v6911 = vmul.f32 %v6895, %v2832
  %v6912 = vadd.f32 %v6600, %v6896
  %v6913 = vadd.f32 %v6601, %v6897
  %v6914 = vadd.f32 %v6602, %v6898
  %v6915 = vadd.f32 %v6603, %v6899
  %v6916 = vadd.f32 %v6604, %v6900
  %v6917 = vadd.f32 %v6605, %v6901
  %v6918 = vadd.f32 %v6606, %v6902
  %v6919 = vadd.f32 %v6607, %v6903
  %v6920 = vadd.f32 %v6608, %v6904
  %v6921 = vadd.f32 %v6609, %v6905
  %v6922 = vadd.f32 %v6610, %v6906
  %v6923 = vadd.f32 %v6611, %v6907
  %v6924 = vadd.f32 %v6612, %v6908
  %v6925 = vadd.f32 %v6613, %v6909
  %v6926 = vadd.f32 %v6614, %v6910
  %v6927 = vadd.f32 %v6615, %v6911
  %v6928 = vld [vmem:[#allocation3 + $0xb] sm:$0xff]
  %v6929 = vld [vmem:[#allocation3 + $0x13] sm:$0xff]
  %v6930 = vld [vmem:[#allocation3 + $0x1b] sm:$0xff]
  %v6931 = vld [vmem:[#allocation3 + $0x23] sm:$0xff]
  %v6932 = vld [vmem:[#allocation3 + $0x2b] sm:$0xff]
  %v6933 = vld [vmem:[#allocation3 + $0x33] sm:$0xff]
  %v6934 = vld [vmem:[#allocation3 + $0x3b] sm:$0xff]
  %v6935 = vld [vmem:[#allocation3 + $0x43] sm:$0xff]
  %v6936 = vld [vmem:[#allocation3 + $0x8b] sm:$0xff]
  %v6937 = vld [vmem:[#allocation3 + $0x93] sm:$0xff]
  %v6938 = vld [vmem:[#allocation3 + $0x9b] sm:$0xff]
  %v6939 = vld [vmem:[#allocation3 + $0xa3] sm:$0xff]
  %v6940 = vld [vmem:[#allocation3 + $0xab] sm:$0xff]
  %v6941 = vld [vmem:[#allocation3 + $0xb3] sm:$0xff]
  %v6942 = vld [vmem:[#allocation3 + $0xbb] sm:$0xff]
  %v6943 = vld [vmem:[#allocation3 + $0xc3] sm:$0xff]
  %v6944 = vlaneseq
  %v6945 = vshrl.u32 %v6944, 7
  %v6946 = vsub.s32 6, %v6945
  %v6947 = vrot.slane %v5049, %v6946
  %v6948 = vmul.f32 %v6928, %v6947
  %v6949 = vmul.f32 %v6929, %v6947
  %v6950 = vmul.f32 %v6930, %v6947
  %v6951 = vmul.f32 %v6931, %v6947
  %v6952 = vmul.f32 %v6932, %v6947
  %v6953 = vmul.f32 %v6933, %v6947
  %v6954 = vmul.f32 %v6934, %v6947
  %v6955 = vmul.f32 %v6935, %v6947
  %v6956 = vmul.f32 %v6936, %v6947
  %v6957 = vmul.f32 %v6937, %v6947
  %v6958 = vmul.f32 %v6938, %v6947
  %v6959 = vmul.f32 %v6939, %v6947
  %v6960 = vmul.f32 %v6940, %v6947
  %v6961 = vmul.f32 %v6941, %v6947
  %v6962 = vmul.f32 %v6942, %v6947
  %v6963 = vmul.f32 %v6943, %v6947
  %v6964 = vadd.f32 %v6948, 0.0
  %v6965 = vadd.f32 %v6949, 0.0
  %v6966 = vadd.f32 %v6950, 0.0
  %v6967 = vadd.f32 %v6951, 0.0
  %v6968 = vadd.f32 %v6952, 0.0
  %v6969 = vadd.f32 %v6953, 0.0
  %v6970 = vadd.f32 %v6954, 0.0
  %v6971 = vadd.f32 %v6955, 0.0
  %v6972 = vadd.f32 %v6956, 0.0
  %v6973 = vadd.f32 %v6957, 0.0
  %v6974 = vadd.f32 %v6958, 0.0
  %v6975 = vadd.f32 %v6959, 0.0
  %v6976 = vadd.f32 %v6960, 0.0
  %v6977 = vadd.f32 %v6961, 0.0
  %v6978 = vadd.f32 %v6962, 0.0
  %v6979 = vadd.f32 %v6963, 0.0
  %v6980 = vld [vmem:[#allocation3 + $0x4b] sm:$0xff]
  %v6981 = vld [vmem:[#allocation3 + $0xcb] sm:$0xff]
  %v6982 = vlaneseq
  %v6983 = vshrl.u32 %v6982, 7
  %v6984 = vsub.s32 6, %v6983
  %v6985 = vrot.slane %v5050, %v6984
  %v6986 = vmul.f32 %v6929, %v6985
  %v6987 = vmul.f32 %v6930, %v6985
  %v6988 = vmul.f32 %v6931, %v6985
  %v6989 = vmul.f32 %v6932, %v6985
  %v6990 = vmul.f32 %v6933, %v6985
  %v6991 = vmul.f32 %v6934, %v6985
  %v6992 = vmul.f32 %v6935, %v6985
  %v6993 = vmul.f32 %v6980, %v6985
  %v6994 = vmul.f32 %v6937, %v6985
  %v6995 = vmul.f32 %v6938, %v6985
  %v6996 = vmul.f32 %v6939, %v6985
  %v6997 = vmul.f32 %v6940, %v6985
  %v6998 = vmul.f32 %v6941, %v6985
  %v6999 = vmul.f32 %v6942, %v6985
  %v7000 = vmul.f32 %v6943, %v6985
  %v7001 = vmul.f32 %v6981, %v6985
  %v7002 = vadd.f32 %v6964, %v6986
  %v7003 = vadd.f32 %v6965, %v6987
  %v7004 = vadd.f32 %v6966, %v6988
  %v7005 = vadd.f32 %v6967, %v6989
  %v7006 = vadd.f32 %v6968, %v6990
  %v7007 = vadd.f32 %v6969, %v6991
  %v7008 = vadd.f32 %v6970, %v6992
  %v7009 = vadd.f32 %v6971, %v6993
  %v7010 = vadd.f32 %v6972, %v6994
  %v7011 = vadd.f32 %v6973, %v6995
  %v7012 = vadd.f32 %v6974, %v6996
  %v7013 = vadd.f32 %v6975, %v6997
  %v7014 = vadd.f32 %v6976, %v6998
  %v7015 = vadd.f32 %v6977, %v6999
  %v7016 = vadd.f32 %v6978, %v7000
  %v7017 = vadd.f32 %v6979, %v7001
  %v7018 = vld [vmem:[#allocation3 + $0x53] sm:$0xff]
  %v7019 = vld [vmem:[#allocation3 + $0xd3] sm:$0xff]
  %v7020 = vlaneseq
  %v7021 = vshrl.u32 %v7020, 7
  %v7022 = vsub.s32 6, %v7021
  %v7023 = vrot.slane %v5051, %v7022
  %v7024 = vmul.f32 %v6930, %v7023
  %v7025 = vmul.f32 %v6931, %v7023
  %v7026 = vmul.f32 %v6932, %v7023
  %v7027 = vmul.f32 %v6933, %v7023
  %v7028 = vmul.f32 %v6934, %v7023
  %v7029 = vmul.f32 %v6935, %v7023
  %v7030 = vmul.f32 %v6980, %v7023
  %v7031 = vmul.f32 %v7018, %v7023
  %v7032 = vmul.f32 %v6938, %v7023
  %v7033 = vmul.f32 %v6939, %v7023
  %v7034 = vmul.f32 %v6940, %v7023
  %v7035 = vmul.f32 %v6941, %v7023
  %v7036 = vmul.f32 %v6942, %v7023
  %v7037 = vmul.f32 %v6943, %v7023
  %v7038 = vmul.f32 %v6981, %v7023
  %v7039 = vmul.f32 %v7019, %v7023
  %v7040 = vadd.f32 %v7002, %v7024
  %v7041 = vadd.f32 %v7003, %v7025
  %v7042 = vadd.f32 %v7004, %v7026
  %v7043 = vadd.f32 %v7005, %v7027
  %v7044 = vadd.f32 %v7006, %v7028
  %v7045 = vadd.f32 %v7007, %v7029
  %v7046 = vadd.f32 %v7008, %v7030
  %v7047 = vadd.f32 %v7009, %v7031
  %v7048 = vadd.f32 %v7010, %v7032
  %v7049 = vadd.f32 %v7011, %v7033
  %v7050 = vadd.f32 %v7012, %v7034
  %v7051 = vadd.f32 %v7013, %v7035
  %v7052 = vadd.f32 %v7014, %v7036
  %v7053 = vadd.f32 %v7015, %v7037
  %v7054 = vadd.f32 %v7016, %v7038
  %v7055 = vadd.f32 %v7017, %v7039
  %v7056 = vld [vmem:[#allocation3 + $0x5b] sm:$0xff]
  %v7057 = vld [vmem:[#allocation3 + $0xdb] sm:$0xff]
  %v7058 = vlaneseq
  %v7059 = vshrl.u32 %v7058, 7
  %v7060 = vsub.s32 6, %v7059
  %v7061 = vrot.slane %v5052, %v7060
  %v7062 = vmul.f32 %v6931, %v7061
  %v7063 = vmul.f32 %v6932, %v7061
  %v7064 = vmul.f32 %v6933, %v7061
  %v7065 = vmul.f32 %v6934, %v7061
  %v7066 = vmul.f32 %v6935, %v7061
  %v7067 = vmul.f32 %v6980, %v7061
  %v7068 = vmul.f32 %v7018, %v7061
  %v7069 = vmul.f32 %v7056, %v7061
  %v7070 = vmul.f32 %v6939, %v7061
  %v7071 = vmul.f32 %v6940, %v7061
  %v7072 = vmul.f32 %v6941, %v7061
  %v7073 = vmul.f32 %v6942, %v7061
  %v7074 = vmul.f32 %v6943, %v7061
  %v7075 = vmul.f32 %v6981, %v7061
  %v7076 = vmul.f32 %v7019, %v7061
  %v7077 = vmul.f32 %v7057, %v7061
  %v7078 = vadd.f32 %v7040, %v7062
  %v7079 = vadd.f32 %v7041, %v7063
  %v7080 = vadd.f32 %v7042, %v7064
  %v7081 = vadd.f32 %v7043, %v7065
  %v7082 = vadd.f32 %v7044, %v7066
  %v7083 = vadd.f32 %v7045, %v7067
  %v7084 = vadd.f32 %v7046, %v7068
  %v7085 = vadd.f32 %v7047, %v7069
  %v7086 = vadd.f32 %v7048, %v7070
  %v7087 = vadd.f32 %v7049, %v7071
  %v7088 = vadd.f32 %v7050, %v7072
  %v7089 = vadd.f32 %v7051, %v7073
  %v7090 = vadd.f32 %v7052, %v7074
  %v7091 = vadd.f32 %v7053, %v7075
  %v7092 = vadd.f32 %v7054, %v7076
  %v7093 = vadd.f32 %v7055, %v7077
  %v7094 = vld [vmem:[#allocation3 + $0x63] sm:$0xff]
  %v7095 = vld [vmem:[#allocation3 + $0xe3] sm:$0xff]
  %v7096 = vlaneseq
  %v7097 = vshrl.u32 %v7096, 7
  %v7098 = vsub.s32 6, %v7097
  %v7099 = vrot.slane %v5053, %v7098
  %v7100 = vmul.f32 %v6932, %v7099
  %v7101 = vmul.f32 %v6933, %v7099
  %v7102 = vmul.f32 %v6934, %v7099
  %v7103 = vmul.f32 %v6935, %v7099
  %v7104 = vmul.f32 %v6980, %v7099
  %v7105 = vmul.f32 %v7018, %v7099
  %v7106 = vmul.f32 %v7056, %v7099
  %v7107 = vmul.f32 %v7094, %v7099
  %v7108 = vmul.f32 %v6940, %v7099
  %v7109 = vmul.f32 %v6941, %v7099
  %v7110 = vmul.f32 %v6942, %v7099
  %v7111 = vmul.f32 %v6943, %v7099
  %v7112 = vmul.f32 %v6981, %v7099
  %v7113 = vmul.f32 %v7019, %v7099
  %v7114 = vmul.f32 %v7057, %v7099
  %v7115 = vmul.f32 %v7095, %v7099
  %v7116 = vadd.f32 %v7078, %v7100
  %v7117 = vadd.f32 %v7079, %v7101
  %v7118 = vadd.f32 %v7080, %v7102
  %v7119 = vadd.f32 %v7081, %v7103
  %v7120 = vadd.f32 %v7082, %v7104
  %v7121 = vadd.f32 %v7083, %v7105
  %v7122 = vadd.f32 %v7084, %v7106
  %v7123 = vadd.f32 %v7085, %v7107
  %v7124 = vadd.f32 %v7086, %v7108
  %v7125 = vadd.f32 %v7087, %v7109
  %v7126 = vadd.f32 %v7088, %v7110
  %v7127 = vadd.f32 %v7089, %v7111
  %v7128 = vadd.f32 %v7090, %v7112
  %v7129 = vadd.f32 %v7091, %v7113
  %v7130 = vadd.f32 %v7092, %v7114
  %v7131 = vadd.f32 %v7093, %v7115
  %v7132 = vld [vmem:[#allocation3 + $0x6b] sm:$0xff]
  %v7133 = vld [vmem:[#allocation3 + $0xeb] sm:$0xff]
  %v7134 = vlaneseq
  %v7135 = vshrl.u32 %v7134, 7
  %v7136 = vsub.s32 6, %v7135
  %v7137 = vrot.slane %v5054, %v7136
  %v7138 = vmul.f32 %v6933, %v7137
  %v7139 = vmul.f32 %v6934, %v7137
  %v7140 = vmul.f32 %v6935, %v7137
  %v7141 = vmul.f32 %v6980, %v7137
  %v7142 = vmul.f32 %v7018, %v7137
  %v7143 = vmul.f32 %v7056, %v7137
  %v7144 = vmul.f32 %v7094, %v7137
  %v7145 = vmul.f32 %v7132, %v7137
  %v7146 = vmul.f32 %v6941, %v7137
  %v7147 = vmul.f32 %v6942, %v7137
  %v7148 = vmul.f32 %v6943, %v7137
  %v7149 = vmul.f32 %v6981, %v7137
  %v7150 = vmul.f32 %v7019, %v7137
  %v7151 = vmul.f32 %v7057, %v7137
  %v7152 = vmul.f32 %v7095, %v7137
  %v7153 = vmul.f32 %v7133, %v7137
  %v7154 = vadd.f32 %v7116, %v7138
  %v7155 = vadd.f32 %v7117, %v7139
  %v7156 = vadd.f32 %v7118, %v7140
  %v7157 = vadd.f32 %v7119, %v7141
  %v7158 = vadd.f32 %v7120, %v7142
  %v7159 = vadd.f32 %v7121, %v7143
  %v7160 = vadd.f32 %v7122, %v7144
  %v7161 = vadd.f32 %v7123, %v7145
  %v7162 = vadd.f32 %v7124, %v7146
  %v7163 = vadd.f32 %v7125, %v7147
  %v7164 = vadd.f32 %v7126, %v7148
  %v7165 = vadd.f32 %v7127, %v7149
  %v7166 = vadd.f32 %v7128, %v7150
  %v7167 = vadd.f32 %v7129, %v7151
  %v7168 = vadd.f32 %v7130, %v7152
  %v7169 = vadd.f32 %v7131, %v7153
  %v7170 = vld [vmem:[#allocation3 + $0x73] sm:$0xff]
  %v7171 = vld [vmem:[#allocation3 + $0xf3] sm:$0xff]
  %v7172 = vlaneseq
  %v7173 = vshrl.u32 %v7172, 7
  %v7174 = vsub.s32 6, %v7173
  %v7175 = vrot.slane %v5055, %v7174
  %v7176 = vmul.f32 %v6934, %v7175
  %v7177 = vmul.f32 %v6935, %v7175
  %v7178 = vmul.f32 %v6980, %v7175
  %v7179 = vmul.f32 %v7018, %v7175
  %v7180 = vmul.f32 %v7056, %v7175
  %v7181 = vmul.f32 %v7094, %v7175
  %v7182 = vmul.f32 %v7132, %v7175
  %v7183 = vmul.f32 %v7170, %v7175
  %v7184 = vmul.f32 %v6942, %v7175
  %v7185 = vmul.f32 %v6943, %v7175
  %v7186 = vmul.f32 %v6981, %v7175
  %v7187 = vmul.f32 %v7019, %v7175
  %v7188 = vmul.f32 %v7057, %v7175
  %v7189 = vmul.f32 %v7095, %v7175
  %v7190 = vmul.f32 %v7133, %v7175
  %v7191 = vmul.f32 %v7171, %v7175
  %v7192 = vadd.f32 %v7154, %v7176
  %v7193 = vadd.f32 %v7155, %v7177
  %v7194 = vadd.f32 %v7156, %v7178
  %v7195 = vadd.f32 %v7157, %v7179
  %v7196 = vadd.f32 %v7158, %v7180
  %v7197 = vadd.f32 %v7159, %v7181
  %v7198 = vadd.f32 %v7160, %v7182
  %v7199 = vadd.f32 %v7161, %v7183
  %v7200 = vadd.f32 %v7162, %v7184
  %v7201 = vadd.f32 %v7163, %v7185
  %v7202 = vadd.f32 %v7164, %v7186
  %v7203 = vadd.f32 %v7165, %v7187
  %v7204 = vadd.f32 %v7166, %v7188
  %v7205 = vadd.f32 %v7167, %v7189
  %v7206 = vadd.f32 %v7168, %v7190
  %v7207 = vadd.f32 %v7169, %v7191
  %v7208 = vmul.f32 %v7192, %v3149
  %v7209 = vmul.f32 %v7193, %v3154
  %v7210 = vmul.f32 %v7194, %v3159
  %v7211 = vmul.f32 %v7195, %v3164
  %v7212 = vmul.f32 %v7196, %v3169
  %v7213 = vmul.f32 %v7197, %v3174
  %v7214 = vmul.f32 %v7198, %v3179
  %v7215 = vmul.f32 %v7199, %v3184
  %v7216 = vmul.f32 %v7200, %v3149
  %v7217 = vmul.f32 %v7201, %v3154
  %v7218 = vmul.f32 %v7202, %v3159
  %v7219 = vmul.f32 %v7203, %v3164
  %v7220 = vmul.f32 %v7204, %v3169
  %v7221 = vmul.f32 %v7205, %v3174
  %v7222 = vmul.f32 %v7206, %v3179
  %v7223 = vmul.f32 %v7207, %v3184
  %v7224 = vadd.f32 %v6912, %v7208
  %v7225 = vadd.f32 %v6913, %v7209
  %v7226 = vadd.f32 %v6914, %v7210
  %v7227 = vadd.f32 %v6915, %v7211
  %v7228 = vadd.f32 %v6916, %v7212
  %v7229 = vadd.f32 %v6917, %v7213
  %v7230 = vadd.f32 %v6918, %v7214
  %v7231 = vadd.f32 %v6919, %v7215
  %v7232 = vadd.f32 %v6920, %v7216
  %v7233 = vadd.f32 %v6921, %v7217
  %v7234 = vadd.f32 %v6922, %v7218
  %v7235 = vadd.f32 %v6923, %v7219
  %v7236 = vadd.f32 %v6924, %v7220
  %v7237 = vadd.f32 %v6925, %v7221
  %v7238 = vadd.f32 %v6926, %v7222
  %v7239 = vadd.f32 %v6927, %v7223
  %v7240 = vld [vmem:[%s11] sm:$0x1]
  %v7242 = vlaneseq
  %v7243 = vshrl.u32 %v7242, 7
  %v7244 = vsub.s32 0, %v7243
  %v7245 = vrot.slane %v7240, %v7244
  %v7247 = vadd.f32 %v7224, %v7245
  %v7248 = vadd.f32 %v7225, %v7245
  %v7249 = vadd.f32 %v7226, %v7245
  %v7250 = vadd.f32 %v7227, %v7245
  %v7251 = vadd.f32 %v7228, %v7245
  %v7252 = vadd.f32 %v7229, %v7245
  %v7253 = vadd.f32 %v7230, %v7245
  %v7254 = vadd.f32 %v7231, %v7245
  %v7255 = vadd.f32 %v7232, %v7245
  %v7256 = vadd.f32 %v7233, %v7245
  %v7257 = vadd.f32 %v7234, %v7245
  %v7258 = vadd.f32 %v7235, %v7245
  %v7259 = vadd.f32 %v7236, %v7245
  %v7260 = vadd.f32 %v7237, %v7245
  %v7261 = vadd.f32 %v7238, %v7245
  %v7262 = vadd.f32 %v7239, %v7245
  %v7263 = vld [vmem:[%s12] sm:$0xff]
  %v7264 = vld [vmem:[%s12 + $0x8] sm:$0xff]
  %v7265 = vld [vmem:[%s12 + $0x10] sm:$0xff]
  %v7266 = vld [vmem:[%s12 + $0x18] sm:$0xff]
  %v7267 = vsel %vm3620, %v3958, -inf
  %v7268 = vsel %vm3620, %v3959, -inf
  %v7269 = vsel %vm3620, %v3960, -inf
  %v7270 = vsel %vm3620, %v3961, -inf
  %v7271 = vsel %vm3620, %v3962, -inf
  %v7272 = vmax.f32 %v7267, %v7271
  %v7273 = vsel %vm3620, %v3963, -inf
  %v7274 = vmax.f32 %v7268, %v7273
  %v7275 = vsel %vm3620, %v3964, -inf
  %v7276 = vmax.f32 %v7269, %v7275
  %v7277 = vsel %vm3620, %v3965, -inf
  %v7278 = vmax.f32 %v7270, %v7277
  %v7279 = vmax.f32 %v7272, %v7274
  %v7280 = vmax.f32 %v7276, %v7278
  %v7281 = vmax.f32 %v7279, %v7280
  %v7282 = vrot.slane %v7281, 4
  %v7283 = vmax.f32 %v7281, %v7282
  %v7284 = vrot.slane %v7283, 2
  %v7285 = vmax.f32 %v7283, %v7284
  %v7286 = vrot.slane %v7285, 1
  %v7287 = vmax.f32 %v7285, %v7286
  %v7288 = vsub.f32 %v3958, %v7287
  %v7289 = vsub.f32 %v3959, %v7287
  %v7290 = vsub.f32 %v3960, %v7287
  %v7291 = vsub.f32 %v3961, %v7287
  %v7292 = vsub.f32 %v3962, %v7287
  %v7293 = vsub.f32 %v3963, %v7287
  %v7294 = vsub.f32 %v3964, %v7287
  %v7295 = vsub.f32 %v3965, %v7287
  %v7296 = vmul.f32 %v7288, 1.442695
  %v7297 = vpow.pop %v7296
  %v7298 = vmul.f32 %v7289, 1.442695
  %v7299 = vpow.pop %v7298
  %v7300 = vmul.f32 %v7290, 1.442695
  %v7301 = vpow.pop %v7300
  %v7302 = vmul.f32 %v7291, 1.442695
  %v7303 = vpow.pop %v7302
  %v7304 = vmul.f32 %v7292, 1.442695
  %v7305 = vpow.pop %v7304
  %v7306 = vmul.f32 %v7293, 1.442695
  %v7307 = vpow.pop %v7306
  %v7308 = vmul.f32 %v7294, 1.442695
  %v7309 = vpow.pop %v7308
  %v7310 = vmul.f32 %v7295, 1.442695
  %v7311 = vpow.pop %v7310
  %v7312 = vsel %vm3620, %v7297, 0.0
  %v7313 = vsel %vm3620, %v7299, 0.0
  %v7314 = vadd.f32 %v7312, %v7313
  %v7315 = vsel %vm3620, %v7301, 0.0
  %v7316 = vadd.f32 %v7314, %v7315
  %v7317 = vsel %vm3620, %v7303, 0.0
  %v7318 = vadd.f32 %v7316, %v7317
  %v7319 = vsel %vm3620, %v7305, 0.0
  %v7320 = vadd.f32 %v7318, %v7319
  %v7321 = vsel %vm3620, %v7307, 0.0
  %v7322 = vadd.f32 %v7320, %v7321
  %v7323 = vsel %vm3620, %v7309, 0.0
  %v7324 = vadd.f32 %v7322, %v7323
  %v7325 = vsel %vm3620, %v7311, 0.0
  %v7326 = vadd.f32 %v7324, %v7325
  %v7327 = vrot.slane %v7326, 4
  %v7328 = vadd.f32 %v7326, %v7327
  %v7329 = vrot.slane %v7328, 2
  %v7330 = vadd.f32 %v7328, %v7329
  %v7331 = vrot.slane %v7330, 1
  %v7332 = vadd.f32 %v7330, %v7331
  %v7333 = vrcp.pop %v7332
  %v7334 = vmul.f32 %v7297, %v7333
  %v7335 = vmul.f32 %v7299, %v7333
  %v7336 = vmul.f32 %v7301, %v7333
  %v7337 = vmul.f32 %v7303, %v7333
  %v7338 = vmul.f32 %v7305, %v7333
  %v7339 = vmul.f32 %v7307, %v7333
  %v7340 = vmul.f32 %v7309, %v7333
  %v7341 = vmul.f32 %v7311, %v7333
  %v7342 = vpack.c.bf16 %v7335, %v7334
  %v7343 = vpack.c.bf16 %v7337, %v7336
  %v7344 = vpack.c.bf16 %v7339, %v7338
  %v7345 = vpack.c.bf16 %v7341, %v7340
  %v7346 = vpack.c.bf16 %v3959, %v3958
  %v7347 = vpack.c.bf16 %v3961, %v3960
  %v7348 = vpack.c.bf16 %v3963, %v3962
  %v7349 = vpack.c.bf16 %v3965, %v3964
  %7350 = vxpose.xlu0.c.b16.start [1/8] %v7342, 128
  %7351 = vxpose.xlu0.c.b16.cont [2/8] %v7343, 128
  %7352 = vxpose.xlu0.c.b16.cont [3/8] %v7344, 128
  %7353 = vxpose.xlu0.c.b16.cont [4/8] %v7345, 128
  %7354 = vxpose.xlu0.c.b16.cont [5/8] 0, 128
  %7355 = vxpose.xlu0.c.b16.cont [6/8] 0, 128
  %7356 = vxpose.xlu0.c.b16.cont [7/8] 0, 128
  %7357 = vxpose.xlu0.c.b16.end [8/8] 0, 128
  %v7358 = vpop.trf.xlu0
  %v7359 = vpop.trf.xlu0
  %v7360 = vpop.trf.xlu0
  %v7361 = vpop.trf.xlu0
  %v7362 = vpop.trf.xlu0
  %v7363 = vpop.trf.xlu0
  %v7364 = vpop.trf.xlu0
  %v7365 = vpop.trf.xlu0
  %7370 = vrot.lane.b32.xlu0 %v7346, 96
  %v7371 = vpop.permute.xlu0 %7370
  %7372 = vrot.lane.b32.xlu0 %v7347, 96
  %v7373 = vpop.permute.xlu0 %7372
  %7374 = vrot.lane.b32.xlu0 %v7348, 96
  %v7375 = vpop.permute.xlu0 %7374
  %7376 = vrot.lane.b32.xlu0 %v7349, 96
  %v7377 = vpop.permute.xlu0 %7376
  %v7383 = vsel %vm3653, %v7358, 0
  %v7386 = vsel %vm3653, %v7359, 0
  %7388 = vmatprep.subr.bf16.mxu0 0
  %7389 = vmatpush1.bf16.msra.mxu0 %v7371
  %7390 = vmatprep.subr.bf16.mxu0 0
  %7391 = vmatpush1.bf16.msra.mxu0 %v7373
  %7392 = vmatprep.subr.bf16.mxu0 0
  %7393 = vmatpush1.bf16.msra.mxu0 %v7375
  %7394 = vmatprep.subr.bf16.mxu0 0
  %7395 = vmatpush1.bf16.msra.mxu0 %v7377
  %7396 = vmatprep.subr.bf16.mxu0 0
  %7397 = vmatpush1.bf16.msra.mxu0 0
  %7398 = vmatprep.subr.bf16.mxu0 0
  %7399 = vmatpush1.bf16.msra.mxu0 0
  %7400 = vmatprep.subr.bf16.mxu0 0
  %7401 = vmatpush1.bf16.msra.mxu0 0
  %7402 = vmatprep.subr.bf16.mxu0 0
  %7403 = vmatpush1.bf16.msra.mxu0 0
  %7404 = vmatprep.subr.bf16.mxu0 0
  %7405 = vmatpush1.bf16.msra.mxu0 0
  %7406 = vmatprep.subr.bf16.mxu0 0
  %7407 = vmatpush1.bf16.msra.mxu0 0
  %7408 = vmatprep.subr.bf16.mxu0 0
  %7409 = vmatpush1.bf16.msra.mxu0 0
  %7410 = vmatprep.subr.bf16.mxu0 0
  %7411 = vmatpush1.bf16.msra.mxu0 0
  %7412 = vmatprep.subr.bf16.mxu0 0
  %7413 = vmatpush1.bf16.msra.mxu0 0
  %7414 = vmatprep.subr.bf16.mxu0 0
  %7415 = vmatpush1.bf16.msra.mxu0 0
  %7416 = vmatprep.subr.bf16.mxu0 0
  %7417 = vmatpush1.bf16.msra.mxu0 0
  %7418 = vmatprep.subr.bf16.mxu0 0
  %7419 = vmatpush1.bf16.msra.mxu0 0
  %7420 = vmatprep.mubr.bf16.mxu0 0
  %7421 = vmatmul.mubr.bf16.gmra.mrb[0].mxu0 %v7383
  %v7422 = vpop.f32.mrb[0].mxu0
  %v7423 = vadd.f32 0.0, %v7422
  %v7424 = vpop.f32.mrb[0].mxu0
  %v7425 = vpop.f32.mrb[0].mxu0
  %v7426 = vadd.f32 0.0, %v7425
  %v7427 = vpop.f32.mrb[0].mxu0
  %7428 = vmatprep.mubr.bf16.mxu0 0
  %7429 = vmatmul.mubr.bf16.gmra.mrb[0].mxu0 %v7386
  %v7430 = vpop.f32.mrb[0].mxu0
  %v7431 = vadd.f32 0.0, %v7430
  %v7432 = vpop.f32.mrb[0].mxu0
  %v7433 = vpop.f32.mrb[0].mxu0
  %v7434 = vadd.f32 0.0, %v7433
  %v7435 = vpop.f32.mrb[0].mxu0
  %7436 = vdwg.mxu0
  %v7437 = vmul.f32 %v7423, %v7263
  %v7438 = vmul.f32 %v7426, %v7264
  %v7439 = vmul.f32 %v7431, %v7265
  %v7440 = vmul.f32 %v7434, %v7266
  %v7441 = vpack.c.bf16 %v7438, %v7437
  %v7442 = vpack.c.bf16 %v7440, %v7439
  %7443 = vrot.lane.b32.xlu0 %v7346, 64
  %v7444 = vpop.permute.xlu0 %7443
  %7445 = vrot.lane.b32.xlu0 %v7347, 64
  %v7446 = vpop.permute.xlu0 %7445
  %7447 = vrot.lane.b32.xlu0 %v7348, 64
  %v7448 = vpop.permute.xlu0 %7447
  %7449 = vrot.lane.b32.xlu0 %v7349, 64
  %v7450 = vpop.permute.xlu0 %7449
  %v7452 = vsel %vm3620, %v7444, 0
  %v7455 = vsel %vm3620, %v7446, 0
  %v7458 = vsel %vm3620, %v7448, 0
  %v7461 = vsel %vm3620, %v7450, 0
  %7463 = vmatprep.subr.bf16.mxu0 0
  %7464 = vmatpush1.bf16.msra.mxu0 %v7441
  %7465 = vmatprep.subr.bf16.mxu0 0
  %7466 = vmatpush1.bf16.msra.mxu0 %v7442
  %7467 = vmatprep.subr.bf16.mxu0 0
  %7468 = vmatpush1.bf16.msra.mxu0 0
  %7469 = vmatprep.subr.bf16.mxu0 0
  %7470 = vmatpush1.bf16.msra.mxu0 0
  %7471 = vmatprep.subr.bf16.mxu0 0
  %7472 = vmatpush1.bf16.msra.mxu0 0
  %7473 = vmatprep.subr.bf16.mxu0 0
  %7474 = vmatpush1.bf16.msra.mxu0 0
  %7475 = vmatprep.subr.bf16.mxu0 0
  %7476 = vmatpush1.bf16.msra.mxu0 0
  %7477 = vmatprep.subr.bf16.mxu0 0
  %7478 = vmatpush1.bf16.msra.mxu0 0
  %7479 = vmatprep.subr.bf16.mxu0 0
  %7480 = vmatpush1.bf16.msra.mxu0 0
  %7481 = vmatprep.subr.bf16.mxu0 0
  %7482 = vmatpush1.bf16.msra.mxu0 0
  %7483 = vmatprep.subr.bf16.mxu0 0
  %7484 = vmatpush1.bf16.msra.mxu0 0
  %7485 = vmatprep.subr.bf16.mxu0 0
  %7486 = vmatpush1.bf16.msra.mxu0 0
  %7487 = vmatprep.subr.bf16.mxu0 0
  %7488 = vmatpush1.bf16.msra.mxu0 0
  %7489 = vmatprep.subr.bf16.mxu0 0
  %7490 = vmatpush1.bf16.msra.mxu0 0
  %7491 = vmatprep.subr.bf16.mxu0 0
  %7492 = vmatpush1.bf16.msra.mxu0 0
  %7493 = vmatprep.subr.bf16.mxu0 0
  %7494 = vmatpush1.bf16.msra.mxu0 0
  %7495 = vmatprep.mubr.bf16.mxu0 0
  %7496 = vmatmul.mubr.bf16.gmra.mrb[0].mxu0 %v7452
  %v7497 = vpop.f32.mrb[0].mxu0
  %v7498 = vadd.f32 0.0, %v7497
  %v7499 = vpop.f32.mrb[0].mxu0
  %v7500 = vpop.f32.mrb[0].mxu0
  %v7501 = vadd.f32 0.0, %v7500
  %v7502 = vpop.f32.mrb[0].mxu0
  %7503 = vmatprep.mubr.bf16.mxu0 0
  %7504 = vmatmul.mubr.bf16.gmra.mrb[0].mxu0 %v7455
  %v7505 = vpop.f32.mrb[0].mxu0
  %v7506 = vadd.f32 0.0, %v7505
  %v7507 = vpop.f32.mrb[0].mxu0
  %v7508 = vpop.f32.mrb[0].mxu0
  %v7509 = vadd.f32 0.0, %v7508
  %v7510 = vpop.f32.mrb[0].mxu0
  %7511 = vmatprep.mubr.bf16.mxu0 0
  %7512 = vmatmul.mubr.bf16.gmra.mrb[0].mxu0 %v7458
  %v7513 = vpop.f32.mrb[0].mxu0
  %v7514 = vadd.f32 0.0, %v7513
  %v7515 = vpop.f32.mrb[0].mxu0
  %v7516 = vpop.f32.mrb[0].mxu0
  %v7517 = vadd.f32 0.0, %v7516
  %v7518 = vpop.f32.mrb[0].mxu0
  %7519 = vmatprep.mubr.bf16.mxu0 0
  %7520 = vmatmul.mubr.bf16.gmra.mrb[0].mxu0 %v7461
  %v7521 = vpop.f32.mrb[0].mxu0
  %v7522 = vadd.f32 0.0, %v7521
  %v7523 = vpop.f32.mrb[0].mxu0
  %v7524 = vpop.f32.mrb[0].mxu0
  %v7525 = vadd.f32 0.0, %v7524
  %v7526 = vpop.f32.mrb[0].mxu0
  %7527 = vdwg.mxu0
  %v7528 = vmul.f32 %v7498, 0.4472136
  %v7529 = vmul.f32 %v7501, 0.4472136
  %v7530 = vmul.f32 %v7506, 0.4472136
  %v7531 = vmul.f32 %v7509, 0.4472136
  %v7532 = vmul.f32 %v7514, 0.4472136
  %v7533 = vmul.f32 %v7517, 0.4472136
  %v7534 = vmul.f32 %v7522, 0.4472136
  %v7535 = vmul.f32 %v7525, 0.4472136
  %7544 = vrot.lane.b32.xlu0 %v7247, 64
  %v7545 = vpop.permute.xlu0 %7544
  %7546 = vrot.lane.b32.xlu0 %v7248, 64
  %v7547 = vpop.permute.xlu0 %7546
  %7548 = vrot.lane.b32.xlu0 %v7249, 64
  %v7549 = vpop.permute.xlu0 %7548
  %7550 = vrot.lane.b32.xlu0 %v7250, 64
  %v7551 = vpop.permute.xlu0 %7550
  %7552 = vrot.lane.b32.xlu0 %v7251, 64
  %v7553 = vpop.permute.xlu0 %7552
  %7554 = vrot.lane.b32.xlu0 %v7252, 64
  %v7555 = vpop.permute.xlu0 %7554
  %7556 = vrot.lane.b32.xlu0 %v7253, 64
  %v7557 = vpop.permute.xlu0 %7556
  %7558 = vrot.lane.b32.xlu0 %v7254, 64
  %v7559 = vpop.permute.xlu0 %7558
  %v7568 = vmul.f32 %v3958, %v7545
  %v7569 = vmul.f32 %v3959, %v7547
  %v7570 = vmul.f32 %v3960, %v7549
  %v7571 = vmul.f32 %v3961, %v7551
  %v7572 = vmul.f32 %v3962, %v7553
  %v7573 = vmul.f32 %v3963, %v7555
  %v7574 = vmul.f32 %v3964, %v7557
  %v7575 = vmul.f32 %v3965, %v7559
  %7584 = vrot.lane.b32.xlu0 %v7568, 64
  %v7585 = vpop.permute.xlu0 %7584
  %7586 = vrot.lane.b32.xlu0 %v7569, 64
  %v7587 = vpop.permute.xlu0 %7586
  %7588 = vrot.lane.b32.xlu0 %v7570, 64
  %v7589 = vpop.permute.xlu0 %7588
  %7590 = vrot.lane.b32.xlu0 %v7571, 64
  %v7591 = vpop.permute.xlu0 %7590
  %7592 = vrot.lane.b32.xlu0 %v7572, 64
  %v7593 = vpop.permute.xlu0 %7592
  %7594 = vrot.lane.b32.xlu0 %v7573, 64
  %v7595 = vpop.permute.xlu0 %7594
  %7596 = vrot.lane.b32.xlu0 %v7574, 64
  %v7597 = vpop.permute.xlu0 %7596
  %7598 = vrot.lane.b32.xlu0 %v7575, 64
  %v7599 = vpop.permute.xlu0 %7598
  %v7608 = vadd.f32 %v7528, %v7585
  %v7609 = vadd.f32 %v7529, %v7587
  %v7610 = vadd.f32 %v7530, %v7589
  %v7611 = vadd.f32 %v7531, %v7591
  %v7612 = vadd.f32 %v7532, %v7593
  %v7613 = vadd.f32 %v7533, %v7595
  %v7614 = vadd.f32 %v7534, %v7597
  %v7615 = vadd.f32 %v7535, %v7599
  %v7616 = vsel %vm3620, %v3966, -inf
  %v7617 = vsel %vm3620, %v3967, -inf
  %v7618 = vsel %vm3620, %v3968, -inf
  %v7619 = vsel %vm3620, %v3969, -inf
  %v7620 = vsel %vm3620, %v3970, -inf
  %v7621 = vmax.f32 %v7616, %v7620
  %v7622 = vsel %vm3620, %v3971, -inf
  %v7623 = vmax.f32 %v7617, %v7622
  %v7624 = vsel %vm3620, %v3972, -inf
  %v7625 = vmax.f32 %v7618, %v7624
  %v7626 = vsel %vm3620, %v3973, -inf
  %v7627 = vmax.f32 %v7619, %v7626
  %v7628 = vmax.f32 %v7621, %v7623
  %v7629 = vmax.f32 %v7625, %v7627
  %v7630 = vmax.f32 %v7628, %v7629
  %v7631 = vrot.slane %v7630, 4
  %v7632 = vmax.f32 %v7630, %v7631
  %v7633 = vrot.slane %v7632, 2
  %v7634 = vmax.f32 %v7632, %v7633
  %v7635 = vrot.slane %v7634, 1
  %v7636 = vmax.f32 %v7634, %v7635
  %v7637 = vsub.f32 %v3966, %v7636
  %v7638 = vsub.f32 %v3967, %v7636
  %v7639 = vsub.f32 %v3968, %v7636
  %v7640 = vsub.f32 %v3969, %v7636
  %v7641 = vsub.f32 %v3970, %v7636
  %v7642 = vsub.f32 %v3971, %v7636
  %v7643 = vsub.f32 %v3972, %v7636
  %v7644 = vsub.f32 %v3973, %v7636
  %v7645 = vmul.f32 %v7637, 1.442695
  %v7646 = vpow.pop %v7645
  %v7647 = vmul.f32 %v7638, 1.442695
  %v7648 = vpow.pop %v7647
  %v7649 = vmul.f32 %v7639, 1.442695
  %v7650 = vpow.pop %v7649
  %v7651 = vmul.f32 %v7640, 1.442695
  %v7652 = vpow.pop %v7651
  %v7653 = vmul.f32 %v7641, 1.442695
  %v7654 = vpow.pop %v7653
  %v7655 = vmul.f32 %v7642, 1.442695
  %v7656 = vpow.pop %v7655
  %v7657 = vmul.f32 %v7643, 1.442695
  %v7658 = vpow.pop %v7657
  %v7659 = vmul.f32 %v7644, 1.442695
  %v7660 = vpow.pop %v7659
  %v7661 = vsel %vm3620, %v7646, 0.0
  %v7662 = vsel %vm3620, %v7648, 0.0
  %v7663 = vadd.f32 %v7661, %v7662
  %v7664 = vsel %vm3620, %v7650, 0.0
  %v7665 = vadd.f32 %v7663, %v7664
  %v7666 = vsel %vm3620, %v7652, 0.0
  %v7667 = vadd.f32 %v7665, %v7666
  %v7668 = vsel %vm3620, %v7654, 0.0
  %v7669 = vadd.f32 %v7667, %v7668
  %v7670 = vsel %vm3620, %v7656, 0.0
  %v7671 = vadd.f32 %v7669, %v7670
  %v7672 = vsel %vm3620, %v7658, 0.0
  %v7673 = vadd.f32 %v7671, %v7672
  %v7674 = vsel %vm3620, %v7660, 0.0
  %v7675 = vadd.f32 %v7673, %v7674
  %v7676 = vrot.slane %v7675, 4
  %v7677 = vadd.f32 %v7675, %v7676
  %v7678 = vrot.slane %v7677, 2
  %v7679 = vadd.f32 %v7677, %v7678
  %v7680 = vrot.slane %v7679, 1
  %v7681 = vadd.f32 %v7679, %v7680
  %v7682 = vrcp.pop %v7681
  %v7683 = vmul.f32 %v7646, %v7682
  %v7684 = vmul.f32 %v7648, %v7682
  %v7685 = vmul.f32 %v7650, %v7682
  %v7686 = vmul.f32 %v7652, %v7682
  %v7687 = vmul.f32 %v7654, %v7682
  %v7688 = vmul.f32 %v7656, %v7682
  %v7689 = vmul.f32 %v7658, %v7682
  %v7690 = vmul.f32 %v7660, %v7682
  %v7691 = vpack.c.bf16 %v7684, %v7683
  %v7692 = vpack.c.bf16 %v7686, %v7685
  %v7693 = vpack.c.bf16 %v7688, %v7687
  %v7694 = vpack.c.bf16 %v7690, %v7689
  %v7695 = vpack.c.bf16 %v3967, %v3966
  %v7696 = vpack.c.bf16 %v3969, %v3968
  %v7697 = vpack.c.bf16 %v3971, %v3970
  %v7698 = vpack.c.bf16 %v3973, %v3972
  %7699 = vxpose.xlu0.c.b16.start [1/8] %v7691, 128
  %7700 = vxpose.xlu0.c.b16.cont [2/8] %v7692, 128
  %7701 = vxpose.xlu0.c.b16.cont [3/8] %v7693, 128
  %7702 = vxpose.xlu0.c.b16.cont [4/8] %v7694, 128
  %7703 = vxpose.xlu0.c.b16.cont [5/8] 0, 128
  %7704 = vxpose.xlu0.c.b16.cont [6/8] 0, 128
  %7705 = vxpose.xlu0.c.b16.cont [7/8] 0, 128
  %7706 = vxpose.xlu0.c.b16.end [8/8] 0, 128
  %v7707 = vpop.trf.xlu0
  %v7708 = vpop.trf.xlu0
  %v7709 = vpop.trf.xlu0
  %v7710 = vpop.trf.xlu0
  %v7711 = vpop.trf.xlu0
  %v7712 = vpop.trf.xlu0
  %v7713 = vpop.trf.xlu0
  %v7714 = vpop.trf.xlu0
  %7719 = vrot.lane.b32.xlu0 %v7695, 96
  %v7720 = vpop.permute.xlu0 %7719
  %7721 = vrot.lane.b32.xlu0 %v7696, 96
  %v7722 = vpop.permute.xlu0 %7721
  %7723 = vrot.lane.b32.xlu0 %v7697, 96
  %v7724 = vpop.permute.xlu0 %7723
  %7725 = vrot.lane.b32.xlu0 %v7698, 96
  %v7726 = vpop.permute.xlu0 %7725
  %v7732 = vsel %vm3653, %v7707, 0
  %v7735 = vsel %vm3653, %v7708, 0
  %7737 = vmatprep.subr.bf16.mxu0 0
  %7738 = vmatpush1.bf16.msra.mxu0 %v7720
  %7739 = vmatprep.subr.bf16.mxu0 0
  %7740 = vmatpush1.bf16.msra.mxu0 %v7722
  %7741 = vmatprep.subr.bf16.mxu0 0
  %7742 = vmatpush1.bf16.msra.mxu0 %v7724
  %7743 = vmatprep.subr.bf16.mxu0 0
  %7744 = vmatpush1.bf16.msra.mxu0 %v7726
  %7745 = vmatprep.subr.bf16.mxu0 0
  %7746 = vmatpush1.bf16.msra.mxu0 0
  %7747 = vmatprep.subr.bf16.mxu0 0
  %7748 = vmatpush1.bf16.msra.mxu0 0
  %7749 = vmatprep.subr.bf16.mxu0 0
  %7750 = vmatpush1.bf16.msra.mxu0 0
  %7751 = vmatprep.subr.bf16.mxu0 0
  %7752 = vmatpush1.bf16.msra.mxu0 0
  %7753 = vmatprep.subr.bf16.mxu0 0
  %7754 = vmatpush1.bf16.msra.mxu0 0
  %7755 = vmatprep.subr.bf16.mxu0 0
  %7756 = vmatpush1.bf16.msra.mxu0 0
  %7757 = vmatprep.subr.bf16.mxu0 0
  %7758 = vmatpush1.bf16.msra.mxu0 0
  %7759 = vmatprep.subr.bf16.mxu0 0
  %7760 = vmatpush1.bf16.msra.mxu0 0
  %7761 = vmatprep.subr.bf16.mxu0 0
  %7762 = vmatpush1.bf16.msra.mxu0 0
  %7763 = vmatprep.subr.bf16.mxu0 0
  %7764 = vmatpush1.bf16.msra.mxu0 0
  %7765 = vmatprep.subr.bf16.mxu0 0
  %7766 = vmatpush1.bf16.msra.mxu0 0
  %7767 = vmatprep.subr.bf16.mxu0 0
  %7768 = vmatpush1.bf16.msra.mxu0 0
  %7769 = vmatprep.mubr.bf16.mxu0 0
  %7770 = vmatmul.mubr.bf16.gmra.mrb[0].mxu0 %v7732
  %v7771 = vpop.f32.mrb[0].mxu0
  %v7772 = vadd.f32 0.0, %v7771
  %v7773 = vpop.f32.mrb[0].mxu0
  %v7774 = vpop.f32.mrb[0].mxu0
  %v7775 = vadd.f32 0.0, %v7774
  %v7776 = vpop.f32.mrb[0].mxu0
  %7777 = vmatprep.mubr.bf16.mxu0 0
  %7778 = vmatmul.mubr.bf16.gmra.mrb[0].mxu0 %v7735
  %v7779 = vpop.f32.mrb[0].mxu0
  %v7780 = vadd.f32 0.0, %v7779
  %v7781 = vpop.f32.mrb[0].mxu0
  %v7782 = vpop.f32.mrb[0].mxu0
  %v7783 = vadd.f32 0.0, %v7782
  %v7784 = vpop.f32.mrb[0].mxu0
  %7785 = vdwg.mxu0
  %v7786 = vmul.f32 %v7772, %v7263
  %v7787 = vmul.f32 %v7775, %v7264
  %v7788 = vmul.f32 %v7780, %v7265
  %v7789 = vmul.f32 %v7783, %v7266
  %v7790 = vpack.c.bf16 %v7787, %v7786
  %v7791 = vpack.c.bf16 %v7789, %v7788
  %7792 = vrot.lane.b32.xlu0 %v7695, 64
  %v7793 = vpop.permute.xlu0 %7792
  %7794 = vrot.lane.b32.xlu0 %v7696, 64
  %v7795 = vpop.permute.xlu0 %7794
  %7796 = vrot.lane.b32.xlu0 %v7697, 64
  %v7797 = vpop.permute.xlu0 %7796
  %7798 = vrot.lane.b32.xlu0 %v7698, 64
  %v7799 = vpop.permute.xlu0 %7798
  %v7801 = vsel %vm3620, %v7793, 0
  %v7804 = vsel %vm3620, %v7795, 0
  %v7807 = vsel %vm3620, %v7797, 0
  %v7810 = vsel %vm3620, %v7799, 0
  %7812 = vmatprep.subr.bf16.mxu0 0
  %7813 = vmatpush1.bf16.msra.mxu0 %v7790
  %7814 = vmatprep.subr.bf16.mxu0 0
  %7815 = vmatpush1.bf16.msra.mxu0 %v7791
  %7816 = vmatprep.subr.bf16.mxu0 0
  %7817 = vmatpush1.bf16.msra.mxu0 0
  %7818 = vmatprep.subr.bf16.mxu0 0
  %7819 = vmatpush1.bf16.msra.mxu0 0
  %7820 = vmatprep.subr.bf16.mxu0 0
  %7821 = vmatpush1.bf16.msra.mxu0 0
  %7822 = vmatprep.subr.bf16.mxu0 0
  %7823 = vmatpush1.bf16.msra.mxu0 0
  %7824 = vmatprep.subr.bf16.mxu0 0
  %7825 = vmatpush1.bf16.msra.mxu0 0
  %7826 = vmatprep.subr.bf16.mxu0 0
  %7827 = vmatpush1.bf16.msra.mxu0 0
  %7828 = vmatprep.subr.bf16.mxu0 0
  %7829 = vmatpush1.bf16.msra.mxu0 0
  %7830 = vmatprep.subr.bf16.mxu0 0
  %7831 = vmatpush1.bf16.msra.mxu0 0
  %7832 = vmatprep.subr.bf16.mxu0 0
  %7833 = vmatpush1.bf16.msra.mxu0 0
  %7834 = vmatprep.subr.bf16.mxu0 0
  %7835 = vmatpush1.bf16.msra.mxu0 0
  %7836 = vmatprep.subr.bf16.mxu0 0
  %7837 = vmatpush1.bf16.msra.mxu0 0
  %7838 = vmatprep.subr.bf16.mxu0 0
  %7839 = vmatpush1.bf16.msra.mxu0 0
  %7840 = vmatprep.subr.bf16.mxu0 0
  %7841 = vmatpush1.bf16.msra.mxu0 0
  %7842 = vmatprep.subr.bf16.mxu0 0
  %7843 = vmatpush1.bf16.msra.mxu0 0
  %7844 = vmatprep.mubr.bf16.mxu0 0
  %7845 = vmatmul.mubr.bf16.gmra.mrb[0].mxu0 %v7801
  %v7846 = vpop.f32.mrb[0].mxu0
  %v7847 = vadd.f32 0.0, %v7846
  %v7848 = vpop.f32.mrb[0].mxu0
  %v7849 = vpop.f32.mrb[0].mxu0
  %v7850 = vadd.f32 0.0, %v7849
  %v7851 = vpop.f32.mrb[0].mxu0
  %7852 = vmatprep.mubr.bf16.mxu0 0
  %7853 = vmatmul.mubr.bf16.gmra.mrb[0].mxu0 %v7804
  %v7854 = vpop.f32.mrb[0].mxu0
  %v7855 = vadd.f32 0.0, %v7854
  %v7856 = vpop.f32.mrb[0].mxu0
  %v7857 = vpop.f32.mrb[0].mxu0
  %v7858 = vadd.f32 0.0, %v7857
  %v7859 = vpop.f32.mrb[0].mxu0
  %7860 = vmatprep.mubr.bf16.mxu0 0
  %7861 = vmatmul.mubr.bf16.gmra.mrb[0].mxu0 %v7807
  %v7862 = vpop.f32.mrb[0].mxu0
  %v7863 = vadd.f32 0.0, %v7862
  %v7864 = vpop.f32.mrb[0].mxu0
  %v7865 = vpop.f32.mrb[0].mxu0
  %v7866 = vadd.f32 0.0, %v7865
  %v7867 = vpop.f32.mrb[0].mxu0
  %7868 = vmatprep.mubr.bf16.mxu0 0
  %7869 = vmatmul.mubr.bf16.gmra.mrb[0].mxu0 %v7810
  %v7870 = vpop.f32.mrb[0].mxu0
  %v7871 = vadd.f32 0.0, %v7870
  %v7872 = vpop.f32.mrb[0].mxu0
  %v7873 = vpop.f32.mrb[0].mxu0
  %v7874 = vadd.f32 0.0, %v7873
  %v7875 = vpop.f32.mrb[0].mxu0
  %7876 = vdwg.mxu0
  %v7877 = vmul.f32 %v7847, 0.4472136
  %v7878 = vmul.f32 %v7850, 0.4472136
  %v7879 = vmul.f32 %v7855, 0.4472136
  %v7880 = vmul.f32 %v7858, 0.4472136
  %v7881 = vmul.f32 %v7863, 0.4472136
  %v7882 = vmul.f32 %v7866, 0.4472136
  %v7883 = vmul.f32 %v7871, 0.4472136
  %v7884 = vmul.f32 %v7874, 0.4472136
  %7893 = vrot.lane.b32.xlu0 %v7255, 64
  %v7894 = vpop.permute.xlu0 %7893
  %7895 = vrot.lane.b32.xlu0 %v7256, 64
  %v7896 = vpop.permute.xlu0 %7895
  %7897 = vrot.lane.b32.xlu0 %v7257, 64
  %v7898 = vpop.permute.xlu0 %7897
  %7899 = vrot.lane.b32.xlu0 %v7258, 64
  %v7900 = vpop.permute.xlu0 %7899
  %7901 = vrot.lane.b32.xlu0 %v7259, 64
  %v7902 = vpop.permute.xlu0 %7901
  %7903 = vrot.lane.b32.xlu0 %v7260, 64
  %v7904 = vpop.permute.xlu0 %7903
  %7905 = vrot.lane.b32.xlu0 %v7261, 64
  %v7906 = vpop.permute.xlu0 %7905
  %7907 = vrot.lane.b32.xlu0 %v7262, 64
  %v7908 = vpop.permute.xlu0 %7907
  %v7917 = vmul.f32 %v3966, %v7894
  %v7918 = vmul.f32 %v3967, %v7896
  %v7919 = vmul.f32 %v3968, %v7898
  %v7920 = vmul.f32 %v3969, %v7900
  %v7921 = vmul.f32 %v3970, %v7902
  %v7922 = vmul.f32 %v3971, %v7904
  %v7923 = vmul.f32 %v3972, %v7906
  %v7924 = vmul.f32 %v3973, %v7908
  %7933 = vrot.lane.b32.xlu0 %v7917, 64
  %v7934 = vpop.permute.xlu0 %7933
  %7935 = vrot.lane.b32.xlu0 %v7918, 64
  %v7936 = vpop.permute.xlu0 %7935
  %7937 = vrot.lane.b32.xlu0 %v7919, 64
  %v7938 = vpop.permute.xlu0 %7937
  %7939 = vrot.lane.b32.xlu0 %v7920, 64
  %v7940 = vpop.permute.xlu0 %7939
  %7941 = vrot.lane.b32.xlu0 %v7921, 64
  %v7942 = vpop.permute.xlu0 %7941
  %7943 = vrot.lane.b32.xlu0 %v7922, 64
  %v7944 = vpop.permute.xlu0 %7943
  %7945 = vrot.lane.b32.xlu0 %v7923, 64
  %v7946 = vpop.permute.xlu0 %7945
  %7947 = vrot.lane.b32.xlu0 %v7924, 64
  %v7948 = vpop.permute.xlu0 %7947
  %v7957 = vadd.f32 %v7877, %v7934
  %v7958 = vadd.f32 %v7878, %v7936
  %v7959 = vadd.f32 %v7879, %v7938
  %v7960 = vadd.f32 %v7880, %v7940
  %v7961 = vadd.f32 %v7881, %v7942
  %v7962 = vadd.f32 %v7882, %v7944
  %v7963 = vadd.f32 %v7883, %v7946
  %v7964 = vadd.f32 %v7884, %v7948
  %7981 = vrot.lane.b32.xlu0 %v4921, 88
  %v7982 = vpop.permute.xlu0 %7981
  %7983 = vrot.lane.b32.xlu0 %v4922, 88
  %v7984 = vpop.permute.xlu0 %7983
  %7985 = vrot.lane.b32.xlu0 %v4923, 88
  %v7986 = vpop.permute.xlu0 %7985
  %7987 = vrot.lane.b32.xlu0 %v4924, 88
  %v7988 = vpop.permute.xlu0 %7987
  %7989 = vrot.lane.b32.xlu0 %v4925, 88
  %v7990 = vpop.permute.xlu0 %7989
  %7991 = vrot.lane.b32.xlu0 %v4926, 88
  %v7992 = vpop.permute.xlu0 %7991
  %7993 = vrot.lane.b32.xlu0 %v4927, 88
  %v7994 = vpop.permute.xlu0 %7993
  %7995 = vrot.lane.b32.xlu0 %v4928, 88
  %v7996 = vpop.permute.xlu0 %7995
  %7997 = vrot.lane.b32.xlu0 %v4929, 88
  %v7998 = vpop.permute.xlu0 %7997
  %7999 = vrot.lane.b32.xlu0 %v4930, 88
  %v8000 = vpop.permute.xlu0 %7999
  %8001 = vrot.lane.b32.xlu0 %v4931, 88
  %v8002 = vpop.permute.xlu0 %8001
  %8003 = vrot.lane.b32.xlu0 %v4932, 88
  %v8004 = vpop.permute.xlu0 %8003
  %8005 = vrot.lane.b32.xlu0 %v4933, 88
  %v8006 = vpop.permute.xlu0 %8005
  %8007 = vrot.lane.b32.xlu0 %v4934, 88
  %v8008 = vpop.permute.xlu0 %8007
  %8009 = vrot.lane.b32.xlu0 %v4935, 88
  %v8010 = vpop.permute.xlu0 %8009
  %8011 = vrot.lane.b32.xlu0 %v4936, 88
  %v8012 = vpop.permute.xlu0 %8011
  %v8029 = vsel %vm3620, %v7608, %v7982
  %v8030 = vsel %vm3620, %v7609, %v7984
  %v8031 = vsel %vm3620, %v7610, %v7986
  %v8032 = vsel %vm3620, %v7611, %v7988
  %v8033 = vsel %vm3620, %v7612, %v7990
  %v8034 = vsel %vm3620, %v7613, %v7992
  %v8035 = vsel %vm3620, %v7614, %v7994
  %v8036 = vsel %vm3620, %v7615, %v7996
  %v8037 = vsel %vm3620, %v7957, %v7998
  %v8038 = vsel %vm3620, %v7958, %v8000
  %v8039 = vsel %vm3620, %v7959, %v8002
  %v8040 = vsel %vm3620, %v7960, %v8004
  %v8041 = vsel %vm3620, %v7961, %v8006
  %v8042 = vsel %vm3620, %v7962, %v8008
  %v8043 = vsel %vm3620, %v7963, %v8010
  %v8044 = vsel %vm3620, %v7964, %v8012
  %v8045 = vpack.c.bf16 %v8030, %v8029
  %v8046 = vpack.c.bf16 %v8032, %v8031
  %v8047 = vpack.c.bf16 %v8034, %v8033
  %v8048 = vpack.c.bf16 %v8036, %v8035
  %v8049 = vpack.c.bf16 %v8038, %v8037
  %v8050 = vpack.c.bf16 %v8040, %v8039
  %v8051 = vpack.c.bf16 %v8042, %v8041
  %v8052 = vpack.c.bf16 %v8044, %v8043
  %v8053 = vld [vmem:[%s13] sm:$0xf]
  %v8054 = vld [vmem:[%s13 + $0x4] sm:$0xf]
  %v8055 = vld [vmem:[%s13 + $0x8] sm:$0xf]
  %v8056 = vld [vmem:[%s13 + $0xc] sm:$0xf]
  %v8057 = vld [vmem:[%s13 + $0x10] sm:$0xf]
  %v8058 = vld [vmem:[%s14] sm:$0x1]
  %v8060 = vlaneseq
  %v8061 = vshrl.u32 %v8060, 7
  %v8062 = vsub.s32 0, %v8061
  %v8063 = vrot.slane %v8058, %v8062
  %v8070 = vunpack.c.l.b16 %v8053
  %v8071 = vunpack.c.l.b16 %v8054
  %v8072 = vunpack.c.l.b16 %v8055
  %v8073 = vunpack.c.l.b16 %v8056
  %v8074 = vunpack.c.l.b16 %v8057
  %v8075 = vpack.c.b16 %v8071, %v8070
  %v8076 = vpack.c.b16 %v8073, %v8072
  %v8077 = vpack.c.b16 %v8074, %v8074
  %v8081 = vsel %vm111, %v8045, 0
  %v8084 = vsel %vm111, %v8046, 0
  %v8087 = vsel %vm111, %v8047, 0
  %v8090 = vsel %vm111, %v8048, 0
  %v8093 = vsel %vm111, %v8049, 0
  %v8096 = vsel %vm111, %v8050, 0
  %v8099 = vsel %vm111, %v8051, 0
  %v8102 = vsel %vm111, %v8052, 0
  %v8105 = vsel %vm136, %v8077, 0
  %8107 = vmatprep.subr.bf16.mxu0 0
  %8108 = vmatpush1.bf16.msra.mxu0 %v8075
  %8109 = vmatprep.subr.bf16.mxu0 0
  %8110 = vmatpush1.bf16.msra.mxu0 %v8076
  %8111 = vmatprep.subr.bf16.mxu0 0
  %8112 = vmatpush1.bf16.msra.mxu0 %v8105
  %8113 = vmatprep.subr.bf16.mxu0 0
  %8114 = vmatpush1.bf16.msra.mxu0 0
  %8115 = vmatprep.subr.bf16.mxu0 0
  %8116 = vmatpush1.bf16.msra.mxu0 0
  %8117 = vmatprep.subr.bf16.mxu0 0
  %8118 = vmatpush1.bf16.msra.mxu0 0
  %8119 = vmatprep.subr.bf16.mxu0 0
  %8120 = vmatpush1.bf16.msra.mxu0 0
  %8121 = vmatprep.subr.bf16.mxu0 0
  %8122 = vmatpush1.bf16.msra.mxu0 0
  %8123 = vmatprep.subr.bf16.mxu0 0
  %8124 = vmatpush1.bf16.msra.mxu0 0
  %8125 = vmatprep.subr.bf16.mxu0 0
  %8126 = vmatpush1.bf16.msra.mxu0 0
  %8127 = vmatprep.subr.bf16.mxu0 0
  %8128 = vmatpush1.bf16.msra.mxu0 0
  %8129 = vmatprep.subr.bf16.mxu0 0
  %8130 = vmatpush1.bf16.msra.mxu0 0
  %8131 = vmatprep.subr.bf16.mxu0 0
  %8132 = vmatpush1.bf16.msra.mxu0 0
  %8133 = vmatprep.subr.bf16.mxu0 0
  %8134 = vmatpush1.bf16.msra.mxu0 0
  %8135 = vmatprep.subr.bf16.mxu0 0
  %8136 = vmatpush1.bf16.msra.mxu0 0
  %8137 = vmatprep.subr.bf16.mxu0 0
  %8138 = vmatpush1.bf16.msra.mxu0 0
  %8139 = vmatprep.mubr.bf16.mxu0 0
  %8140 = vmatmul.mubr.bf16.gmra.mrb[0].mxu0 %v8081
  %v8141 = vpop.f32.mrb[0].mxu0
  %v8142 = vadd.f32 %v8063, %v8141
  %v8143 = vpop.f32.mrb[0].mxu0
  %v8144 = vpop.f32.mrb[0].mxu0
  %v8145 = vadd.f32 %v8063, %v8144
  %v8146 = vpop.f32.mrb[0].mxu0
  %8147 = vmatprep.mubr.bf16.mxu0 0
  %8148 = vmatmul.mubr.bf16.gmra.mrb[0].mxu0 %v8084
  %v8149 = vpop.f32.mrb[0].mxu0
  %v8150 = vadd.f32 %v8063, %v8149
  %v8151 = vpop.f32.mrb[0].mxu0
  %v8152 = vpop.f32.mrb[0].mxu0
  %v8153 = vadd.f32 %v8063, %v8152
  %v8154 = vpop.f32.mrb[0].mxu0
  %8155 = vmatprep.mubr.bf16.mxu0 0
  %8156 = vmatmul.mubr.bf16.gmra.mrb[0].mxu0 %v8087
  %v8157 = vpop.f32.mrb[0].mxu0
  %v8158 = vadd.f32 %v8063, %v8157
  %v8159 = vpop.f32.mrb[0].mxu0
  %v8160 = vpop.f32.mrb[0].mxu0
  %v8161 = vadd.f32 %v8063, %v8160
  %v8162 = vpop.f32.mrb[0].mxu0
  %8163 = vmatprep.mubr.bf16.mxu0 0
  %8164 = vmatmul.mubr.bf16.gmra.mrb[0].mxu0 %v8090
  %v8165 = vpop.f32.mrb[0].mxu0
  %v8166 = vadd.f32 %v8063, %v8165
  %v8167 = vpop.f32.mrb[0].mxu0
  %v8168 = vpop.f32.mrb[0].mxu0
  %v8169 = vadd.f32 %v8063, %v8168
  %v8170 = vpop.f32.mrb[0].mxu0
  %8171 = vmatprep.mubr.bf16.mxu0 0
  %8172 = vmatmul.mubr.bf16.gmra.mrb[0].mxu0 %v8093
  %v8173 = vpop.f32.mrb[0].mxu0
  %v8174 = vadd.f32 %v8063, %v8173
  %v8175 = vpop.f32.mrb[0].mxu0
  %v8176 = vpop.f32.mrb[0].mxu0
  %v8177 = vadd.f32 %v8063, %v8176
  %v8178 = vpop.f32.mrb[0].mxu0
  %8179 = vmatprep.mubr.bf16.mxu0 0
  %8180 = vmatmul.mubr.bf16.gmra.mrb[0].mxu0 %v8096
  %v8181 = vpop.f32.mrb[0].mxu0
  %v8182 = vadd.f32 %v8063, %v8181
  %v8183 = vpop.f32.mrb[0].mxu0
  %v8184 = vpop.f32.mrb[0].mxu0
  %v8185 = vadd.f32 %v8063, %v8184
  %v8186 = vpop.f32.mrb[0].mxu0
  %8187 = vmatprep.mubr.bf16.mxu0 0
  %8188 = vmatmul.mubr.bf16.gmra.mrb[0].mxu0 %v8099
  %v8189 = vpop.f32.mrb[0].mxu0
  %v8190 = vadd.f32 %v8063, %v8189
  %v8191 = vpop.f32.mrb[0].mxu0
  %v8192 = vpop.f32.mrb[0].mxu0
  %v8193 = vadd.f32 %v8063, %v8192
  %v8194 = vpop.f32.mrb[0].mxu0
  %8195 = vmatprep.mubr.bf16.mxu0 0
  %8196 = vmatmul.mubr.bf16.gmra.mrb[0].mxu0 %v8102
  %v8197 = vpop.f32.mrb[0].mxu0
  %v8198 = vadd.f32 %v8063, %v8197
  %v8199 = vpop.f32.mrb[0].mxu0
  %v8200 = vpop.f32.mrb[0].mxu0
  %v8201 = vadd.f32 %v8063, %v8200
  %v8202 = vpop.f32.mrb[0].mxu0
  %8203 = vdwg.mxu0
  %8204 = vst.msk [vmem:[%s15] sm:$0xff] %vm111, %v8142
  %8205 = vst.msk [vmem:[%s15 + $0x8] sm:$0xff] %vm111, %v8145
  %8206 = vst.msk [vmem:[%s15 + $0x10] sm:$0xff] %vm111, %v8150
  %8207 = vst.msk [vmem:[%s15 + $0x18] sm:$0xff] %vm111, %v8153
  %8208 = vst.msk [vmem:[%s15 + $0x20] sm:$0xff] %vm111, %v8158
  %8209 = vst.msk [vmem:[%s15 + $0x28] sm:$0xff] %vm111, %v8161
  %8210 = vst.msk [vmem:[%s15 + $0x30] sm:$0xff] %vm111, %v8166
  %8211 = vst.msk [vmem:[%s15 + $0x38] sm:$0xff] %vm111, %v8169
  %8212 = vst.msk [vmem:[%s15 + $0x40] sm:$0xff] %vm111, %v8174
  %8213 = vst.msk [vmem:[%s15 + $0x48] sm:$0xff] %vm111, %v8177
  %8214 = vst.msk [vmem:[%s15 + $0x50] sm:$0xff] %vm111, %v8182
  %8215 = vst.msk [vmem:[%s15 + $0x58] sm:$0xff] %vm111, %v8185
  %8216 = vst.msk [vmem:[%s15 + $0x60] sm:$0xff] %vm111, %v8190
  %8217 = vst.msk [vmem:[%s15 + $0x68] sm:$0xff] %vm111, %v8193
  %8218 = vst.msk [vmem:[%s15 + $0x70] sm:$0xff] %vm111, %v8198
  %8219 = vst.msk [vmem:[%s15 + $0x78] sm:$0xff] %vm111, %v8201
  // Predicated region
  $region62: #{_lambda_.1} parent=0 // pred_check
    _
  $region63: #{_lambda_.1} parent=0 // pred_check_branch
    %8221 = sbr.rel (0) target = $region65
  $region64: #{_lambda_.1} parent=0 // pred_region
    _
  $region65: #{_lambda_.1} parent=0 // pred_fallthru
    _
  // Predicated region
  $region66: #{_lambda_.1} parent=0 // pred_check
    _
  $region67: #{_lambda_.1} parent=0 // pred_check_branch
    %8223 = sbr.rel (0) target = $region69
  $region68: #{_lambda_.1} parent=0 // pred_region
    _
  $region69: #{_lambda_.1} parent=0 // pred_fallthru
    _

</llo_original>
